<compile_context>
chip_gen: v7x
topology: tpu7x:2x2x1
jax: 0.10.0
libtpu: 0.0.40
codegen_flags: <defaults>
</compile_context>

<pallas_src>
import functools

import jax
import jax.numpy as jnp
from jax import lax
from jax.experimental import pallas as pl
from jax.experimental.pallas import tpu as pltpu

_ALIGN = 16  # width alignment: multiple of both the f32 (8) and bf16 (16)
             # sublane groups, so (rows, W) collapses are layout-preserving.


def _round_up(x, m):
    return (x + m - 1) // m * m


def res_conv_block_kernel(x_ref, w1_ref, s1_ref, b1_ref, w2_ref, s2_ref, b2_ref,
                          wid_ref, bid_ref, o_ref, h1_ref, *, H, W, Wo, Wc):
    """One batch image per grid step.

    x_ref : (1, H+4, Wc+2, Cin) bf16 — input zero-padded by 2 on top/left and
            >=2 on bottom/right, so conv1 can be evaluated on the extended
            (H+2, Wc) grid that already contains conv2's zero halo.
    h1_ref: (H+2, Wc, Cout) f32 VMEM scratch = relu(bn1(conv1)) with its 1-px
            halo zeroed (== conv2's padded input). Stored once, full-width,
            offset-0 (no zero-fill of the whole buffer, no offset-1 stores).
    o_ref : (1, H, Wo, Cout) f32 output block (Wo = W rounded up to _ALIGN).
    """
    Cin = x_ref.shape[-1]
    Cout = h1_ref.shape[-1]
    Hc = H + 2

    # bf16 on the wire; up-cast once so the kx (sublane) shifts happen on f32.
    x2 = x_ref[0].astype(jnp.float32)                 # (H+4, Wc+2, Cin)
    s1 = s1_ref[...]
    b1 = b1_ref[...]
    s2 = s2_ref[...]
    b2 = b2_ref[...]

    # ---- conv1 (3x3, no bias) on the extended grid, + identity 1x1 conv ----
    acc1 = None
    ident = None
    for kx in range(3):
        # one sublane-offset slice per kx, reused for all three ky taps
        xs = x2[:, kx:kx + Wc, :].astype(jnp.bfloat16)        # (H+4, Wc, Cin)
        if kx == 2:
            # identity needs x2[2:2+H, 2:2+Wo] == xs[2:2+H, 0:Wo] (aligned)
            id_tap = xs[2:2 + H, 0:Wo, :].reshape(H * Wo, Cin)
            ident = jnp.dot(id_tap, wid_ref[...],
                            preferred_element_type=jnp.float32) + bid_ref[...]
        for ky in range(3):
            tap = xs[ky:ky + Hc].reshape(Hc * Wc, Cin)        # aligned collapse
            m = jnp.dot(tap, w1_ref[3 * ky + kx],
                        preferred_element_type=jnp.float32)
            acc1 = m if acc1 is None else acc1 + m

    h1 = jnp.maximum(acc1 * s1 + b1, 0.0).reshape(Hc, Wc, Cout)

    # Zero the 1-px halo (rows 0 / H+1, cols 0 / >= W+1): this *is* conv2's
    # zero padding, so no padded-scratch zero-fill / interior copy is needed.
    rows = lax.broadcasted_iota(jnp.int32, (Hc, Wc, Cout), 0)
    cols = lax.broadcasted_iota(jnp.int32, (Hc, Wc, Cout), 1)
    interior = (rows >= 1) & (rows <= H) & (cols >= 1) & (cols <= W)
    h1_ref[...] = jnp.where(interior, h1, 0.0)

    # ---- conv2 (3x3, no bias) over the (H, Wo) grid ----
    acc2 = None
    for kx in range(3):
        hs = h1_ref[:, kx:kx + Wo, :].astype(jnp.bfloat16)    # (Hc, Wo, Cout)
        for ky in range(3):
            tap = hs[ky:ky + H].reshape(H * Wo, Cout)
            m = jnp.dot(tap, w2_ref[3 * ky + kx],
                        preferred_element_type=jnp.float32)
            acc2 = m if acc2 is None else acc2 + m

    # bn2 (folded) + residual + relu, single full-width aligned store.
    out = jnp.maximum(acc2 * s2 + b2 + ident, 0.0)            # (H*Wo, Cout)
    o_ref[...] = out.reshape(1, H, Wo, Cout).astype(o_ref.dtype)


def res_conv_block_forward(x_nchw, params):
    """x_nchw: (B, Cin, H, W) float32 -> (B, Cout, H, W) float32 (eval-mode BN)."""
    (w1, w2, wid, bid, g1, be1, rm1, rv1, g2, be2, rm2, rv2) = params
    eps = 1e-5
    s1 = (g1 / jnp.sqrt(rv1 + eps)).astype(jnp.float32)
    b1 = (be1 - rm1 * s1).astype(jnp.float32)
    s2 = (g2 / jnp.sqrt(rv2 + eps)).astype(jnp.float32)
    b2 = (be2 - rm2 * s2).astype(jnp.float32)

    B, Cin, H, W = x_nchw.shape
    Cout = w1.shape[0]
    Wo = _round_up(W, _ALIGN)        # compute/output width (aligned)
    Wc = Wo + _ALIGN                 # conv1 extended compute width (>= W+2)
    Hc = H + 2

    # glue: layout + zero padding in plain JAX (bf16 on the way in).
    x = jnp.transpose(x_nchw, (0, 2, 3, 1))                          # NHWC
    x2 = jnp.pad(x, ((0, 0), (2, 2), (2, Wc - W), (0, 0))).astype(jnp.bfloat16)

    # PyTorch conv weight (Cout, Cin, kh, kw) -> per-tap (Cin, Cout), tap = 3*ky+kx
    w1_k = jnp.transpose(w1, (2, 3, 1, 0)).reshape(9, Cin, Cout).astype(jnp.bfloat16)
    w2_k = jnp.transpose(w2, (2, 3, 1, 0)).reshape(9, Cout, Cout).astype(jnp.bfloat16)
    wid_k = jnp.transpose(wid[:, :, 0, 0], (1, 0)).astype(jnp.bfloat16)  # (Cin, Cout)
    row = lambda v: v.reshape(1, Cout).astype(jnp.float32)

    kernel = functools.partial(res_conv_block_kernel, H=H, W=W, Wo=Wo, Wc=Wc)

    flops = 2 * B * (Hc * Wc * 9 * Cin * Cout        # conv1 (extended grid)
                     + H * Wo * 9 * Cout * Cout      # conv2
                     + H * Wo * Cin * Cout)          # identity 1x1
    bytes_accessed = (B * (H + 4) * (Wc + 2) * Cin * 2       # x2 (bf16)
                      + B * H * Wo * Cout * 4                # output (f32)
                      + (9 * Cin * Cout + 9 * Cout * Cout + Cin * Cout) * 2
                      + 5 * Cout * 4)

    out_nhwc = pl.pallas_call(
        kernel,
        out_shape=jax.ShapeDtypeStruct((B, H, Wo, Cout), jnp.float32),
        grid=(B,),
        in_specs=[
            pl.BlockSpec((1, H + 4, Wc + 2, Cin), lambda b: (b, 0, 0, 0)),  # x2
            pl.BlockSpec((9, Cin, Cout), lambda b: (0, 0, 0)),              # w1
            pl.BlockSpec((1, Cout), lambda b: (0, 0)),                      # s1
            pl.BlockSpec((1, Cout), lambda b: (0, 0)),                      # b1
            pl.BlockSpec((9, Cout, Cout), lambda b: (0, 0, 0)),             # w2
            pl.BlockSpec((1, Cout), lambda b: (0, 0)),                      # s2
            pl.BlockSpec((1, Cout), lambda b: (0, 0)),                      # b2
            pl.BlockSpec((Cin, Cout), lambda b: (0, 0)),                    # wid
            pl.BlockSpec((1, Cout), lambda b: (0, 0)),                      # bid
        ],
        out_specs=pl.BlockSpec((1, H, Wo, Cout), lambda b: (b, 0, 0, 0)),
        scratch_shapes=[pltpu.VMEM((Hc, Wc, Cout), jnp.float32)],
        compiler_params=pltpu.CompilerParams(
            dimension_semantics=("parallel",),
            vmem_limit_bytes=32 * 1024 * 1024),
        cost_estimate=pl.CostEstimate(flops=flops, transcendentals=0,
                                      bytes_accessed=bytes_accessed),
    )(x2, w1_k, row(s1), row(b1), w2_k, row(s2), row(b2), wid_k, row(bid))

    out = out_nhwc[:, :, :W, :]
    return jnp.transpose(out, (0, 3, 1, 2))                          # NCHW


def ref_forward(x, params, *, bf16):
    """Pure-JAX reference (eval-mode BN), NCHW. bf16=True matches the kernel's
    bf16-operand / f32-accumulate matmul numerics."""
    (w1, w2, wid, bid, g1, be1, rm1, rv1, g2, be2, rm2, rv2) = params
    eps = 1e-5
    dn = ('NCHW', 'OIHW', 'NCHW')

    def conv(inp, w, p):
        if bf16:
            return lax.conv_general_dilated(
                inp.astype(jnp.bfloat16), w.astype(jnp.bfloat16), (1, 1),
                [(p, p), (p, p)], dimension_numbers=dn,
                preferred_element_type=jnp.float32)
        return lax.conv_general_dilated(
            inp, w, (1, 1), [(p, p), (p, p)], dimension_numbers=dn,
            precision=lax.Precision.HIGHEST)

    def bn(h, g, be, rm, rv):
        c = lambda v: v[None, :, None, None]
        return (h - c(rm)) / jnp.sqrt(c(rv) + eps) * c(g) + c(be)

    ident = conv(x, wid, 0) + bid[None, :, None, None]
    h = jax.nn.relu(bn(conv(x, w1, 1), g1, be1, rm1, rv1))
    h = bn(conv(h, w2, 1), g2, be2, rm2, rv2) + ident
    return jax.nn.relu(h)


if __name__ == "__main__":
    B, Cin, Cout, H, W = 2, 4, 8, 16, 16

    key = jax.random.PRNGKey(0)
    ks = jax.random.split(key, 13)
    w1 = 0.2 * jax.random.normal(ks[0], (Cout, Cin, 3, 3), jnp.float32)
    w2 = 0.2 * jax.random.normal(ks[1], (Cout, Cout, 3, 3), jnp.float32)
    wid = 0.2 * jax.random.normal(ks[2], (Cout, Cin, 1, 1), jnp.float32)
    bid = 0.1 * jax.random.normal(ks[3], (Cout,), jnp.float32)
    g1 = 1.0 + 0.1 * jax.random.normal(ks[4], (Cout,), jnp.float32)
    be1 = 0.1 * jax.random.normal(ks[5], (Cout,), jnp.float32)
    rm1 = 0.1 * jax.random.normal(ks[6], (Cout,), jnp.float32)
    rv1 = 1.0 + 0.1 * jnp.abs(jax.random.normal(ks[7], (Cout,), jnp.float32))
    g2 = 1.0 + 0.1 * jax.random.normal(ks[8], (Cout,), jnp.float32)
    be2 = 0.1 * jax.random.normal(ks[9], (Cout,), jnp.float32)
    rm2 = 0.1 * jax.random.normal(ks[10], (Cout,), jnp.float32)
    rv2 = 1.0 + 0.1 * jnp.abs(jax.random.normal(ks[11], (Cout,), jnp.float32))
    params = (w1, w2, wid, bid, g1, be1, rm1, rv1, g2, be2, rm2, rv2)

    x = jax.random.normal(ks[12], (B, Cin, H, W), jnp.float32)

    fwd = jax.jit(res_conv_block_forward)
    out = jax.block_until_ready(fwd(x, params))
    assert out.shape == (B, Cout, H, W), out.shape

    # Matched-precision check (bf16 operands, f32 accumulation) — tight.
    ref_bf = jax.block_until_ready(ref_forward(x, params, bf16=True))
    err_bf = float(jnp.max(jnp.abs(out - ref_bf)))
    assert bool(jnp.allclose(out, ref_bf, atol=5e-3, rtol=5e-3)), err_bf

    # Full-precision check — loose, bounds the deliberate bf16 trade.
    ref_hi = jax.block_until_ready(ref_forward(x, params, bf16=False))
    err_hi = float(jnp.max(jnp.abs(out - ref_hi)))
    assert bool(jnp.allclose(out, ref_hi, atol=5e-2, rtol=5e-2)), err_hi

    print("KERNEL_OK")
</pallas_src>

<mosaic_0001>
module attributes {stable_mosaic.version = 11 : i64} {
  func.func @res_conv_block_kernel(%arg0: i32, %arg1: memref<1x20x34x4xbf16, #tpu.memory_space<vmem>>, %arg2: memref<9x4x8xbf16, #tpu.memory_space<vmem>>, %arg3: memref<1x8xf32, #tpu.memory_space<vmem>>, %arg4: memref<1x8xf32, #tpu.memory_space<vmem>>, %arg5: memref<9x8x8xbf16, #tpu.memory_space<vmem>>, %arg6: memref<1x8xf32, #tpu.memory_space<vmem>>, %arg7: memref<1x8xf32, #tpu.memory_space<vmem>>, %arg8: memref<4x8xbf16, #tpu.memory_space<vmem>>, %arg9: memref<1x8xf32, #tpu.memory_space<vmem>>, %arg10: memref<1x16x16x8xf32, #tpu.memory_space<vmem>>, %arg11: memref<18x32x8xf32, #tpu.memory_space<vmem>>) attributes {dimension_semantics = [#tpu.dimension_semantics<parallel>], iteration_bounds = array<i64: 2>, scalar_prefetch = 0 : i64, scratch_operands = 1 : i64, tpu.core_type = #tpu.core_type<tc>, window_params = [{transform_indices = @transform_0, window_bounds = array<i64: 1, 20, 34, 4>}, {pipeline_mode = #tpu.pipeline_mode<synchronous>, transform_indices = @transform_1, window_bounds = array<i64: 9, 4, 8>}, {pipeline_mode = #tpu.pipeline_mode<synchronous>, transform_indices = @transform_2, window_bounds = array<i64: 1, 8>}, {pipeline_mode = #tpu.pipeline_mode<synchronous>, transform_indices = @transform_3, window_bounds = array<i64: 1, 8>}, {pipeline_mode = #tpu.pipeline_mode<synchronous>, transform_indices = @transform_4, window_bounds = array<i64: 9, 8, 8>}, {pipeline_mode = #tpu.pipeline_mode<synchronous>, transform_indices = @transform_5, window_bounds = array<i64: 1, 8>}, {pipeline_mode = #tpu.pipeline_mode<synchronous>, transform_indices = @transform_6, window_bounds = array<i64: 1, 8>}, {pipeline_mode = #tpu.pipeline_mode<synchronous>, transform_indices = @transform_7, window_bounds = array<i64: 4, 8>}, {pipeline_mode = #tpu.pipeline_mode<synchronous>, transform_indices = @transform_8, window_bounds = array<i64: 1, 8>}, {transform_indices = @transform_9, window_bounds = array<i64: 1, 16, 16, 8>}]} {
    %c0 = arith.constant 0 : index
    %c0_0 = arith.constant 0 : index
    %c0_1 = arith.constant 0 : index
    %c0_2 = arith.constant 0 : index
    %0 = vector.load %arg1[%c0, %c0_0, %c0_1, %c0_2] : memref<1x20x34x4xbf16, #tpu.memory_space<vmem>>, vector<1x20x34x4xbf16>
    %1 = vector.shape_cast %0 : vector<1x20x34x4xbf16> to vector<20x34x4xbf16>
    %2 = arith.extf %1 : vector<20x34x4xbf16> to vector<20x34x4xf32>
    %c0_3 = arith.constant 0 : index
    %c0_4 = arith.constant 0 : index
    %3 = vector.load %arg3[%c0_3, %c0_4] : memref<1x8xf32, #tpu.memory_space<vmem>>, vector<1x8xf32>
    %c0_5 = arith.constant 0 : index
    %c0_6 = arith.constant 0 : index
    %4 = vector.load %arg4[%c0_5, %c0_6] : memref<1x8xf32, #tpu.memory_space<vmem>>, vector<1x8xf32>
    %c0_7 = arith.constant 0 : index
    %c0_8 = arith.constant 0 : index
    %5 = vector.load %arg6[%c0_7, %c0_8] : memref<1x8xf32, #tpu.memory_space<vmem>>, vector<1x8xf32>
    %c0_9 = arith.constant 0 : index
    %c0_10 = arith.constant 0 : index
    %6 = vector.load %arg7[%c0_9, %c0_10] : memref<1x8xf32, #tpu.memory_space<vmem>>, vector<1x8xf32>
    %7 = vector.extract_strided_slice %2 {offsets = [0, 0, 0], sizes = [20, 32, 4], strides = [1, 1, 1]} : vector<20x34x4xf32> to vector<20x32x4xf32>
    %8 = arith.truncf %7 : vector<20x32x4xf32> to vector<20x32x4xbf16>
    %9 = vector.extract_strided_slice %8 {offsets = [0, 0, 0], sizes = [18, 32, 4], strides = [1, 1, 1]} : vector<20x32x4xbf16> to vector<18x32x4xbf16>
    %10 = vector.shape_cast %9 : vector<18x32x4xbf16> to vector<576x4xbf16>
    %c0_11 = arith.constant 0 : index
    %c0_12 = arith.constant 0 : index
    %c0_13 = arith.constant 0 : index
    %11 = vector.load %arg2[%c0_11, %c0_12, %c0_13] : memref<9x4x8xbf16, #tpu.memory_space<vmem>>, vector<1x4x8xbf16>
    %12 = vector.shape_cast %11 : vector<1x4x8xbf16> to vector<4x8xbf16>
    %cst = arith.constant dense<0.000000e+00> : vector<576x8xf32>
    %13 = tpu.matmul %10, %12, %cst {dimension_numbers = #tpu.dot_dimension_numbers<[1], [0], [0], [1], [0, 0, 1, 1], [], []>} : vector<576x4xbf16>, vector<4x8xbf16>, vector<576x8xf32> -> vector<576x8xf32>
    %14 = vector.extract_strided_slice %8 {offsets = [1, 0, 0], sizes = [18, 32, 4], strides = [1, 1, 1]} : vector<20x32x4xbf16> to vector<18x32x4xbf16>
    %15 = vector.shape_cast %14 : vector<18x32x4xbf16> to vector<576x4xbf16>
    %c3 = arith.constant 3 : index
    %c0_14 = arith.constant 0 : index
    %c0_15 = arith.constant 0 : index
    %16 = vector.load %arg2[%c3, %c0_14, %c0_15] : memref<9x4x8xbf16, #tpu.memory_space<vmem>>, vector<1x4x8xbf16>
    %17 = vector.shape_cast %16 : vector<1x4x8xbf16> to vector<4x8xbf16>
    %cst_16 = arith.constant dense<0.000000e+00> : vector<576x8xf32>
    %18 = tpu.matmul %15, %17, %cst_16 {dimension_numbers = #tpu.dot_dimension_numbers<[1], [0], [0], [1], [0, 0, 1, 1], [], []>} : vector<576x4xbf16>, vector<4x8xbf16>, vector<576x8xf32> -> vector<576x8xf32>
    %19 = arith.addf %13, %18 : vector<576x8xf32>
    %20 = vector.extract_strided_slice %8 {offsets = [2, 0, 0], sizes = [18, 32, 4], strides = [1, 1, 1]} : vector<20x32x4xbf16> to vector<18x32x4xbf16>
    %21 = vector.shape_cast %20 : vector<18x32x4xbf16> to vector<576x4xbf16>
    %c6 = arith.constant 6 : index
    %c0_17 = arith.constant 0 : index
    %c0_18 = arith.constant 0 : index
    %22 = vector.load %arg2[%c6, %c0_17, %c0_18] : memref<9x4x8xbf16, #tpu.memory_space<vmem>>, vector<1x4x8xbf16>
    %23 = vector.shape_cast %22 : vector<1x4x8xbf16> to vector<4x8xbf16>
    %cst_19 = arith.constant dense<0.000000e+00> : vector<576x8xf32>
    %24 = tpu.matmul %21, %23, %cst_19 {dimension_numbers = #tpu.dot_dimension_numbers<[1], [0], [0], [1], [0, 0, 1, 1], [], []>} : vector<576x4xbf16>, vector<4x8xbf16>, vector<576x8xf32> -> vector<576x8xf32>
    %25 = arith.addf %19, %24 : vector<576x8xf32>
    %26 = vector.extract_strided_slice %2 {offsets = [0, 1, 0], sizes = [20, 32, 4], strides = [1, 1, 1]} : vector<20x34x4xf32> to vector<20x32x4xf32>
    %27 = arith.truncf %26 : vector<20x32x4xf32> to vector<20x32x4xbf16>
    %28 = vector.extract_strided_slice %27 {offsets = [0, 0, 0], sizes = [18, 32, 4], strides = [1, 1, 1]} : vector<20x32x4xbf16> to vector<18x32x4xbf16>
    %29 = vector.shape_cast %28 : vector<18x32x4xbf16> to vector<576x4xbf16>
    %c1 = arith.constant 1 : index
    %c0_20 = arith.constant 0 : index
    %c0_21 = arith.constant 0 : index
    %30 = vector.load %arg2[%c1, %c0_20, %c0_21] : memref<9x4x8xbf16, #tpu.memory_space<vmem>>, vector<1x4x8xbf16>
    %31 = vector.shape_cast %30 : vector<1x4x8xbf16> to vector<4x8xbf16>
    %cst_22 = arith.constant dense<0.000000e+00> : vector<576x8xf32>
    %32 = tpu.matmul %29, %31, %cst_22 {dimension_numbers = #tpu.dot_dimension_numbers<[1], [0], [0], [1], [0, 0, 1, 1], [], []>} : vector<576x4xbf16>, vector<4x8xbf16>, vector<576x8xf32> -> vector<576x8xf32>
    %33 = arith.addf %25, %32 : vector<576x8xf32>
    %34 = vector.extract_strided_slice %27 {offsets = [1, 0, 0], sizes = [18, 32, 4], strides = [1, 1, 1]} : vector<20x32x4xbf16> to vector<18x32x4xbf16>
    %35 = vector.shape_cast %34 : vector<18x32x4xbf16> to vector<576x4xbf16>
    %c4 = arith.constant 4 : index
    %c0_23 = arith.constant 0 : index
    %c0_24 = arith.constant 0 : index
    %36 = vector.load %arg2[%c4, %c0_23, %c0_24] : memref<9x4x8xbf16, #tpu.memory_space<vmem>>, vector<1x4x8xbf16>
    %37 = vector.shape_cast %36 : vector<1x4x8xbf16> to vector<4x8xbf16>
    %cst_25 = arith.constant dense<0.000000e+00> : vector<576x8xf32>
    %38 = tpu.matmul %35, %37, %cst_25 {dimension_numbers = #tpu.dot_dimension_numbers<[1], [0], [0], [1], [0, 0, 1, 1], [], []>} : vector<576x4xbf16>, vector<4x8xbf16>, vector<576x8xf32> -> vector<576x8xf32>
    %39 = arith.addf %33, %38 : vector<576x8xf32>
    %40 = vector.extract_strided_slice %27 {offsets = [2, 0, 0], sizes = [18, 32, 4], strides = [1, 1, 1]} : vector<20x32x4xbf16> to vector<18x32x4xbf16>
    %41 = vector.shape_cast %40 : vector<18x32x4xbf16> to vector<576x4xbf16>
    %c7 = arith.constant 7 : index
    %c0_26 = arith.constant 0 : index
    %c0_27 = arith.constant 0 : index
    %42 = vector.load %arg2[%c7, %c0_26, %c0_27] : memref<9x4x8xbf16, #tpu.memory_space<vmem>>, vector<1x4x8xbf16>
    %43 = vector.shape_cast %42 : vector<1x4x8xbf16> to vector<4x8xbf16>
    %cst_28 = arith.constant dense<0.000000e+00> : vector<576x8xf32>
    %44 = tpu.matmul %41, %43, %cst_28 {dimension_numbers = #tpu.dot_dimension_numbers<[1], [0], [0], [1], [0, 0, 1, 1], [], []>} : vector<576x4xbf16>, vector<4x8xbf16>, vector<576x8xf32> -> vector<576x8xf32>
    %45 = arith.addf %39, %44 : vector<576x8xf32>
    %46 = vector.extract_strided_slice %2 {offsets = [0, 2, 0], sizes = [20, 32, 4], strides = [1, 1, 1]} : vector<20x34x4xf32> to vector<20x32x4xf32>
    %47 = arith.truncf %46 : vector<20x32x4xf32> to vector<20x32x4xbf16>
    %48 = vector.extract_strided_slice %47 {offsets = [2, 0, 0], sizes = [16, 16, 4], strides = [1, 1, 1]} : vector<20x32x4xbf16> to vector<16x16x4xbf16>
    %49 = vector.shape_cast %48 : vector<16x16x4xbf16> to vector<256x4xbf16>
    %c0_29 = arith.constant 0 : index
    %c0_30 = arith.constant 0 : index
    %50 = vector.load %arg8[%c0_29, %c0_30] : memref<4x8xbf16, #tpu.memory_space<vmem>>, vector<4x8xbf16>
    %cst_31 = arith.constant dense<0.000000e+00> : vector<256x8xf32>
    %51 = tpu.matmul %49, %50, %cst_31 {dimension_numbers = #tpu.dot_dimension_numbers<[1], [0], [0], [1], [0, 0, 1, 1], [], []>} : vector<256x4xbf16>, vector<4x8xbf16>, vector<256x8xf32> -> vector<256x8xf32>
    %c0_32 = arith.constant 0 : index
    %c0_33 = arith.constant 0 : index
    %52 = vector.load %arg9[%c0_32, %c0_33] : memref<1x8xf32, #tpu.memory_space<vmem>>, vector<1x8xf32>
    %53 = vector.broadcast %52 : vector<1x8xf32> to vector<256x8xf32>
    %54 = arith.addf %51, %53 : vector<256x8xf32>
    %55 = vector.extract_strided_slice %47 {offsets = [0, 0, 0], sizes = [18, 32, 4], strides = [1, 1, 1]} : vector<20x32x4xbf16> to vector<18x32x4xbf16>
    %56 = vector.shape_cast %55 : vector<18x32x4xbf16> to vector<576x4xbf16>
    %c2 = arith.constant 2 : index
    %c0_34 = arith.constant 0 : index
    %c0_35 = arith.constant 0 : index
    %57 = vector.load %arg2[%c2, %c0_34, %c0_35] : memref<9x4x8xbf16, #tpu.memory_space<vmem>>, vector<1x4x8xbf16>
    %58 = vector.shape_cast %57 : vector<1x4x8xbf16> to vector<4x8xbf16>
    %cst_36 = arith.constant dense<0.000000e+00> : vector<576x8xf32>
    %59 = tpu.matmul %56, %58, %cst_36 {dimension_numbers = #tpu.dot_dimension_numbers<[1], [0], [0], [1], [0, 0, 1, 1], [], []>} : vector<576x4xbf16>, vector<4x8xbf16>, vector<576x8xf32> -> vector<576x8xf32>
    %60 = arith.addf %45, %59 : vector<576x8xf32>
    %61 = vector.extract_strided_slice %47 {offsets = [1, 0, 0], sizes = [18, 32, 4], strides = [1, 1, 1]} : vector<20x32x4xbf16> to vector<18x32x4xbf16>
    %62 = vector.shape_cast %61 : vector<18x32x4xbf16> to vector<576x4xbf16>
    %c5 = arith.constant 5 : index
    %c0_37 = arith.constant 0 : index
    %c0_38 = arith.constant 0 : index
    %63 = vector.load %arg2[%c5, %c0_37, %c0_38] : memref<9x4x8xbf16, #tpu.memory_space<vmem>>, vector<1x4x8xbf16>
    %64 = vector.shape_cast %63 : vector<1x4x8xbf16> to vector<4x8xbf16>
    %cst_39 = arith.constant dense<0.000000e+00> : vector<576x8xf32>
    %65 = tpu.matmul %62, %64, %cst_39 {dimension_numbers = #tpu.dot_dimension_numbers<[1], [0], [0], [1], [0, 0, 1, 1], [], []>} : vector<576x4xbf16>, vector<4x8xbf16>, vector<576x8xf32> -> vector<576x8xf32>
    %66 = arith.addf %60, %65 : vector<576x8xf32>
    %67 = vector.extract_strided_slice %47 {offsets = [2, 0, 0], sizes = [18, 32, 4], strides = [1, 1, 1]} : vector<20x32x4xbf16> to vector<18x32x4xbf16>
    %68 = vector.shape_cast %67 : vector<18x32x4xbf16> to vector<576x4xbf16>
    %c8 = arith.constant 8 : index
    %c0_40 = arith.constant 0 : index
    %c0_41 = arith.constant 0 : index
    %69 = vector.load %arg2[%c8, %c0_40, %c0_41] : memref<9x4x8xbf16, #tpu.memory_space<vmem>>, vector<1x4x8xbf16>
    %70 = vector.shape_cast %69 : vector<1x4x8xbf16> to vector<4x8xbf16>
    %cst_42 = arith.constant dense<0.000000e+00> : vector<576x8xf32>
    %71 = tpu.matmul %68, %70, %cst_42 {dimension_numbers = #tpu.dot_dimension_numbers<[1], [0], [0], [1], [0, 0, 1, 1], [], []>} : vector<576x4xbf16>, vector<4x8xbf16>, vector<576x8xf32> -> vector<576x8xf32>
    %72 = arith.addf %66, %71 : vector<576x8xf32>
    %73 = vector.broadcast %3 : vector<1x8xf32> to vector<576x8xf32>
    %74 = arith.mulf %72, %73 : vector<576x8xf32>
    %75 = vector.broadcast %4 : vector<1x8xf32> to vector<576x8xf32>
    %76 = arith.addf %74, %75 : vector<576x8xf32>
    %cst_43 = arith.constant 0.000000e+00 : f32
    %77 = vector.broadcast %cst_43 : f32 to vector<576x8xf32>
    %78 = arith.maximumf %76, %77 : vector<576x8xf32>
    %79 = vector.shape_cast %78 : vector<576x8xf32> to vector<18x32x8xf32>
    %80 = tpu.iota {dimensions = array<i32: 0>} : vector<18x32x8xi32>
    %81 = tpu.iota {dimensions = array<i32: 1>} : vector<18x32x8xi32>
    %c1_i32 = arith.constant 1 : i32
    %82 = vector.broadcast %c1_i32 : i32 to vector<18x32x8xi32>
    %83 = arith.cmpi sge, %80, %82 : vector<18x32x8xi32>
    %c16_i32 = arith.constant 16 : i32
    %84 = vector.broadcast %c16_i32 : i32 to vector<18x32x8xi32>
    %85 = arith.cmpi sle, %80, %84 : vector<18x32x8xi32>
    %86 = arith.andi %83, %85 : vector<18x32x8xi1>
    %c1_i32_44 = arith.constant 1 : i32
    %87 = vector.broadcast %c1_i32_44 : i32 to vector<18x32x8xi32>
    %88 = arith.cmpi sge, %81, %87 : vector<18x32x8xi32>
    %89 = arith.andi %86, %88 : vector<18x32x8xi1>
    %c16_i32_45 = arith.constant 16 : i32
    %90 = vector.broadcast %c16_i32_45 : i32 to vector<18x32x8xi32>
    %91 = arith.cmpi sle, %81, %90 : vector<18x32x8xi32>
    %92 = arith.andi %89, %91 : vector<18x32x8xi1>
    %cst_46 = arith.constant 0.000000e+00 : f32
    %93 = vector.broadcast %cst_46 : f32 to vector<18x32x8xf32>
    %94 = arith.select %92, %79, %93 : vector<18x32x8xi1>, vector<18x32x8xf32>
    %c0_47 = arith.constant 0 : index
    %c0_48 = arith.constant 0 : index
    %c0_49 = arith.constant 0 : index
    %95 = vector.load %arg11[%c0_47, %c0_48, %c0_49] : memref<18x32x8xf32, #tpu.memory_space<vmem>>, vector<18x32x8xf32>
    tpu.vector_store %arg11[%c0_47, %c0_48, %c0_49], %94 {strides = array<i32>} : memref<18x32x8xf32, #tpu.memory_space<vmem>>, vector<18x32x8xf32>,
    %c0_50 = arith.constant 0 : index
    %c0_51 = arith.constant 0 : index
    %c0_52 = arith.constant 0 : index
    %96 = vector.load %arg11[%c0_50, %c0_51, %c0_52] : memref<18x32x8xf32, #tpu.memory_space<vmem>>, vector<18x16x8xf32>
    %97 = arith.truncf %96 : vector<18x16x8xf32> to vector<18x16x8xbf16>
    %98 = vector.extract_strided_slice %97 {offsets = [0, 0, 0], sizes = [16, 16, 8], strides = [1, 1, 1]} : vector<18x16x8xbf16> to vector<16x16x8xbf16>
    %99 = vector.shape_cast %98 : vector<16x16x8xbf16> to vector<256x8xbf16>
    %c0_53 = arith.constant 0 : index
    %c0_54 = arith.constant 0 : index
    %c0_55 = arith.constant 0 : index
    %100 = vector.load %arg5[%c0_53, %c0_54, %c0_55] : memref<9x8x8xbf16, #tpu.memory_space<vmem>>, vector<1x8x8xbf16>
    %101 = vector.shape_cast %100 : vector<1x8x8xbf16> to vector<8x8xbf16>
    %cst_56 = arith.constant dense<0.000000e+00> : vector<256x8xf32>
    %102 = tpu.matmul %99, %101, %cst_56 {dimension_numbers = #tpu.dot_dimension_numbers<[1], [0], [0], [1], [0, 0, 1, 1], [], []>} : vector<256x8xbf16>, vector<8x8xbf16>, vector<256x8xf32> -> vector<256x8xf32>
    %103 = vector.extract_strided_slice %97 {offsets = [1, 0, 0], sizes = [16, 16, 8], strides = [1, 1, 1]} : vector<18x16x8xbf16> to vector<16x16x8xbf16>
    %104 = vector.shape_cast %103 : vector<16x16x8xbf16> to vector<256x8xbf16>
    %c3_57 = arith.constant 3 : index
    %c0_58 = arith.constant 0 : index
    %c0_59 = arith.constant 0 : index
    %105 = vector.load %arg5[%c3_57, %c0_58, %c0_59] : memref<9x8x8xbf16, #tpu.memory_space<vmem>>, vector<1x8x8xbf16>
    %106 = vector.shape_cast %105 : vector<1x8x8xbf16> to vector<8x8xbf16>
    %cst_60 = arith.constant dense<0.000000e+00> : vector<256x8xf32>
    %107 = tpu.matmul %104, %106, %cst_60 {dimension_numbers = #tpu.dot_dimension_numbers<[1], [0], [0], [1], [0, 0, 1, 1], [], []>} : vector<256x8xbf16>, vector<8x8xbf16>, vector<256x8xf32> -> vector<256x8xf32>
    %108 = arith.addf %102, %107 : vector<256x8xf32>
    %109 = vector.extract_strided_slice %97 {offsets = [2, 0, 0], sizes = [16, 16, 8], strides = [1, 1, 1]} : vector<18x16x8xbf16> to vector<16x16x8xbf16>
    %110 = vector.shape_cast %109 : vector<16x16x8xbf16> to vector<256x8xbf16>
    %c6_61 = arith.constant 6 : index
    %c0_62 = arith.constant 0 : index
    %c0_63 = arith.constant 0 : index
    %111 = vector.load %arg5[%c6_61, %c0_62, %c0_63] : memref<9x8x8xbf16, #tpu.memory_space<vmem>>, vector<1x8x8xbf16>
    %112 = vector.shape_cast %111 : vector<1x8x8xbf16> to vector<8x8xbf16>
    %cst_64 = arith.constant dense<0.000000e+00> : vector<256x8xf32>
    %113 = tpu.matmul %110, %112, %cst_64 {dimension_numbers = #tpu.dot_dimension_numbers<[1], [0], [0], [1], [0, 0, 1, 1], [], []>} : vector<256x8xbf16>, vector<8x8xbf16>, vector<256x8xf32> -> vector<256x8xf32>
    %114 = arith.addf %108, %113 : vector<256x8xf32>
    %c0_65 = arith.constant 0 : index
    %c1_66 = arith.constant 1 : index
    %c0_67 = arith.constant 0 : index
    %115 = vector.load %arg11[%c0_65, %c1_66, %c0_67] : memref<18x32x8xf32, #tpu.memory_space<vmem>>, vector<18x16x8xf32>
    %116 = arith.truncf %115 : vector<18x16x8xf32> to vector<18x16x8xbf16>
    %117 = vector.extract_strided_slice %116 {offsets = [0, 0, 0], sizes = [16, 16, 8], strides = [1, 1, 1]} : vector<18x16x8xbf16> to vector<16x16x8xbf16>
    %118 = vector.shape_cast %117 : vector<16x16x8xbf16> to vector<256x8xbf16>
    %c1_68 = arith.constant 1 : index
    %c0_69 = arith.constant 0 : index
    %c0_70 = arith.constant 0 : index
    %119 = vector.load %arg5[%c1_68, %c0_69, %c0_70] : memref<9x8x8xbf16, #tpu.memory_space<vmem>>, vector<1x8x8xbf16>
    %120 = vector.shape_cast %119 : vector<1x8x8xbf16> to vector<8x8xbf16>
    %cst_71 = arith.constant dense<0.000000e+00> : vector<256x8xf32>
    %121 = tpu.matmul %118, %120, %cst_71 {dimension_numbers = #tpu.dot_dimension_numbers<[1], [0], [0], [1], [0, 0, 1, 1], [], []>} : vector<256x8xbf16>, vector<8x8xbf16>, vector<256x8xf32> -> vector<256x8xf32>
    %122 = arith.addf %114, %121 : vector<256x8xf32>
    %123 = vector.extract_strided_slice %116 {offsets = [1, 0, 0], sizes = [16, 16, 8], strides = [1, 1, 1]} : vector<18x16x8xbf16> to vector<16x16x8xbf16>
    %124 = vector.shape_cast %123 : vector<16x16x8xbf16> to vector<256x8xbf16>
    %c4_72 = arith.constant 4 : index
    %c0_73 = arith.constant 0 : index
    %c0_74 = arith.constant 0 : index
    %125 = vector.load %arg5[%c4_72, %c0_73, %c0_74] : memref<9x8x8xbf16, #tpu.memory_space<vmem>>, vector<1x8x8xbf16>
    %126 = vector.shape_cast %125 : vector<1x8x8xbf16> to vector<8x8xbf16>
    %cst_75 = arith.constant dense<0.000000e+00> : vector<256x8xf32>
    %127 = tpu.matmul %124, %126, %cst_75 {dimension_numbers = #tpu.dot_dimension_numbers<[1], [0], [0], [1], [0, 0, 1, 1], [], []>} : vector<256x8xbf16>, vector<8x8xbf16>, vector<256x8xf32> -> vector<256x8xf32>
    %128 = arith.addf %122, %127 : vector<256x8xf32>
    %129 = vector.extract_strided_slice %116 {offsets = [2, 0, 0], sizes = [16, 16, 8], strides = [1, 1, 1]} : vector<18x16x8xbf16> to vector<16x16x8xbf16>
    %130 = vector.shape_cast %129 : vector<16x16x8xbf16> to vector<256x8xbf16>
    %c7_76 = arith.constant 7 : index
    %c0_77 = arith.constant 0 : index
    %c0_78 = arith.constant 0 : index
    %131 = vector.load %arg5[%c7_76, %c0_77, %c0_78] : memref<9x8x8xbf16, #tpu.memory_space<vmem>>, vector<1x8x8xbf16>
    %132 = vector.shape_cast %131 : vector<1x8x8xbf16> to vector<8x8xbf16>
    %cst_79 = arith.constant dense<0.000000e+00> : vector<256x8xf32>
    %133 = tpu.matmul %130, %132, %cst_79 {dimension_numbers = #tpu.dot_dimension_numbers<[1], [0], [0], [1], [0, 0, 1, 1], [], []>} : vector<256x8xbf16>, vector<8x8xbf16>, vector<256x8xf32> -> vector<256x8xf32>
    %134 = arith.addf %128, %133 : vector<256x8xf32>
    %c0_80 = arith.constant 0 : index
    %c2_81 = arith.constant 2 : index
    %c0_82 = arith.constant 0 : index
    %135 = vector.load %arg11[%c0_80, %c2_81, %c0_82] : memref<18x32x8xf32, #tpu.memory_space<vmem>>, vector<18x16x8xf32>
    %136 = arith.truncf %135 : vector<18x16x8xf32> to vector<18x16x8xbf16>
    %137 = vector.extract_strided_slice %136 {offsets = [0, 0, 0], sizes = [16, 16, 8], strides = [1, 1, 1]} : vector<18x16x8xbf16> to vector<16x16x8xbf16>
    %138 = vector.shape_cast %137 : vector<16x16x8xbf16> to vector<256x8xbf16>
    %c2_83 = arith.constant 2 : index
    %c0_84 = arith.constant 0 : index
    %c0_85 = arith.constant 0 : index
    %139 = vector.load %arg5[%c2_83, %c0_84, %c0_85] : memref<9x8x8xbf16, #tpu.memory_space<vmem>>, vector<1x8x8xbf16>
    %140 = vector.shape_cast %139 : vector<1x8x8xbf16> to vector<8x8xbf16>
    %cst_86 = arith.constant dense<0.000000e+00> : vector<256x8xf32>
    %141 = tpu.matmul %138, %140, %cst_86 {dimension_numbers = #tpu.dot_dimension_numbers<[1], [0], [0], [1], [0, 0, 1, 1], [], []>} : vector<256x8xbf16>, vector<8x8xbf16>, vector<256x8xf32> -> vector<256x8xf32>
    %142 = arith.addf %134, %141 : vector<256x8xf32>
    %143 = vector.extract_strided_slice %136 {offsets = [1, 0, 0], sizes = [16, 16, 8], strides = [1, 1, 1]} : vector<18x16x8xbf16> to vector<16x16x8xbf16>
    %144 = vector.shape_cast %143 : vector<16x16x8xbf16> to vector<256x8xbf16>
    %c5_87 = arith.constant 5 : index
    %c0_88 = arith.constant 0 : index
    %c0_89 = arith.constant 0 : index
    %145 = vector.load %arg5[%c5_87, %c0_88, %c0_89] : memref<9x8x8xbf16, #tpu.memory_space<vmem>>, vector<1x8x8xbf16>
    %146 = vector.shape_cast %145 : vector<1x8x8xbf16> to vector<8x8xbf16>
    %cst_90 = arith.constant dense<0.000000e+00> : vector<256x8xf32>
    %147 = tpu.matmul %144, %146, %cst_90 {dimension_numbers = #tpu.dot_dimension_numbers<[1], [0], [0], [1], [0, 0, 1, 1], [], []>} : vector<256x8xbf16>, vector<8x8xbf16>, vector<256x8xf32> -> vector<256x8xf32>
    %148 = arith.addf %142, %147 : vector<256x8xf32>
    %149 = vector.extract_strided_slice %136 {offsets = [2, 0, 0], sizes = [16, 16, 8], strides = [1, 1, 1]} : vector<18x16x8xbf16> to vector<16x16x8xbf16>
    %150 = vector.shape_cast %149 : vector<16x16x8xbf16> to vector<256x8xbf16>
    %c8_91 = arith.constant 8 : index
    %c0_92 = arith.constant 0 : index
    %c0_93 = arith.constant 0 : index
    %151 = vector.load %arg5[%c8_91, %c0_92, %c0_93] : memref<9x8x8xbf16, #tpu.memory_space<vmem>>, vector<1x8x8xbf16>
    %152 = vector.shape_cast %151 : vector<1x8x8xbf16> to vector<8x8xbf16>
    %cst_94 = arith.constant dense<0.000000e+00> : vector<256x8xf32>
    %153 = tpu.matmul %150, %152, %cst_94 {dimension_numbers = #tpu.dot_dimension_numbers<[1], [0], [0], [1], [0, 0, 1, 1], [], []>} : vector<256x8xbf16>, vector<8x8xbf16>, vector<256x8xf32> -> vector<256x8xf32>
    %154 = arith.addf %148, %153 : vector<256x8xf32>
    %155 = vector.broadcast %5 : vector<1x8xf32> to vector<256x8xf32>
    %156 = arith.mulf %154, %155 : vector<256x8xf32>
    %157 = vector.broadcast %6 : vector<1x8xf32> to vector<256x8xf32>
    %158 = arith.addf %156, %157 : vector<256x8xf32>
    %159 = arith.addf %158, %54 : vector<256x8xf32>
    %cst_95 = arith.constant 0.000000e+00 : f32
    %160 = vector.broadcast %cst_95 : f32 to vector<256x8xf32>
    %161 = arith.maximumf %159, %160 : vector<256x8xf32>
    %162 = vector.shape_cast %161 : vector<256x8xf32> to vector<1x16x16x8xf32>
    %c0_96 = arith.constant 0 : index
    %c0_97 = arith.constant 0 : index
    %c0_98 = arith.constant 0 : index
    %c0_99 = arith.constant 0 : index
    %163 = vector.load %arg10[%c0_96, %c0_97, %c0_98, %c0_99] : memref<1x16x16x8xf32, #tpu.memory_space<vmem>>, vector<1x16x16x8xf32>
    tpu.vector_store %arg10[%c0_96, %c0_97, %c0_98, %c0_99], %162 {strides = array<i32>} : memref<1x16x16x8xf32, #tpu.memory_space<vmem>>, vector<1x16x16x8xf32>,
    return
  }
  func.func @transform_0(%arg0: i32) -> (i32, i32, i32, i32) {
    %c0_i32 = arith.constant 0 : i32
    %c0_i32_0 = arith.constant 0 : i32
    %c0_i32_1 = arith.constant 0 : i32
    %c0_i32_2 = arith.constant 0 : i32
    return %arg0, %c0_i32, %c0_i32_0, %c0_i32_1 : i32, i32, i32, i32
  }
  func.func @transform_1(%arg0: i32) -> (i32, i32, i32) {
    %c0_i32 = arith.constant 0 : i32
    %c0_i32_0 = arith.constant 0 : i32
    %c0_i32_1 = arith.constant 0 : i32
    %c0_i32_2 = arith.constant 0 : i32
    return %c0_i32, %c0_i32_0, %c0_i32_1 : i32, i32, i32
  }
  func.func @transform_2(%arg0: i32) -> (i32, i32) {
    %c0_i32 = arith.constant 0 : i32
    %c0_i32_0 = arith.constant 0 : i32
    %c0_i32_1 = arith.constant 0 : i32
    return %c0_i32, %c0_i32_0 : i32, i32
  }
  func.func @transform_3(%arg0: i32) -> (i32, i32) {
    %c0_i32 = arith.constant 0 : i32
    %c0_i32_0 = arith.constant 0 : i32
    %c0_i32_1 = arith.constant 0 : i32
    return %c0_i32, %c0_i32_0 : i32, i32
  }
  func.func @transform_4(%arg0: i32) -> (i32, i32, i32) {
    %c0_i32 = arith.constant 0 : i32
    %c0_i32_0 = arith.constant 0 : i32
    %c0_i32_1 = arith.constant 0 : i32
    %c0_i32_2 = arith.constant 0 : i32
    return %c0_i32, %c0_i32_0, %c0_i32_1 : i32, i32, i32
  }
  func.func @transform_5(%arg0: i32) -> (i32, i32) {
    %c0_i32 = arith.constant 0 : i32
    %c0_i32_0 = arith.constant 0 : i32
    %c0_i32_1 = arith.constant 0 : i32
    return %c0_i32, %c0_i32_0 : i32, i32
  }
  func.func @transform_6(%arg0: i32) -> (i32, i32) {
    %c0_i32 = arith.constant 0 : i32
    %c0_i32_0 = arith.constant 0 : i32
    %c0_i32_1 = arith.constant 0 : i32
    return %c0_i32, %c0_i32_0 : i32, i32
  }
  func.func @transform_7(%arg0: i32) -> (i32, i32) {
    %c0_i32 = arith.constant 0 : i32
    %c0_i32_0 = arith.constant 0 : i32
    %c0_i32_1 = arith.constant 0 : i32
    return %c0_i32, %c0_i32_0 : i32, i32
  }
  func.func @transform_8(%arg0: i32) -> (i32, i32) {
    %c0_i32 = arith.constant 0 : i32
    %c0_i32_0 = arith.constant 0 : i32
    %c0_i32_1 = arith.constant 0 : i32
    return %c0_i32, %c0_i32_0 : i32, i32
  }
  func.func @transform_9(%arg0: i32) -> (i32, i32, i32, i32) {
    %c0_i32 = arith.constant 0 : i32
    %c0_i32_0 = arith.constant 0 : i32
    %c0_i32_1 = arith.constant 0 : i32
    %c0_i32_2 = arith.constant 0 : i32
    return %arg0, %c0_i32, %c0_i32_0, %c0_i32_1 : i32, i32, i32, i32
  }
}

</mosaic_0001>

<llo_original>
// kernel: res_conv_block_forward.1
$region0: #{res_conv_block_forward.1}
  #allocation0 [shape = 'u32[]', space=smem, size = 0x4, offset = 0x4, fixed_abs, tag = 'smem constant byte address 0x4 - core index']
  #allocation1 [shape = 'u32[144,128]{1,0:T(1,128)}', space=vmem, size = 0x12000, scoped, tag = 'internal scratch']
  #allocation2 [shape = 'f32[18,32,8]{2,1,0:T(8,128)}', space=vmem, size = 0x48000, scoped, tag = 'scratch operand']
  %s0 = inlined_call_operand.vmem [shape: bf16[2,20,34,4], index: 0, kind: input, shape index: {}]
  %s1 = inlined_call_operand.vmem [shape: bf16[9,4,8], index: 1, kind: input, shape index: {}]
  %s2 = inlined_call_operand.vmem [shape: f32[1,8], index: 2, kind: input, shape index: {}]
  %s3 = inlined_call_operand.vmem [shape: f32[1,8], index: 3, kind: input, shape index: {}]
  %s4 = inlined_call_operand.vmem [shape: bf16[9,8,8], index: 4, kind: input, shape index: {}]
  %s5 = inlined_call_operand.vmem [shape: f32[1,8], index: 5, kind: input, shape index: {}]
  %s6 = inlined_call_operand.vmem [shape: f32[1,8], index: 6, kind: input, shape index: {}]
  %s7 = inlined_call_operand.vmem [shape: bf16[4,8], index: 7, kind: input, shape index: {}]
  %s8 = inlined_call_operand.vmem [shape: f32[1,8], index: 8, kind: input, shape index: {}]
  %s9 = inlined_call_operand.vmem [shape: f32[2,16,16,8], index: 9, kind: output, shape index: {}]
  %s10 = sld [smem:[#allocation0]]
  $region69: #{res_conv_block_forward.1} parent=0
    _
  %s12 = ssub.s32 1, %s10
  %s13 = scalar_select 0, %s12, %s10
  loop: start=0, step=1, limit=4
  $region2: #{res_conv_block_forward.1} parent=0 // loop_pre_header
    _
  $region3: #{res_conv_block_forward.1} parent=0 // loop_header
    %s15 = sphi 0, %s19
    %p16 = scmp.ge.s32.totalorder %s15, 4
    %s25 = sphi 0, %s27
    %s28 = sphi 0, %s25
    %s29 = sphi 0, %s28
    %s45 = sphi 0, %s29
    %s49 = sphi 0, %s49
    %s51 = sphi 0, %s49
    %s52 = sphi 0, %s51
    %s66 = sphi 0, %s52
    %s70 = sphi 0, %s70
    %s72 = sphi 0, %s70
    %s73 = sphi 0, %s72
    %s87 = sphi 0, %s73
    %s91 = sphi 0, %s91
    %s93 = sphi 0, %s91
    %s94 = sphi 0, %s93
    %s108 = sphi 0, %s94
    %s112 = sphi 0, %s112
    %s114 = sphi 0, %s112
    %s115 = sphi 0, %s114
    %s129 = sphi 0, %s115
    %s133 = sphi 0, %s133
    %s135 = sphi 0, %s133
    %s136 = sphi 0, %s135
    %s150 = sphi 0, %s136
    %s154 = sphi 0, %s154
    %s156 = sphi 0, %s154
    %s157 = sphi 0, %s156
    %s171 = sphi 0, %s157
    %s175 = sphi 0, %s175
    %s177 = sphi 0, %s175
    %s178 = sphi 0, %s177
    %s192 = sphi 0, %s178
    %s196 = sphi 0, %s196
    %s198 = sphi 0, %s196
    %s199 = sphi 0, %s198
    %s213 = sphi 0, %s199
    %s219 = sphi 0, %s221
    %s222 = sphi 0, %s219
    %s223 = sphi 0, %s222
    %s239 = sphi 0, %s223
  $region4: #{res_conv_block_forward.1} parent=0 // loop_header_branch
    %18 = sbr.rel (%p16) target = $region8
  $region5: #{res_conv_block_forward.1} parent=0 // loop_body
    %s20 = ssub.s32 %s15, 1
    %s21 = ssub.s32 %s15, 2
    %s22 = sadd.s32 %s15, 1
    %s23 = ssub.s32 %s15, %s22
    %p24 = scmp.eq.s32.totalorder %s23, 0
    %s26 = sadd.s32 %s25, 1
    %s27 = scalar_select %p24, %s25, %s26
    %p30 = pneg %p24
    %p31 = scmp.eq.s32.totalorder %s15, 1
    %p32 = por %p30, %p31
    %p33 = scmp.ne.s32.totalorder %s25, %s28
    %p34 = scmp.eq.s32.totalorder %s15, 0
    %p35 = por %p33, %p34
    %p36 = scmp.ne.s32.totalorder %s25, %s28
    %p37 = scmp.eq.s32.totalorder %s20, 1
    %p38 = por %p36, %p37
    %p39 = scmp.ne.s32.totalorder %s28, %s29
    %p40 = scmp.eq.s32.totalorder %s20, 0
    %p41 = por %p39, %p40
    %p42 = scmp.ne.s32.totalorder %s28, %s29
    %p43 = scmp.eq.s32.totalorder %s21, 1
    %p44 = por %p42, %p43
    %p46 = scmp.ne.s32.totalorder %s29, %s45
    %p47 = scmp.eq.s32.totalorder %s21, 0
    %p48 = por %p46, %p47
    %s50 = sadd.s32 %s49, 1
    %p53 = scmp.eq.s32.totalorder %s15, 1
    %p54 = scmp.ne.s32.totalorder %s49, %s51
    %p55 = scmp.eq.s32.totalorder %s15, 0
    %p56 = por %p54, %p55
    %p57 = scmp.ne.s32.totalorder %s49, %s51
    %p58 = scmp.eq.s32.totalorder %s20, 1
    %p59 = por %p57, %p58
    %p60 = scmp.ne.s32.totalorder %s51, %s52
    %p61 = scmp.eq.s32.totalorder %s20, 0
    %p62 = por %p60, %p61
    %p63 = scmp.ne.s32.totalorder %s51, %s52
    %p64 = scmp.eq.s32.totalorder %s21, 1
    %p65 = por %p63, %p64
    %p67 = scmp.ne.s32.totalorder %s52, %s66
    %p68 = scmp.eq.s32.totalorder %s21, 0
    %p69 = por %p67, %p68
    %s71 = sadd.s32 %s70, 1
    %p74 = scmp.eq.s32.totalorder %s15, 1
    %p75 = scmp.ne.s32.totalorder %s70, %s72
    %p76 = scmp.eq.s32.totalorder %s15, 0
    %p77 = por %p75, %p76
    %p78 = scmp.ne.s32.totalorder %s70, %s72
    %p79 = scmp.eq.s32.totalorder %s20, 1
    %p80 = por %p78, %p79
    %p81 = scmp.ne.s32.totalorder %s72, %s73
    %p82 = scmp.eq.s32.totalorder %s20, 0
    %p83 = por %p81, %p82
    %p84 = scmp.ne.s32.totalorder %s72, %s73
    %p85 = scmp.eq.s32.totalorder %s21, 1
    %p86 = por %p84, %p85
    %p88 = scmp.ne.s32.totalorder %s73, %s87
    %p89 = scmp.eq.s32.totalorder %s21, 0
    %p90 = por %p88, %p89
    %s92 = sadd.s32 %s91, 1
    %p95 = scmp.eq.s32.totalorder %s15, 1
    %p96 = scmp.ne.s32.totalorder %s91, %s93
    %p97 = scmp.eq.s32.totalorder %s15, 0
    %p98 = por %p96, %p97
    %p99 = scmp.ne.s32.totalorder %s91, %s93
    %p100 = scmp.eq.s32.totalorder %s20, 1
    %p101 = por %p99, %p100
    %p102 = scmp.ne.s32.totalorder %s93, %s94
    %p103 = scmp.eq.s32.totalorder %s20, 0
    %p104 = por %p102, %p103
    %p105 = scmp.ne.s32.totalorder %s93, %s94
    %p106 = scmp.eq.s32.totalorder %s21, 1
    %p107 = por %p105, %p106
    %p109 = scmp.ne.s32.totalorder %s94, %s108
    %p110 = scmp.eq.s32.totalorder %s21, 0
    %p111 = por %p109, %p110
    %s113 = sadd.s32 %s112, 1
    %p116 = scmp.eq.s32.totalorder %s15, 1
    %p117 = scmp.ne.s32.totalorder %s112, %s114
    %p118 = scmp.eq.s32.totalorder %s15, 0
    %p119 = por %p117, %p118
    %p120 = scmp.ne.s32.totalorder %s112, %s114
    %p121 = scmp.eq.s32.totalorder %s20, 1
    %p122 = por %p120, %p121
    %p123 = scmp.ne.s32.totalorder %s114, %s115
    %p124 = scmp.eq.s32.totalorder %s20, 0
    %p125 = por %p123, %p124
    %p126 = scmp.ne.s32.totalorder %s114, %s115
    %p127 = scmp.eq.s32.totalorder %s21, 1
    %p128 = por %p126, %p127
    %p130 = scmp.ne.s32.totalorder %s115, %s129
    %p131 = scmp.eq.s32.totalorder %s21, 0
    %p132 = por %p130, %p131
    %s134 = sadd.s32 %s133, 1
    %p137 = scmp.eq.s32.totalorder %s15, 1
    %p138 = scmp.ne.s32.totalorder %s133, %s135
    %p139 = scmp.eq.s32.totalorder %s15, 0
    %p140 = por %p138, %p139
    %p141 = scmp.ne.s32.totalorder %s133, %s135
    %p142 = scmp.eq.s32.totalorder %s20, 1
    %p143 = por %p141, %p142
    %p144 = scmp.ne.s32.totalorder %s135, %s136
    %p145 = scmp.eq.s32.totalorder %s20, 0
    %p146 = por %p144, %p145
    %p147 = scmp.ne.s32.totalorder %s135, %s136
    %p148 = scmp.eq.s32.totalorder %s21, 1
    %p149 = por %p147, %p148
    %p151 = scmp.ne.s32.totalorder %s136, %s150
    %p152 = scmp.eq.s32.totalorder %s21, 0
    %p153 = por %p151, %p152
    %s155 = sadd.s32 %s154, 1
    %p158 = scmp.eq.s32.totalorder %s15, 1
    %p159 = scmp.ne.s32.totalorder %s154, %s156
    %p160 = scmp.eq.s32.totalorder %s15, 0
    %p161 = por %p159, %p160
    %p162 = scmp.ne.s32.totalorder %s154, %s156
    %p163 = scmp.eq.s32.totalorder %s20, 1
    %p164 = por %p162, %p163
    %p165 = scmp.ne.s32.totalorder %s156, %s157
    %p166 = scmp.eq.s32.totalorder %s20, 0
    %p167 = por %p165, %p166
    %p168 = scmp.ne.s32.totalorder %s156, %s157
    %p169 = scmp.eq.s32.totalorder %s21, 1
    %p170 = por %p168, %p169
    %p172 = scmp.ne.s32.totalorder %s157, %s171
    %p173 = scmp.eq.s32.totalorder %s21, 0
    %p174 = por %p172, %p173
    %s176 = sadd.s32 %s175, 1
    %p179 = scmp.eq.s32.totalorder %s15, 1
    %p180 = scmp.ne.s32.totalorder %s175, %s177
    %p181 = scmp.eq.s32.totalorder %s15, 0
    %p182 = por %p180, %p181
    %p183 = scmp.ne.s32.totalorder %s175, %s177
    %p184 = scmp.eq.s32.totalorder %s20, 1
    %p185 = por %p183, %p184
    %p186 = scmp.ne.s32.totalorder %s177, %s178
    %p187 = scmp.eq.s32.totalorder %s20, 0
    %p188 = por %p186, %p187
    %p189 = scmp.ne.s32.totalorder %s177, %s178
    %p190 = scmp.eq.s32.totalorder %s21, 1
    %p191 = por %p189, %p190
    %p193 = scmp.ne.s32.totalorder %s178, %s192
    %p194 = scmp.eq.s32.totalorder %s21, 0
    %p195 = por %p193, %p194
    %s197 = sadd.s32 %s196, 1
    %p200 = scmp.eq.s32.totalorder %s15, 1
    %p201 = scmp.ne.s32.totalorder %s196, %s198
    %p202 = scmp.eq.s32.totalorder %s15, 0
    %p203 = por %p201, %p202
    %p204 = scmp.ne.s32.totalorder %s196, %s198
    %p205 = scmp.eq.s32.totalorder %s20, 1
    %p206 = por %p204, %p205
    %p207 = scmp.ne.s32.totalorder %s198, %s199
    %p208 = scmp.eq.s32.totalorder %s20, 0
    %p209 = por %p207, %p208
    %p210 = scmp.ne.s32.totalorder %s198, %s199
    %p211 = scmp.eq.s32.totalorder %s21, 1
    %p212 = por %p210, %p211
    %p214 = scmp.ne.s32.totalorder %s199, %s213
    %p215 = scmp.eq.s32.totalorder %s21, 0
    %p216 = por %p214, %p215
    %s217 = ssub.s32 %s15, %s22
    %p218 = scmp.eq.s32.totalorder %s217, 0
    %s220 = sadd.s32 %s219, 1
    %s221 = scalar_select %p218, %s219, %s220
    %p224 = pneg %p218
    %p225 = scmp.eq.s32.totalorder %s15, 1
    %p226 = por %p224, %p225
    %p227 = scmp.ne.s32.totalorder %s219, %s222
    %p228 = scmp.eq.s32.totalorder %s15, 0
    %p229 = por %p227, %p228
    %p230 = scmp.ne.s32.totalorder %s219, %s222
    %p231 = scmp.eq.s32.totalorder %s20, 1
    %p232 = por %p230, %p231
    %p233 = scmp.ne.s32.totalorder %s222, %s223
    %p234 = scmp.eq.s32.totalorder %s20, 0
    %p235 = por %p233, %p234
    %p236 = scmp.ne.s32.totalorder %s222, %s223
    %p237 = scmp.eq.s32.totalorder %s21, 1
    %p238 = por %p236, %p237
    %p240 = scmp.ne.s32.totalorder %s223, %s239
    %p241 = scmp.eq.s32.totalorder %s21, 0
    %p242 = por %p240, %p241
    %p243 = scmp.le.s32.totalorder 1, %s15
    %p244 = scmp.lt.s32.totalorder %s15, 3
    %p245 = pnand %p243, %p244
    %p246 = pneg %p245
    // Predicated region
    $region9: #{res_conv_block_forward.1} parent=5 // pred_check
      _
    $region10: #{res_conv_block_forward.1} parent=5 // pred_check_branch
      %248 = sbr.rel (%p245) target = $region12
    $region11: #{res_conv_block_forward.1} parent=5 // pred_region
      %s249 = ssub.s32 %s15, 1
      // Predicated region
      $region13: #{res_conv_block_forward.1} parent=11 // pred_check
        %p250 = pneg %p62
      $region14: #{res_conv_block_forward.1} parent=11 // pred_check_branch
        %252 = sbr.rel (%p250) target = $region16
      $region15: #{res_conv_block_forward.1} parent=11 // pred_region
        _
      $region16: #{res_conv_block_forward.1} parent=11 // pred_fallthru
        _
      // Predicated region
      $region17: #{res_conv_block_forward.1} parent=11 // pred_check
        %p253 = pneg %p83
      $region18: #{res_conv_block_forward.1} parent=11 // pred_check_branch
        %255 = sbr.rel (%p253) target = $region20
      $region19: #{res_conv_block_forward.1} parent=11 // pred_region
        _
      $region20: #{res_conv_block_forward.1} parent=11 // pred_fallthru
        _
      // Predicated region
      $region21: #{res_conv_block_forward.1} parent=11 // pred_check
        %p256 = pneg %p104
      $region22: #{res_conv_block_forward.1} parent=11 // pred_check_branch
        %258 = sbr.rel (%p256) target = $region24
      $region23: #{res_conv_block_forward.1} parent=11 // pred_region
        _
      $region24: #{res_conv_block_forward.1} parent=11 // pred_fallthru
        _
      // Predicated region
      $region25: #{res_conv_block_forward.1} parent=11 // pred_check
        %p259 = pneg %p125
      $region26: #{res_conv_block_forward.1} parent=11 // pred_check_branch
        %261 = sbr.rel (%p259) target = $region28
      $region27: #{res_conv_block_forward.1} parent=11 // pred_region
        _
      $region28: #{res_conv_block_forward.1} parent=11 // pred_fallthru
        _
      // Predicated region
      $region29: #{res_conv_block_forward.1} parent=11 // pred_check
        %p262 = pneg %p146
      $region30: #{res_conv_block_forward.1} parent=11 // pred_check_branch
        %264 = sbr.rel (%p262) target = $region32
      $region31: #{res_conv_block_forward.1} parent=11 // pred_region
        _
      $region32: #{res_conv_block_forward.1} parent=11 // pred_fallthru
        _
      // Predicated region
      $region33: #{res_conv_block_forward.1} parent=11 // pred_check
        %p265 = pneg %p167
      $region34: #{res_conv_block_forward.1} parent=11 // pred_check_branch
        %267 = sbr.rel (%p265) target = $region36
      $region35: #{res_conv_block_forward.1} parent=11 // pred_region
        _
      $region36: #{res_conv_block_forward.1} parent=11 // pred_fallthru
        _
      // Predicated region
      $region37: #{res_conv_block_forward.1} parent=11 // pred_check
        %p268 = pneg %p188
      $region38: #{res_conv_block_forward.1} parent=11 // pred_check_branch
        %270 = sbr.rel (%p268) target = $region40
      $region39: #{res_conv_block_forward.1} parent=11 // pred_region
        _
      $region40: #{res_conv_block_forward.1} parent=11 // pred_fallthru
        _
      // Predicated region
      $region41: #{res_conv_block_forward.1} parent=11 // pred_check
        %p271 = pneg %p209
      $region42: #{res_conv_block_forward.1} parent=11 // pred_check_branch
        %273 = sbr.rel (%p271) target = $region44
      $region43: #{res_conv_block_forward.1} parent=11 // pred_region
        _
      $region44: #{res_conv_block_forward.1} parent=11 // pred_fallthru
        _
    $region12: #{res_conv_block_forward.1} parent=5 // pred_fallthru
      _
    %p274 = scmp.lt.s32.totalorder %s15, 2
    // Predicated region
    $region45: #{res_conv_block_forward.1} parent=5 // pred_check
      %p275 = pneg %p274
    $region46: #{res_conv_block_forward.1} parent=5 // pred_check_branch
      %277 = sbr.rel (%p275) target = $region48
    $region47: #{res_conv_block_forward.1} parent=5 // pred_region
      // Predicated region
      $region49: #{res_conv_block_forward.1} parent=47 // pred_check
        %p278 = pneg %p35
      $region50: #{res_conv_block_forward.1} parent=47 // pred_check_branch
        %280 = sbr.rel (%p278) target = $region52
      $region51: #{res_conv_block_forward.1} parent=47 // pred_region
        %p281 = scmp.lt.s32.totalorder %s15, 1
        %s282 = scalar_select %p281, %s15, 1
        %s283 = smul.addr %s282, 100
        %s284 = smul.addr %s283, 4
        %s285 = scalar_lea.vmem %s0, %s284
      $region52: #{res_conv_block_forward.1} parent=47 // pred_fallthru
        _
    $region48: #{res_conv_block_forward.1} parent=5 // pred_fallthru
      _
    %p286 = scmp.le.s32.totalorder 1, %s15
    %p287 = scmp.lt.s32.totalorder %s15, 3
    %p288 = pnand %p286, %p287
    %p289 = pneg %p288
    // Predicated region
    $region53: #{res_conv_block_forward.1} parent=5 // pred_check
      _
    $region54: #{res_conv_block_forward.1} parent=5 // pred_check_branch
      %291 = sbr.rel (%p288) target = $region56
    $region55: #{res_conv_block_forward.1} parent=5 // pred_region
      %s292 = ssub.s32 %s15, 1
      %p293 = scmp.lt.s32.totalorder %s20, 1
      %s294 = scalar_select %p293, %s20, 1
      %s295 = smul.addr %s294, 100
      %s296 = smul.addr %s295, 4
      %s297 = scalar_lea.vmem %s0, %s296
      %p298 = pneg %p41
      %p299 = pneg %p38
      %p300 = pneg %p62
      %p301 = pneg %p59
      %p302 = pneg %p83
      %p303 = pneg %p80
      %p304 = pneg %p104
      %p305 = pneg %p101
      %p306 = pneg %p125
      %p307 = pneg %p122
      %p308 = pneg %p146
      %p309 = pneg %p143
      %p310 = pneg %p167
      %p311 = pneg %p164
      %p312 = pneg %p188
      %p313 = pneg %p185
      %p314 = pneg %p209
      %p315 = pneg %p206
      %p316 = pneg %p235
      %p317 = pneg %p232
      %p318 = scmp.lt.s32.totalorder %s20, 1
      %s319 = scalar_select %p318, %s20, 1
      %s320 = smul.addr %s319, 32
      %s321 = smul.addr %s320, 8
      %s322 = scalar_lea.vmem %s9, %s321
      %p323 = scmp.lt.s32.totalorder %s20, 1
      %s324 = scalar_select %p323, %s20, 1
      %s325 = smul.addr %s324, 100
      %s326 = smul.addr %s325, 4
      %s327 = scalar_lea.vmem %s0, %s326
      %p328 = scmp.lt.s32.totalorder %s20, 1
      %s329 = scalar_select %p328, %s20, 1
      %s330 = smul.addr %s329, 32
      %s331 = smul.addr %s330, 8
      %s332 = scalar_lea.vmem %s9, %s331
      %v334 = vld [vmem:[%s327] sm:$0xf]
      %v335 = vld [vmem:[%s327 + $0x4] sm:$0xf]
      %v336 = vld [vmem:[%s327 + $0x8] sm:$0xf]
      %v337 = vld [vmem:[%s327 + $0xc] sm:$0xf]
      %v338 = vld [vmem:[%s327 + $0x10] sm:$0x1]
      %v339 = vld [vmem:[%s327 + $0x14] sm:$0xf]
      %v340 = vld [vmem:[%s327 + $0x18] sm:$0xf]
      %v341 = vld [vmem:[%s327 + $0x1c] sm:$0xf]
      %v342 = vld [vmem:[%s327 + $0x20] sm:$0xf]
      %v343 = vld [vmem:[%s327 + $0x24] sm:$0x1]
      %v344 = vld [vmem:[%s327 + $0x28] sm:$0xf]
      %v345 = vld [vmem:[%s327 + $0x2c] sm:$0xf]
      %v346 = vld [vmem:[%s327 + $0x30] sm:$0xf]
      %v347 = vld [vmem:[%s327 + $0x34] sm:$0xf]
      %v348 = vld [vmem:[%s327 + $0x38] sm:$0x1]
      %v349 = vld [vmem:[%s327 + $0x3c] sm:$0xf]
      %v350 = vld [vmem:[%s327 + $0x40] sm:$0xf]
      %v351 = vld [vmem:[%s327 + $0x44] sm:$0xf]
      %v352 = vld [vmem:[%s327 + $0x48] sm:$0xf]
      %v353 = vld [vmem:[%s327 + $0x4c] sm:$0x1]
      %v354 = vld [vmem:[%s327 + $0x50] sm:$0xf]
      %v355 = vld [vmem:[%s327 + $0x54] sm:$0xf]
      %v356 = vld [vmem:[%s327 + $0x58] sm:$0xf]
      %v357 = vld [vmem:[%s327 + $0x5c] sm:$0xf]
      %v358 = vld [vmem:[%s327 + $0x60] sm:$0x1]
      %v359 = vld [vmem:[%s327 + $0x64] sm:$0xf]
      %v360 = vld [vmem:[%s327 + $0x68] sm:$0xf]
      %v361 = vld [vmem:[%s327 + $0x6c] sm:$0xf]
      %v362 = vld [vmem:[%s327 + $0x70] sm:$0xf]
      %v363 = vld [vmem:[%s327 + $0x74] sm:$0x1]
      %v364 = vld [vmem:[%s327 + $0x78] sm:$0xf]
      %v365 = vld [vmem:[%s327 + $0x7c] sm:$0xf]
      %v366 = vld [vmem:[%s327 + $0x80] sm:$0xf]
      %v367 = vld [vmem:[%s327 + $0x84] sm:$0xf]
      %v368 = vld [vmem:[%s327 + $0x88] sm:$0x1]
      %v369 = vld [vmem:[%s327 + $0x8c] sm:$0xf]
      %v370 = vld [vmem:[%s327 + $0x90] sm:$0xf]
      %v371 = vld [vmem:[%s327 + $0x94] sm:$0xf]
      %v372 = vld [vmem:[%s327 + $0x98] sm:$0xf]
      %v373 = vld [vmem:[%s327 + $0x9c] sm:$0x1]
      %v374 = vld [vmem:[%s327 + $0xa0] sm:$0xf]
      %v375 = vld [vmem:[%s327 + $0xa4] sm:$0xf]
      %v376 = vld [vmem:[%s327 + $0xa8] sm:$0xf]
      %v377 = vld [vmem:[%s327 + $0xac] sm:$0xf]
      %v378 = vld [vmem:[%s327 + $0xb0] sm:$0x1]
      %v379 = vld [vmem:[%s327 + $0xb4] sm:$0xf]
      %v380 = vld [vmem:[%s327 + $0xb8] sm:$0xf]
      %v381 = vld [vmem:[%s327 + $0xbc] sm:$0xf]
      %v382 = vld [vmem:[%s327 + $0xc0] sm:$0xf]
      %v383 = vld [vmem:[%s327 + $0xc4] sm:$0x1]
      %v384 = vld [vmem:[%s327 + $0xc8] sm:$0xf]
      %v385 = vld [vmem:[%s327 + $0xcc] sm:$0xf]
      %v386 = vld [vmem:[%s327 + $0xd0] sm:$0xf]
      %v387 = vld [vmem:[%s327 + $0xd4] sm:$0xf]
      %v388 = vld [vmem:[%s327 + $0xd8] sm:$0x1]
      %v389 = vld [vmem:[%s327 + $0xdc] sm:$0xf]
      %v390 = vld [vmem:[%s327 + $0xe0] sm:$0xf]
      %v391 = vld [vmem:[%s327 + $0xe4] sm:$0xf]
      %v392 = vld [vmem:[%s327 + $0xe8] sm:$0xf]
      %v393 = vld [vmem:[%s327 + $0xec] sm:$0x1]
      %v394 = vld [vmem:[%s327 + $0xf0] sm:$0xf]
      %v395 = vld [vmem:[%s327 + $0xf4] sm:$0xf]
      %v396 = vld [vmem:[%s327 + $0xf8] sm:$0xf]
      %v397 = vld [vmem:[%s327 + $0xfc] sm:$0xf]
      %v398 = vld [vmem:[%s327 + $0x100] sm:$0x1]
      %v399 = vld [vmem:[%s327 + $0x104] sm:$0xf]
      %v400 = vld [vmem:[%s327 + $0x108] sm:$0xf]
      %v401 = vld [vmem:[%s327 + $0x10c] sm:$0xf]
      %v402 = vld [vmem:[%s327 + $0x110] sm:$0xf]
      %v403 = vld [vmem:[%s327 + $0x114] sm:$0x1]
      %v404 = vld [vmem:[%s327 + $0x118] sm:$0xf]
      %v405 = vld [vmem:[%s327 + $0x11c] sm:$0xf]
      %v406 = vld [vmem:[%s327 + $0x120] sm:$0xf]
      %v407 = vld [vmem:[%s327 + $0x124] sm:$0xf]
      %v408 = vld [vmem:[%s327 + $0x128] sm:$0x1]
      %v409 = vld [vmem:[%s327 + $0x12c] sm:$0xf]
      %v410 = vld [vmem:[%s327 + $0x130] sm:$0xf]
      %v411 = vld [vmem:[%s327 + $0x134] sm:$0xf]
      %v412 = vld [vmem:[%s327 + $0x138] sm:$0xf]
      %v413 = vld [vmem:[%s327 + $0x13c] sm:$0x1]
      %v414 = vld [vmem:[%s327 + $0x140] sm:$0xf]
      %v415 = vld [vmem:[%s327 + $0x144] sm:$0xf]
      %v416 = vld [vmem:[%s327 + $0x148] sm:$0xf]
      %v417 = vld [vmem:[%s327 + $0x14c] sm:$0xf]
      %v418 = vld [vmem:[%s327 + $0x150] sm:$0x1]
      %v419 = vld [vmem:[%s327 + $0x154] sm:$0xf]
      %v420 = vld [vmem:[%s327 + $0x158] sm:$0xf]
      %v421 = vld [vmem:[%s327 + $0x15c] sm:$0xf]
      %v422 = vld [vmem:[%s327 + $0x160] sm:$0xf]
      %v423 = vld [vmem:[%s327 + $0x164] sm:$0x1]
      %v424 = vld [vmem:[%s327 + $0x168] sm:$0xf]
      %v425 = vld [vmem:[%s327 + $0x16c] sm:$0xf]
      %v426 = vld [vmem:[%s327 + $0x170] sm:$0xf]
      %v427 = vld [vmem:[%s327 + $0x174] sm:$0xf]
      %v428 = vld [vmem:[%s327 + $0x178] sm:$0x1]
      %v429 = vld [vmem:[%s327 + $0x17c] sm:$0xf]
      %v430 = vld [vmem:[%s327 + $0x180] sm:$0xf]
      %v431 = vld [vmem:[%s327 + $0x184] sm:$0xf]
      %v432 = vld [vmem:[%s327 + $0x188] sm:$0xf]
      %v433 = vld [vmem:[%s327 + $0x18c] sm:$0x1]
      %v434 = vunpack.c.l.bf16 %v334
      %v435 = vunpack.c.l.bf16 %v335
      %v436 = vunpack.c.l.bf16 %v336
      %v437 = vunpack.c.l.bf16 %v337
      %v438 = vunpack.c.l.bf16 %v338
      %v439 = vunpack.c.l.bf16 %v339
      %v440 = vunpack.c.l.bf16 %v340
      %v441 = vunpack.c.l.bf16 %v341
      %v442 = vunpack.c.l.bf16 %v342
      %v443 = vunpack.c.l.bf16 %v343
      %v444 = vunpack.c.l.bf16 %v344
      %v445 = vunpack.c.l.bf16 %v345
      %v446 = vunpack.c.l.bf16 %v346
      %v447 = vunpack.c.l.bf16 %v347
      %v448 = vunpack.c.l.bf16 %v348
      %v449 = vunpack.c.l.bf16 %v349
      %v450 = vunpack.c.l.bf16 %v350
      %v451 = vunpack.c.l.bf16 %v351
      %v452 = vunpack.c.l.bf16 %v352
      %v453 = vunpack.c.l.bf16 %v353
      %v454 = vunpack.c.l.bf16 %v354
      %v455 = vunpack.c.l.bf16 %v355
      %v456 = vunpack.c.l.bf16 %v356
      %v457 = vunpack.c.l.bf16 %v357
      %v458 = vunpack.c.l.bf16 %v358
      %v459 = vunpack.c.l.bf16 %v359
      %v460 = vunpack.c.l.bf16 %v360
      %v461 = vunpack.c.l.bf16 %v361
      %v462 = vunpack.c.l.bf16 %v362
      %v463 = vunpack.c.l.bf16 %v363
      %v464 = vunpack.c.l.bf16 %v364
      %v465 = vunpack.c.l.bf16 %v365
      %v466 = vunpack.c.l.bf16 %v366
      %v467 = vunpack.c.l.bf16 %v367
      %v468 = vunpack.c.l.bf16 %v368
      %v469 = vunpack.c.l.bf16 %v369
      %v470 = vunpack.c.l.bf16 %v370
      %v471 = vunpack.c.l.bf16 %v371
      %v472 = vunpack.c.l.bf16 %v372
      %v473 = vunpack.c.l.bf16 %v373
      %v474 = vunpack.c.l.bf16 %v374
      %v475 = vunpack.c.l.bf16 %v375
      %v476 = vunpack.c.l.bf16 %v376
      %v477 = vunpack.c.l.bf16 %v377
      %v478 = vunpack.c.l.bf16 %v378
      %v479 = vunpack.c.l.bf16 %v379
      %v480 = vunpack.c.l.bf16 %v380
      %v481 = vunpack.c.l.bf16 %v381
      %v482 = vunpack.c.l.bf16 %v382
      %v483 = vunpack.c.l.bf16 %v383
      %v484 = vunpack.c.l.bf16 %v384
      %v485 = vunpack.c.l.bf16 %v385
      %v486 = vunpack.c.l.bf16 %v386
      %v487 = vunpack.c.l.bf16 %v387
      %v488 = vunpack.c.l.bf16 %v388
      %v489 = vunpack.c.l.bf16 %v389
      %v490 = vunpack.c.l.bf16 %v390
      %v491 = vunpack.c.l.bf16 %v391
      %v492 = vunpack.c.l.bf16 %v392
      %v493 = vunpack.c.l.bf16 %v393
      %v494 = vunpack.c.l.bf16 %v394
      %v495 = vunpack.c.l.bf16 %v395
      %v496 = vunpack.c.l.bf16 %v396
      %v497 = vunpack.c.l.bf16 %v397
      %v498 = vunpack.c.l.bf16 %v398
      %v499 = vunpack.c.l.bf16 %v399
      %v500 = vunpack.c.l.bf16 %v400
      %v501 = vunpack.c.l.bf16 %v401
      %v502 = vunpack.c.l.bf16 %v402
      %v503 = vunpack.c.l.bf16 %v403
      %v504 = vunpack.c.l.bf16 %v404
      %v505 = vunpack.c.l.bf16 %v405
      %v506 = vunpack.c.l.bf16 %v406
      %v507 = vunpack.c.l.bf16 %v407
      %v508 = vunpack.c.l.bf16 %v408
      %v509 = vunpack.c.l.bf16 %v409
      %v510 = vunpack.c.l.bf16 %v410
      %v511 = vunpack.c.l.bf16 %v411
      %v512 = vunpack.c.l.bf16 %v412
      %v513 = vunpack.c.l.bf16 %v413
      %v514 = vunpack.c.l.bf16 %v414
      %v515 = vunpack.c.l.bf16 %v415
      %v516 = vunpack.c.l.bf16 %v416
      %v517 = vunpack.c.l.bf16 %v417
      %v518 = vunpack.c.l.bf16 %v418
      %v519 = vunpack.c.l.bf16 %v419
      %v520 = vunpack.c.l.bf16 %v420
      %v521 = vunpack.c.l.bf16 %v421
      %v522 = vunpack.c.l.bf16 %v422
      %v523 = vunpack.c.l.bf16 %v423
      %v524 = vunpack.c.l.bf16 %v424
      %v525 = vunpack.c.l.bf16 %v425
      %v526 = vunpack.c.l.bf16 %v426
      %v527 = vunpack.c.l.bf16 %v427
      %v528 = vunpack.c.l.bf16 %v428
      %v529 = vunpack.c.l.bf16 %v429
      %v530 = vunpack.c.l.bf16 %v430
      %v531 = vunpack.c.l.bf16 %v431
      %v532 = vunpack.c.l.bf16 %v432
      %v533 = vunpack.c.l.bf16 %v433
      %v534 = vld [vmem:[%s2] sm:$0x1]
      %v535 = vld [vmem:[%s3] sm:$0x1]
      %v536 = vld [vmem:[%s5] sm:$0x1]
      %v537 = vld [vmem:[%s6] sm:$0x1]
      %v538 = vpack.c.bf16 %v435, %v434
      %v539 = vpack.c.bf16 %v437, %v436
      %v540 = vpack.c.bf16 %v440, %v439
      %v541 = vpack.c.bf16 %v442, %v441
      %v542 = vpack.c.bf16 %v445, %v444
      %v543 = vpack.c.bf16 %v447, %v446
      %v544 = vpack.c.bf16 %v450, %v449
      %v545 = vpack.c.bf16 %v452, %v451
      %v546 = vpack.c.bf16 %v455, %v454
      %v547 = vpack.c.bf16 %v457, %v456
      %v548 = vpack.c.bf16 %v460, %v459
      %v549 = vpack.c.bf16 %v462, %v461
      %v550 = vpack.c.bf16 %v465, %v464
      %v551 = vpack.c.bf16 %v467, %v466
      %v552 = vpack.c.bf16 %v470, %v469
      %v553 = vpack.c.bf16 %v472, %v471
      %v554 = vpack.c.bf16 %v475, %v474
      %v555 = vpack.c.bf16 %v477, %v476
      %v556 = vpack.c.bf16 %v480, %v479
      %v557 = vpack.c.bf16 %v482, %v481
      %v558 = vpack.c.bf16 %v485, %v484
      %v559 = vpack.c.bf16 %v487, %v486
      %v560 = vpack.c.bf16 %v490, %v489
      %v561 = vpack.c.bf16 %v492, %v491
      %v562 = vpack.c.bf16 %v495, %v494
      %v563 = vpack.c.bf16 %v497, %v496
      %v564 = vpack.c.bf16 %v500, %v499
      %v565 = vpack.c.bf16 %v502, %v501
      %v566 = vpack.c.bf16 %v505, %v504
      %v567 = vpack.c.bf16 %v507, %v506
      %v568 = vpack.c.bf16 %v510, %v509
      %v569 = vpack.c.bf16 %v512, %v511
      %v570 = vpack.c.bf16 %v515, %v514
      %v571 = vpack.c.bf16 %v517, %v516
      %v572 = vpack.c.bf16 %v520, %v519
      %v573 = vpack.c.bf16 %v522, %v521
      %v574 = vpack.c.bf16 %v525, %v524
      %v575 = vpack.c.bf16 %v527, %v526
      %v576 = vpack.c.bf16 %v530, %v529
      %v577 = vpack.c.bf16 %v532, %v531
      %v578 = vld [vmem:[%s1] sm:$0x3]
      %s579 = scalar_lea.vmem %s1, 6
      %v580 = vld [vmem:[%s579] sm:$0x3]
      %vm581 = vcmask 31744
      %v583 = vsel %vm581, %v540, 0
      %v586 = vsel %vm581, %v541, 0
      %v589 = vsel %vm581, %v542, 0
      %v592 = vsel %vm581, %v543, 0
      %v595 = vsel %vm581, %v544, 0
      %v598 = vsel %vm581, %v545, 0
      %v601 = vsel %vm581, %v546, 0
      %v604 = vsel %vm581, %v547, 0
      %v607 = vsel %vm581, %v548, 0
      %v610 = vsel %vm581, %v549, 0
      %v613 = vsel %vm581, %v550, 0
      %v616 = vsel %vm581, %v551, 0
      %v619 = vsel %vm581, %v552, 0
      %v622 = vsel %vm581, %v553, 0
      %v625 = vsel %vm581, %v554, 0
      %v628 = vsel %vm581, %v555, 0
      %v631 = vsel %vm581, %v556, 0
      %v634 = vsel %vm581, %v557, 0
      %v637 = vsel %vm581, %v558, 0
      %v640 = vsel %vm581, %v559, 0
      %v643 = vsel %vm581, %v560, 0
      %v646 = vsel %vm581, %v561, 0
      %v649 = vsel %vm581, %v562, 0
      %v652 = vsel %vm581, %v563, 0
      %v655 = vsel %vm581, %v564, 0
      %v658 = vsel %vm581, %v565, 0
      %v661 = vsel %vm581, %v566, 0
      %v664 = vsel %vm581, %v567, 0
      %v667 = vsel %vm581, %v568, 0
      %v670 = vsel %vm581, %v569, 0
      %v673 = vsel %vm581, %v570, 0
      %v676 = vsel %vm581, %v571, 0
      %v679 = vsel %vm581, %v572, 0
      %v682 = vsel %vm581, %v573, 0
      %v685 = vsel %vm581, %v574, 0
      %v688 = vsel %vm581, %v575, 0
      %vm690 = vcmask 1041408
      %v692 = vsel %vm690, %v580, 0
      %694 = vmatprep.subr.bf16.mxu0 0
      %695 = vmatpush1.bf16.msra.mxu0 %v692
      %696 = vmatprep.subr.bf16.mxu0 0
      %697 = vmatpush1.bf16.msra.mxu0 0
      %698 = vmatprep.subr.bf16.mxu0 0
      %699 = vmatpush1.bf16.msra.mxu0 0
      %700 = vmatprep.subr.bf16.mxu0 0
      %701 = vmatpush1.bf16.msra.mxu0 0
      %702 = vmatprep.subr.bf16.mxu0 0
      %703 = vmatpush1.bf16.msra.mxu0 0
      %704 = vmatprep.subr.bf16.mxu0 0
      %705 = vmatpush1.bf16.msra.mxu0 0
      %706 = vmatprep.subr.bf16.mxu0 0
      %707 = vmatpush1.bf16.msra.mxu0 0
      %708 = vmatprep.subr.bf16.mxu0 0
      %709 = vmatpush1.bf16.msra.mxu0 0
      %710 = vmatprep.subr.bf16.mxu0 0
      %711 = vmatpush1.bf16.msra.mxu0 0
      %712 = vmatprep.subr.bf16.mxu0 0
      %713 = vmatpush1.bf16.msra.mxu0 0
      %714 = vmatprep.subr.bf16.mxu0 0
      %715 = vmatpush1.bf16.msra.mxu0 0
      %716 = vmatprep.subr.bf16.mxu0 0
      %717 = vmatpush1.bf16.msra.mxu0 0
      %718 = vmatprep.subr.bf16.mxu0 0
      %719 = vmatpush1.bf16.msra.mxu0 0
      %720 = vmatprep.subr.bf16.mxu0 0
      %721 = vmatpush1.bf16.msra.mxu0 0
      %722 = vmatprep.subr.bf16.mxu0 0
      %723 = vmatpush1.bf16.msra.mxu0 0
      %724 = vmatprep.subr.bf16.mxu0 0
      %725 = vmatpush1.bf16.msra.mxu0 0
      %726 = vmatprep.mubr.bf16.mxu0 0
      %727 = vmatmul.mubr.bf16.gmra.mrb[0].mxu0 %v583
      %v728 = vpop.f32.mrb[0].mxu0
      %v729 = vadd.f32 0.0, %v728
      %v730 = vpop.f32.mrb[0].mxu0
      %v731 = vpop.f32.mrb[0].mxu0
      %v732 = vadd.f32 0.0, %v731
      %v733 = vpop.f32.mrb[0].mxu0
      %734 = vmatprep.mubr.bf16.mxu0 0
      %735 = vmatmul.mubr.bf16.gmra.mrb[0].mxu0 %v586
      %v736 = vpop.f32.mrb[0].mxu0
      %v737 = vadd.f32 0.0, %v736
      %v738 = vpop.f32.mrb[0].mxu0
      %v739 = vpop.f32.mrb[0].mxu0
      %v740 = vadd.f32 0.0, %v739
      %v741 = vpop.f32.mrb[0].mxu0
      %742 = vmatprep.mubr.bf16.mxu0 0
      %743 = vmatmul.mubr.bf16.gmra.mrb[0].mxu0 %v589
      %v744 = vpop.f32.mrb[0].mxu0
      %v745 = vadd.f32 0.0, %v744
      %v746 = vpop.f32.mrb[0].mxu0
      %v747 = vpop.f32.mrb[0].mxu0
      %v748 = vadd.f32 0.0, %v747
      %v749 = vpop.f32.mrb[0].mxu0
      %750 = vmatprep.mubr.bf16.mxu0 0
      %751 = vmatmul.mubr.bf16.gmra.mrb[0].mxu0 %v592
      %v752 = vpop.f32.mrb[0].mxu0
      %v753 = vadd.f32 0.0, %v752
      %v754 = vpop.f32.mrb[0].mxu0
      %v755 = vpop.f32.mrb[0].mxu0
      %v756 = vadd.f32 0.0, %v755
      %v757 = vpop.f32.mrb[0].mxu0
      %758 = vmatprep.mubr.bf16.mxu0 0
      %759 = vmatmul.mubr.bf16.gmra.mrb[0].mxu0 %v595
      %v760 = vpop.f32.mrb[0].mxu0
      %v761 = vadd.f32 0.0, %v760
      %v762 = vpop.f32.mrb[0].mxu0
      %v763 = vpop.f32.mrb[0].mxu0
      %v764 = vadd.f32 0.0, %v763
      %v765 = vpop.f32.mrb[0].mxu0
      %766 = vmatprep.mubr.bf16.mxu0 0
      %767 = vmatmul.mubr.bf16.gmra.mrb[0].mxu0 %v598
      %v768 = vpop.f32.mrb[0].mxu0
      %v769 = vadd.f32 0.0, %v768
      %v770 = vpop.f32.mrb[0].mxu0
      %v771 = vpop.f32.mrb[0].mxu0
      %v772 = vadd.f32 0.0, %v771
      %v773 = vpop.f32.mrb[0].mxu0
      %774 = vmatprep.mubr.bf16.mxu0 0
      %775 = vmatmul.mubr.bf16.gmra.mrb[0].mxu0 %v601
      %v776 = vpop.f32.mrb[0].mxu0
      %v777 = vadd.f32 0.0, %v776
      %v778 = vpop.f32.mrb[0].mxu0
      %v779 = vpop.f32.mrb[0].mxu0
      %v780 = vadd.f32 0.0, %v779
      %v781 = vpop.f32.mrb[0].mxu0
      %782 = vmatprep.mubr.bf16.mxu0 0
      %783 = vmatmul.mubr.bf16.gmra.mrb[0].mxu0 %v604
      %v784 = vpop.f32.mrb[0].mxu0
      %v785 = vadd.f32 0.0, %v784
      %v786 = vpop.f32.mrb[0].mxu0
      %v787 = vpop.f32.mrb[0].mxu0
      %v788 = vadd.f32 0.0, %v787
      %v789 = vpop.f32.mrb[0].mxu0
      %790 = vmatprep.mubr.bf16.mxu0 0
      %791 = vmatmul.mubr.bf16.gmra.mrb[0].mxu0 %v607
      %v792 = vpop.f32.mrb[0].mxu0
      %v793 = vadd.f32 0.0, %v792
      %v794 = vpop.f32.mrb[0].mxu0
      %v795 = vpop.f32.mrb[0].mxu0
      %v796 = vadd.f32 0.0, %v795
      %v797 = vpop.f32.mrb[0].mxu0
      %798 = vmatprep.mubr.bf16.mxu0 0
      %799 = vmatmul.mubr.bf16.gmra.mrb[0].mxu0 %v610
      %v800 = vpop.f32.mrb[0].mxu0
      %v801 = vadd.f32 0.0, %v800
      %v802 = vpop.f32.mrb[0].mxu0
      %v803 = vpop.f32.mrb[0].mxu0
      %v804 = vadd.f32 0.0, %v803
      %v805 = vpop.f32.mrb[0].mxu0
      %806 = vmatprep.mubr.bf16.mxu0 0
      %807 = vmatmul.mubr.bf16.gmra.mrb[0].mxu0 %v613
      %v808 = vpop.f32.mrb[0].mxu0
      %v809 = vadd.f32 0.0, %v808
      %v810 = vpop.f32.mrb[0].mxu0
      %v811 = vpop.f32.mrb[0].mxu0
      %v812 = vadd.f32 0.0, %v811
      %v813 = vpop.f32.mrb[0].mxu0
      %814 = vmatprep.mubr.bf16.mxu0 0
      %815 = vmatmul.mubr.bf16.gmra.mrb[0].mxu0 %v616
      %v816 = vpop.f32.mrb[0].mxu0
      %v817 = vadd.f32 0.0, %v816
      %v818 = vpop.f32.mrb[0].mxu0
      %v819 = vpop.f32.mrb[0].mxu0
      %v820 = vadd.f32 0.0, %v819
      %v821 = vpop.f32.mrb[0].mxu0
      %822 = vmatprep.mubr.bf16.mxu0 0
      %823 = vmatmul.mubr.bf16.gmra.mrb[0].mxu0 %v619
      %v824 = vpop.f32.mrb[0].mxu0
      %v825 = vadd.f32 0.0, %v824
      %v826 = vpop.f32.mrb[0].mxu0
      %v827 = vpop.f32.mrb[0].mxu0
      %v828 = vadd.f32 0.0, %v827
      %v829 = vpop.f32.mrb[0].mxu0
      %830 = vmatprep.mubr.bf16.mxu0 0
      %831 = vmatmul.mubr.bf16.gmra.mrb[0].mxu0 %v622
      %v832 = vpop.f32.mrb[0].mxu0
      %v833 = vadd.f32 0.0, %v832
      %v834 = vpop.f32.mrb[0].mxu0
      %v835 = vpop.f32.mrb[0].mxu0
      %v836 = vadd.f32 0.0, %v835
      %v837 = vpop.f32.mrb[0].mxu0
      %838 = vmatprep.mubr.bf16.mxu0 0
      %839 = vmatmul.mubr.bf16.gmra.mrb[0].mxu0 %v625
      %v840 = vpop.f32.mrb[0].mxu0
      %v841 = vadd.f32 0.0, %v840
      %v842 = vpop.f32.mrb[0].mxu0
      %v843 = vpop.f32.mrb[0].mxu0
      %v844 = vadd.f32 0.0, %v843
      %v845 = vpop.f32.mrb[0].mxu0
      %846 = vmatprep.mubr.bf16.mxu0 0
      %847 = vmatmul.mubr.bf16.gmra.mrb[0].mxu0 %v628
      %v848 = vpop.f32.mrb[0].mxu0
      %v849 = vadd.f32 0.0, %v848
      %v850 = vpop.f32.mrb[0].mxu0
      %v851 = vpop.f32.mrb[0].mxu0
      %v852 = vadd.f32 0.0, %v851
      %v853 = vpop.f32.mrb[0].mxu0
      %854 = vmatprep.mubr.bf16.mxu0 0
      %855 = vmatmul.mubr.bf16.gmra.mrb[0].mxu0 %v631
      %v856 = vpop.f32.mrb[0].mxu0
      %v857 = vadd.f32 0.0, %v856
      %v858 = vpop.f32.mrb[0].mxu0
      %v859 = vpop.f32.mrb[0].mxu0
      %v860 = vadd.f32 0.0, %v859
      %v861 = vpop.f32.mrb[0].mxu0
      %862 = vmatprep.mubr.bf16.mxu0 0
      %863 = vmatmul.mubr.bf16.gmra.mrb[0].mxu0 %v634
      %v864 = vpop.f32.mrb[0].mxu0
      %v865 = vadd.f32 0.0, %v864
      %v866 = vpop.f32.mrb[0].mxu0
      %v867 = vpop.f32.mrb[0].mxu0
      %v868 = vadd.f32 0.0, %v867
      %v869 = vpop.f32.mrb[0].mxu0
      %870 = vmatprep.mubr.bf16.mxu0 0
      %871 = vmatmul.mubr.bf16.gmra.mrb[0].mxu0 %v637
      %v872 = vpop.f32.mrb[0].mxu0
      %v873 = vadd.f32 0.0, %v872
      %v874 = vpop.f32.mrb[0].mxu0
      %v875 = vpop.f32.mrb[0].mxu0
      %v876 = vadd.f32 0.0, %v875
      %v877 = vpop.f32.mrb[0].mxu0
      %878 = vmatprep.mubr.bf16.mxu0 0
      %879 = vmatmul.mubr.bf16.gmra.mrb[0].mxu0 %v640
      %v880 = vpop.f32.mrb[0].mxu0
      %v881 = vadd.f32 0.0, %v880
      %v882 = vpop.f32.mrb[0].mxu0
      %v883 = vpop.f32.mrb[0].mxu0
      %v884 = vadd.f32 0.0, %v883
      %v885 = vpop.f32.mrb[0].mxu0
      %886 = vmatprep.mubr.bf16.mxu0 0
      %887 = vmatmul.mubr.bf16.gmra.mrb[0].mxu0 %v643
      %v888 = vpop.f32.mrb[0].mxu0
      %v889 = vadd.f32 0.0, %v888
      %v890 = vpop.f32.mrb[0].mxu0
      %v891 = vpop.f32.mrb[0].mxu0
      %v892 = vadd.f32 0.0, %v891
      %v893 = vpop.f32.mrb[0].mxu0
      %894 = vmatprep.mubr.bf16.mxu0 0
      %895 = vmatmul.mubr.bf16.gmra.mrb[0].mxu0 %v646
      %v896 = vpop.f32.mrb[0].mxu0
      %v897 = vadd.f32 0.0, %v896
      %v898 = vpop.f32.mrb[0].mxu0
      %v899 = vpop.f32.mrb[0].mxu0
      %v900 = vadd.f32 0.0, %v899
      %v901 = vpop.f32.mrb[0].mxu0
      %902 = vmatprep.mubr.bf16.mxu0 0
      %903 = vmatmul.mubr.bf16.gmra.mrb[0].mxu0 %v649
      %v904 = vpop.f32.mrb[0].mxu0
      %v905 = vadd.f32 0.0, %v904
      %v906 = vpop.f32.mrb[0].mxu0
      %v907 = vpop.f32.mrb[0].mxu0
      %v908 = vadd.f32 0.0, %v907
      %v909 = vpop.f32.mrb[0].mxu0
      %910 = vmatprep.mubr.bf16.mxu0 0
      %911 = vmatmul.mubr.bf16.gmra.mrb[0].mxu0 %v652
      %v912 = vpop.f32.mrb[0].mxu0
      %v913 = vadd.f32 0.0, %v912
      %v914 = vpop.f32.mrb[0].mxu0
      %v915 = vpop.f32.mrb[0].mxu0
      %v916 = vadd.f32 0.0, %v915
      %v917 = vpop.f32.mrb[0].mxu0
      %918 = vmatprep.mubr.bf16.mxu0 0
      %919 = vmatmul.mubr.bf16.gmra.mrb[0].mxu0 %v655
      %v920 = vpop.f32.mrb[0].mxu0
      %v921 = vadd.f32 0.0, %v920
      %v922 = vpop.f32.mrb[0].mxu0
      %v923 = vpop.f32.mrb[0].mxu0
      %v924 = vadd.f32 0.0, %v923
      %v925 = vpop.f32.mrb[0].mxu0
      %926 = vmatprep.mubr.bf16.mxu0 0
      %927 = vmatmul.mubr.bf16.gmra.mrb[0].mxu0 %v658
      %v928 = vpop.f32.mrb[0].mxu0
      %v929 = vadd.f32 0.0, %v928
      %v930 = vpop.f32.mrb[0].mxu0
      %v931 = vpop.f32.mrb[0].mxu0
      %v932 = vadd.f32 0.0, %v931
      %v933 = vpop.f32.mrb[0].mxu0
      %934 = vmatprep.mubr.bf16.mxu0 0
      %935 = vmatmul.mubr.bf16.gmra.mrb[0].mxu0 %v661
      %v936 = vpop.f32.mrb[0].mxu0
      %v937 = vadd.f32 0.0, %v936
      %v938 = vpop.f32.mrb[0].mxu0
      %v939 = vpop.f32.mrb[0].mxu0
      %v940 = vadd.f32 0.0, %v939
      %v941 = vpop.f32.mrb[0].mxu0
      %942 = vmatprep.mubr.bf16.mxu0 0
      %943 = vmatmul.mubr.bf16.gmra.mrb[0].mxu0 %v664
      %v944 = vpop.f32.mrb[0].mxu0
      %v945 = vadd.f32 0.0, %v944
      %v946 = vpop.f32.mrb[0].mxu0
      %v947 = vpop.f32.mrb[0].mxu0
      %v948 = vadd.f32 0.0, %v947
      %v949 = vpop.f32.mrb[0].mxu0
      %950 = vmatprep.mubr.bf16.mxu0 0
      %951 = vmatmul.mubr.bf16.gmra.mrb[0].mxu0 %v667
      %v952 = vpop.f32.mrb[0].mxu0
      %v953 = vadd.f32 0.0, %v952
      %v954 = vpop.f32.mrb[0].mxu0
      %v955 = vpop.f32.mrb[0].mxu0
      %v956 = vadd.f32 0.0, %v955
      %v957 = vpop.f32.mrb[0].mxu0
      %958 = vmatprep.mubr.bf16.mxu0 0
      %959 = vmatmul.mubr.bf16.gmra.mrb[0].mxu0 %v670
      %v960 = vpop.f32.mrb[0].mxu0
      %v961 = vadd.f32 0.0, %v960
      %v962 = vpop.f32.mrb[0].mxu0
      %v963 = vpop.f32.mrb[0].mxu0
      %v964 = vadd.f32 0.0, %v963
      %v965 = vpop.f32.mrb[0].mxu0
      %966 = vmatprep.mubr.bf16.mxu0 0
      %967 = vmatmul.mubr.bf16.gmra.mrb[0].mxu0 %v673
      %v968 = vpop.f32.mrb[0].mxu0
      %v969 = vadd.f32 0.0, %v968
      %v970 = vpop.f32.mrb[0].mxu0
      %v971 = vpop.f32.mrb[0].mxu0
      %v972 = vadd.f32 0.0, %v971
      %v973 = vpop.f32.mrb[0].mxu0
      %974 = vmatprep.mubr.bf16.mxu0 0
      %975 = vmatmul.mubr.bf16.gmra.mrb[0].mxu0 %v676
      %v976 = vpop.f32.mrb[0].mxu0
      %v977 = vadd.f32 0.0, %v976
      %v978 = vpop.f32.mrb[0].mxu0
      %v979 = vpop.f32.mrb[0].mxu0
      %v980 = vadd.f32 0.0, %v979
      %v981 = vpop.f32.mrb[0].mxu0
      %982 = vmatprep.mubr.bf16.mxu0 0
      %983 = vmatmul.mubr.bf16.gmra.mrb[0].mxu0 %v679
      %v984 = vpop.f32.mrb[0].mxu0
      %v985 = vadd.f32 0.0, %v984
      %v986 = vpop.f32.mrb[0].mxu0
      %v987 = vpop.f32.mrb[0].mxu0
      %v988 = vadd.f32 0.0, %v987
      %v989 = vpop.f32.mrb[0].mxu0
      %990 = vmatprep.mubr.bf16.mxu0 0
      %991 = vmatmul.mubr.bf16.gmra.mrb[0].mxu0 %v682
      %v992 = vpop.f32.mrb[0].mxu0
      %v993 = vadd.f32 0.0, %v992
      %v994 = vpop.f32.mrb[0].mxu0
      %v995 = vpop.f32.mrb[0].mxu0
      %v996 = vadd.f32 0.0, %v995
      %v997 = vpop.f32.mrb[0].mxu0
      %998 = vmatprep.mubr.bf16.mxu0 0
      %999 = vmatmul.mubr.bf16.gmra.mrb[0].mxu0 %v685
      %v1000 = vpop.f32.mrb[0].mxu0
      %v1001 = vadd.f32 0.0, %v1000
      %v1002 = vpop.f32.mrb[0].mxu0
      %v1003 = vpop.f32.mrb[0].mxu0
      %v1004 = vadd.f32 0.0, %v1003
      %v1005 = vpop.f32.mrb[0].mxu0
      %1006 = vmatprep.mubr.bf16.mxu0 0
      %1007 = vmatmul.mubr.bf16.gmra.mrb[0].mxu0 %v688
      %v1008 = vpop.f32.mrb[0].mxu0
      %v1009 = vadd.f32 0.0, %v1008
      %v1010 = vpop.f32.mrb[0].mxu0
      %v1011 = vpop.f32.mrb[0].mxu0
      %v1012 = vadd.f32 0.0, %v1011
      %v1013 = vpop.f32.mrb[0].mxu0
      %1014 = vdwg.mxu0
      %v1016 = vsel %vm581, %v538, 0
      %v1019 = vsel %vm581, %v539, 0
      %v1022 = vsel %vm690, %v578, 0
      %1024 = vmatprep.subr.bf16.mxu0 0
      %1025 = vmatpush1.bf16.msra.mxu0 %v1022
      %1026 = vmatprep.subr.bf16.mxu0 0
      %1027 = vmatpush1.bf16.msra.mxu0 0
      %1028 = vmatprep.subr.bf16.mxu0 0
      %1029 = vmatpush1.bf16.msra.mxu0 0
      %1030 = vmatprep.subr.bf16.mxu0 0
      %1031 = vmatpush1.bf16.msra.mxu0 0
      %1032 = vmatprep.subr.bf16.mxu0 0
      %1033 = vmatpush1.bf16.msra.mxu0 0
      %1034 = vmatprep.subr.bf16.mxu0 0
      %1035 = vmatpush1.bf16.msra.mxu0 0
      %1036 = vmatprep.subr.bf16.mxu0 0
      %1037 = vmatpush1.bf16.msra.mxu0 0
      %1038 = vmatprep.subr.bf16.mxu0 0
      %1039 = vmatpush1.bf16.msra.mxu0 0
      %1040 = vmatprep.subr.bf16.mxu0 0
      %1041 = vmatpush1.bf16.msra.mxu0 0
      %1042 = vmatprep.subr.bf16.mxu0 0
      %1043 = vmatpush1.bf16.msra.mxu0 0
      %1044 = vmatprep.subr.bf16.mxu0 0
      %1045 = vmatpush1.bf16.msra.mxu0 0
      %1046 = vmatprep.subr.bf16.mxu0 0
      %1047 = vmatpush1.bf16.msra.mxu0 0
      %1048 = vmatprep.subr.bf16.mxu0 0
      %1049 = vmatpush1.bf16.msra.mxu0 0
      %1050 = vmatprep.subr.bf16.mxu0 0
      %1051 = vmatpush1.bf16.msra.mxu0 0
      %1052 = vmatprep.subr.bf16.mxu0 0
      %1053 = vmatpush1.bf16.msra.mxu0 0
      %1054 = vmatprep.subr.bf16.mxu0 0
      %1055 = vmatpush1.bf16.msra.mxu0 0
      %1056 = vmatprep.mubr.bf16.mxu0 0
      %1057 = vmatmul.mubr.bf16.gmra.mrb[0].mxu0 %v1016
      %v1058 = vpop.f32.mrb[0].mxu0
      %v1059 = vadd.f32 %v729, %v1058
      %v1060 = vpop.f32.mrb[0].mxu0
      %v1061 = vpop.f32.mrb[0].mxu0
      %v1062 = vadd.f32 %v732, %v1061
      %v1063 = vpop.f32.mrb[0].mxu0
      %1064 = vmatprep.mubr.bf16.mxu0 0
      %1065 = vmatmul.mubr.bf16.gmra.mrb[0].mxu0 %v1019
      %v1066 = vpop.f32.mrb[0].mxu0
      %v1067 = vadd.f32 %v737, %v1066
      %v1068 = vpop.f32.mrb[0].mxu0
      %v1069 = vpop.f32.mrb[0].mxu0
      %v1070 = vadd.f32 %v740, %v1069
      %v1071 = vpop.f32.mrb[0].mxu0
      %1072 = vmatprep.mubr.bf16.mxu0 0
      %1073 = vmatmul.mubr.bf16.gmra.mrb[0].mxu0 %v583
      %v1074 = vpop.f32.mrb[0].mxu0
      %v1075 = vadd.f32 %v745, %v1074
      %v1076 = vpop.f32.mrb[0].mxu0
      %v1077 = vpop.f32.mrb[0].mxu0
      %v1078 = vadd.f32 %v748, %v1077
      %v1079 = vpop.f32.mrb[0].mxu0
      %1080 = vmatprep.mubr.bf16.mxu0 0
      %1081 = vmatmul.mubr.bf16.gmra.mrb[0].mxu0 %v586
      %v1082 = vpop.f32.mrb[0].mxu0
      %v1083 = vadd.f32 %v753, %v1082
      %v1084 = vpop.f32.mrb[0].mxu0
      %v1085 = vpop.f32.mrb[0].mxu0
      %v1086 = vadd.f32 %v756, %v1085
      %v1087 = vpop.f32.mrb[0].mxu0
      %1088 = vmatprep.mubr.bf16.mxu0 0
      %1089 = vmatmul.mubr.bf16.gmra.mrb[0].mxu0 %v589
      %v1090 = vpop.f32.mrb[0].mxu0
      %v1091 = vadd.f32 %v761, %v1090
      %v1092 = vpop.f32.mrb[0].mxu0
      %v1093 = vpop.f32.mrb[0].mxu0
      %v1094 = vadd.f32 %v764, %v1093
      %v1095 = vpop.f32.mrb[0].mxu0
      %1096 = vmatprep.mubr.bf16.mxu0 0
      %1097 = vmatmul.mubr.bf16.gmra.mrb[0].mxu0 %v592
      %v1098 = vpop.f32.mrb[0].mxu0
      %v1099 = vadd.f32 %v769, %v1098
      %v1100 = vpop.f32.mrb[0].mxu0
      %v1101 = vpop.f32.mrb[0].mxu0
      %v1102 = vadd.f32 %v772, %v1101
      %v1103 = vpop.f32.mrb[0].mxu0
      %1104 = vmatprep.mubr.bf16.mxu0 0
      %1105 = vmatmul.mubr.bf16.gmra.mrb[0].mxu0 %v595
      %v1106 = vpop.f32.mrb[0].mxu0
      %v1107 = vadd.f32 %v777, %v1106
      %v1108 = vpop.f32.mrb[0].mxu0
      %v1109 = vpop.f32.mrb[0].mxu0
      %v1110 = vadd.f32 %v780, %v1109
      %v1111 = vpop.f32.mrb[0].mxu0
      %1112 = vmatprep.mubr.bf16.mxu0 0
      %1113 = vmatmul.mubr.bf16.gmra.mrb[0].mxu0 %v598
      %v1114 = vpop.f32.mrb[0].mxu0
      %v1115 = vadd.f32 %v785, %v1114
      %v1116 = vpop.f32.mrb[0].mxu0
      %v1117 = vpop.f32.mrb[0].mxu0
      %v1118 = vadd.f32 %v788, %v1117
      %v1119 = vpop.f32.mrb[0].mxu0
      %1120 = vmatprep.mubr.bf16.mxu0 0
      %1121 = vmatmul.mubr.bf16.gmra.mrb[0].mxu0 %v601
      %v1122 = vpop.f32.mrb[0].mxu0
      %v1123 = vadd.f32 %v793, %v1122
      %v1124 = vpop.f32.mrb[0].mxu0
      %v1125 = vpop.f32.mrb[0].mxu0
      %v1126 = vadd.f32 %v796, %v1125
      %v1127 = vpop.f32.mrb[0].mxu0
      %1128 = vmatprep.mubr.bf16.mxu0 0
      %1129 = vmatmul.mubr.bf16.gmra.mrb[0].mxu0 %v604
      %v1130 = vpop.f32.mrb[0].mxu0
      %v1131 = vadd.f32 %v801, %v1130
      %v1132 = vpop.f32.mrb[0].mxu0
      %v1133 = vpop.f32.mrb[0].mxu0
      %v1134 = vadd.f32 %v804, %v1133
      %v1135 = vpop.f32.mrb[0].mxu0
      %1136 = vmatprep.mubr.bf16.mxu0 0
      %1137 = vmatmul.mubr.bf16.gmra.mrb[0].mxu0 %v607
      %v1138 = vpop.f32.mrb[0].mxu0
      %v1139 = vadd.f32 %v809, %v1138
      %v1140 = vpop.f32.mrb[0].mxu0
      %v1141 = vpop.f32.mrb[0].mxu0
      %v1142 = vadd.f32 %v812, %v1141
      %v1143 = vpop.f32.mrb[0].mxu0
      %1144 = vmatprep.mubr.bf16.mxu0 0
      %1145 = vmatmul.mubr.bf16.gmra.mrb[0].mxu0 %v610
      %v1146 = vpop.f32.mrb[0].mxu0
      %v1147 = vadd.f32 %v817, %v1146
      %v1148 = vpop.f32.mrb[0].mxu0
      %v1149 = vpop.f32.mrb[0].mxu0
      %v1150 = vadd.f32 %v820, %v1149
      %v1151 = vpop.f32.mrb[0].mxu0
      %1152 = vmatprep.mubr.bf16.mxu0 0
      %1153 = vmatmul.mubr.bf16.gmra.mrb[0].mxu0 %v613
      %v1154 = vpop.f32.mrb[0].mxu0
      %v1155 = vadd.f32 %v825, %v1154
      %v1156 = vpop.f32.mrb[0].mxu0
      %v1157 = vpop.f32.mrb[0].mxu0
      %v1158 = vadd.f32 %v828, %v1157
      %v1159 = vpop.f32.mrb[0].mxu0
      %1160 = vmatprep.mubr.bf16.mxu0 0
      %1161 = vmatmul.mubr.bf16.gmra.mrb[0].mxu0 %v616
      %v1162 = vpop.f32.mrb[0].mxu0
      %v1163 = vadd.f32 %v833, %v1162
      %v1164 = vpop.f32.mrb[0].mxu0
      %v1165 = vpop.f32.mrb[0].mxu0
      %v1166 = vadd.f32 %v836, %v1165
      %v1167 = vpop.f32.mrb[0].mxu0
      %1168 = vmatprep.mubr.bf16.mxu0 0
      %1169 = vmatmul.mubr.bf16.gmra.mrb[0].mxu0 %v619
      %v1170 = vpop.f32.mrb[0].mxu0
      %v1171 = vadd.f32 %v841, %v1170
      %v1172 = vpop.f32.mrb[0].mxu0
      %v1173 = vpop.f32.mrb[0].mxu0
      %v1174 = vadd.f32 %v844, %v1173
      %v1175 = vpop.f32.mrb[0].mxu0
      %1176 = vmatprep.mubr.bf16.mxu0 0
      %1177 = vmatmul.mubr.bf16.gmra.mrb[0].mxu0 %v622
      %v1178 = vpop.f32.mrb[0].mxu0
      %v1179 = vadd.f32 %v849, %v1178
      %v1180 = vpop.f32.mrb[0].mxu0
      %v1181 = vpop.f32.mrb[0].mxu0
      %v1182 = vadd.f32 %v852, %v1181
      %v1183 = vpop.f32.mrb[0].mxu0
      %1184 = vmatprep.mubr.bf16.mxu0 0
      %1185 = vmatmul.mubr.bf16.gmra.mrb[0].mxu0 %v625
      %v1186 = vpop.f32.mrb[0].mxu0
      %v1187 = vadd.f32 %v857, %v1186
      %v1188 = vpop.f32.mrb[0].mxu0
      %v1189 = vpop.f32.mrb[0].mxu0
      %v1190 = vadd.f32 %v860, %v1189
      %v1191 = vpop.f32.mrb[0].mxu0
      %1192 = vmatprep.mubr.bf16.mxu0 0
      %1193 = vmatmul.mubr.bf16.gmra.mrb[0].mxu0 %v628
      %v1194 = vpop.f32.mrb[0].mxu0
      %v1195 = vadd.f32 %v865, %v1194
      %v1196 = vpop.f32.mrb[0].mxu0
      %v1197 = vpop.f32.mrb[0].mxu0
      %v1198 = vadd.f32 %v868, %v1197
      %v1199 = vpop.f32.mrb[0].mxu0
      %1200 = vmatprep.mubr.bf16.mxu0 0
      %1201 = vmatmul.mubr.bf16.gmra.mrb[0].mxu0 %v631
      %v1202 = vpop.f32.mrb[0].mxu0
      %v1203 = vadd.f32 %v873, %v1202
      %v1204 = vpop.f32.mrb[0].mxu0
      %v1205 = vpop.f32.mrb[0].mxu0
      %v1206 = vadd.f32 %v876, %v1205
      %v1207 = vpop.f32.mrb[0].mxu0
      %1208 = vmatprep.mubr.bf16.mxu0 0
      %1209 = vmatmul.mubr.bf16.gmra.mrb[0].mxu0 %v634
      %v1210 = vpop.f32.mrb[0].mxu0
      %v1211 = vadd.f32 %v881, %v1210
      %v1212 = vpop.f32.mrb[0].mxu0
      %v1213 = vpop.f32.mrb[0].mxu0
      %v1214 = vadd.f32 %v884, %v1213
      %v1215 = vpop.f32.mrb[0].mxu0
      %1216 = vmatprep.mubr.bf16.mxu0 0
      %1217 = vmatmul.mubr.bf16.gmra.mrb[0].mxu0 %v637
      %v1218 = vpop.f32.mrb[0].mxu0
      %v1219 = vadd.f32 %v889, %v1218
      %v1220 = vpop.f32.mrb[0].mxu0
      %v1221 = vpop.f32.mrb[0].mxu0
      %v1222 = vadd.f32 %v892, %v1221
      %v1223 = vpop.f32.mrb[0].mxu0
      %1224 = vmatprep.mubr.bf16.mxu0 0
      %1225 = vmatmul.mubr.bf16.gmra.mrb[0].mxu0 %v640
      %v1226 = vpop.f32.mrb[0].mxu0
      %v1227 = vadd.f32 %v897, %v1226
      %v1228 = vpop.f32.mrb[0].mxu0
      %v1229 = vpop.f32.mrb[0].mxu0
      %v1230 = vadd.f32 %v900, %v1229
      %v1231 = vpop.f32.mrb[0].mxu0
      %1232 = vmatprep.mubr.bf16.mxu0 0
      %1233 = vmatmul.mubr.bf16.gmra.mrb[0].mxu0 %v643
      %v1234 = vpop.f32.mrb[0].mxu0
      %v1235 = vadd.f32 %v905, %v1234
      %v1236 = vpop.f32.mrb[0].mxu0
      %v1237 = vpop.f32.mrb[0].mxu0
      %v1238 = vadd.f32 %v908, %v1237
      %v1239 = vpop.f32.mrb[0].mxu0
      %1240 = vmatprep.mubr.bf16.mxu0 0
      %1241 = vmatmul.mubr.bf16.gmra.mrb[0].mxu0 %v646
      %v1242 = vpop.f32.mrb[0].mxu0
      %v1243 = vadd.f32 %v913, %v1242
      %v1244 = vpop.f32.mrb[0].mxu0
      %v1245 = vpop.f32.mrb[0].mxu0
      %v1246 = vadd.f32 %v916, %v1245
      %v1247 = vpop.f32.mrb[0].mxu0
      %1248 = vmatprep.mubr.bf16.mxu0 0
      %1249 = vmatmul.mubr.bf16.gmra.mrb[0].mxu0 %v649
      %v1250 = vpop.f32.mrb[0].mxu0
      %v1251 = vadd.f32 %v921, %v1250
      %v1252 = vpop.f32.mrb[0].mxu0
      %v1253 = vpop.f32.mrb[0].mxu0
      %v1254 = vadd.f32 %v924, %v1253
      %v1255 = vpop.f32.mrb[0].mxu0
      %1256 = vmatprep.mubr.bf16.mxu0 0
      %1257 = vmatmul.mubr.bf16.gmra.mrb[0].mxu0 %v652
      %v1258 = vpop.f32.mrb[0].mxu0
      %v1259 = vadd.f32 %v929, %v1258
      %v1260 = vpop.f32.mrb[0].mxu0
      %v1261 = vpop.f32.mrb[0].mxu0
      %v1262 = vadd.f32 %v932, %v1261
      %v1263 = vpop.f32.mrb[0].mxu0
      %1264 = vmatprep.mubr.bf16.mxu0 0
      %1265 = vmatmul.mubr.bf16.gmra.mrb[0].mxu0 %v655
      %v1266 = vpop.f32.mrb[0].mxu0
      %v1267 = vadd.f32 %v937, %v1266
      %v1268 = vpop.f32.mrb[0].mxu0
      %v1269 = vpop.f32.mrb[0].mxu0
      %v1270 = vadd.f32 %v940, %v1269
      %v1271 = vpop.f32.mrb[0].mxu0
      %1272 = vmatprep.mubr.bf16.mxu0 0
      %1273 = vmatmul.mubr.bf16.gmra.mrb[0].mxu0 %v658
      %v1274 = vpop.f32.mrb[0].mxu0
      %v1275 = vadd.f32 %v945, %v1274
      %v1276 = vpop.f32.mrb[0].mxu0
      %v1277 = vpop.f32.mrb[0].mxu0
      %v1278 = vadd.f32 %v948, %v1277
      %v1279 = vpop.f32.mrb[0].mxu0
      %1280 = vmatprep.mubr.bf16.mxu0 0
      %1281 = vmatmul.mubr.bf16.gmra.mrb[0].mxu0 %v661
      %v1282 = vpop.f32.mrb[0].mxu0
      %v1283 = vadd.f32 %v953, %v1282
      %v1284 = vpop.f32.mrb[0].mxu0
      %v1285 = vpop.f32.mrb[0].mxu0
      %v1286 = vadd.f32 %v956, %v1285
      %v1287 = vpop.f32.mrb[0].mxu0
      %1288 = vmatprep.mubr.bf16.mxu0 0
      %1289 = vmatmul.mubr.bf16.gmra.mrb[0].mxu0 %v664
      %v1290 = vpop.f32.mrb[0].mxu0
      %v1291 = vadd.f32 %v961, %v1290
      %v1292 = vpop.f32.mrb[0].mxu0
      %v1293 = vpop.f32.mrb[0].mxu0
      %v1294 = vadd.f32 %v964, %v1293
      %v1295 = vpop.f32.mrb[0].mxu0
      %1296 = vmatprep.mubr.bf16.mxu0 0
      %1297 = vmatmul.mubr.bf16.gmra.mrb[0].mxu0 %v667
      %v1298 = vpop.f32.mrb[0].mxu0
      %v1299 = vadd.f32 %v969, %v1298
      %v1300 = vpop.f32.mrb[0].mxu0
      %v1301 = vpop.f32.mrb[0].mxu0
      %v1302 = vadd.f32 %v972, %v1301
      %v1303 = vpop.f32.mrb[0].mxu0
      %1304 = vmatprep.mubr.bf16.mxu0 0
      %1305 = vmatmul.mubr.bf16.gmra.mrb[0].mxu0 %v670
      %v1306 = vpop.f32.mrb[0].mxu0
      %v1307 = vadd.f32 %v977, %v1306
      %v1308 = vpop.f32.mrb[0].mxu0
      %v1309 = vpop.f32.mrb[0].mxu0
      %v1310 = vadd.f32 %v980, %v1309
      %v1311 = vpop.f32.mrb[0].mxu0
      %1312 = vmatprep.mubr.bf16.mxu0 0
      %1313 = vmatmul.mubr.bf16.gmra.mrb[0].mxu0 %v673
      %v1314 = vpop.f32.mrb[0].mxu0
      %v1315 = vadd.f32 %v985, %v1314
      %v1316 = vpop.f32.mrb[0].mxu0
      %v1317 = vpop.f32.mrb[0].mxu0
      %v1318 = vadd.f32 %v988, %v1317
      %v1319 = vpop.f32.mrb[0].mxu0
      %1320 = vmatprep.mubr.bf16.mxu0 0
      %1321 = vmatmul.mubr.bf16.gmra.mrb[0].mxu0 %v676
      %v1322 = vpop.f32.mrb[0].mxu0
      %v1323 = vadd.f32 %v993, %v1322
      %v1324 = vpop.f32.mrb[0].mxu0
      %v1325 = vpop.f32.mrb[0].mxu0
      %v1326 = vadd.f32 %v996, %v1325
      %v1327 = vpop.f32.mrb[0].mxu0
      %1328 = vmatprep.mubr.bf16.mxu0 0
      %1329 = vmatmul.mubr.bf16.gmra.mrb[0].mxu0 %v679
      %v1330 = vpop.f32.mrb[0].mxu0
      %v1331 = vadd.f32 %v1001, %v1330
      %v1332 = vpop.f32.mrb[0].mxu0
      %v1333 = vpop.f32.mrb[0].mxu0
      %v1334 = vadd.f32 %v1004, %v1333
      %v1335 = vpop.f32.mrb[0].mxu0
      %1336 = vmatprep.mubr.bf16.mxu0 0
      %1337 = vmatmul.mubr.bf16.gmra.mrb[0].mxu0 %v682
      %v1338 = vpop.f32.mrb[0].mxu0
      %v1339 = vadd.f32 %v1009, %v1338
      %v1340 = vpop.f32.mrb[0].mxu0
      %v1341 = vpop.f32.mrb[0].mxu0
      %v1342 = vadd.f32 %v1012, %v1341
      %v1343 = vpop.f32.mrb[0].mxu0
      %1344 = vdwg.mxu0
      %s1345 = scalar_lea.vmem %s1, 12
      %v1346 = vld [vmem:[%s1345] sm:$0x3]
      %v1348 = vsel %vm581, %v576, 0
      %v1351 = vsel %vm581, %v577, 0
      %v1354 = vsel %vm690, %v1346, 0
      %1356 = vmatprep.subr.bf16.mxu0 0
      %1357 = vmatpush1.bf16.msra.mxu0 %v1354
      %1358 = vmatprep.subr.bf16.mxu0 0
      %1359 = vmatpush1.bf16.msra.mxu0 0
      %1360 = vmatprep.subr.bf16.mxu0 0
      %1361 = vmatpush1.bf16.msra.mxu0 0
      %1362 = vmatprep.subr.bf16.mxu0 0
      %1363 = vmatpush1.bf16.msra.mxu0 0
      %1364 = vmatprep.subr.bf16.mxu0 0
      %1365 = vmatpush1.bf16.msra.mxu0 0
      %1366 = vmatprep.subr.bf16.mxu0 0
      %1367 = vmatpush1.bf16.msra.mxu0 0
      %1368 = vmatprep.subr.bf16.mxu0 0
      %1369 = vmatpush1.bf16.msra.mxu0 0
      %1370 = vmatprep.subr.bf16.mxu0 0
      %1371 = vmatpush1.bf16.msra.mxu0 0
      %1372 = vmatprep.subr.bf16.mxu0 0
      %1373 = vmatpush1.bf16.msra.mxu0 0
      %1374 = vmatprep.subr.bf16.mxu0 0
      %1375 = vmatpush1.bf16.msra.mxu0 0
      %1376 = vmatprep.subr.bf16.mxu0 0
      %1377 = vmatpush1.bf16.msra.mxu0 0
      %1378 = vmatprep.subr.bf16.mxu0 0
      %1379 = vmatpush1.bf16.msra.mxu0 0
      %1380 = vmatprep.subr.bf16.mxu0 0
      %1381 = vmatpush1.bf16.msra.mxu0 0
      %1382 = vmatprep.subr.bf16.mxu0 0
      %1383 = vmatpush1.bf16.msra.mxu0 0
      %1384 = vmatprep.subr.bf16.mxu0 0
      %1385 = vmatpush1.bf16.msra.mxu0 0
      %1386 = vmatprep.subr.bf16.mxu0 0
      %1387 = vmatpush1.bf16.msra.mxu0 0
      %1388 = vmatprep.mubr.bf16.mxu0 0
      %1389 = vmatmul.mubr.bf16.gmra.mrb[0].mxu0 %v589
      %v1390 = vpop.f32.mrb[0].mxu0
      %v1391 = vadd.f32 0.0, %v1390
      %v1392 = vpop.f32.mrb[0].mxu0
      %v1393 = vpop.f32.mrb[0].mxu0
      %v1394 = vadd.f32 0.0, %v1393
      %v1395 = vpop.f32.mrb[0].mxu0
      %1396 = vmatprep.mubr.bf16.mxu0 0
      %1397 = vmatmul.mubr.bf16.gmra.mrb[0].mxu0 %v592
      %v1398 = vpop.f32.mrb[0].mxu0
      %v1399 = vadd.f32 0.0, %v1398
      %v1400 = vpop.f32.mrb[0].mxu0
      %v1401 = vpop.f32.mrb[0].mxu0
      %v1402 = vadd.f32 0.0, %v1401
      %v1403 = vpop.f32.mrb[0].mxu0
      %1404 = vmatprep.mubr.bf16.mxu0 0
      %1405 = vmatmul.mubr.bf16.gmra.mrb[0].mxu0 %v595
      %v1406 = vpop.f32.mrb[0].mxu0
      %v1407 = vadd.f32 0.0, %v1406
      %v1408 = vpop.f32.mrb[0].mxu0
      %v1409 = vpop.f32.mrb[0].mxu0
      %v1410 = vadd.f32 0.0, %v1409
      %v1411 = vpop.f32.mrb[0].mxu0
      %1412 = vmatprep.mubr.bf16.mxu0 0
      %1413 = vmatmul.mubr.bf16.gmra.mrb[0].mxu0 %v598
      %v1414 = vpop.f32.mrb[0].mxu0
      %v1415 = vadd.f32 0.0, %v1414
      %v1416 = vpop.f32.mrb[0].mxu0
      %v1417 = vpop.f32.mrb[0].mxu0
      %v1418 = vadd.f32 0.0, %v1417
      %v1419 = vpop.f32.mrb[0].mxu0
      %1420 = vmatprep.mubr.bf16.mxu0 0
      %1421 = vmatmul.mubr.bf16.gmra.mrb[0].mxu0 %v601
      %v1422 = vpop.f32.mrb[0].mxu0
      %v1423 = vadd.f32 0.0, %v1422
      %v1424 = vpop.f32.mrb[0].mxu0
      %v1425 = vpop.f32.mrb[0].mxu0
      %v1426 = vadd.f32 0.0, %v1425
      %v1427 = vpop.f32.mrb[0].mxu0
      %1428 = vmatprep.mubr.bf16.mxu0 0
      %1429 = vmatmul.mubr.bf16.gmra.mrb[0].mxu0 %v604
      %v1430 = vpop.f32.mrb[0].mxu0
      %v1431 = vadd.f32 0.0, %v1430
      %v1432 = vpop.f32.mrb[0].mxu0
      %v1433 = vpop.f32.mrb[0].mxu0
      %v1434 = vadd.f32 0.0, %v1433
      %v1435 = vpop.f32.mrb[0].mxu0
      %1436 = vmatprep.mubr.bf16.mxu0 0
      %1437 = vmatmul.mubr.bf16.gmra.mrb[0].mxu0 %v607
      %v1438 = vpop.f32.mrb[0].mxu0
      %v1439 = vadd.f32 0.0, %v1438
      %v1440 = vpop.f32.mrb[0].mxu0
      %v1441 = vpop.f32.mrb[0].mxu0
      %v1442 = vadd.f32 0.0, %v1441
      %v1443 = vpop.f32.mrb[0].mxu0
      %1444 = vmatprep.mubr.bf16.mxu0 0
      %1445 = vmatmul.mubr.bf16.gmra.mrb[0].mxu0 %v610
      %v1446 = vpop.f32.mrb[0].mxu0
      %v1447 = vadd.f32 0.0, %v1446
      %v1448 = vpop.f32.mrb[0].mxu0
      %v1449 = vpop.f32.mrb[0].mxu0
      %v1450 = vadd.f32 0.0, %v1449
      %v1451 = vpop.f32.mrb[0].mxu0
      %1452 = vmatprep.mubr.bf16.mxu0 0
      %1453 = vmatmul.mubr.bf16.gmra.mrb[0].mxu0 %v613
      %v1454 = vpop.f32.mrb[0].mxu0
      %v1455 = vadd.f32 0.0, %v1454
      %v1456 = vpop.f32.mrb[0].mxu0
      %v1457 = vpop.f32.mrb[0].mxu0
      %v1458 = vadd.f32 0.0, %v1457
      %v1459 = vpop.f32.mrb[0].mxu0
      %1460 = vmatprep.mubr.bf16.mxu0 0
      %1461 = vmatmul.mubr.bf16.gmra.mrb[0].mxu0 %v616
      %v1462 = vpop.f32.mrb[0].mxu0
      %v1463 = vadd.f32 0.0, %v1462
      %v1464 = vpop.f32.mrb[0].mxu0
      %v1465 = vpop.f32.mrb[0].mxu0
      %v1466 = vadd.f32 0.0, %v1465
      %v1467 = vpop.f32.mrb[0].mxu0
      %1468 = vmatprep.mubr.bf16.mxu0 0
      %1469 = vmatmul.mubr.bf16.gmra.mrb[0].mxu0 %v619
      %v1470 = vpop.f32.mrb[0].mxu0
      %v1471 = vadd.f32 0.0, %v1470
      %v1472 = vpop.f32.mrb[0].mxu0
      %v1473 = vpop.f32.mrb[0].mxu0
      %v1474 = vadd.f32 0.0, %v1473
      %v1475 = vpop.f32.mrb[0].mxu0
      %1476 = vmatprep.mubr.bf16.mxu0 0
      %1477 = vmatmul.mubr.bf16.gmra.mrb[0].mxu0 %v622
      %v1478 = vpop.f32.mrb[0].mxu0
      %v1479 = vadd.f32 0.0, %v1478
      %v1480 = vpop.f32.mrb[0].mxu0
      %v1481 = vpop.f32.mrb[0].mxu0
      %v1482 = vadd.f32 0.0, %v1481
      %v1483 = vpop.f32.mrb[0].mxu0
      %1484 = vmatprep.mubr.bf16.mxu0 0
      %1485 = vmatmul.mubr.bf16.gmra.mrb[0].mxu0 %v625
      %v1486 = vpop.f32.mrb[0].mxu0
      %v1487 = vadd.f32 0.0, %v1486
      %v1488 = vpop.f32.mrb[0].mxu0
      %v1489 = vpop.f32.mrb[0].mxu0
      %v1490 = vadd.f32 0.0, %v1489
      %v1491 = vpop.f32.mrb[0].mxu0
      %1492 = vmatprep.mubr.bf16.mxu0 0
      %1493 = vmatmul.mubr.bf16.gmra.mrb[0].mxu0 %v628
      %v1494 = vpop.f32.mrb[0].mxu0
      %v1495 = vadd.f32 0.0, %v1494
      %v1496 = vpop.f32.mrb[0].mxu0
      %v1497 = vpop.f32.mrb[0].mxu0
      %v1498 = vadd.f32 0.0, %v1497
      %v1499 = vpop.f32.mrb[0].mxu0
      %1500 = vmatprep.mubr.bf16.mxu0 0
      %1501 = vmatmul.mubr.bf16.gmra.mrb[0].mxu0 %v631
      %v1502 = vpop.f32.mrb[0].mxu0
      %v1503 = vadd.f32 0.0, %v1502
      %v1504 = vpop.f32.mrb[0].mxu0
      %v1505 = vpop.f32.mrb[0].mxu0
      %v1506 = vadd.f32 0.0, %v1505
      %v1507 = vpop.f32.mrb[0].mxu0
      %1508 = vmatprep.mubr.bf16.mxu0 0
      %1509 = vmatmul.mubr.bf16.gmra.mrb[0].mxu0 %v634
      %v1510 = vpop.f32.mrb[0].mxu0
      %v1511 = vadd.f32 0.0, %v1510
      %v1512 = vpop.f32.mrb[0].mxu0
      %v1513 = vpop.f32.mrb[0].mxu0
      %v1514 = vadd.f32 0.0, %v1513
      %v1515 = vpop.f32.mrb[0].mxu0
      %1516 = vmatprep.mubr.bf16.mxu0 0
      %1517 = vmatmul.mubr.bf16.gmra.mrb[0].mxu0 %v637
      %v1518 = vpop.f32.mrb[0].mxu0
      %v1519 = vadd.f32 0.0, %v1518
      %v1520 = vpop.f32.mrb[0].mxu0
      %v1521 = vpop.f32.mrb[0].mxu0
      %v1522 = vadd.f32 0.0, %v1521
      %v1523 = vpop.f32.mrb[0].mxu0
      %1524 = vmatprep.mubr.bf16.mxu0 0
      %1525 = vmatmul.mubr.bf16.gmra.mrb[0].mxu0 %v640
      %v1526 = vpop.f32.mrb[0].mxu0
      %v1527 = vadd.f32 0.0, %v1526
      %v1528 = vpop.f32.mrb[0].mxu0
      %v1529 = vpop.f32.mrb[0].mxu0
      %v1530 = vadd.f32 0.0, %v1529
      %v1531 = vpop.f32.mrb[0].mxu0
      %1532 = vmatprep.mubr.bf16.mxu0 0
      %1533 = vmatmul.mubr.bf16.gmra.mrb[0].mxu0 %v643
      %v1534 = vpop.f32.mrb[0].mxu0
      %v1535 = vadd.f32 0.0, %v1534
      %v1536 = vpop.f32.mrb[0].mxu0
      %v1537 = vpop.f32.mrb[0].mxu0
      %v1538 = vadd.f32 0.0, %v1537
      %v1539 = vpop.f32.mrb[0].mxu0
      %1540 = vmatprep.mubr.bf16.mxu0 0
      %1541 = vmatmul.mubr.bf16.gmra.mrb[0].mxu0 %v646
      %v1542 = vpop.f32.mrb[0].mxu0
      %v1543 = vadd.f32 0.0, %v1542
      %v1544 = vpop.f32.mrb[0].mxu0
      %v1545 = vpop.f32.mrb[0].mxu0
      %v1546 = vadd.f32 0.0, %v1545
      %v1547 = vpop.f32.mrb[0].mxu0
      %1548 = vmatprep.mubr.bf16.mxu0 0
      %1549 = vmatmul.mubr.bf16.gmra.mrb[0].mxu0 %v649
      %v1550 = vpop.f32.mrb[0].mxu0
      %v1551 = vadd.f32 0.0, %v1550
      %v1552 = vpop.f32.mrb[0].mxu0
      %v1553 = vpop.f32.mrb[0].mxu0
      %v1554 = vadd.f32 0.0, %v1553
      %v1555 = vpop.f32.mrb[0].mxu0
      %1556 = vmatprep.mubr.bf16.mxu0 0
      %1557 = vmatmul.mubr.bf16.gmra.mrb[0].mxu0 %v652
      %v1558 = vpop.f32.mrb[0].mxu0
      %v1559 = vadd.f32 0.0, %v1558
      %v1560 = vpop.f32.mrb[0].mxu0
      %v1561 = vpop.f32.mrb[0].mxu0
      %v1562 = vadd.f32 0.0, %v1561
      %v1563 = vpop.f32.mrb[0].mxu0
      %1564 = vmatprep.mubr.bf16.mxu0 0
      %1565 = vmatmul.mubr.bf16.gmra.mrb[0].mxu0 %v655
      %v1566 = vpop.f32.mrb[0].mxu0
      %v1567 = vadd.f32 0.0, %v1566
      %v1568 = vpop.f32.mrb[0].mxu0
      %v1569 = vpop.f32.mrb[0].mxu0
      %v1570 = vadd.f32 0.0, %v1569
      %v1571 = vpop.f32.mrb[0].mxu0
      %1572 = vmatprep.mubr.bf16.mxu0 0
      %1573 = vmatmul.mubr.bf16.gmra.mrb[0].mxu0 %v658
      %v1574 = vpop.f32.mrb[0].mxu0
      %v1575 = vadd.f32 0.0, %v1574
      %v1576 = vpop.f32.mrb[0].mxu0
      %v1577 = vpop.f32.mrb[0].mxu0
      %v1578 = vadd.f32 0.0, %v1577
      %v1579 = vpop.f32.mrb[0].mxu0
      %1580 = vmatprep.mubr.bf16.mxu0 0
      %1581 = vmatmul.mubr.bf16.gmra.mrb[0].mxu0 %v661
      %v1582 = vpop.f32.mrb[0].mxu0
      %v1583 = vadd.f32 0.0, %v1582
      %v1584 = vpop.f32.mrb[0].mxu0
      %v1585 = vpop.f32.mrb[0].mxu0
      %v1586 = vadd.f32 0.0, %v1585
      %v1587 = vpop.f32.mrb[0].mxu0
      %1588 = vmatprep.mubr.bf16.mxu0 0
      %1589 = vmatmul.mubr.bf16.gmra.mrb[0].mxu0 %v664
      %v1590 = vpop.f32.mrb[0].mxu0
      %v1591 = vadd.f32 0.0, %v1590
      %v1592 = vpop.f32.mrb[0].mxu0
      %v1593 = vpop.f32.mrb[0].mxu0
      %v1594 = vadd.f32 0.0, %v1593
      %v1595 = vpop.f32.mrb[0].mxu0
      %1596 = vmatprep.mubr.bf16.mxu0 0
      %1597 = vmatmul.mubr.bf16.gmra.mrb[0].mxu0 %v667
      %v1598 = vpop.f32.mrb[0].mxu0
      %v1599 = vadd.f32 0.0, %v1598
      %v1600 = vpop.f32.mrb[0].mxu0
      %v1601 = vpop.f32.mrb[0].mxu0
      %v1602 = vadd.f32 0.0, %v1601
      %v1603 = vpop.f32.mrb[0].mxu0
      %1604 = vmatprep.mubr.bf16.mxu0 0
      %1605 = vmatmul.mubr.bf16.gmra.mrb[0].mxu0 %v670
      %v1606 = vpop.f32.mrb[0].mxu0
      %v1607 = vadd.f32 0.0, %v1606
      %v1608 = vpop.f32.mrb[0].mxu0
      %v1609 = vpop.f32.mrb[0].mxu0
      %v1610 = vadd.f32 0.0, %v1609
      %v1611 = vpop.f32.mrb[0].mxu0
      %1612 = vmatprep.mubr.bf16.mxu0 0
      %1613 = vmatmul.mubr.bf16.gmra.mrb[0].mxu0 %v673
      %v1614 = vpop.f32.mrb[0].mxu0
      %v1615 = vadd.f32 0.0, %v1614
      %v1616 = vpop.f32.mrb[0].mxu0
      %v1617 = vpop.f32.mrb[0].mxu0
      %v1618 = vadd.f32 0.0, %v1617
      %v1619 = vpop.f32.mrb[0].mxu0
      %1620 = vmatprep.mubr.bf16.mxu0 0
      %1621 = vmatmul.mubr.bf16.gmra.mrb[0].mxu0 %v676
      %v1622 = vpop.f32.mrb[0].mxu0
      %v1623 = vadd.f32 0.0, %v1622
      %v1624 = vpop.f32.mrb[0].mxu0
      %v1625 = vpop.f32.mrb[0].mxu0
      %v1626 = vadd.f32 0.0, %v1625
      %v1627 = vpop.f32.mrb[0].mxu0
      %1628 = vmatprep.mubr.bf16.mxu0 0
      %1629 = vmatmul.mubr.bf16.gmra.mrb[0].mxu0 %v679
      %v1630 = vpop.f32.mrb[0].mxu0
      %v1631 = vadd.f32 0.0, %v1630
      %v1632 = vpop.f32.mrb[0].mxu0
      %v1633 = vpop.f32.mrb[0].mxu0
      %v1634 = vadd.f32 0.0, %v1633
      %v1635 = vpop.f32.mrb[0].mxu0
      %1636 = vmatprep.mubr.bf16.mxu0 0
      %1637 = vmatmul.mubr.bf16.gmra.mrb[0].mxu0 %v682
      %v1638 = vpop.f32.mrb[0].mxu0
      %v1639 = vadd.f32 0.0, %v1638
      %v1640 = vpop.f32.mrb[0].mxu0
      %v1641 = vpop.f32.mrb[0].mxu0
      %v1642 = vadd.f32 0.0, %v1641
      %v1643 = vpop.f32.mrb[0].mxu0
      %1644 = vmatprep.mubr.bf16.mxu0 0
      %1645 = vmatmul.mubr.bf16.gmra.mrb[0].mxu0 %v685
      %v1646 = vpop.f32.mrb[0].mxu0
      %v1647 = vadd.f32 0.0, %v1646
      %v1648 = vpop.f32.mrb[0].mxu0
      %v1649 = vpop.f32.mrb[0].mxu0
      %v1650 = vadd.f32 0.0, %v1649
      %v1651 = vpop.f32.mrb[0].mxu0
      %1652 = vmatprep.mubr.bf16.mxu0 0
      %1653 = vmatmul.mubr.bf16.gmra.mrb[0].mxu0 %v688
      %v1654 = vpop.f32.mrb[0].mxu0
      %v1655 = vadd.f32 0.0, %v1654
      %v1656 = vpop.f32.mrb[0].mxu0
      %v1657 = vpop.f32.mrb[0].mxu0
      %v1658 = vadd.f32 0.0, %v1657
      %v1659 = vpop.f32.mrb[0].mxu0
      %1660 = vmatprep.mubr.bf16.mxu0 0
      %1661 = vmatmul.mubr.bf16.gmra.mrb[0].mxu0 %v1348
      %v1662 = vpop.f32.mrb[0].mxu0
      %v1663 = vadd.f32 0.0, %v1662
      %v1664 = vpop.f32.mrb[0].mxu0
      %v1665 = vpop.f32.mrb[0].mxu0
      %v1666 = vadd.f32 0.0, %v1665
      %v1667 = vpop.f32.mrb[0].mxu0
      %1668 = vmatprep.mubr.bf16.mxu0 0
      %1669 = vmatmul.mubr.bf16.gmra.mrb[0].mxu0 %v1351
      %v1670 = vpop.f32.mrb[0].mxu0
      %v1671 = vadd.f32 0.0, %v1670
      %v1672 = vpop.f32.mrb[0].mxu0
      %v1673 = vpop.f32.mrb[0].mxu0
      %v1674 = vadd.f32 0.0, %v1673
      %v1675 = vpop.f32.mrb[0].mxu0
      %1676 = vdwg.mxu0
      %v1677 = vadd.f32 %v1059, %v1391
      %v1678 = vadd.f32 %v1062, %v1394
      %v1679 = vadd.f32 %v1067, %v1399
      %v1680 = vadd.f32 %v1070, %v1402
      %v1681 = vadd.f32 %v1075, %v1407
      %v1682 = vadd.f32 %v1078, %v1410
      %v1683 = vadd.f32 %v1083, %v1415
      %v1684 = vadd.f32 %v1086, %v1418
      %v1685 = vadd.f32 %v1091, %v1423
      %v1686 = vadd.f32 %v1094, %v1426
      %v1687 = vadd.f32 %v1099, %v1431
      %v1688 = vadd.f32 %v1102, %v1434
      %v1689 = vadd.f32 %v1107, %v1439
      %v1690 = vadd.f32 %v1110, %v1442
      %v1691 = vadd.f32 %v1115, %v1447
      %v1692 = vadd.f32 %v1118, %v1450
      %v1693 = vadd.f32 %v1123, %v1455
      %v1694 = vadd.f32 %v1126, %v1458
      %v1695 = vadd.f32 %v1131, %v1463
      %v1696 = vadd.f32 %v1134, %v1466
      %v1697 = vadd.f32 %v1139, %v1471
      %v1698 = vadd.f32 %v1142, %v1474
      %v1699 = vadd.f32 %v1147, %v1479
      %v1700 = vadd.f32 %v1150, %v1482
      %v1701 = vadd.f32 %v1155, %v1487
      %v1702 = vadd.f32 %v1158, %v1490
      %v1703 = vadd.f32 %v1163, %v1495
      %v1704 = vadd.f32 %v1166, %v1498
      %v1705 = vadd.f32 %v1171, %v1503
      %v1706 = vadd.f32 %v1174, %v1506
      %v1707 = vadd.f32 %v1179, %v1511
      %v1708 = vadd.f32 %v1182, %v1514
      %v1709 = vadd.f32 %v1187, %v1519
      %v1710 = vadd.f32 %v1190, %v1522
      %v1711 = vadd.f32 %v1195, %v1527
      %v1712 = vadd.f32 %v1198, %v1530
      %v1713 = vadd.f32 %v1203, %v1535
      %v1714 = vadd.f32 %v1206, %v1538
      %v1715 = vadd.f32 %v1211, %v1543
      %v1716 = vadd.f32 %v1214, %v1546
      %v1717 = vadd.f32 %v1219, %v1551
      %v1718 = vadd.f32 %v1222, %v1554
      %v1719 = vadd.f32 %v1227, %v1559
      %v1720 = vadd.f32 %v1230, %v1562
      %v1721 = vadd.f32 %v1235, %v1567
      %v1722 = vadd.f32 %v1238, %v1570
      %v1723 = vadd.f32 %v1243, %v1575
      %v1724 = vadd.f32 %v1246, %v1578
      %v1725 = vadd.f32 %v1251, %v1583
      %v1726 = vadd.f32 %v1254, %v1586
      %v1727 = vadd.f32 %v1259, %v1591
      %v1728 = vadd.f32 %v1262, %v1594
      %v1729 = vadd.f32 %v1267, %v1599
      %v1730 = vadd.f32 %v1270, %v1602
      %v1731 = vadd.f32 %v1275, %v1607
      %v1732 = vadd.f32 %v1278, %v1610
      %v1733 = vadd.f32 %v1283, %v1615
      %v1734 = vadd.f32 %v1286, %v1618
      %v1735 = vadd.f32 %v1291, %v1623
      %v1736 = vadd.f32 %v1294, %v1626
      %v1737 = vadd.f32 %v1299, %v1631
      %v1738 = vadd.f32 %v1302, %v1634
      %v1739 = vadd.f32 %v1307, %v1639
      %v1740 = vadd.f32 %v1310, %v1642
      %v1741 = vadd.f32 %v1315, %v1647
      %v1742 = vadd.f32 %v1318, %v1650
      %v1743 = vadd.f32 %v1323, %v1655
      %v1744 = vadd.f32 %v1326, %v1658
      %v1745 = vadd.f32 %v1331, %v1663
      %v1746 = vadd.f32 %v1334, %v1666
      %v1747 = vadd.f32 %v1339, %v1671
      %v1748 = vadd.f32 %v1342, %v1674
      %v1749 = vpack.c.bf16 %v438, %v438
      %v1750 = vpack.c.bf16 %v443, %v443
      %v1751 = vpack.c.bf16 %v448, %v448
      %v1752 = vpack.c.bf16 %v453, %v453
      %v1753 = vpack.c.bf16 %v458, %v458
      %v1754 = vpack.c.bf16 %v463, %v463
      %v1755 = vpack.c.bf16 %v468, %v468
      %v1756 = vpack.c.bf16 %v473, %v473
      %v1757 = vpack.c.bf16 %v478, %v478
      %v1758 = vpack.c.bf16 %v483, %v483
      %v1759 = vpack.c.bf16 %v488, %v488
      %v1760 = vpack.c.bf16 %v493, %v493
      %v1761 = vpack.c.bf16 %v498, %v498
      %v1762 = vpack.c.bf16 %v503, %v503
      %v1763 = vpack.c.bf16 %v508, %v508
      %v1764 = vpack.c.bf16 %v513, %v513
      %v1765 = vpack.c.bf16 %v518, %v518
      %v1766 = vpack.c.bf16 %v523, %v523
      %v1767 = vpack.c.bf16 %v528, %v528
      %v1768 = vpack.c.bf16 %v533, %v533
      %vm1769 = vsmask.f32 7424
      %v1770 = vshrl.u32 %v538, 16
      %v1772 = vshll.u32 %v538, 16
      %v1774 = vrot.slane %v1772, 1
      %v1775 = vor.u32 %v1770, %v1774
      %v1776 = vshll.u32 %v539, 16
      %v1778 = vrot.slane %v1776, 1
      %v1779 = vsel %vm1769, %v1775, %v1778
      %v1780 = vshrl.u32 %v539, 16
      %v1782 = vor.u32 %v1780, %v1778
      %v1784 = vshll.u32 %v1749, 16
      %v1786 = vrot.slane %v1784, 1
      %v1787 = vsel %vm1769, %v1782, %v1786
      %v1788 = vshrl.u32 %v540, 16
      %v1790 = vshll.u32 %v540, 16
      %v1792 = vrot.slane %v1790, 1
      %v1793 = vor.u32 %v1788, %v1792
      %v1794 = vshll.u32 %v541, 16
      %v1796 = vrot.slane %v1794, 1
      %v1797 = vsel %vm1769, %v1793, %v1796
      %v1798 = vshrl.u32 %v541, 16
      %v1800 = vor.u32 %v1798, %v1796
      %v1802 = vshll.u32 %v1750, 16
      %v1804 = vrot.slane %v1802, 1
      %v1805 = vsel %vm1769, %v1800, %v1804
      %v1806 = vshrl.u32 %v542, 16
      %v1808 = vshll.u32 %v542, 16
      %v1810 = vrot.slane %v1808, 1
      %v1811 = vor.u32 %v1806, %v1810
      %v1812 = vshll.u32 %v543, 16
      %v1814 = vrot.slane %v1812, 1
      %v1815 = vsel %vm1769, %v1811, %v1814
      %v1816 = vshrl.u32 %v543, 16
      %v1818 = vor.u32 %v1816, %v1814
      %v1820 = vshll.u32 %v1751, 16
      %v1822 = vrot.slane %v1820, 1
      %v1823 = vsel %vm1769, %v1818, %v1822
      %v1824 = vshrl.u32 %v544, 16
      %v1826 = vshll.u32 %v544, 16
      %v1828 = vrot.slane %v1826, 1
      %v1829 = vor.u32 %v1824, %v1828
      %v1830 = vshll.u32 %v545, 16
      %v1832 = vrot.slane %v1830, 1
      %v1833 = vsel %vm1769, %v1829, %v1832
      %v1834 = vshrl.u32 %v545, 16
      %v1836 = vor.u32 %v1834, %v1832
      %v1838 = vshll.u32 %v1752, 16
      %v1840 = vrot.slane %v1838, 1
      %v1841 = vsel %vm1769, %v1836, %v1840
      %v1842 = vshrl.u32 %v546, 16
      %v1844 = vshll.u32 %v546, 16
      %v1846 = vrot.slane %v1844, 1
      %v1847 = vor.u32 %v1842, %v1846
      %v1848 = vshll.u32 %v547, 16
      %v1850 = vrot.slane %v1848, 1
      %v1851 = vsel %vm1769, %v1847, %v1850
      %v1852 = vshrl.u32 %v547, 16
      %v1854 = vor.u32 %v1852, %v1850
      %v1856 = vshll.u32 %v1753, 16
      %v1858 = vrot.slane %v1856, 1
      %v1859 = vsel %vm1769, %v1854, %v1858
      %v1860 = vshrl.u32 %v548, 16
      %v1862 = vshll.u32 %v548, 16
      %v1864 = vrot.slane %v1862, 1
      %v1865 = vor.u32 %v1860, %v1864
      %v1866 = vshll.u32 %v549, 16
      %v1868 = vrot.slane %v1866, 1
      %v1869 = vsel %vm1769, %v1865, %v1868
      %v1870 = vshrl.u32 %v549, 16
      %v1872 = vor.u32 %v1870, %v1868
      %v1874 = vshll.u32 %v1754, 16
      %v1876 = vrot.slane %v1874, 1
      %v1877 = vsel %vm1769, %v1872, %v1876
      %v1878 = vshrl.u32 %v550, 16
      %v1880 = vshll.u32 %v550, 16
      %v1882 = vrot.slane %v1880, 1
      %v1883 = vor.u32 %v1878, %v1882
      %v1884 = vshll.u32 %v551, 16
      %v1886 = vrot.slane %v1884, 1
      %v1887 = vsel %vm1769, %v1883, %v1886
      %v1888 = vshrl.u32 %v551, 16
      %v1890 = vor.u32 %v1888, %v1886
      %v1892 = vshll.u32 %v1755, 16
      %v1894 = vrot.slane %v1892, 1
      %v1895 = vsel %vm1769, %v1890, %v1894
      %v1896 = vshrl.u32 %v552, 16
      %v1898 = vshll.u32 %v552, 16
      %v1900 = vrot.slane %v1898, 1
      %v1901 = vor.u32 %v1896, %v1900
      %v1902 = vshll.u32 %v553, 16
      %v1904 = vrot.slane %v1902, 1
      %v1905 = vsel %vm1769, %v1901, %v1904
      %v1906 = vshrl.u32 %v553, 16
      %v1908 = vor.u32 %v1906, %v1904
      %v1910 = vshll.u32 %v1756, 16
      %v1912 = vrot.slane %v1910, 1
      %v1913 = vsel %vm1769, %v1908, %v1912
      %v1914 = vshrl.u32 %v554, 16
      %v1916 = vshll.u32 %v554, 16
      %v1918 = vrot.slane %v1916, 1
      %v1919 = vor.u32 %v1914, %v1918
      %v1920 = vshll.u32 %v555, 16
      %v1922 = vrot.slane %v1920, 1
      %v1923 = vsel %vm1769, %v1919, %v1922
      %v1924 = vshrl.u32 %v555, 16
      %v1926 = vor.u32 %v1924, %v1922
      %v1928 = vshll.u32 %v1757, 16
      %v1930 = vrot.slane %v1928, 1
      %v1931 = vsel %vm1769, %v1926, %v1930
      %v1932 = vshrl.u32 %v556, 16
      %v1934 = vshll.u32 %v556, 16
      %v1936 = vrot.slane %v1934, 1
      %v1937 = vor.u32 %v1932, %v1936
      %v1938 = vshll.u32 %v557, 16
      %v1940 = vrot.slane %v1938, 1
      %v1941 = vsel %vm1769, %v1937, %v1940
      %v1942 = vshrl.u32 %v557, 16
      %v1944 = vor.u32 %v1942, %v1940
      %v1946 = vshll.u32 %v1758, 16
      %v1948 = vrot.slane %v1946, 1
      %v1949 = vsel %vm1769, %v1944, %v1948
      %v1950 = vshrl.u32 %v558, 16
      %v1952 = vshll.u32 %v558, 16
      %v1954 = vrot.slane %v1952, 1
      %v1955 = vor.u32 %v1950, %v1954
      %v1956 = vshll.u32 %v559, 16
      %v1958 = vrot.slane %v1956, 1
      %v1959 = vsel %vm1769, %v1955, %v1958
      %v1960 = vshrl.u32 %v559, 16
      %v1962 = vor.u32 %v1960, %v1958
      %v1964 = vshll.u32 %v1759, 16
      %v1966 = vrot.slane %v1964, 1
      %v1967 = vsel %vm1769, %v1962, %v1966
      %v1968 = vshrl.u32 %v560, 16
      %v1970 = vshll.u32 %v560, 16
      %v1972 = vrot.slane %v1970, 1
      %v1973 = vor.u32 %v1968, %v1972
      %v1974 = vshll.u32 %v561, 16
      %v1976 = vrot.slane %v1974, 1
      %v1977 = vsel %vm1769, %v1973, %v1976
      %v1978 = vshrl.u32 %v561, 16
      %v1980 = vor.u32 %v1978, %v1976
      %v1982 = vshll.u32 %v1760, 16
      %v1984 = vrot.slane %v1982, 1
      %v1985 = vsel %vm1769, %v1980, %v1984
      %v1986 = vshrl.u32 %v562, 16
      %v1988 = vshll.u32 %v562, 16
      %v1990 = vrot.slane %v1988, 1
      %v1991 = vor.u32 %v1986, %v1990
      %v1992 = vshll.u32 %v563, 16
      %v1994 = vrot.slane %v1992, 1
      %v1995 = vsel %vm1769, %v1991, %v1994
      %v1996 = vshrl.u32 %v563, 16
      %v1998 = vor.u32 %v1996, %v1994
      %v2000 = vshll.u32 %v1761, 16
      %v2002 = vrot.slane %v2000, 1
      %v2003 = vsel %vm1769, %v1998, %v2002
      %v2004 = vshrl.u32 %v564, 16
      %v2006 = vshll.u32 %v564, 16
      %v2008 = vrot.slane %v2006, 1
      %v2009 = vor.u32 %v2004, %v2008
      %v2010 = vshll.u32 %v565, 16
      %v2012 = vrot.slane %v2010, 1
      %v2013 = vsel %vm1769, %v2009, %v2012
      %v2014 = vshrl.u32 %v565, 16
      %v2016 = vor.u32 %v2014, %v2012
      %v2018 = vshll.u32 %v1762, 16
      %v2020 = vrot.slane %v2018, 1
      %v2021 = vsel %vm1769, %v2016, %v2020
      %v2022 = vshrl.u32 %v566, 16
      %v2024 = vshll.u32 %v566, 16
      %v2026 = vrot.slane %v2024, 1
      %v2027 = vor.u32 %v2022, %v2026
      %v2028 = vshll.u32 %v567, 16
      %v2030 = vrot.slane %v2028, 1
      %v2031 = vsel %vm1769, %v2027, %v2030
      %v2032 = vshrl.u32 %v567, 16
      %v2034 = vor.u32 %v2032, %v2030
      %v2036 = vshll.u32 %v1763, 16
      %v2038 = vrot.slane %v2036, 1
      %v2039 = vsel %vm1769, %v2034, %v2038
      %v2040 = vshrl.u32 %v568, 16
      %v2042 = vshll.u32 %v568, 16
      %v2044 = vrot.slane %v2042, 1
      %v2045 = vor.u32 %v2040, %v2044
      %v2046 = vshll.u32 %v569, 16
      %v2048 = vrot.slane %v2046, 1
      %v2049 = vsel %vm1769, %v2045, %v2048
      %v2050 = vshrl.u32 %v569, 16
      %v2052 = vor.u32 %v2050, %v2048
      %v2054 = vshll.u32 %v1764, 16
      %v2056 = vrot.slane %v2054, 1
      %v2057 = vsel %vm1769, %v2052, %v2056
      %v2058 = vshrl.u32 %v570, 16
      %v2060 = vshll.u32 %v570, 16
      %v2062 = vrot.slane %v2060, 1
      %v2063 = vor.u32 %v2058, %v2062
      %v2064 = vshll.u32 %v571, 16
      %v2066 = vrot.slane %v2064, 1
      %v2067 = vsel %vm1769, %v2063, %v2066
      %v2068 = vshrl.u32 %v571, 16
      %v2070 = vor.u32 %v2068, %v2066
      %v2072 = vshll.u32 %v1765, 16
      %v2074 = vrot.slane %v2072, 1
      %v2075 = vsel %vm1769, %v2070, %v2074
      %v2076 = vshrl.u32 %v572, 16
      %v2078 = vshll.u32 %v572, 16
      %v2080 = vrot.slane %v2078, 1
      %v2081 = vor.u32 %v2076, %v2080
      %v2082 = vshll.u32 %v573, 16
      %v2084 = vrot.slane %v2082, 1
      %v2085 = vsel %vm1769, %v2081, %v2084
      %v2086 = vshrl.u32 %v573, 16
      %v2088 = vor.u32 %v2086, %v2084
      %v2090 = vshll.u32 %v1766, 16
      %v2092 = vrot.slane %v2090, 1
      %v2093 = vsel %vm1769, %v2088, %v2092
      %s2094 = scalar_lea.vmem %s1, 2
      %v2095 = vld [vmem:[%s2094] sm:$0x3]
      %v2097 = vsel %vm581, %v1779, 0
      %v2100 = vsel %vm581, %v1787, 0
      %v2103 = vsel %vm581, %v1797, 0
      %v2106 = vsel %vm581, %v1805, 0
      %v2109 = vsel %vm581, %v1815, 0
      %v2112 = vsel %vm581, %v1823, 0
      %v2115 = vsel %vm581, %v1833, 0
      %v2118 = vsel %vm581, %v1841, 0
      %v2121 = vsel %vm581, %v1851, 0
      %v2124 = vsel %vm581, %v1859, 0
      %v2127 = vsel %vm581, %v1869, 0
      %v2130 = vsel %vm581, %v1877, 0
      %v2133 = vsel %vm581, %v1887, 0
      %v2136 = vsel %vm581, %v1895, 0
      %v2139 = vsel %vm581, %v1905, 0
      %v2142 = vsel %vm581, %v1913, 0
      %v2145 = vsel %vm581, %v1923, 0
      %v2148 = vsel %vm581, %v1931, 0
      %v2151 = vsel %vm581, %v1941, 0
      %v2154 = vsel %vm581, %v1949, 0
      %v2157 = vsel %vm581, %v1959, 0
      %v2160 = vsel %vm581, %v1967, 0
      %v2163 = vsel %vm581, %v1977, 0
      %v2166 = vsel %vm581, %v1985, 0
      %v2169 = vsel %vm581, %v1995, 0
      %v2172 = vsel %vm581, %v2003, 0
      %v2175 = vsel %vm581, %v2013, 0
      %v2178 = vsel %vm581, %v2021, 0
      %v2181 = vsel %vm581, %v2031, 0
      %v2184 = vsel %vm581, %v2039, 0
      %v2187 = vsel %vm581, %v2049, 0
      %v2190 = vsel %vm581, %v2057, 0
      %v2193 = vsel %vm581, %v2067, 0
      %v2196 = vsel %vm581, %v2075, 0
      %v2199 = vsel %vm581, %v2085, 0
      %v2202 = vsel %vm581, %v2093, 0
      %v2205 = vsel %vm690, %v2095, 0
      %2207 = vmatprep.subr.bf16.mxu0 0
      %2208 = vmatpush1.bf16.msra.mxu0 %v2205
      %2209 = vmatprep.subr.bf16.mxu0 0
      %2210 = vmatpush1.bf16.msra.mxu0 0
      %2211 = vmatprep.subr.bf16.mxu0 0
      %2212 = vmatpush1.bf16.msra.mxu0 0
      %2213 = vmatprep.subr.bf16.mxu0 0
      %2214 = vmatpush1.bf16.msra.mxu0 0
      %2215 = vmatprep.subr.bf16.mxu0 0
      %2216 = vmatpush1.bf16.msra.mxu0 0
      %2217 = vmatprep.subr.bf16.mxu0 0
      %2218 = vmatpush1.bf16.msra.mxu0 0
      %2219 = vmatprep.subr.bf16.mxu0 0
      %2220 = vmatpush1.bf16.msra.mxu0 0
      %2221 = vmatprep.subr.bf16.mxu0 0
      %2222 = vmatpush1.bf16.msra.mxu0 0
      %2223 = vmatprep.subr.bf16.mxu0 0
      %2224 = vmatpush1.bf16.msra.mxu0 0
      %2225 = vmatprep.subr.bf16.mxu0 0
      %2226 = vmatpush1.bf16.msra.mxu0 0
      %2227 = vmatprep.subr.bf16.mxu0 0
      %2228 = vmatpush1.bf16.msra.mxu0 0
      %2229 = vmatprep.subr.bf16.mxu0 0
      %2230 = vmatpush1.bf16.msra.mxu0 0
      %2231 = vmatprep.subr.bf16.mxu0 0
      %2232 = vmatpush1.bf16.msra.mxu0 0
      %2233 = vmatprep.subr.bf16.mxu0 0
      %2234 = vmatpush1.bf16.msra.mxu0 0
      %2235 = vmatprep.subr.bf16.mxu0 0
      %2236 = vmatpush1.bf16.msra.mxu0 0
      %2237 = vmatprep.subr.bf16.mxu0 0
      %2238 = vmatpush1.bf16.msra.mxu0 0
      %2239 = vmatprep.mubr.bf16.mxu0 0
      %2240 = vmatmul.mubr.bf16.gmra.mrb[0].mxu0 %v2097
      %v2241 = vpop.f32.mrb[0].mxu0
      %v2242 = vadd.f32 0.0, %v2241
      %v2243 = vpop.f32.mrb[0].mxu0
      %v2244 = vpop.f32.mrb[0].mxu0
      %v2245 = vadd.f32 0.0, %v2244
      %v2246 = vpop.f32.mrb[0].mxu0
      %2247 = vmatprep.mubr.bf16.mxu0 0
      %2248 = vmatmul.mubr.bf16.gmra.mrb[0].mxu0 %v2100
      %v2249 = vpop.f32.mrb[0].mxu0
      %v2250 = vadd.f32 0.0, %v2249
      %v2251 = vpop.f32.mrb[0].mxu0
      %v2252 = vpop.f32.mrb[0].mxu0
      %v2253 = vadd.f32 0.0, %v2252
      %v2254 = vpop.f32.mrb[0].mxu0
      %2255 = vmatprep.mubr.bf16.mxu0 0
      %2256 = vmatmul.mubr.bf16.gmra.mrb[0].mxu0 %v2103
      %v2257 = vpop.f32.mrb[0].mxu0
      %v2258 = vadd.f32 0.0, %v2257
      %v2259 = vpop.f32.mrb[0].mxu0
      %v2260 = vpop.f32.mrb[0].mxu0
      %v2261 = vadd.f32 0.0, %v2260
      %v2262 = vpop.f32.mrb[0].mxu0
      %2263 = vmatprep.mubr.bf16.mxu0 0
      %2264 = vmatmul.mubr.bf16.gmra.mrb[0].mxu0 %v2106
      %v2265 = vpop.f32.mrb[0].mxu0
      %v2266 = vadd.f32 0.0, %v2265
      %v2267 = vpop.f32.mrb[0].mxu0
      %v2268 = vpop.f32.mrb[0].mxu0
      %v2269 = vadd.f32 0.0, %v2268
      %v2270 = vpop.f32.mrb[0].mxu0
      %2271 = vmatprep.mubr.bf16.mxu0 0
      %2272 = vmatmul.mubr.bf16.gmra.mrb[0].mxu0 %v2109
      %v2273 = vpop.f32.mrb[0].mxu0
      %v2274 = vadd.f32 0.0, %v2273
      %v2275 = vpop.f32.mrb[0].mxu0
      %v2276 = vpop.f32.mrb[0].mxu0
      %v2277 = vadd.f32 0.0, %v2276
      %v2278 = vpop.f32.mrb[0].mxu0
      %2279 = vmatprep.mubr.bf16.mxu0 0
      %2280 = vmatmul.mubr.bf16.gmra.mrb[0].mxu0 %v2112
      %v2281 = vpop.f32.mrb[0].mxu0
      %v2282 = vadd.f32 0.0, %v2281
      %v2283 = vpop.f32.mrb[0].mxu0
      %v2284 = vpop.f32.mrb[0].mxu0
      %v2285 = vadd.f32 0.0, %v2284
      %v2286 = vpop.f32.mrb[0].mxu0
      %2287 = vmatprep.mubr.bf16.mxu0 0
      %2288 = vmatmul.mubr.bf16.gmra.mrb[0].mxu0 %v2115
      %v2289 = vpop.f32.mrb[0].mxu0
      %v2290 = vadd.f32 0.0, %v2289
      %v2291 = vpop.f32.mrb[0].mxu0
      %v2292 = vpop.f32.mrb[0].mxu0
      %v2293 = vadd.f32 0.0, %v2292
      %v2294 = vpop.f32.mrb[0].mxu0
      %2295 = vmatprep.mubr.bf16.mxu0 0
      %2296 = vmatmul.mubr.bf16.gmra.mrb[0].mxu0 %v2118
      %v2297 = vpop.f32.mrb[0].mxu0
      %v2298 = vadd.f32 0.0, %v2297
      %v2299 = vpop.f32.mrb[0].mxu0
      %v2300 = vpop.f32.mrb[0].mxu0
      %v2301 = vadd.f32 0.0, %v2300
      %v2302 = vpop.f32.mrb[0].mxu0
      %2303 = vmatprep.mubr.bf16.mxu0 0
      %2304 = vmatmul.mubr.bf16.gmra.mrb[0].mxu0 %v2121
      %v2305 = vpop.f32.mrb[0].mxu0
      %v2306 = vadd.f32 0.0, %v2305
      %v2307 = vpop.f32.mrb[0].mxu0
      %v2308 = vpop.f32.mrb[0].mxu0
      %v2309 = vadd.f32 0.0, %v2308
      %v2310 = vpop.f32.mrb[0].mxu0
      %2311 = vmatprep.mubr.bf16.mxu0 0
      %2312 = vmatmul.mubr.bf16.gmra.mrb[0].mxu0 %v2124
      %v2313 = vpop.f32.mrb[0].mxu0
      %v2314 = vadd.f32 0.0, %v2313
      %v2315 = vpop.f32.mrb[0].mxu0
      %v2316 = vpop.f32.mrb[0].mxu0
      %v2317 = vadd.f32 0.0, %v2316
      %v2318 = vpop.f32.mrb[0].mxu0
      %2319 = vmatprep.mubr.bf16.mxu0 0
      %2320 = vmatmul.mubr.bf16.gmra.mrb[0].mxu0 %v2127
      %v2321 = vpop.f32.mrb[0].mxu0
      %v2322 = vadd.f32 0.0, %v2321
      %v2323 = vpop.f32.mrb[0].mxu0
      %v2324 = vpop.f32.mrb[0].mxu0
      %v2325 = vadd.f32 0.0, %v2324
      %v2326 = vpop.f32.mrb[0].mxu0
      %2327 = vmatprep.mubr.bf16.mxu0 0
      %2328 = vmatmul.mubr.bf16.gmra.mrb[0].mxu0 %v2130
      %v2329 = vpop.f32.mrb[0].mxu0
      %v2330 = vadd.f32 0.0, %v2329
      %v2331 = vpop.f32.mrb[0].mxu0
      %v2332 = vpop.f32.mrb[0].mxu0
      %v2333 = vadd.f32 0.0, %v2332
      %v2334 = vpop.f32.mrb[0].mxu0
      %2335 = vmatprep.mubr.bf16.mxu0 0
      %2336 = vmatmul.mubr.bf16.gmra.mrb[0].mxu0 %v2133
      %v2337 = vpop.f32.mrb[0].mxu0
      %v2338 = vadd.f32 0.0, %v2337
      %v2339 = vpop.f32.mrb[0].mxu0
      %v2340 = vpop.f32.mrb[0].mxu0
      %v2341 = vadd.f32 0.0, %v2340
      %v2342 = vpop.f32.mrb[0].mxu0
      %2343 = vmatprep.mubr.bf16.mxu0 0
      %2344 = vmatmul.mubr.bf16.gmra.mrb[0].mxu0 %v2136
      %v2345 = vpop.f32.mrb[0].mxu0
      %v2346 = vadd.f32 0.0, %v2345
      %v2347 = vpop.f32.mrb[0].mxu0
      %v2348 = vpop.f32.mrb[0].mxu0
      %v2349 = vadd.f32 0.0, %v2348
      %v2350 = vpop.f32.mrb[0].mxu0
      %2351 = vmatprep.mubr.bf16.mxu0 0
      %2352 = vmatmul.mubr.bf16.gmra.mrb[0].mxu0 %v2139
      %v2353 = vpop.f32.mrb[0].mxu0
      %v2354 = vadd.f32 0.0, %v2353
      %v2355 = vpop.f32.mrb[0].mxu0
      %v2356 = vpop.f32.mrb[0].mxu0
      %v2357 = vadd.f32 0.0, %v2356
      %v2358 = vpop.f32.mrb[0].mxu0
      %2359 = vmatprep.mubr.bf16.mxu0 0
      %2360 = vmatmul.mubr.bf16.gmra.mrb[0].mxu0 %v2142
      %v2361 = vpop.f32.mrb[0].mxu0
      %v2362 = vadd.f32 0.0, %v2361
      %v2363 = vpop.f32.mrb[0].mxu0
      %v2364 = vpop.f32.mrb[0].mxu0
      %v2365 = vadd.f32 0.0, %v2364
      %v2366 = vpop.f32.mrb[0].mxu0
      %2367 = vmatprep.mubr.bf16.mxu0 0
      %2368 = vmatmul.mubr.bf16.gmra.mrb[0].mxu0 %v2145
      %v2369 = vpop.f32.mrb[0].mxu0
      %v2370 = vadd.f32 0.0, %v2369
      %v2371 = vpop.f32.mrb[0].mxu0
      %v2372 = vpop.f32.mrb[0].mxu0
      %v2373 = vadd.f32 0.0, %v2372
      %v2374 = vpop.f32.mrb[0].mxu0
      %2375 = vmatprep.mubr.bf16.mxu0 0
      %2376 = vmatmul.mubr.bf16.gmra.mrb[0].mxu0 %v2148
      %v2377 = vpop.f32.mrb[0].mxu0
      %v2378 = vadd.f32 0.0, %v2377
      %v2379 = vpop.f32.mrb[0].mxu0
      %v2380 = vpop.f32.mrb[0].mxu0
      %v2381 = vadd.f32 0.0, %v2380
      %v2382 = vpop.f32.mrb[0].mxu0
      %2383 = vmatprep.mubr.bf16.mxu0 0
      %2384 = vmatmul.mubr.bf16.gmra.mrb[0].mxu0 %v2151
      %v2385 = vpop.f32.mrb[0].mxu0
      %v2386 = vadd.f32 0.0, %v2385
      %v2387 = vpop.f32.mrb[0].mxu0
      %v2388 = vpop.f32.mrb[0].mxu0
      %v2389 = vadd.f32 0.0, %v2388
      %v2390 = vpop.f32.mrb[0].mxu0
      %2391 = vmatprep.mubr.bf16.mxu0 0
      %2392 = vmatmul.mubr.bf16.gmra.mrb[0].mxu0 %v2154
      %v2393 = vpop.f32.mrb[0].mxu0
      %v2394 = vadd.f32 0.0, %v2393
      %v2395 = vpop.f32.mrb[0].mxu0
      %v2396 = vpop.f32.mrb[0].mxu0
      %v2397 = vadd.f32 0.0, %v2396
      %v2398 = vpop.f32.mrb[0].mxu0
      %2399 = vmatprep.mubr.bf16.mxu0 0
      %2400 = vmatmul.mubr.bf16.gmra.mrb[0].mxu0 %v2157
      %v2401 = vpop.f32.mrb[0].mxu0
      %v2402 = vadd.f32 0.0, %v2401
      %v2403 = vpop.f32.mrb[0].mxu0
      %v2404 = vpop.f32.mrb[0].mxu0
      %v2405 = vadd.f32 0.0, %v2404
      %v2406 = vpop.f32.mrb[0].mxu0
      %2407 = vmatprep.mubr.bf16.mxu0 0
      %2408 = vmatmul.mubr.bf16.gmra.mrb[0].mxu0 %v2160
      %v2409 = vpop.f32.mrb[0].mxu0
      %v2410 = vadd.f32 0.0, %v2409
      %v2411 = vpop.f32.mrb[0].mxu0
      %v2412 = vpop.f32.mrb[0].mxu0
      %v2413 = vadd.f32 0.0, %v2412
      %v2414 = vpop.f32.mrb[0].mxu0
      %2415 = vmatprep.mubr.bf16.mxu0 0
      %2416 = vmatmul.mubr.bf16.gmra.mrb[0].mxu0 %v2163
      %v2417 = vpop.f32.mrb[0].mxu0
      %v2418 = vadd.f32 0.0, %v2417
      %v2419 = vpop.f32.mrb[0].mxu0
      %v2420 = vpop.f32.mrb[0].mxu0
      %v2421 = vadd.f32 0.0, %v2420
      %v2422 = vpop.f32.mrb[0].mxu0
      %2423 = vmatprep.mubr.bf16.mxu0 0
      %2424 = vmatmul.mubr.bf16.gmra.mrb[0].mxu0 %v2166
      %v2425 = vpop.f32.mrb[0].mxu0
      %v2426 = vadd.f32 0.0, %v2425
      %v2427 = vpop.f32.mrb[0].mxu0
      %v2428 = vpop.f32.mrb[0].mxu0
      %v2429 = vadd.f32 0.0, %v2428
      %v2430 = vpop.f32.mrb[0].mxu0
      %2431 = vmatprep.mubr.bf16.mxu0 0
      %2432 = vmatmul.mubr.bf16.gmra.mrb[0].mxu0 %v2169
      %v2433 = vpop.f32.mrb[0].mxu0
      %v2434 = vadd.f32 0.0, %v2433
      %v2435 = vpop.f32.mrb[0].mxu0
      %v2436 = vpop.f32.mrb[0].mxu0
      %v2437 = vadd.f32 0.0, %v2436
      %v2438 = vpop.f32.mrb[0].mxu0
      %2439 = vmatprep.mubr.bf16.mxu0 0
      %2440 = vmatmul.mubr.bf16.gmra.mrb[0].mxu0 %v2172
      %v2441 = vpop.f32.mrb[0].mxu0
      %v2442 = vadd.f32 0.0, %v2441
      %v2443 = vpop.f32.mrb[0].mxu0
      %v2444 = vpop.f32.mrb[0].mxu0
      %v2445 = vadd.f32 0.0, %v2444
      %v2446 = vpop.f32.mrb[0].mxu0
      %2447 = vmatprep.mubr.bf16.mxu0 0
      %2448 = vmatmul.mubr.bf16.gmra.mrb[0].mxu0 %v2175
      %v2449 = vpop.f32.mrb[0].mxu0
      %v2450 = vadd.f32 0.0, %v2449
      %v2451 = vpop.f32.mrb[0].mxu0
      %v2452 = vpop.f32.mrb[0].mxu0
      %v2453 = vadd.f32 0.0, %v2452
      %v2454 = vpop.f32.mrb[0].mxu0
      %2455 = vmatprep.mubr.bf16.mxu0 0
      %2456 = vmatmul.mubr.bf16.gmra.mrb[0].mxu0 %v2178
      %v2457 = vpop.f32.mrb[0].mxu0
      %v2458 = vadd.f32 0.0, %v2457
      %v2459 = vpop.f32.mrb[0].mxu0
      %v2460 = vpop.f32.mrb[0].mxu0
      %v2461 = vadd.f32 0.0, %v2460
      %v2462 = vpop.f32.mrb[0].mxu0
      %2463 = vmatprep.mubr.bf16.mxu0 0
      %2464 = vmatmul.mubr.bf16.gmra.mrb[0].mxu0 %v2181
      %v2465 = vpop.f32.mrb[0].mxu0
      %v2466 = vadd.f32 0.0, %v2465
      %v2467 = vpop.f32.mrb[0].mxu0
      %v2468 = vpop.f32.mrb[0].mxu0
      %v2469 = vadd.f32 0.0, %v2468
      %v2470 = vpop.f32.mrb[0].mxu0
      %2471 = vmatprep.mubr.bf16.mxu0 0
      %2472 = vmatmul.mubr.bf16.gmra.mrb[0].mxu0 %v2184
      %v2473 = vpop.f32.mrb[0].mxu0
      %v2474 = vadd.f32 0.0, %v2473
      %v2475 = vpop.f32.mrb[0].mxu0
      %v2476 = vpop.f32.mrb[0].mxu0
      %v2477 = vadd.f32 0.0, %v2476
      %v2478 = vpop.f32.mrb[0].mxu0
      %2479 = vmatprep.mubr.bf16.mxu0 0
      %2480 = vmatmul.mubr.bf16.gmra.mrb[0].mxu0 %v2187
      %v2481 = vpop.f32.mrb[0].mxu0
      %v2482 = vadd.f32 0.0, %v2481
      %v2483 = vpop.f32.mrb[0].mxu0
      %v2484 = vpop.f32.mrb[0].mxu0
      %v2485 = vadd.f32 0.0, %v2484
      %v2486 = vpop.f32.mrb[0].mxu0
      %2487 = vmatprep.mubr.bf16.mxu0 0
      %2488 = vmatmul.mubr.bf16.gmra.mrb[0].mxu0 %v2190
      %v2489 = vpop.f32.mrb[0].mxu0
      %v2490 = vadd.f32 0.0, %v2489
      %v2491 = vpop.f32.mrb[0].mxu0
      %v2492 = vpop.f32.mrb[0].mxu0
      %v2493 = vadd.f32 0.0, %v2492
      %v2494 = vpop.f32.mrb[0].mxu0
      %2495 = vmatprep.mubr.bf16.mxu0 0
      %2496 = vmatmul.mubr.bf16.gmra.mrb[0].mxu0 %v2193
      %v2497 = vpop.f32.mrb[0].mxu0
      %v2498 = vadd.f32 0.0, %v2497
      %v2499 = vpop.f32.mrb[0].mxu0
      %v2500 = vpop.f32.mrb[0].mxu0
      %v2501 = vadd.f32 0.0, %v2500
      %v2502 = vpop.f32.mrb[0].mxu0
      %2503 = vmatprep.mubr.bf16.mxu0 0
      %2504 = vmatmul.mubr.bf16.gmra.mrb[0].mxu0 %v2196
      %v2505 = vpop.f32.mrb[0].mxu0
      %v2506 = vadd.f32 0.0, %v2505
      %v2507 = vpop.f32.mrb[0].mxu0
      %v2508 = vpop.f32.mrb[0].mxu0
      %v2509 = vadd.f32 0.0, %v2508
      %v2510 = vpop.f32.mrb[0].mxu0
      %2511 = vmatprep.mubr.bf16.mxu0 0
      %2512 = vmatmul.mubr.bf16.gmra.mrb[0].mxu0 %v2199
      %v2513 = vpop.f32.mrb[0].mxu0
      %v2514 = vadd.f32 0.0, %v2513
      %v2515 = vpop.f32.mrb[0].mxu0
      %v2516 = vpop.f32.mrb[0].mxu0
      %v2517 = vadd.f32 0.0, %v2516
      %v2518 = vpop.f32.mrb[0].mxu0
      %2519 = vmatprep.mubr.bf16.mxu0 0
      %2520 = vmatmul.mubr.bf16.gmra.mrb[0].mxu0 %v2202
      %v2521 = vpop.f32.mrb[0].mxu0
      %v2522 = vadd.f32 0.0, %v2521
      %v2523 = vpop.f32.mrb[0].mxu0
      %v2524 = vpop.f32.mrb[0].mxu0
      %v2525 = vadd.f32 0.0, %v2524
      %v2526 = vpop.f32.mrb[0].mxu0
      %2527 = vdwg.mxu0
      %v2528 = vadd.f32 %v1677, %v2242
      %v2529 = vadd.f32 %v1678, %v2245
      %v2530 = vadd.f32 %v1679, %v2250
      %v2531 = vadd.f32 %v1680, %v2253
      %v2532 = vadd.f32 %v1681, %v2258
      %v2533 = vadd.f32 %v1682, %v2261
      %v2534 = vadd.f32 %v1683, %v2266
      %v2535 = vadd.f32 %v1684, %v2269
      %v2536 = vadd.f32 %v1685, %v2274
      %v2537 = vadd.f32 %v1686, %v2277
      %v2538 = vadd.f32 %v1687, %v2282
      %v2539 = vadd.f32 %v1688, %v2285
      %v2540 = vadd.f32 %v1689, %v2290
      %v2541 = vadd.f32 %v1690, %v2293
      %v2542 = vadd.f32 %v1691, %v2298
      %v2543 = vadd.f32 %v1692, %v2301
      %v2544 = vadd.f32 %v1693, %v2306
      %v2545 = vadd.f32 %v1694, %v2309
      %v2546 = vadd.f32 %v1695, %v2314
      %v2547 = vadd.f32 %v1696, %v2317
      %v2548 = vadd.f32 %v1697, %v2322
      %v2549 = vadd.f32 %v1698, %v2325
      %v2550 = vadd.f32 %v1699, %v2330
      %v2551 = vadd.f32 %v1700, %v2333
      %v2552 = vadd.f32 %v1701, %v2338
      %v2553 = vadd.f32 %v1702, %v2341
      %v2554 = vadd.f32 %v1703, %v2346
      %v2555 = vadd.f32 %v1704, %v2349
      %v2556 = vadd.f32 %v1705, %v2354
      %v2557 = vadd.f32 %v1706, %v2357
      %v2558 = vadd.f32 %v1707, %v2362
      %v2559 = vadd.f32 %v1708, %v2365
      %v2560 = vadd.f32 %v1709, %v2370
      %v2561 = vadd.f32 %v1710, %v2373
      %v2562 = vadd.f32 %v1711, %v2378
      %v2563 = vadd.f32 %v1712, %v2381
      %v2564 = vadd.f32 %v1713, %v2386
      %v2565 = vadd.f32 %v1714, %v2389
      %v2566 = vadd.f32 %v1715, %v2394
      %v2567 = vadd.f32 %v1716, %v2397
      %v2568 = vadd.f32 %v1717, %v2402
      %v2569 = vadd.f32 %v1718, %v2405
      %v2570 = vadd.f32 %v1719, %v2410
      %v2571 = vadd.f32 %v1720, %v2413
      %v2572 = vadd.f32 %v1721, %v2418
      %v2573 = vadd.f32 %v1722, %v2421
      %v2574 = vadd.f32 %v1723, %v2426
      %v2575 = vadd.f32 %v1724, %v2429
      %v2576 = vadd.f32 %v1725, %v2434
      %v2577 = vadd.f32 %v1726, %v2437
      %v2578 = vadd.f32 %v1727, %v2442
      %v2579 = vadd.f32 %v1728, %v2445
      %v2580 = vadd.f32 %v1729, %v2450
      %v2581 = vadd.f32 %v1730, %v2453
      %v2582 = vadd.f32 %v1731, %v2458
      %v2583 = vadd.f32 %v1732, %v2461
      %v2584 = vadd.f32 %v1733, %v2466
      %v2585 = vadd.f32 %v1734, %v2469
      %v2586 = vadd.f32 %v1735, %v2474
      %v2587 = vadd.f32 %v1736, %v2477
      %v2588 = vadd.f32 %v1737, %v2482
      %v2589 = vadd.f32 %v1738, %v2485
      %v2590 = vadd.f32 %v1739, %v2490
      %v2591 = vadd.f32 %v1740, %v2493
      %v2592 = vadd.f32 %v1741, %v2498
      %v2593 = vadd.f32 %v1742, %v2501
      %v2594 = vadd.f32 %v1743, %v2506
      %v2595 = vadd.f32 %v1744, %v2509
      %v2596 = vadd.f32 %v1745, %v2514
      %v2597 = vadd.f32 %v1746, %v2517
      %v2598 = vadd.f32 %v1747, %v2522
      %v2599 = vadd.f32 %v1748, %v2525
      %v2600 = vshrl.u32 %v574, 16
      %v2602 = vshll.u32 %v574, 16
      %v2604 = vrot.slane %v2602, 1
      %v2605 = vor.u32 %v2600, %v2604
      %v2606 = vshll.u32 %v575, 16
      %v2608 = vrot.slane %v2606, 1
      %v2609 = vsel %vm1769, %v2605, %v2608
      %v2610 = vshrl.u32 %v575, 16
      %v2612 = vor.u32 %v2610, %v2608
      %v2614 = vshll.u32 %v1767, 16
      %v2616 = vrot.slane %v2614, 1
      %v2617 = vsel %vm1769, %v2612, %v2616
      %s2618 = scalar_lea.vmem %s1, 8
      %v2619 = vld [vmem:[%s2618] sm:$0x3]
      %v2621 = vsel %vm581, %v2609, 0
      %v2624 = vsel %vm581, %v2617, 0
      %v2627 = vsel %vm690, %v2619, 0
      %2629 = vmatprep.subr.bf16.mxu0 0
      %2630 = vmatpush1.bf16.msra.mxu0 %v2627
      %2631 = vmatprep.subr.bf16.mxu0 0
      %2632 = vmatpush1.bf16.msra.mxu0 0
      %2633 = vmatprep.subr.bf16.mxu0 0
      %2634 = vmatpush1.bf16.msra.mxu0 0
      %2635 = vmatprep.subr.bf16.mxu0 0
      %2636 = vmatpush1.bf16.msra.mxu0 0
      %2637 = vmatprep.subr.bf16.mxu0 0
      %2638 = vmatpush1.bf16.msra.mxu0 0
      %2639 = vmatprep.subr.bf16.mxu0 0
      %2640 = vmatpush1.bf16.msra.mxu0 0
      %2641 = vmatprep.subr.bf16.mxu0 0
      %2642 = vmatpush1.bf16.msra.mxu0 0
      %2643 = vmatprep.subr.bf16.mxu0 0
      %2644 = vmatpush1.bf16.msra.mxu0 0
      %2645 = vmatprep.subr.bf16.mxu0 0
      %2646 = vmatpush1.bf16.msra.mxu0 0
      %2647 = vmatprep.subr.bf16.mxu0 0
      %2648 = vmatpush1.bf16.msra.mxu0 0
      %2649 = vmatprep.subr.bf16.mxu0 0
      %2650 = vmatpush1.bf16.msra.mxu0 0
      %2651 = vmatprep.subr.bf16.mxu0 0
      %2652 = vmatpush1.bf16.msra.mxu0 0
      %2653 = vmatprep.subr.bf16.mxu0 0
      %2654 = vmatpush1.bf16.msra.mxu0 0
      %2655 = vmatprep.subr.bf16.mxu0 0
      %2656 = vmatpush1.bf16.msra.mxu0 0
      %2657 = vmatprep.subr.bf16.mxu0 0
      %2658 = vmatpush1.bf16.msra.mxu0 0
      %2659 = vmatprep.subr.bf16.mxu0 0
      %2660 = vmatpush1.bf16.msra.mxu0 0
      %2661 = vmatprep.mubr.bf16.mxu0 0
      %2662 = vmatmul.mubr.bf16.gmra.mrb[0].mxu0 %v2103
      %v2663 = vpop.f32.mrb[0].mxu0
      %v2664 = vadd.f32 0.0, %v2663
      %v2665 = vpop.f32.mrb[0].mxu0
      %v2666 = vpop.f32.mrb[0].mxu0
      %v2667 = vadd.f32 0.0, %v2666
      %v2668 = vpop.f32.mrb[0].mxu0
      %2669 = vmatprep.mubr.bf16.mxu0 0
      %2670 = vmatmul.mubr.bf16.gmra.mrb[0].mxu0 %v2106
      %v2671 = vpop.f32.mrb[0].mxu0
      %v2672 = vadd.f32 0.0, %v2671
      %v2673 = vpop.f32.mrb[0].mxu0
      %v2674 = vpop.f32.mrb[0].mxu0
      %v2675 = vadd.f32 0.0, %v2674
      %v2676 = vpop.f32.mrb[0].mxu0
      %2677 = vmatprep.mubr.bf16.mxu0 0
      %2678 = vmatmul.mubr.bf16.gmra.mrb[0].mxu0 %v2109
      %v2679 = vpop.f32.mrb[0].mxu0
      %v2680 = vadd.f32 0.0, %v2679
      %v2681 = vpop.f32.mrb[0].mxu0
      %v2682 = vpop.f32.mrb[0].mxu0
      %v2683 = vadd.f32 0.0, %v2682
      %v2684 = vpop.f32.mrb[0].mxu0
      %2685 = vmatprep.mubr.bf16.mxu0 0
      %2686 = vmatmul.mubr.bf16.gmra.mrb[0].mxu0 %v2112
      %v2687 = vpop.f32.mrb[0].mxu0
      %v2688 = vadd.f32 0.0, %v2687
      %v2689 = vpop.f32.mrb[0].mxu0
      %v2690 = vpop.f32.mrb[0].mxu0
      %v2691 = vadd.f32 0.0, %v2690
      %v2692 = vpop.f32.mrb[0].mxu0
      %2693 = vmatprep.mubr.bf16.mxu0 0
      %2694 = vmatmul.mubr.bf16.gmra.mrb[0].mxu0 %v2115
      %v2695 = vpop.f32.mrb[0].mxu0
      %v2696 = vadd.f32 0.0, %v2695
      %v2697 = vpop.f32.mrb[0].mxu0
      %v2698 = vpop.f32.mrb[0].mxu0
      %v2699 = vadd.f32 0.0, %v2698
      %v2700 = vpop.f32.mrb[0].mxu0
      %2701 = vmatprep.mubr.bf16.mxu0 0
      %2702 = vmatmul.mubr.bf16.gmra.mrb[0].mxu0 %v2118
      %v2703 = vpop.f32.mrb[0].mxu0
      %v2704 = vadd.f32 0.0, %v2703
      %v2705 = vpop.f32.mrb[0].mxu0
      %v2706 = vpop.f32.mrb[0].mxu0
      %v2707 = vadd.f32 0.0, %v2706
      %v2708 = vpop.f32.mrb[0].mxu0
      %2709 = vmatprep.mubr.bf16.mxu0 0
      %2710 = vmatmul.mubr.bf16.gmra.mrb[0].mxu0 %v2121
      %v2711 = vpop.f32.mrb[0].mxu0
      %v2712 = vadd.f32 0.0, %v2711
      %v2713 = vpop.f32.mrb[0].mxu0
      %v2714 = vpop.f32.mrb[0].mxu0
      %v2715 = vadd.f32 0.0, %v2714
      %v2716 = vpop.f32.mrb[0].mxu0
      %2717 = vmatprep.mubr.bf16.mxu0 0
      %2718 = vmatmul.mubr.bf16.gmra.mrb[0].mxu0 %v2124
      %v2719 = vpop.f32.mrb[0].mxu0
      %v2720 = vadd.f32 0.0, %v2719
      %v2721 = vpop.f32.mrb[0].mxu0
      %v2722 = vpop.f32.mrb[0].mxu0
      %v2723 = vadd.f32 0.0, %v2722
      %v2724 = vpop.f32.mrb[0].mxu0
      %2725 = vmatprep.mubr.bf16.mxu0 0
      %2726 = vmatmul.mubr.bf16.gmra.mrb[0].mxu0 %v2127
      %v2727 = vpop.f32.mrb[0].mxu0
      %v2728 = vadd.f32 0.0, %v2727
      %v2729 = vpop.f32.mrb[0].mxu0
      %v2730 = vpop.f32.mrb[0].mxu0
      %v2731 = vadd.f32 0.0, %v2730
      %v2732 = vpop.f32.mrb[0].mxu0
      %2733 = vmatprep.mubr.bf16.mxu0 0
      %2734 = vmatmul.mubr.bf16.gmra.mrb[0].mxu0 %v2130
      %v2735 = vpop.f32.mrb[0].mxu0
      %v2736 = vadd.f32 0.0, %v2735
      %v2737 = vpop.f32.mrb[0].mxu0
      %v2738 = vpop.f32.mrb[0].mxu0
      %v2739 = vadd.f32 0.0, %v2738
      %v2740 = vpop.f32.mrb[0].mxu0
      %2741 = vmatprep.mubr.bf16.mxu0 0
      %2742 = vmatmul.mubr.bf16.gmra.mrb[0].mxu0 %v2133
      %v2743 = vpop.f32.mrb[0].mxu0
      %v2744 = vadd.f32 0.0, %v2743
      %v2745 = vpop.f32.mrb[0].mxu0
      %v2746 = vpop.f32.mrb[0].mxu0
      %v2747 = vadd.f32 0.0, %v2746
      %v2748 = vpop.f32.mrb[0].mxu0
      %2749 = vmatprep.mubr.bf16.mxu0 0
      %2750 = vmatmul.mubr.bf16.gmra.mrb[0].mxu0 %v2136
      %v2751 = vpop.f32.mrb[0].mxu0
      %v2752 = vadd.f32 0.0, %v2751
      %v2753 = vpop.f32.mrb[0].mxu0
      %v2754 = vpop.f32.mrb[0].mxu0
      %v2755 = vadd.f32 0.0, %v2754
      %v2756 = vpop.f32.mrb[0].mxu0
      %2757 = vmatprep.mubr.bf16.mxu0 0
      %2758 = vmatmul.mubr.bf16.gmra.mrb[0].mxu0 %v2139
      %v2759 = vpop.f32.mrb[0].mxu0
      %v2760 = vadd.f32 0.0, %v2759
      %v2761 = vpop.f32.mrb[0].mxu0
      %v2762 = vpop.f32.mrb[0].mxu0
      %v2763 = vadd.f32 0.0, %v2762
      %v2764 = vpop.f32.mrb[0].mxu0
      %2765 = vmatprep.mubr.bf16.mxu0 0
      %2766 = vmatmul.mubr.bf16.gmra.mrb[0].mxu0 %v2142
      %v2767 = vpop.f32.mrb[0].mxu0
      %v2768 = vadd.f32 0.0, %v2767
      %v2769 = vpop.f32.mrb[0].mxu0
      %v2770 = vpop.f32.mrb[0].mxu0
      %v2771 = vadd.f32 0.0, %v2770
      %v2772 = vpop.f32.mrb[0].mxu0
      %2773 = vmatprep.mubr.bf16.mxu0 0
      %2774 = vmatmul.mubr.bf16.gmra.mrb[0].mxu0 %v2145
      %v2775 = vpop.f32.mrb[0].mxu0
      %v2776 = vadd.f32 0.0, %v2775
      %v2777 = vpop.f32.mrb[0].mxu0
      %v2778 = vpop.f32.mrb[0].mxu0
      %v2779 = vadd.f32 0.0, %v2778
      %v2780 = vpop.f32.mrb[0].mxu0
      %2781 = vmatprep.mubr.bf16.mxu0 0
      %2782 = vmatmul.mubr.bf16.gmra.mrb[0].mxu0 %v2148
      %v2783 = vpop.f32.mrb[0].mxu0
      %v2784 = vadd.f32 0.0, %v2783
      %v2785 = vpop.f32.mrb[0].mxu0
      %v2786 = vpop.f32.mrb[0].mxu0
      %v2787 = vadd.f32 0.0, %v2786
      %v2788 = vpop.f32.mrb[0].mxu0
      %2789 = vmatprep.mubr.bf16.mxu0 0
      %2790 = vmatmul.mubr.bf16.gmra.mrb[0].mxu0 %v2151
      %v2791 = vpop.f32.mrb[0].mxu0
      %v2792 = vadd.f32 0.0, %v2791
      %v2793 = vpop.f32.mrb[0].mxu0
      %v2794 = vpop.f32.mrb[0].mxu0
      %v2795 = vadd.f32 0.0, %v2794
      %v2796 = vpop.f32.mrb[0].mxu0
      %2797 = vmatprep.mubr.bf16.mxu0 0
      %2798 = vmatmul.mubr.bf16.gmra.mrb[0].mxu0 %v2154
      %v2799 = vpop.f32.mrb[0].mxu0
      %v2800 = vadd.f32 0.0, %v2799
      %v2801 = vpop.f32.mrb[0].mxu0
      %v2802 = vpop.f32.mrb[0].mxu0
      %v2803 = vadd.f32 0.0, %v2802
      %v2804 = vpop.f32.mrb[0].mxu0
      %2805 = vmatprep.mubr.bf16.mxu0 0
      %2806 = vmatmul.mubr.bf16.gmra.mrb[0].mxu0 %v2157
      %v2807 = vpop.f32.mrb[0].mxu0
      %v2808 = vadd.f32 0.0, %v2807
      %v2809 = vpop.f32.mrb[0].mxu0
      %v2810 = vpop.f32.mrb[0].mxu0
      %v2811 = vadd.f32 0.0, %v2810
      %v2812 = vpop.f32.mrb[0].mxu0
      %2813 = vmatprep.mubr.bf16.mxu0 0
      %2814 = vmatmul.mubr.bf16.gmra.mrb[0].mxu0 %v2160
      %v2815 = vpop.f32.mrb[0].mxu0
      %v2816 = vadd.f32 0.0, %v2815
      %v2817 = vpop.f32.mrb[0].mxu0
      %v2818 = vpop.f32.mrb[0].mxu0
      %v2819 = vadd.f32 0.0, %v2818
      %v2820 = vpop.f32.mrb[0].mxu0
      %2821 = vmatprep.mubr.bf16.mxu0 0
      %2822 = vmatmul.mubr.bf16.gmra.mrb[0].mxu0 %v2163
      %v2823 = vpop.f32.mrb[0].mxu0
      %v2824 = vadd.f32 0.0, %v2823
      %v2825 = vpop.f32.mrb[0].mxu0
      %v2826 = vpop.f32.mrb[0].mxu0
      %v2827 = vadd.f32 0.0, %v2826
      %v2828 = vpop.f32.mrb[0].mxu0
      %2829 = vmatprep.mubr.bf16.mxu0 0
      %2830 = vmatmul.mubr.bf16.gmra.mrb[0].mxu0 %v2166
      %v2831 = vpop.f32.mrb[0].mxu0
      %v2832 = vadd.f32 0.0, %v2831
      %v2833 = vpop.f32.mrb[0].mxu0
      %v2834 = vpop.f32.mrb[0].mxu0
      %v2835 = vadd.f32 0.0, %v2834
      %v2836 = vpop.f32.mrb[0].mxu0
      %2837 = vmatprep.mubr.bf16.mxu0 0
      %2838 = vmatmul.mubr.bf16.gmra.mrb[0].mxu0 %v2169
      %v2839 = vpop.f32.mrb[0].mxu0
      %v2840 = vadd.f32 0.0, %v2839
      %v2841 = vpop.f32.mrb[0].mxu0
      %v2842 = vpop.f32.mrb[0].mxu0
      %v2843 = vadd.f32 0.0, %v2842
      %v2844 = vpop.f32.mrb[0].mxu0
      %2845 = vmatprep.mubr.bf16.mxu0 0
      %2846 = vmatmul.mubr.bf16.gmra.mrb[0].mxu0 %v2172
      %v2847 = vpop.f32.mrb[0].mxu0
      %v2848 = vadd.f32 0.0, %v2847
      %v2849 = vpop.f32.mrb[0].mxu0
      %v2850 = vpop.f32.mrb[0].mxu0
      %v2851 = vadd.f32 0.0, %v2850
      %v2852 = vpop.f32.mrb[0].mxu0
      %2853 = vmatprep.mubr.bf16.mxu0 0
      %2854 = vmatmul.mubr.bf16.gmra.mrb[0].mxu0 %v2175
      %v2855 = vpop.f32.mrb[0].mxu0
      %v2856 = vadd.f32 0.0, %v2855
      %v2857 = vpop.f32.mrb[0].mxu0
      %v2858 = vpop.f32.mrb[0].mxu0
      %v2859 = vadd.f32 0.0, %v2858
      %v2860 = vpop.f32.mrb[0].mxu0
      %2861 = vmatprep.mubr.bf16.mxu0 0
      %2862 = vmatmul.mubr.bf16.gmra.mrb[0].mxu0 %v2178
      %v2863 = vpop.f32.mrb[0].mxu0
      %v2864 = vadd.f32 0.0, %v2863
      %v2865 = vpop.f32.mrb[0].mxu0
      %v2866 = vpop.f32.mrb[0].mxu0
      %v2867 = vadd.f32 0.0, %v2866
      %v2868 = vpop.f32.mrb[0].mxu0
      %2869 = vmatprep.mubr.bf16.mxu0 0
      %2870 = vmatmul.mubr.bf16.gmra.mrb[0].mxu0 %v2181
      %v2871 = vpop.f32.mrb[0].mxu0
      %v2872 = vadd.f32 0.0, %v2871
      %v2873 = vpop.f32.mrb[0].mxu0
      %v2874 = vpop.f32.mrb[0].mxu0
      %v2875 = vadd.f32 0.0, %v2874
      %v2876 = vpop.f32.mrb[0].mxu0
      %2877 = vmatprep.mubr.bf16.mxu0 0
      %2878 = vmatmul.mubr.bf16.gmra.mrb[0].mxu0 %v2184
      %v2879 = vpop.f32.mrb[0].mxu0
      %v2880 = vadd.f32 0.0, %v2879
      %v2881 = vpop.f32.mrb[0].mxu0
      %v2882 = vpop.f32.mrb[0].mxu0
      %v2883 = vadd.f32 0.0, %v2882
      %v2884 = vpop.f32.mrb[0].mxu0
      %2885 = vmatprep.mubr.bf16.mxu0 0
      %2886 = vmatmul.mubr.bf16.gmra.mrb[0].mxu0 %v2187
      %v2887 = vpop.f32.mrb[0].mxu0
      %v2888 = vadd.f32 0.0, %v2887
      %v2889 = vpop.f32.mrb[0].mxu0
      %v2890 = vpop.f32.mrb[0].mxu0
      %v2891 = vadd.f32 0.0, %v2890
      %v2892 = vpop.f32.mrb[0].mxu0
      %2893 = vmatprep.mubr.bf16.mxu0 0
      %2894 = vmatmul.mubr.bf16.gmra.mrb[0].mxu0 %v2190
      %v2895 = vpop.f32.mrb[0].mxu0
      %v2896 = vadd.f32 0.0, %v2895
      %v2897 = vpop.f32.mrb[0].mxu0
      %v2898 = vpop.f32.mrb[0].mxu0
      %v2899 = vadd.f32 0.0, %v2898
      %v2900 = vpop.f32.mrb[0].mxu0
      %2901 = vmatprep.mubr.bf16.mxu0 0
      %2902 = vmatmul.mubr.bf16.gmra.mrb[0].mxu0 %v2193
      %v2903 = vpop.f32.mrb[0].mxu0
      %v2904 = vadd.f32 0.0, %v2903
      %v2905 = vpop.f32.mrb[0].mxu0
      %v2906 = vpop.f32.mrb[0].mxu0
      %v2907 = vadd.f32 0.0, %v2906
      %v2908 = vpop.f32.mrb[0].mxu0
      %2909 = vmatprep.mubr.bf16.mxu0 0
      %2910 = vmatmul.mubr.bf16.gmra.mrb[0].mxu0 %v2196
      %v2911 = vpop.f32.mrb[0].mxu0
      %v2912 = vadd.f32 0.0, %v2911
      %v2913 = vpop.f32.mrb[0].mxu0
      %v2914 = vpop.f32.mrb[0].mxu0
      %v2915 = vadd.f32 0.0, %v2914
      %v2916 = vpop.f32.mrb[0].mxu0
      %2917 = vmatprep.mubr.bf16.mxu0 0
      %2918 = vmatmul.mubr.bf16.gmra.mrb[0].mxu0 %v2199
      %v2919 = vpop.f32.mrb[0].mxu0
      %v2920 = vadd.f32 0.0, %v2919
      %v2921 = vpop.f32.mrb[0].mxu0
      %v2922 = vpop.f32.mrb[0].mxu0
      %v2923 = vadd.f32 0.0, %v2922
      %v2924 = vpop.f32.mrb[0].mxu0
      %2925 = vmatprep.mubr.bf16.mxu0 0
      %2926 = vmatmul.mubr.bf16.gmra.mrb[0].mxu0 %v2202
      %v2927 = vpop.f32.mrb[0].mxu0
      %v2928 = vadd.f32 0.0, %v2927
      %v2929 = vpop.f32.mrb[0].mxu0
      %v2930 = vpop.f32.mrb[0].mxu0
      %v2931 = vadd.f32 0.0, %v2930
      %v2932 = vpop.f32.mrb[0].mxu0
      %2933 = vmatprep.mubr.bf16.mxu0 0
      %2934 = vmatmul.mubr.bf16.gmra.mrb[0].mxu0 %v2621
      %v2935 = vpop.f32.mrb[0].mxu0
      %v2936 = vadd.f32 0.0, %v2935
      %v2937 = vpop.f32.mrb[0].mxu0
      %v2938 = vpop.f32.mrb[0].mxu0
      %v2939 = vadd.f32 0.0, %v2938
      %v2940 = vpop.f32.mrb[0].mxu0
      %2941 = vmatprep.mubr.bf16.mxu0 0
      %2942 = vmatmul.mubr.bf16.gmra.mrb[0].mxu0 %v2624
      %v2943 = vpop.f32.mrb[0].mxu0
      %v2944 = vadd.f32 0.0, %v2943
      %v2945 = vpop.f32.mrb[0].mxu0
      %v2946 = vpop.f32.mrb[0].mxu0
      %v2947 = vadd.f32 0.0, %v2946
      %v2948 = vpop.f32.mrb[0].mxu0
      %2949 = vdwg.mxu0
      %v2950 = vadd.f32 %v2528, %v2664
      %v2951 = vadd.f32 %v2529, %v2667
      %v2952 = vadd.f32 %v2530, %v2672
      %v2953 = vadd.f32 %v2531, %v2675
      %v2954 = vadd.f32 %v2532, %v2680
      %v2955 = vadd.f32 %v2533, %v2683
      %v2956 = vadd.f32 %v2534, %v2688
      %v2957 = vadd.f32 %v2535, %v2691
      %v2958 = vadd.f32 %v2536, %v2696
      %v2959 = vadd.f32 %v2537, %v2699
      %v2960 = vadd.f32 %v2538, %v2704
      %v2961 = vadd.f32 %v2539, %v2707
      %v2962 = vadd.f32 %v2540, %v2712
      %v2963 = vadd.f32 %v2541, %v2715
      %v2964 = vadd.f32 %v2542, %v2720
      %v2965 = vadd.f32 %v2543, %v2723
      %v2966 = vadd.f32 %v2544, %v2728
      %v2967 = vadd.f32 %v2545, %v2731
      %v2968 = vadd.f32 %v2546, %v2736
      %v2969 = vadd.f32 %v2547, %v2739
      %v2970 = vadd.f32 %v2548, %v2744
      %v2971 = vadd.f32 %v2549, %v2747
      %v2972 = vadd.f32 %v2550, %v2752
      %v2973 = vadd.f32 %v2551, %v2755
      %v2974 = vadd.f32 %v2552, %v2760
      %v2975 = vadd.f32 %v2553, %v2763
      %v2976 = vadd.f32 %v2554, %v2768
      %v2977 = vadd.f32 %v2555, %v2771
      %v2978 = vadd.f32 %v2556, %v2776
      %v2979 = vadd.f32 %v2557, %v2779
      %v2980 = vadd.f32 %v2558, %v2784
      %v2981 = vadd.f32 %v2559, %v2787
      %v2982 = vadd.f32 %v2560, %v2792
      %v2983 = vadd.f32 %v2561, %v2795
      %v2984 = vadd.f32 %v2562, %v2800
      %v2985 = vadd.f32 %v2563, %v2803
      %v2986 = vadd.f32 %v2564, %v2808
      %v2987 = vadd.f32 %v2565, %v2811
      %v2988 = vadd.f32 %v2566, %v2816
      %v2989 = vadd.f32 %v2567, %v2819
      %v2990 = vadd.f32 %v2568, %v2824
      %v2991 = vadd.f32 %v2569, %v2827
      %v2992 = vadd.f32 %v2570, %v2832
      %v2993 = vadd.f32 %v2571, %v2835
      %v2994 = vadd.f32 %v2572, %v2840
      %v2995 = vadd.f32 %v2573, %v2843
      %v2996 = vadd.f32 %v2574, %v2848
      %v2997 = vadd.f32 %v2575, %v2851
      %v2998 = vadd.f32 %v2576, %v2856
      %v2999 = vadd.f32 %v2577, %v2859
      %v3000 = vadd.f32 %v2578, %v2864
      %v3001 = vadd.f32 %v2579, %v2867
      %v3002 = vadd.f32 %v2580, %v2872
      %v3003 = vadd.f32 %v2581, %v2875
      %v3004 = vadd.f32 %v2582, %v2880
      %v3005 = vadd.f32 %v2583, %v2883
      %v3006 = vadd.f32 %v2584, %v2888
      %v3007 = vadd.f32 %v2585, %v2891
      %v3008 = vadd.f32 %v2586, %v2896
      %v3009 = vadd.f32 %v2587, %v2899
      %v3010 = vadd.f32 %v2588, %v2904
      %v3011 = vadd.f32 %v2589, %v2907
      %v3012 = vadd.f32 %v2590, %v2912
      %v3013 = vadd.f32 %v2591, %v2915
      %v3014 = vadd.f32 %v2592, %v2920
      %v3015 = vadd.f32 %v2593, %v2923
      %v3016 = vadd.f32 %v2594, %v2928
      %v3017 = vadd.f32 %v2595, %v2931
      %v3018 = vadd.f32 %v2596, %v2936
      %v3019 = vadd.f32 %v2597, %v2939
      %v3020 = vadd.f32 %v2598, %v2944
      %v3021 = vadd.f32 %v2599, %v2947
      %v3022 = vshrl.u32 %v576, 16
      %v3024 = vshll.u32 %v576, 16
      %v3026 = vrot.slane %v3024, 1
      %v3027 = vor.u32 %v3022, %v3026
      %v3028 = vshll.u32 %v577, 16
      %v3030 = vrot.slane %v3028, 1
      %v3031 = vsel %vm1769, %v3027, %v3030
      %v3032 = vshrl.u32 %v577, 16
      %v3034 = vor.u32 %v3032, %v3030
      %v3036 = vshll.u32 %v1768, 16
      %v3038 = vrot.slane %v3036, 1
      %v3039 = vsel %vm1769, %v3034, %v3038
      %s3040 = scalar_lea.vmem %s1, 14
      %v3041 = vld [vmem:[%s3040] sm:$0x3]
      %v3043 = vsel %vm581, %v3031, 0
      %v3046 = vsel %vm581, %v3039, 0
      %v3049 = vsel %vm690, %v3041, 0
      %3051 = vmatprep.subr.bf16.mxu0 0
      %3052 = vmatpush1.bf16.msra.mxu0 %v3049
      %3053 = vmatprep.subr.bf16.mxu0 0
      %3054 = vmatpush1.bf16.msra.mxu0 0
      %3055 = vmatprep.subr.bf16.mxu0 0
      %3056 = vmatpush1.bf16.msra.mxu0 0
      %3057 = vmatprep.subr.bf16.mxu0 0
      %3058 = vmatpush1.bf16.msra.mxu0 0
      %3059 = vmatprep.subr.bf16.mxu0 0
      %3060 = vmatpush1.bf16.msra.mxu0 0
      %3061 = vmatprep.subr.bf16.mxu0 0
      %3062 = vmatpush1.bf16.msra.mxu0 0
      %3063 = vmatprep.subr.bf16.mxu0 0
      %3064 = vmatpush1.bf16.msra.mxu0 0
      %3065 = vmatprep.subr.bf16.mxu0 0
      %3066 = vmatpush1.bf16.msra.mxu0 0
      %3067 = vmatprep.subr.bf16.mxu0 0
      %3068 = vmatpush1.bf16.msra.mxu0 0
      %3069 = vmatprep.subr.bf16.mxu0 0
      %3070 = vmatpush1.bf16.msra.mxu0 0
      %3071 = vmatprep.subr.bf16.mxu0 0
      %3072 = vmatpush1.bf16.msra.mxu0 0
      %3073 = vmatprep.subr.bf16.mxu0 0
      %3074 = vmatpush1.bf16.msra.mxu0 0
      %3075 = vmatprep.subr.bf16.mxu0 0
      %3076 = vmatpush1.bf16.msra.mxu0 0
      %3077 = vmatprep.subr.bf16.mxu0 0
      %3078 = vmatpush1.bf16.msra.mxu0 0
      %3079 = vmatprep.subr.bf16.mxu0 0
      %3080 = vmatpush1.bf16.msra.mxu0 0
      %3081 = vmatprep.subr.bf16.mxu0 0
      %3082 = vmatpush1.bf16.msra.mxu0 0
      %3083 = vmatprep.mubr.bf16.mxu0 0
      %3084 = vmatmul.mubr.bf16.gmra.mrb[0].mxu0 %v2109
      %v3085 = vpop.f32.mrb[0].mxu0
      %v3086 = vadd.f32 0.0, %v3085
      %v3087 = vpop.f32.mrb[0].mxu0
      %v3088 = vpop.f32.mrb[0].mxu0
      %v3089 = vadd.f32 0.0, %v3088
      %v3090 = vpop.f32.mrb[0].mxu0
      %3091 = vmatprep.mubr.bf16.mxu0 0
      %3092 = vmatmul.mubr.bf16.gmra.mrb[0].mxu0 %v2112
      %v3093 = vpop.f32.mrb[0].mxu0
      %v3094 = vadd.f32 0.0, %v3093
      %v3095 = vpop.f32.mrb[0].mxu0
      %v3096 = vpop.f32.mrb[0].mxu0
      %v3097 = vadd.f32 0.0, %v3096
      %v3098 = vpop.f32.mrb[0].mxu0
      %3099 = vmatprep.mubr.bf16.mxu0 0
      %3100 = vmatmul.mubr.bf16.gmra.mrb[0].mxu0 %v2115
      %v3101 = vpop.f32.mrb[0].mxu0
      %v3102 = vadd.f32 0.0, %v3101
      %v3103 = vpop.f32.mrb[0].mxu0
      %v3104 = vpop.f32.mrb[0].mxu0
      %v3105 = vadd.f32 0.0, %v3104
      %v3106 = vpop.f32.mrb[0].mxu0
      %3107 = vmatprep.mubr.bf16.mxu0 0
      %3108 = vmatmul.mubr.bf16.gmra.mrb[0].mxu0 %v2118
      %v3109 = vpop.f32.mrb[0].mxu0
      %v3110 = vadd.f32 0.0, %v3109
      %v3111 = vpop.f32.mrb[0].mxu0
      %v3112 = vpop.f32.mrb[0].mxu0
      %v3113 = vadd.f32 0.0, %v3112
      %v3114 = vpop.f32.mrb[0].mxu0
      %3115 = vmatprep.mubr.bf16.mxu0 0
      %3116 = vmatmul.mubr.bf16.gmra.mrb[0].mxu0 %v2121
      %v3117 = vpop.f32.mrb[0].mxu0
      %v3118 = vadd.f32 0.0, %v3117
      %v3119 = vpop.f32.mrb[0].mxu0
      %v3120 = vpop.f32.mrb[0].mxu0
      %v3121 = vadd.f32 0.0, %v3120
      %v3122 = vpop.f32.mrb[0].mxu0
      %3123 = vmatprep.mubr.bf16.mxu0 0
      %3124 = vmatmul.mubr.bf16.gmra.mrb[0].mxu0 %v2124
      %v3125 = vpop.f32.mrb[0].mxu0
      %v3126 = vadd.f32 0.0, %v3125
      %v3127 = vpop.f32.mrb[0].mxu0
      %v3128 = vpop.f32.mrb[0].mxu0
      %v3129 = vadd.f32 0.0, %v3128
      %v3130 = vpop.f32.mrb[0].mxu0
      %3131 = vmatprep.mubr.bf16.mxu0 0
      %3132 = vmatmul.mubr.bf16.gmra.mrb[0].mxu0 %v2127
      %v3133 = vpop.f32.mrb[0].mxu0
      %v3134 = vadd.f32 0.0, %v3133
      %v3135 = vpop.f32.mrb[0].mxu0
      %v3136 = vpop.f32.mrb[0].mxu0
      %v3137 = vadd.f32 0.0, %v3136
      %v3138 = vpop.f32.mrb[0].mxu0
      %3139 = vmatprep.mubr.bf16.mxu0 0
      %3140 = vmatmul.mubr.bf16.gmra.mrb[0].mxu0 %v2130
      %v3141 = vpop.f32.mrb[0].mxu0
      %v3142 = vadd.f32 0.0, %v3141
      %v3143 = vpop.f32.mrb[0].mxu0
      %v3144 = vpop.f32.mrb[0].mxu0
      %v3145 = vadd.f32 0.0, %v3144
      %v3146 = vpop.f32.mrb[0].mxu0
      %3147 = vmatprep.mubr.bf16.mxu0 0
      %3148 = vmatmul.mubr.bf16.gmra.mrb[0].mxu0 %v2133
      %v3149 = vpop.f32.mrb[0].mxu0
      %v3150 = vadd.f32 0.0, %v3149
      %v3151 = vpop.f32.mrb[0].mxu0
      %v3152 = vpop.f32.mrb[0].mxu0
      %v3153 = vadd.f32 0.0, %v3152
      %v3154 = vpop.f32.mrb[0].mxu0
      %3155 = vmatprep.mubr.bf16.mxu0 0
      %3156 = vmatmul.mubr.bf16.gmra.mrb[0].mxu0 %v2136
      %v3157 = vpop.f32.mrb[0].mxu0
      %v3158 = vadd.f32 0.0, %v3157
      %v3159 = vpop.f32.mrb[0].mxu0
      %v3160 = vpop.f32.mrb[0].mxu0
      %v3161 = vadd.f32 0.0, %v3160
      %v3162 = vpop.f32.mrb[0].mxu0
      %3163 = vmatprep.mubr.bf16.mxu0 0
      %3164 = vmatmul.mubr.bf16.gmra.mrb[0].mxu0 %v2139
      %v3165 = vpop.f32.mrb[0].mxu0
      %v3166 = vadd.f32 0.0, %v3165
      %v3167 = vpop.f32.mrb[0].mxu0
      %v3168 = vpop.f32.mrb[0].mxu0
      %v3169 = vadd.f32 0.0, %v3168
      %v3170 = vpop.f32.mrb[0].mxu0
      %3171 = vmatprep.mubr.bf16.mxu0 0
      %3172 = vmatmul.mubr.bf16.gmra.mrb[0].mxu0 %v2142
      %v3173 = vpop.f32.mrb[0].mxu0
      %v3174 = vadd.f32 0.0, %v3173
      %v3175 = vpop.f32.mrb[0].mxu0
      %v3176 = vpop.f32.mrb[0].mxu0
      %v3177 = vadd.f32 0.0, %v3176
      %v3178 = vpop.f32.mrb[0].mxu0
      %3179 = vmatprep.mubr.bf16.mxu0 0
      %3180 = vmatmul.mubr.bf16.gmra.mrb[0].mxu0 %v2145
      %v3181 = vpop.f32.mrb[0].mxu0
      %v3182 = vadd.f32 0.0, %v3181
      %v3183 = vpop.f32.mrb[0].mxu0
      %v3184 = vpop.f32.mrb[0].mxu0
      %v3185 = vadd.f32 0.0, %v3184
      %v3186 = vpop.f32.mrb[0].mxu0
      %3187 = vmatprep.mubr.bf16.mxu0 0
      %3188 = vmatmul.mubr.bf16.gmra.mrb[0].mxu0 %v2148
      %v3189 = vpop.f32.mrb[0].mxu0
      %v3190 = vadd.f32 0.0, %v3189
      %v3191 = vpop.f32.mrb[0].mxu0
      %v3192 = vpop.f32.mrb[0].mxu0
      %v3193 = vadd.f32 0.0, %v3192
      %v3194 = vpop.f32.mrb[0].mxu0
      %3195 = vmatprep.mubr.bf16.mxu0 0
      %3196 = vmatmul.mubr.bf16.gmra.mrb[0].mxu0 %v2151
      %v3197 = vpop.f32.mrb[0].mxu0
      %v3198 = vadd.f32 0.0, %v3197
      %v3199 = vpop.f32.mrb[0].mxu0
      %v3200 = vpop.f32.mrb[0].mxu0
      %v3201 = vadd.f32 0.0, %v3200
      %v3202 = vpop.f32.mrb[0].mxu0
      %3203 = vmatprep.mubr.bf16.mxu0 0
      %3204 = vmatmul.mubr.bf16.gmra.mrb[0].mxu0 %v2154
      %v3205 = vpop.f32.mrb[0].mxu0
      %v3206 = vadd.f32 0.0, %v3205
      %v3207 = vpop.f32.mrb[0].mxu0
      %v3208 = vpop.f32.mrb[0].mxu0
      %v3209 = vadd.f32 0.0, %v3208
      %v3210 = vpop.f32.mrb[0].mxu0
      %3211 = vmatprep.mubr.bf16.mxu0 0
      %3212 = vmatmul.mubr.bf16.gmra.mrb[0].mxu0 %v2157
      %v3213 = vpop.f32.mrb[0].mxu0
      %v3214 = vadd.f32 0.0, %v3213
      %v3215 = vpop.f32.mrb[0].mxu0
      %v3216 = vpop.f32.mrb[0].mxu0
      %v3217 = vadd.f32 0.0, %v3216
      %v3218 = vpop.f32.mrb[0].mxu0
      %3219 = vmatprep.mubr.bf16.mxu0 0
      %3220 = vmatmul.mubr.bf16.gmra.mrb[0].mxu0 %v2160
      %v3221 = vpop.f32.mrb[0].mxu0
      %v3222 = vadd.f32 0.0, %v3221
      %v3223 = vpop.f32.mrb[0].mxu0
      %v3224 = vpop.f32.mrb[0].mxu0
      %v3225 = vadd.f32 0.0, %v3224
      %v3226 = vpop.f32.mrb[0].mxu0
      %3227 = vmatprep.mubr.bf16.mxu0 0
      %3228 = vmatmul.mubr.bf16.gmra.mrb[0].mxu0 %v2163
      %v3229 = vpop.f32.mrb[0].mxu0
      %v3230 = vadd.f32 0.0, %v3229
      %v3231 = vpop.f32.mrb[0].mxu0
      %v3232 = vpop.f32.mrb[0].mxu0
      %v3233 = vadd.f32 0.0, %v3232
      %v3234 = vpop.f32.mrb[0].mxu0
      %3235 = vmatprep.mubr.bf16.mxu0 0
      %3236 = vmatmul.mubr.bf16.gmra.mrb[0].mxu0 %v2166
      %v3237 = vpop.f32.mrb[0].mxu0
      %v3238 = vadd.f32 0.0, %v3237
      %v3239 = vpop.f32.mrb[0].mxu0
      %v3240 = vpop.f32.mrb[0].mxu0
      %v3241 = vadd.f32 0.0, %v3240
      %v3242 = vpop.f32.mrb[0].mxu0
      %3243 = vmatprep.mubr.bf16.mxu0 0
      %3244 = vmatmul.mubr.bf16.gmra.mrb[0].mxu0 %v2169
      %v3245 = vpop.f32.mrb[0].mxu0
      %v3246 = vadd.f32 0.0, %v3245
      %v3247 = vpop.f32.mrb[0].mxu0
      %v3248 = vpop.f32.mrb[0].mxu0
      %v3249 = vadd.f32 0.0, %v3248
      %v3250 = vpop.f32.mrb[0].mxu0
      %3251 = vmatprep.mubr.bf16.mxu0 0
      %3252 = vmatmul.mubr.bf16.gmra.mrb[0].mxu0 %v2172
      %v3253 = vpop.f32.mrb[0].mxu0
      %v3254 = vadd.f32 0.0, %v3253
      %v3255 = vpop.f32.mrb[0].mxu0
      %v3256 = vpop.f32.mrb[0].mxu0
      %v3257 = vadd.f32 0.0, %v3256
      %v3258 = vpop.f32.mrb[0].mxu0
      %3259 = vmatprep.mubr.bf16.mxu0 0
      %3260 = vmatmul.mubr.bf16.gmra.mrb[0].mxu0 %v2175
      %v3261 = vpop.f32.mrb[0].mxu0
      %v3262 = vadd.f32 0.0, %v3261
      %v3263 = vpop.f32.mrb[0].mxu0
      %v3264 = vpop.f32.mrb[0].mxu0
      %v3265 = vadd.f32 0.0, %v3264
      %v3266 = vpop.f32.mrb[0].mxu0
      %3267 = vmatprep.mubr.bf16.mxu0 0
      %3268 = vmatmul.mubr.bf16.gmra.mrb[0].mxu0 %v2178
      %v3269 = vpop.f32.mrb[0].mxu0
      %v3270 = vadd.f32 0.0, %v3269
      %v3271 = vpop.f32.mrb[0].mxu0
      %v3272 = vpop.f32.mrb[0].mxu0
      %v3273 = vadd.f32 0.0, %v3272
      %v3274 = vpop.f32.mrb[0].mxu0
      %3275 = vmatprep.mubr.bf16.mxu0 0
      %3276 = vmatmul.mubr.bf16.gmra.mrb[0].mxu0 %v2181
      %v3277 = vpop.f32.mrb[0].mxu0
      %v3278 = vadd.f32 0.0, %v3277
      %v3279 = vpop.f32.mrb[0].mxu0
      %v3280 = vpop.f32.mrb[0].mxu0
      %v3281 = vadd.f32 0.0, %v3280
      %v3282 = vpop.f32.mrb[0].mxu0
      %3283 = vmatprep.mubr.bf16.mxu0 0
      %3284 = vmatmul.mubr.bf16.gmra.mrb[0].mxu0 %v2184
      %v3285 = vpop.f32.mrb[0].mxu0
      %v3286 = vadd.f32 0.0, %v3285
      %v3287 = vpop.f32.mrb[0].mxu0
      %v3288 = vpop.f32.mrb[0].mxu0
      %v3289 = vadd.f32 0.0, %v3288
      %v3290 = vpop.f32.mrb[0].mxu0
      %3291 = vmatprep.mubr.bf16.mxu0 0
      %3292 = vmatmul.mubr.bf16.gmra.mrb[0].mxu0 %v2187
      %v3293 = vpop.f32.mrb[0].mxu0
      %v3294 = vadd.f32 0.0, %v3293
      %v3295 = vpop.f32.mrb[0].mxu0
      %v3296 = vpop.f32.mrb[0].mxu0
      %v3297 = vadd.f32 0.0, %v3296
      %v3298 = vpop.f32.mrb[0].mxu0
      %3299 = vmatprep.mubr.bf16.mxu0 0
      %3300 = vmatmul.mubr.bf16.gmra.mrb[0].mxu0 %v2190
      %v3301 = vpop.f32.mrb[0].mxu0
      %v3302 = vadd.f32 0.0, %v3301
      %v3303 = vpop.f32.mrb[0].mxu0
      %v3304 = vpop.f32.mrb[0].mxu0
      %v3305 = vadd.f32 0.0, %v3304
      %v3306 = vpop.f32.mrb[0].mxu0
      %3307 = vmatprep.mubr.bf16.mxu0 0
      %3308 = vmatmul.mubr.bf16.gmra.mrb[0].mxu0 %v2193
      %v3309 = vpop.f32.mrb[0].mxu0
      %v3310 = vadd.f32 0.0, %v3309
      %v3311 = vpop.f32.mrb[0].mxu0
      %v3312 = vpop.f32.mrb[0].mxu0
      %v3313 = vadd.f32 0.0, %v3312
      %v3314 = vpop.f32.mrb[0].mxu0
      %3315 = vmatprep.mubr.bf16.mxu0 0
      %3316 = vmatmul.mubr.bf16.gmra.mrb[0].mxu0 %v2196
      %v3317 = vpop.f32.mrb[0].mxu0
      %v3318 = vadd.f32 0.0, %v3317
      %v3319 = vpop.f32.mrb[0].mxu0
      %v3320 = vpop.f32.mrb[0].mxu0
      %v3321 = vadd.f32 0.0, %v3320
      %v3322 = vpop.f32.mrb[0].mxu0
      %3323 = vmatprep.mubr.bf16.mxu0 0
      %3324 = vmatmul.mubr.bf16.gmra.mrb[0].mxu0 %v2199
      %v3325 = vpop.f32.mrb[0].mxu0
      %v3326 = vadd.f32 0.0, %v3325
      %v3327 = vpop.f32.mrb[0].mxu0
      %v3328 = vpop.f32.mrb[0].mxu0
      %v3329 = vadd.f32 0.0, %v3328
      %v3330 = vpop.f32.mrb[0].mxu0
      %3331 = vmatprep.mubr.bf16.mxu0 0
      %3332 = vmatmul.mubr.bf16.gmra.mrb[0].mxu0 %v2202
      %v3333 = vpop.f32.mrb[0].mxu0
      %v3334 = vadd.f32 0.0, %v3333
      %v3335 = vpop.f32.mrb[0].mxu0
      %v3336 = vpop.f32.mrb[0].mxu0
      %v3337 = vadd.f32 0.0, %v3336
      %v3338 = vpop.f32.mrb[0].mxu0
      %3339 = vmatprep.mubr.bf16.mxu0 0
      %3340 = vmatmul.mubr.bf16.gmra.mrb[0].mxu0 %v2621
      %v3341 = vpop.f32.mrb[0].mxu0
      %v3342 = vadd.f32 0.0, %v3341
      %v3343 = vpop.f32.mrb[0].mxu0
      %v3344 = vpop.f32.mrb[0].mxu0
      %v3345 = vadd.f32 0.0, %v3344
      %v3346 = vpop.f32.mrb[0].mxu0
      %3347 = vmatprep.mubr.bf16.mxu0 0
      %3348 = vmatmul.mubr.bf16.gmra.mrb[0].mxu0 %v2624
      %v3349 = vpop.f32.mrb[0].mxu0
      %v3350 = vadd.f32 0.0, %v3349
      %v3351 = vpop.f32.mrb[0].mxu0
      %v3352 = vpop.f32.mrb[0].mxu0
      %v3353 = vadd.f32 0.0, %v3352
      %v3354 = vpop.f32.mrb[0].mxu0
      %3355 = vmatprep.mubr.bf16.mxu0 0
      %3356 = vmatmul.mubr.bf16.gmra.mrb[0].mxu0 %v3043
      %v3357 = vpop.f32.mrb[0].mxu0
      %v3358 = vadd.f32 0.0, %v3357
      %v3359 = vpop.f32.mrb[0].mxu0
      %v3360 = vpop.f32.mrb[0].mxu0
      %v3361 = vadd.f32 0.0, %v3360
      %v3362 = vpop.f32.mrb[0].mxu0
      %3363 = vmatprep.mubr.bf16.mxu0 0
      %3364 = vmatmul.mubr.bf16.gmra.mrb[0].mxu0 %v3046
      %v3365 = vpop.f32.mrb[0].mxu0
      %v3366 = vadd.f32 0.0, %v3365
      %v3367 = vpop.f32.mrb[0].mxu0
      %v3368 = vpop.f32.mrb[0].mxu0
      %v3369 = vadd.f32 0.0, %v3368
      %v3370 = vpop.f32.mrb[0].mxu0
      %3371 = vdwg.mxu0
      %v3372 = vadd.f32 %v2950, %v3086
      %v3373 = vadd.f32 %v2951, %v3089
      %v3374 = vadd.f32 %v2952, %v3094
      %v3375 = vadd.f32 %v2953, %v3097
      %v3376 = vadd.f32 %v2954, %v3102
      %v3377 = vadd.f32 %v2955, %v3105
      %v3378 = vadd.f32 %v2956, %v3110
      %v3379 = vadd.f32 %v2957, %v3113
      %v3380 = vadd.f32 %v2958, %v3118
      %v3381 = vadd.f32 %v2959, %v3121
      %v3382 = vadd.f32 %v2960, %v3126
      %v3383 = vadd.f32 %v2961, %v3129
      %v3384 = vadd.f32 %v2962, %v3134
      %v3385 = vadd.f32 %v2963, %v3137
      %v3386 = vadd.f32 %v2964, %v3142
      %v3387 = vadd.f32 %v2965, %v3145
      %v3388 = vadd.f32 %v2966, %v3150
      %v3389 = vadd.f32 %v2967, %v3153
      %v3390 = vadd.f32 %v2968, %v3158
      %v3391 = vadd.f32 %v2969, %v3161
      %v3392 = vadd.f32 %v2970, %v3166
      %v3393 = vadd.f32 %v2971, %v3169
      %v3394 = vadd.f32 %v2972, %v3174
      %v3395 = vadd.f32 %v2973, %v3177
      %v3396 = vadd.f32 %v2974, %v3182
      %v3397 = vadd.f32 %v2975, %v3185
      %v3398 = vadd.f32 %v2976, %v3190
      %v3399 = vadd.f32 %v2977, %v3193
      %v3400 = vadd.f32 %v2978, %v3198
      %v3401 = vadd.f32 %v2979, %v3201
      %v3402 = vadd.f32 %v2980, %v3206
      %v3403 = vadd.f32 %v2981, %v3209
      %v3404 = vadd.f32 %v2982, %v3214
      %v3405 = vadd.f32 %v2983, %v3217
      %v3406 = vadd.f32 %v2984, %v3222
      %v3407 = vadd.f32 %v2985, %v3225
      %v3408 = vadd.f32 %v2986, %v3230
      %v3409 = vadd.f32 %v2987, %v3233
      %v3410 = vadd.f32 %v2988, %v3238
      %v3411 = vadd.f32 %v2989, %v3241
      %v3412 = vadd.f32 %v2990, %v3246
      %v3413 = vadd.f32 %v2991, %v3249
      %v3414 = vadd.f32 %v2992, %v3254
      %v3415 = vadd.f32 %v2993, %v3257
      %v3416 = vadd.f32 %v2994, %v3262
      %v3417 = vadd.f32 %v2995, %v3265
      %v3418 = vadd.f32 %v2996, %v3270
      %v3419 = vadd.f32 %v2997, %v3273
      %v3420 = vadd.f32 %v2998, %v3278
      %v3421 = vadd.f32 %v2999, %v3281
      %v3422 = vadd.f32 %v3000, %v3286
      %v3423 = vadd.f32 %v3001, %v3289
      %v3424 = vadd.f32 %v3002, %v3294
      %v3425 = vadd.f32 %v3003, %v3297
      %v3426 = vadd.f32 %v3004, %v3302
      %v3427 = vadd.f32 %v3005, %v3305
      %v3428 = vadd.f32 %v3006, %v3310
      %v3429 = vadd.f32 %v3007, %v3313
      %v3430 = vadd.f32 %v3008, %v3318
      %v3431 = vadd.f32 %v3009, %v3321
      %v3432 = vadd.f32 %v3010, %v3326
      %v3433 = vadd.f32 %v3011, %v3329
      %v3434 = vadd.f32 %v3012, %v3334
      %v3435 = vadd.f32 %v3013, %v3337
      %v3436 = vadd.f32 %v3014, %v3342
      %v3437 = vadd.f32 %v3015, %v3345
      %v3438 = vadd.f32 %v3016, %v3350
      %v3439 = vadd.f32 %v3017, %v3353
      %v3440 = vadd.f32 %v3018, %v3358
      %v3441 = vadd.f32 %v3019, %v3361
      %v3442 = vadd.f32 %v3020, %v3366
      %v3443 = vadd.f32 %v3021, %v3369
      %vm3476 = vcmask 1046528
      %v3477 = vrot.slane %v542, 1
      %v3478 = vrot.slane %v543, 1
      %v3479 = vsel %vm3476, %v3477, %v3478
      %v3480 = vrot.slane %v544, 1
      %v3481 = vrot.slane %v545, 1
      %v3482 = vsel %vm3476, %v3480, %v3481
      %v3483 = vrot.slane %v546, 1
      %v3484 = vrot.slane %v547, 1
      %v3485 = vsel %vm3476, %v3483, %v3484
      %v3486 = vrot.slane %v548, 1
      %v3487 = vrot.slane %v549, 1
      %v3488 = vsel %vm3476, %v3486, %v3487
      %v3489 = vrot.slane %v550, 1
      %v3490 = vrot.slane %v551, 1
      %v3491 = vsel %vm3476, %v3489, %v3490
      %v3492 = vrot.slane %v552, 1
      %v3493 = vrot.slane %v553, 1
      %v3494 = vsel %vm3476, %v3492, %v3493
      %v3495 = vrot.slane %v554, 1
      %v3496 = vrot.slane %v555, 1
      %v3497 = vsel %vm3476, %v3495, %v3496
      %v3498 = vrot.slane %v556, 1
      %v3499 = vrot.slane %v557, 1
      %v3500 = vsel %vm3476, %v3498, %v3499
      %v3501 = vrot.slane %v558, 1
      %v3502 = vrot.slane %v559, 1
      %v3503 = vsel %vm3476, %v3501, %v3502
      %v3504 = vrot.slane %v560, 1
      %v3505 = vrot.slane %v561, 1
      %v3506 = vsel %vm3476, %v3504, %v3505
      %v3507 = vrot.slane %v562, 1
      %v3508 = vrot.slane %v563, 1
      %v3509 = vsel %vm3476, %v3507, %v3508
      %v3510 = vrot.slane %v564, 1
      %v3511 = vrot.slane %v565, 1
      %v3512 = vsel %vm3476, %v3510, %v3511
      %v3513 = vrot.slane %v566, 1
      %v3514 = vrot.slane %v567, 1
      %v3515 = vsel %vm3476, %v3513, %v3514
      %v3516 = vrot.slane %v568, 1
      %v3517 = vrot.slane %v569, 1
      %v3518 = vsel %vm3476, %v3516, %v3517
      %v3519 = vrot.slane %v570, 1
      %v3520 = vrot.slane %v571, 1
      %v3521 = vsel %vm3476, %v3519, %v3520
      %v3522 = vrot.slane %v572, 1
      %v3523 = vrot.slane %v573, 1
      %v3524 = vsel %vm3476, %v3522, %v3523
      %v3525 = vld [vmem:[%s7] sm:$0x3]
      %v3526 = vld [vmem:[%s8] sm:$0x1]
      %v3528 = vlaneseq
      %v3529 = vshrl.u32 %v3528, 7
      %v3530 = vsub.s32 0, %v3529
      %v3531 = vrot.slane %v3526, %v3530
      %v3534 = vsel %vm581, %v3479, 0
      %v3537 = vsel %vm581, %v3482, 0
      %v3540 = vsel %vm581, %v3485, 0
      %v3543 = vsel %vm581, %v3488, 0
      %v3546 = vsel %vm581, %v3491, 0
      %v3549 = vsel %vm581, %v3494, 0
      %v3552 = vsel %vm581, %v3497, 0
      %v3555 = vsel %vm581, %v3500, 0
      %v3558 = vsel %vm581, %v3503, 0
      %v3561 = vsel %vm581, %v3506, 0
      %v3564 = vsel %vm581, %v3509, 0
      %v3567 = vsel %vm581, %v3512, 0
      %v3570 = vsel %vm581, %v3515, 0
      %v3573 = vsel %vm581, %v3518, 0
      %v3576 = vsel %vm581, %v3521, 0
      %v3579 = vsel %vm581, %v3524, 0
      %v3582 = vsel %vm690, %v3525, 0
      %3584 = vmatprep.subr.bf16.mxu0 0
      %3585 = vmatpush1.bf16.msra.mxu0 %v3582
      %3586 = vmatprep.subr.bf16.mxu0 0
      %3587 = vmatpush1.bf16.msra.mxu0 0
      %3588 = vmatprep.subr.bf16.mxu0 0
      %3589 = vmatpush1.bf16.msra.mxu0 0
      %3590 = vmatprep.subr.bf16.mxu0 0
      %3591 = vmatpush1.bf16.msra.mxu0 0
      %3592 = vmatprep.subr.bf16.mxu0 0
      %3593 = vmatpush1.bf16.msra.mxu0 0
      %3594 = vmatprep.subr.bf16.mxu0 0
      %3595 = vmatpush1.bf16.msra.mxu0 0
      %3596 = vmatprep.subr.bf16.mxu0 0
      %3597 = vmatpush1.bf16.msra.mxu0 0
      %3598 = vmatprep.subr.bf16.mxu0 0
      %3599 = vmatpush1.bf16.msra.mxu0 0
      %3600 = vmatprep.subr.bf16.mxu0 0
      %3601 = vmatpush1.bf16.msra.mxu0 0
      %3602 = vmatprep.subr.bf16.mxu0 0
      %3603 = vmatpush1.bf16.msra.mxu0 0
      %3604 = vmatprep.subr.bf16.mxu0 0
      %3605 = vmatpush1.bf16.msra.mxu0 0
      %3606 = vmatprep.subr.bf16.mxu0 0
      %3607 = vmatpush1.bf16.msra.mxu0 0
      %3608 = vmatprep.subr.bf16.mxu0 0
      %3609 = vmatpush1.bf16.msra.mxu0 0
      %3610 = vmatprep.subr.bf16.mxu0 0
      %3611 = vmatpush1.bf16.msra.mxu0 0
      %3612 = vmatprep.subr.bf16.mxu0 0
      %3613 = vmatpush1.bf16.msra.mxu0 0
      %3614 = vmatprep.subr.bf16.mxu0 0
      %3615 = vmatpush1.bf16.msra.mxu0 0
      %3616 = vmatprep.mubr.bf16.mxu0 0
      %3617 = vmatmul.mubr.bf16.gmra.mrb[0].mxu0 %v3534
      %v3618 = vpop.f32.mrb[0].mxu0
      %v3619 = vadd.f32 %v3531, %v3618
      %v3620 = vpop.f32.mrb[0].mxu0
      %v3621 = vpop.f32.mrb[0].mxu0
      %v3622 = vadd.f32 %v3531, %v3621
      %v3623 = vpop.f32.mrb[0].mxu0
      %3624 = vmatprep.mubr.bf16.mxu0 0
      %3625 = vmatmul.mubr.bf16.gmra.mrb[0].mxu0 %v3537
      %v3626 = vpop.f32.mrb[0].mxu0
      %v3627 = vadd.f32 %v3531, %v3626
      %v3628 = vpop.f32.mrb[0].mxu0
      %v3629 = vpop.f32.mrb[0].mxu0
      %v3630 = vadd.f32 %v3531, %v3629
      %v3631 = vpop.f32.mrb[0].mxu0
      %3632 = vmatprep.mubr.bf16.mxu0 0
      %3633 = vmatmul.mubr.bf16.gmra.mrb[0].mxu0 %v3540
      %v3634 = vpop.f32.mrb[0].mxu0
      %v3635 = vadd.f32 %v3531, %v3634
      %v3636 = vpop.f32.mrb[0].mxu0
      %v3637 = vpop.f32.mrb[0].mxu0
      %v3638 = vadd.f32 %v3531, %v3637
      %v3639 = vpop.f32.mrb[0].mxu0
      %3640 = vmatprep.mubr.bf16.mxu0 0
      %3641 = vmatmul.mubr.bf16.gmra.mrb[0].mxu0 %v3543
      %v3642 = vpop.f32.mrb[0].mxu0
      %v3643 = vadd.f32 %v3531, %v3642
      %v3644 = vpop.f32.mrb[0].mxu0
      %v3645 = vpop.f32.mrb[0].mxu0
      %v3646 = vadd.f32 %v3531, %v3645
      %v3647 = vpop.f32.mrb[0].mxu0
      %3648 = vmatprep.mubr.bf16.mxu0 0
      %3649 = vmatmul.mubr.bf16.gmra.mrb[0].mxu0 %v3546
      %v3650 = vpop.f32.mrb[0].mxu0
      %v3651 = vadd.f32 %v3531, %v3650
      %v3652 = vpop.f32.mrb[0].mxu0
      %v3653 = vpop.f32.mrb[0].mxu0
      %v3654 = vadd.f32 %v3531, %v3653
      %v3655 = vpop.f32.mrb[0].mxu0
      %3656 = vmatprep.mubr.bf16.mxu0 0
      %3657 = vmatmul.mubr.bf16.gmra.mrb[0].mxu0 %v3549
      %v3658 = vpop.f32.mrb[0].mxu0
      %v3659 = vadd.f32 %v3531, %v3658
      %v3660 = vpop.f32.mrb[0].mxu0
      %v3661 = vpop.f32.mrb[0].mxu0
      %v3662 = vadd.f32 %v3531, %v3661
      %v3663 = vpop.f32.mrb[0].mxu0
      %3664 = vmatprep.mubr.bf16.mxu0 0
      %3665 = vmatmul.mubr.bf16.gmra.mrb[0].mxu0 %v3552
      %v3666 = vpop.f32.mrb[0].mxu0
      %v3667 = vadd.f32 %v3531, %v3666
      %v3668 = vpop.f32.mrb[0].mxu0
      %v3669 = vpop.f32.mrb[0].mxu0
      %v3670 = vadd.f32 %v3531, %v3669
      %v3671 = vpop.f32.mrb[0].mxu0
      %3672 = vmatprep.mubr.bf16.mxu0 0
      %3673 = vmatmul.mubr.bf16.gmra.mrb[0].mxu0 %v3555
      %v3674 = vpop.f32.mrb[0].mxu0
      %v3675 = vadd.f32 %v3531, %v3674
      %v3676 = vpop.f32.mrb[0].mxu0
      %v3677 = vpop.f32.mrb[0].mxu0
      %v3678 = vadd.f32 %v3531, %v3677
      %v3679 = vpop.f32.mrb[0].mxu0
      %3680 = vmatprep.mubr.bf16.mxu0 0
      %3681 = vmatmul.mubr.bf16.gmra.mrb[0].mxu0 %v3558
      %v3682 = vpop.f32.mrb[0].mxu0
      %v3683 = vadd.f32 %v3531, %v3682
      %v3684 = vpop.f32.mrb[0].mxu0
      %v3685 = vpop.f32.mrb[0].mxu0
      %v3686 = vadd.f32 %v3531, %v3685
      %v3687 = vpop.f32.mrb[0].mxu0
      %3688 = vmatprep.mubr.bf16.mxu0 0
      %3689 = vmatmul.mubr.bf16.gmra.mrb[0].mxu0 %v3561
      %v3690 = vpop.f32.mrb[0].mxu0
      %v3691 = vadd.f32 %v3531, %v3690
      %v3692 = vpop.f32.mrb[0].mxu0
      %v3693 = vpop.f32.mrb[0].mxu0
      %v3694 = vadd.f32 %v3531, %v3693
      %v3695 = vpop.f32.mrb[0].mxu0
      %3696 = vmatprep.mubr.bf16.mxu0 0
      %3697 = vmatmul.mubr.bf16.gmra.mrb[0].mxu0 %v3564
      %v3698 = vpop.f32.mrb[0].mxu0
      %v3699 = vadd.f32 %v3531, %v3698
      %v3700 = vpop.f32.mrb[0].mxu0
      %v3701 = vpop.f32.mrb[0].mxu0
      %v3702 = vadd.f32 %v3531, %v3701
      %v3703 = vpop.f32.mrb[0].mxu0
      %3704 = vmatprep.mubr.bf16.mxu0 0
      %3705 = vmatmul.mubr.bf16.gmra.mrb[0].mxu0 %v3567
      %v3706 = vpop.f32.mrb[0].mxu0
      %v3707 = vadd.f32 %v3531, %v3706
      %v3708 = vpop.f32.mrb[0].mxu0
      %v3709 = vpop.f32.mrb[0].mxu0
      %v3710 = vadd.f32 %v3531, %v3709
      %v3711 = vpop.f32.mrb[0].mxu0
      %3712 = vmatprep.mubr.bf16.mxu0 0
      %3713 = vmatmul.mubr.bf16.gmra.mrb[0].mxu0 %v3570
      %v3714 = vpop.f32.mrb[0].mxu0
      %v3715 = vadd.f32 %v3531, %v3714
      %v3716 = vpop.f32.mrb[0].mxu0
      %v3717 = vpop.f32.mrb[0].mxu0
      %v3718 = vadd.f32 %v3531, %v3717
      %v3719 = vpop.f32.mrb[0].mxu0
      %3720 = vmatprep.mubr.bf16.mxu0 0
      %3721 = vmatmul.mubr.bf16.gmra.mrb[0].mxu0 %v3573
      %v3722 = vpop.f32.mrb[0].mxu0
      %v3723 = vadd.f32 %v3531, %v3722
      %v3724 = vpop.f32.mrb[0].mxu0
      %v3725 = vpop.f32.mrb[0].mxu0
      %v3726 = vadd.f32 %v3531, %v3725
      %v3727 = vpop.f32.mrb[0].mxu0
      %3728 = vmatprep.mubr.bf16.mxu0 0
      %3729 = vmatmul.mubr.bf16.gmra.mrb[0].mxu0 %v3576
      %v3730 = vpop.f32.mrb[0].mxu0
      %v3731 = vadd.f32 %v3531, %v3730
      %v3732 = vpop.f32.mrb[0].mxu0
      %v3733 = vpop.f32.mrb[0].mxu0
      %v3734 = vadd.f32 %v3531, %v3733
      %v3735 = vpop.f32.mrb[0].mxu0
      %3736 = vmatprep.mubr.bf16.mxu0 0
      %3737 = vmatmul.mubr.bf16.gmra.mrb[0].mxu0 %v3579
      %v3738 = vpop.f32.mrb[0].mxu0
      %v3739 = vadd.f32 %v3531, %v3738
      %v3740 = vpop.f32.mrb[0].mxu0
      %v3741 = vpop.f32.mrb[0].mxu0
      %v3742 = vadd.f32 %v3531, %v3741
      %v3743 = vpop.f32.mrb[0].mxu0
      %3744 = vdwg.mxu0
      %v3767 = vrot.slane %v538, 1
      %v3768 = vrot.slane %v539, 1
      %v3769 = vsel %vm3476, %v3767, %v3768
      %v3770 = vrot.slane %v1749, 1
      %v3771 = vsel %vm3476, %v3768, %v3770
      %v3772 = vrot.slane %v540, 1
      %v3773 = vrot.slane %v541, 1
      %v3774 = vsel %vm3476, %v3772, %v3773
      %v3775 = vrot.slane %v1750, 1
      %v3776 = vsel %vm3476, %v3773, %v3775
      %v3777 = vrot.slane %v1751, 1
      %v3778 = vsel %vm3476, %v3478, %v3777
      %v3779 = vrot.slane %v1752, 1
      %v3780 = vsel %vm3476, %v3481, %v3779
      %v3781 = vrot.slane %v1753, 1
      %v3782 = vsel %vm3476, %v3484, %v3781
      %v3783 = vrot.slane %v1754, 1
      %v3784 = vsel %vm3476, %v3487, %v3783
      %v3785 = vrot.slane %v1755, 1
      %v3786 = vsel %vm3476, %v3490, %v3785
      %v3787 = vrot.slane %v1756, 1
      %v3788 = vsel %vm3476, %v3493, %v3787
      %v3789 = vrot.slane %v1757, 1
      %v3790 = vsel %vm3476, %v3496, %v3789
      %v3791 = vrot.slane %v1758, 1
      %v3792 = vsel %vm3476, %v3499, %v3791
      %v3793 = vrot.slane %v1759, 1
      %v3794 = vsel %vm3476, %v3502, %v3793
      %v3795 = vrot.slane %v1760, 1
      %v3796 = vsel %vm3476, %v3505, %v3795
      %v3797 = vrot.slane %v1761, 1
      %v3798 = vsel %vm3476, %v3508, %v3797
      %v3799 = vrot.slane %v1762, 1
      %v3800 = vsel %vm3476, %v3511, %v3799
      %v3801 = vrot.slane %v1763, 1
      %v3802 = vsel %vm3476, %v3514, %v3801
      %v3803 = vrot.slane %v1764, 1
      %v3804 = vsel %vm3476, %v3517, %v3803
      %v3805 = vrot.slane %v1765, 1
      %v3806 = vsel %vm3476, %v3520, %v3805
      %v3807 = vrot.slane %v1766, 1
      %v3808 = vsel %vm3476, %v3523, %v3807
      %s3809 = scalar_lea.vmem %s1, 4
      %v3810 = vld [vmem:[%s3809] sm:$0x3]
      %v3812 = vsel %vm581, %v3769, 0
      %v3815 = vsel %vm581, %v3771, 0
      %v3818 = vsel %vm581, %v3774, 0
      %v3821 = vsel %vm581, %v3776, 0
      %v3824 = vsel %vm581, %v3778, 0
      %v3827 = vsel %vm581, %v3780, 0
      %v3830 = vsel %vm581, %v3782, 0
      %v3833 = vsel %vm581, %v3784, 0
      %v3836 = vsel %vm581, %v3786, 0
      %v3839 = vsel %vm581, %v3788, 0
      %v3842 = vsel %vm581, %v3790, 0
      %v3845 = vsel %vm581, %v3792, 0
      %v3848 = vsel %vm581, %v3794, 0
      %v3851 = vsel %vm581, %v3796, 0
      %v3854 = vsel %vm581, %v3798, 0
      %v3857 = vsel %vm581, %v3800, 0
      %v3860 = vsel %vm581, %v3802, 0
      %v3863 = vsel %vm581, %v3804, 0
      %v3866 = vsel %vm581, %v3806, 0
      %v3869 = vsel %vm581, %v3808, 0
      %v3872 = vsel %vm690, %v3810, 0
      %3874 = vmatprep.subr.bf16.mxu0 0
      %3875 = vmatpush1.bf16.msra.mxu0 %v3872
      %3876 = vmatprep.subr.bf16.mxu0 0
      %3877 = vmatpush1.bf16.msra.mxu0 0
      %3878 = vmatprep.subr.bf16.mxu0 0
      %3879 = vmatpush1.bf16.msra.mxu0 0
      %3880 = vmatprep.subr.bf16.mxu0 0
      %3881 = vmatpush1.bf16.msra.mxu0 0
      %3882 = vmatprep.subr.bf16.mxu0 0
      %3883 = vmatpush1.bf16.msra.mxu0 0
      %3884 = vmatprep.subr.bf16.mxu0 0
      %3885 = vmatpush1.bf16.msra.mxu0 0
      %3886 = vmatprep.subr.bf16.mxu0 0
      %3887 = vmatpush1.bf16.msra.mxu0 0
      %3888 = vmatprep.subr.bf16.mxu0 0
      %3889 = vmatpush1.bf16.msra.mxu0 0
      %3890 = vmatprep.subr.bf16.mxu0 0
      %3891 = vmatpush1.bf16.msra.mxu0 0
      %3892 = vmatprep.subr.bf16.mxu0 0
      %3893 = vmatpush1.bf16.msra.mxu0 0
      %3894 = vmatprep.subr.bf16.mxu0 0
      %3895 = vmatpush1.bf16.msra.mxu0 0
      %3896 = vmatprep.subr.bf16.mxu0 0
      %3897 = vmatpush1.bf16.msra.mxu0 0
      %3898 = vmatprep.subr.bf16.mxu0 0
      %3899 = vmatpush1.bf16.msra.mxu0 0
      %3900 = vmatprep.subr.bf16.mxu0 0
      %3901 = vmatpush1.bf16.msra.mxu0 0
      %3902 = vmatprep.subr.bf16.mxu0 0
      %3903 = vmatpush1.bf16.msra.mxu0 0
      %3904 = vmatprep.subr.bf16.mxu0 0
      %3905 = vmatpush1.bf16.msra.mxu0 0
      %3906 = vmatprep.mubr.bf16.mxu0 0
      %3907 = vmatmul.mubr.bf16.gmra.mrb[0].mxu0 %v3812
      %v3908 = vpop.f32.mrb[0].mxu0
      %v3909 = vadd.f32 0.0, %v3908
      %v3910 = vpop.f32.mrb[0].mxu0
      %v3911 = vpop.f32.mrb[0].mxu0
      %v3912 = vadd.f32 0.0, %v3911
      %v3913 = vpop.f32.mrb[0].mxu0
      %3914 = vmatprep.mubr.bf16.mxu0 0
      %3915 = vmatmul.mubr.bf16.gmra.mrb[0].mxu0 %v3815
      %v3916 = vpop.f32.mrb[0].mxu0
      %v3917 = vadd.f32 0.0, %v3916
      %v3918 = vpop.f32.mrb[0].mxu0
      %v3919 = vpop.f32.mrb[0].mxu0
      %v3920 = vadd.f32 0.0, %v3919
      %v3921 = vpop.f32.mrb[0].mxu0
      %3922 = vmatprep.mubr.bf16.mxu0 0
      %3923 = vmatmul.mubr.bf16.gmra.mrb[0].mxu0 %v3818
      %v3924 = vpop.f32.mrb[0].mxu0
      %v3925 = vadd.f32 0.0, %v3924
      %v3926 = vpop.f32.mrb[0].mxu0
      %v3927 = vpop.f32.mrb[0].mxu0
      %v3928 = vadd.f32 0.0, %v3927
      %v3929 = vpop.f32.mrb[0].mxu0
      %3930 = vmatprep.mubr.bf16.mxu0 0
      %3931 = vmatmul.mubr.bf16.gmra.mrb[0].mxu0 %v3821
      %v3932 = vpop.f32.mrb[0].mxu0
      %v3933 = vadd.f32 0.0, %v3932
      %v3934 = vpop.f32.mrb[0].mxu0
      %v3935 = vpop.f32.mrb[0].mxu0
      %v3936 = vadd.f32 0.0, %v3935
      %v3937 = vpop.f32.mrb[0].mxu0
      %3938 = vmatprep.mubr.bf16.mxu0 0
      %3939 = vmatmul.mubr.bf16.gmra.mrb[0].mxu0 %v3534
      %v3940 = vpop.f32.mrb[0].mxu0
      %v3941 = vadd.f32 0.0, %v3940
      %v3942 = vpop.f32.mrb[0].mxu0
      %v3943 = vpop.f32.mrb[0].mxu0
      %v3944 = vadd.f32 0.0, %v3943
      %v3945 = vpop.f32.mrb[0].mxu0
      %3946 = vmatprep.mubr.bf16.mxu0 0
      %3947 = vmatmul.mubr.bf16.gmra.mrb[0].mxu0 %v3824
      %v3948 = vpop.f32.mrb[0].mxu0
      %v3949 = vadd.f32 0.0, %v3948
      %v3950 = vpop.f32.mrb[0].mxu0
      %v3951 = vpop.f32.mrb[0].mxu0
      %v3952 = vadd.f32 0.0, %v3951
      %v3953 = vpop.f32.mrb[0].mxu0
      %3954 = vmatprep.mubr.bf16.mxu0 0
      %3955 = vmatmul.mubr.bf16.gmra.mrb[0].mxu0 %v3537
      %v3956 = vpop.f32.mrb[0].mxu0
      %v3957 = vadd.f32 0.0, %v3956
      %v3958 = vpop.f32.mrb[0].mxu0
      %v3959 = vpop.f32.mrb[0].mxu0
      %v3960 = vadd.f32 0.0, %v3959
      %v3961 = vpop.f32.mrb[0].mxu0
      %3962 = vmatprep.mubr.bf16.mxu0 0
      %3963 = vmatmul.mubr.bf16.gmra.mrb[0].mxu0 %v3827
      %v3964 = vpop.f32.mrb[0].mxu0
      %v3965 = vadd.f32 0.0, %v3964
      %v3966 = vpop.f32.mrb[0].mxu0
      %v3967 = vpop.f32.mrb[0].mxu0
      %v3968 = vadd.f32 0.0, %v3967
      %v3969 = vpop.f32.mrb[0].mxu0
      %3970 = vmatprep.mubr.bf16.mxu0 0
      %3971 = vmatmul.mubr.bf16.gmra.mrb[0].mxu0 %v3540
      %v3972 = vpop.f32.mrb[0].mxu0
      %v3973 = vadd.f32 0.0, %v3972
      %v3974 = vpop.f32.mrb[0].mxu0
      %v3975 = vpop.f32.mrb[0].mxu0
      %v3976 = vadd.f32 0.0, %v3975
      %v3977 = vpop.f32.mrb[0].mxu0
      %3978 = vmatprep.mubr.bf16.mxu0 0
      %3979 = vmatmul.mubr.bf16.gmra.mrb[0].mxu0 %v3830
      %v3980 = vpop.f32.mrb[0].mxu0
      %v3981 = vadd.f32 0.0, %v3980
      %v3982 = vpop.f32.mrb[0].mxu0
      %v3983 = vpop.f32.mrb[0].mxu0
      %v3984 = vadd.f32 0.0, %v3983
      %v3985 = vpop.f32.mrb[0].mxu0
      %3986 = vmatprep.mubr.bf16.mxu0 0
      %3987 = vmatmul.mubr.bf16.gmra.mrb[0].mxu0 %v3543
      %v3988 = vpop.f32.mrb[0].mxu0
      %v3989 = vadd.f32 0.0, %v3988
      %v3990 = vpop.f32.mrb[0].mxu0
      %v3991 = vpop.f32.mrb[0].mxu0
      %v3992 = vadd.f32 0.0, %v3991
      %v3993 = vpop.f32.mrb[0].mxu0
      %3994 = vmatprep.mubr.bf16.mxu0 0
      %3995 = vmatmul.mubr.bf16.gmra.mrb[0].mxu0 %v3833
      %v3996 = vpop.f32.mrb[0].mxu0
      %v3997 = vadd.f32 0.0, %v3996
      %v3998 = vpop.f32.mrb[0].mxu0
      %v3999 = vpop.f32.mrb[0].mxu0
      %v4000 = vadd.f32 0.0, %v3999
      %v4001 = vpop.f32.mrb[0].mxu0
      %4002 = vmatprep.mubr.bf16.mxu0 0
      %4003 = vmatmul.mubr.bf16.gmra.mrb[0].mxu0 %v3546
      %v4004 = vpop.f32.mrb[0].mxu0
      %v4005 = vadd.f32 0.0, %v4004
      %v4006 = vpop.f32.mrb[0].mxu0
      %v4007 = vpop.f32.mrb[0].mxu0
      %v4008 = vadd.f32 0.0, %v4007
      %v4009 = vpop.f32.mrb[0].mxu0
      %4010 = vmatprep.mubr.bf16.mxu0 0
      %4011 = vmatmul.mubr.bf16.gmra.mrb[0].mxu0 %v3836
      %v4012 = vpop.f32.mrb[0].mxu0
      %v4013 = vadd.f32 0.0, %v4012
      %v4014 = vpop.f32.mrb[0].mxu0
      %v4015 = vpop.f32.mrb[0].mxu0
      %v4016 = vadd.f32 0.0, %v4015
      %v4017 = vpop.f32.mrb[0].mxu0
      %4018 = vmatprep.mubr.bf16.mxu0 0
      %4019 = vmatmul.mubr.bf16.gmra.mrb[0].mxu0 %v3549
      %v4020 = vpop.f32.mrb[0].mxu0
      %v4021 = vadd.f32 0.0, %v4020
      %v4022 = vpop.f32.mrb[0].mxu0
      %v4023 = vpop.f32.mrb[0].mxu0
      %v4024 = vadd.f32 0.0, %v4023
      %v4025 = vpop.f32.mrb[0].mxu0
      %4026 = vmatprep.mubr.bf16.mxu0 0
      %4027 = vmatmul.mubr.bf16.gmra.mrb[0].mxu0 %v3839
      %v4028 = vpop.f32.mrb[0].mxu0
      %v4029 = vadd.f32 0.0, %v4028
      %v4030 = vpop.f32.mrb[0].mxu0
      %v4031 = vpop.f32.mrb[0].mxu0
      %v4032 = vadd.f32 0.0, %v4031
      %v4033 = vpop.f32.mrb[0].mxu0
      %4034 = vmatprep.mubr.bf16.mxu0 0
      %4035 = vmatmul.mubr.bf16.gmra.mrb[0].mxu0 %v3552
      %v4036 = vpop.f32.mrb[0].mxu0
      %v4037 = vadd.f32 0.0, %v4036
      %v4038 = vpop.f32.mrb[0].mxu0
      %v4039 = vpop.f32.mrb[0].mxu0
      %v4040 = vadd.f32 0.0, %v4039
      %v4041 = vpop.f32.mrb[0].mxu0
      %4042 = vmatprep.mubr.bf16.mxu0 0
      %4043 = vmatmul.mubr.bf16.gmra.mrb[0].mxu0 %v3842
      %v4044 = vpop.f32.mrb[0].mxu0
      %v4045 = vadd.f32 0.0, %v4044
      %v4046 = vpop.f32.mrb[0].mxu0
      %v4047 = vpop.f32.mrb[0].mxu0
      %v4048 = vadd.f32 0.0, %v4047
      %v4049 = vpop.f32.mrb[0].mxu0
      %4050 = vmatprep.mubr.bf16.mxu0 0
      %4051 = vmatmul.mubr.bf16.gmra.mrb[0].mxu0 %v3555
      %v4052 = vpop.f32.mrb[0].mxu0
      %v4053 = vadd.f32 0.0, %v4052
      %v4054 = vpop.f32.mrb[0].mxu0
      %v4055 = vpop.f32.mrb[0].mxu0
      %v4056 = vadd.f32 0.0, %v4055
      %v4057 = vpop.f32.mrb[0].mxu0
      %4058 = vmatprep.mubr.bf16.mxu0 0
      %4059 = vmatmul.mubr.bf16.gmra.mrb[0].mxu0 %v3845
      %v4060 = vpop.f32.mrb[0].mxu0
      %v4061 = vadd.f32 0.0, %v4060
      %v4062 = vpop.f32.mrb[0].mxu0
      %v4063 = vpop.f32.mrb[0].mxu0
      %v4064 = vadd.f32 0.0, %v4063
      %v4065 = vpop.f32.mrb[0].mxu0
      %4066 = vmatprep.mubr.bf16.mxu0 0
      %4067 = vmatmul.mubr.bf16.gmra.mrb[0].mxu0 %v3558
      %v4068 = vpop.f32.mrb[0].mxu0
      %v4069 = vadd.f32 0.0, %v4068
      %v4070 = vpop.f32.mrb[0].mxu0
      %v4071 = vpop.f32.mrb[0].mxu0
      %v4072 = vadd.f32 0.0, %v4071
      %v4073 = vpop.f32.mrb[0].mxu0
      %4074 = vmatprep.mubr.bf16.mxu0 0
      %4075 = vmatmul.mubr.bf16.gmra.mrb[0].mxu0 %v3848
      %v4076 = vpop.f32.mrb[0].mxu0
      %v4077 = vadd.f32 0.0, %v4076
      %v4078 = vpop.f32.mrb[0].mxu0
      %v4079 = vpop.f32.mrb[0].mxu0
      %v4080 = vadd.f32 0.0, %v4079
      %v4081 = vpop.f32.mrb[0].mxu0
      %4082 = vmatprep.mubr.bf16.mxu0 0
      %4083 = vmatmul.mubr.bf16.gmra.mrb[0].mxu0 %v3561
      %v4084 = vpop.f32.mrb[0].mxu0
      %v4085 = vadd.f32 0.0, %v4084
      %v4086 = vpop.f32.mrb[0].mxu0
      %v4087 = vpop.f32.mrb[0].mxu0
      %v4088 = vadd.f32 0.0, %v4087
      %v4089 = vpop.f32.mrb[0].mxu0
      %4090 = vmatprep.mubr.bf16.mxu0 0
      %4091 = vmatmul.mubr.bf16.gmra.mrb[0].mxu0 %v3851
      %v4092 = vpop.f32.mrb[0].mxu0
      %v4093 = vadd.f32 0.0, %v4092
      %v4094 = vpop.f32.mrb[0].mxu0
      %v4095 = vpop.f32.mrb[0].mxu0
      %v4096 = vadd.f32 0.0, %v4095
      %v4097 = vpop.f32.mrb[0].mxu0
      %4098 = vmatprep.mubr.bf16.mxu0 0
      %4099 = vmatmul.mubr.bf16.gmra.mrb[0].mxu0 %v3564
      %v4100 = vpop.f32.mrb[0].mxu0
      %v4101 = vadd.f32 0.0, %v4100
      %v4102 = vpop.f32.mrb[0].mxu0
      %v4103 = vpop.f32.mrb[0].mxu0
      %v4104 = vadd.f32 0.0, %v4103
      %v4105 = vpop.f32.mrb[0].mxu0
      %4106 = vmatprep.mubr.bf16.mxu0 0
      %4107 = vmatmul.mubr.bf16.gmra.mrb[0].mxu0 %v3854
      %v4108 = vpop.f32.mrb[0].mxu0
      %v4109 = vadd.f32 0.0, %v4108
      %v4110 = vpop.f32.mrb[0].mxu0
      %v4111 = vpop.f32.mrb[0].mxu0
      %v4112 = vadd.f32 0.0, %v4111
      %v4113 = vpop.f32.mrb[0].mxu0
      %4114 = vmatprep.mubr.bf16.mxu0 0
      %4115 = vmatmul.mubr.bf16.gmra.mrb[0].mxu0 %v3567
      %v4116 = vpop.f32.mrb[0].mxu0
      %v4117 = vadd.f32 0.0, %v4116
      %v4118 = vpop.f32.mrb[0].mxu0
      %v4119 = vpop.f32.mrb[0].mxu0
      %v4120 = vadd.f32 0.0, %v4119
      %v4121 = vpop.f32.mrb[0].mxu0
      %4122 = vmatprep.mubr.bf16.mxu0 0
      %4123 = vmatmul.mubr.bf16.gmra.mrb[0].mxu0 %v3857
      %v4124 = vpop.f32.mrb[0].mxu0
      %v4125 = vadd.f32 0.0, %v4124
      %v4126 = vpop.f32.mrb[0].mxu0
      %v4127 = vpop.f32.mrb[0].mxu0
      %v4128 = vadd.f32 0.0, %v4127
      %v4129 = vpop.f32.mrb[0].mxu0
      %4130 = vmatprep.mubr.bf16.mxu0 0
      %4131 = vmatmul.mubr.bf16.gmra.mrb[0].mxu0 %v3570
      %v4132 = vpop.f32.mrb[0].mxu0
      %v4133 = vadd.f32 0.0, %v4132
      %v4134 = vpop.f32.mrb[0].mxu0
      %v4135 = vpop.f32.mrb[0].mxu0
      %v4136 = vadd.f32 0.0, %v4135
      %v4137 = vpop.f32.mrb[0].mxu0
      %4138 = vmatprep.mubr.bf16.mxu0 0
      %4139 = vmatmul.mubr.bf16.gmra.mrb[0].mxu0 %v3860
      %v4140 = vpop.f32.mrb[0].mxu0
      %v4141 = vadd.f32 0.0, %v4140
      %v4142 = vpop.f32.mrb[0].mxu0
      %v4143 = vpop.f32.mrb[0].mxu0
      %v4144 = vadd.f32 0.0, %v4143
      %v4145 = vpop.f32.mrb[0].mxu0
      %4146 = vmatprep.mubr.bf16.mxu0 0
      %4147 = vmatmul.mubr.bf16.gmra.mrb[0].mxu0 %v3573
      %v4148 = vpop.f32.mrb[0].mxu0
      %v4149 = vadd.f32 0.0, %v4148
      %v4150 = vpop.f32.mrb[0].mxu0
      %v4151 = vpop.f32.mrb[0].mxu0
      %v4152 = vadd.f32 0.0, %v4151
      %v4153 = vpop.f32.mrb[0].mxu0
      %4154 = vmatprep.mubr.bf16.mxu0 0
      %4155 = vmatmul.mubr.bf16.gmra.mrb[0].mxu0 %v3863
      %v4156 = vpop.f32.mrb[0].mxu0
      %v4157 = vadd.f32 0.0, %v4156
      %v4158 = vpop.f32.mrb[0].mxu0
      %v4159 = vpop.f32.mrb[0].mxu0
      %v4160 = vadd.f32 0.0, %v4159
      %v4161 = vpop.f32.mrb[0].mxu0
      %4162 = vmatprep.mubr.bf16.mxu0 0
      %4163 = vmatmul.mubr.bf16.gmra.mrb[0].mxu0 %v3576
      %v4164 = vpop.f32.mrb[0].mxu0
      %v4165 = vadd.f32 0.0, %v4164
      %v4166 = vpop.f32.mrb[0].mxu0
      %v4167 = vpop.f32.mrb[0].mxu0
      %v4168 = vadd.f32 0.0, %v4167
      %v4169 = vpop.f32.mrb[0].mxu0
      %4170 = vmatprep.mubr.bf16.mxu0 0
      %4171 = vmatmul.mubr.bf16.gmra.mrb[0].mxu0 %v3866
      %v4172 = vpop.f32.mrb[0].mxu0
      %v4173 = vadd.f32 0.0, %v4172
      %v4174 = vpop.f32.mrb[0].mxu0
      %v4175 = vpop.f32.mrb[0].mxu0
      %v4176 = vadd.f32 0.0, %v4175
      %v4177 = vpop.f32.mrb[0].mxu0
      %4178 = vmatprep.mubr.bf16.mxu0 0
      %4179 = vmatmul.mubr.bf16.gmra.mrb[0].mxu0 %v3579
      %v4180 = vpop.f32.mrb[0].mxu0
      %v4181 = vadd.f32 0.0, %v4180
      %v4182 = vpop.f32.mrb[0].mxu0
      %v4183 = vpop.f32.mrb[0].mxu0
      %v4184 = vadd.f32 0.0, %v4183
      %v4185 = vpop.f32.mrb[0].mxu0
      %4186 = vmatprep.mubr.bf16.mxu0 0
      %4187 = vmatmul.mubr.bf16.gmra.mrb[0].mxu0 %v3869
      %v4188 = vpop.f32.mrb[0].mxu0
      %v4189 = vadd.f32 0.0, %v4188
      %v4190 = vpop.f32.mrb[0].mxu0
      %v4191 = vpop.f32.mrb[0].mxu0
      %v4192 = vadd.f32 0.0, %v4191
      %v4193 = vpop.f32.mrb[0].mxu0
      %4194 = vdwg.mxu0
      %v4195 = vadd.f32 %v3372, %v3909
      %v4196 = vadd.f32 %v3373, %v3912
      %v4197 = vadd.f32 %v3374, %v3917
      %v4198 = vadd.f32 %v3375, %v3920
      %v4199 = vadd.f32 %v3376, %v3925
      %v4200 = vadd.f32 %v3377, %v3928
      %v4201 = vadd.f32 %v3378, %v3933
      %v4202 = vadd.f32 %v3379, %v3936
      %v4203 = vadd.f32 %v3380, %v3941
      %v4204 = vadd.f32 %v3381, %v3944
      %v4205 = vadd.f32 %v3382, %v3949
      %v4206 = vadd.f32 %v3383, %v3952
      %v4207 = vadd.f32 %v3384, %v3957
      %v4208 = vadd.f32 %v3385, %v3960
      %v4209 = vadd.f32 %v3386, %v3965
      %v4210 = vadd.f32 %v3387, %v3968
      %v4211 = vadd.f32 %v3388, %v3973
      %v4212 = vadd.f32 %v3389, %v3976
      %v4213 = vadd.f32 %v3390, %v3981
      %v4214 = vadd.f32 %v3391, %v3984
      %v4215 = vadd.f32 %v3392, %v3989
      %v4216 = vadd.f32 %v3393, %v3992
      %v4217 = vadd.f32 %v3394, %v3997
      %v4218 = vadd.f32 %v3395, %v4000
      %v4219 = vadd.f32 %v3396, %v4005
      %v4220 = vadd.f32 %v3397, %v4008
      %v4221 = vadd.f32 %v3398, %v4013
      %v4222 = vadd.f32 %v3399, %v4016
      %v4223 = vadd.f32 %v3400, %v4021
      %v4224 = vadd.f32 %v3401, %v4024
      %v4225 = vadd.f32 %v3402, %v4029
      %v4226 = vadd.f32 %v3403, %v4032
      %v4227 = vadd.f32 %v3404, %v4037
      %v4228 = vadd.f32 %v3405, %v4040
      %v4229 = vadd.f32 %v3406, %v4045
      %v4230 = vadd.f32 %v3407, %v4048
      %v4231 = vadd.f32 %v3408, %v4053
      %v4232 = vadd.f32 %v3409, %v4056
      %v4233 = vadd.f32 %v3410, %v4061
      %v4234 = vadd.f32 %v3411, %v4064
      %v4235 = vadd.f32 %v3412, %v4069
      %v4236 = vadd.f32 %v3413, %v4072
      %v4237 = vadd.f32 %v3414, %v4077
      %v4238 = vadd.f32 %v3415, %v4080
      %v4239 = vadd.f32 %v3416, %v4085
      %v4240 = vadd.f32 %v3417, %v4088
      %v4241 = vadd.f32 %v3418, %v4093
      %v4242 = vadd.f32 %v3419, %v4096
      %v4243 = vadd.f32 %v3420, %v4101
      %v4244 = vadd.f32 %v3421, %v4104
      %v4245 = vadd.f32 %v3422, %v4109
      %v4246 = vadd.f32 %v3423, %v4112
      %v4247 = vadd.f32 %v3424, %v4117
      %v4248 = vadd.f32 %v3425, %v4120
      %v4249 = vadd.f32 %v3426, %v4125
      %v4250 = vadd.f32 %v3427, %v4128
      %v4251 = vadd.f32 %v3428, %v4133
      %v4252 = vadd.f32 %v3429, %v4136
      %v4253 = vadd.f32 %v3430, %v4141
      %v4254 = vadd.f32 %v3431, %v4144
      %v4255 = vadd.f32 %v3432, %v4149
      %v4256 = vadd.f32 %v3433, %v4152
      %v4257 = vadd.f32 %v3434, %v4157
      %v4258 = vadd.f32 %v3435, %v4160
      %v4259 = vadd.f32 %v3436, %v4165
      %v4260 = vadd.f32 %v3437, %v4168
      %v4261 = vadd.f32 %v3438, %v4173
      %v4262 = vadd.f32 %v3439, %v4176
      %v4263 = vadd.f32 %v3440, %v4181
      %v4264 = vadd.f32 %v3441, %v4184
      %v4265 = vadd.f32 %v3442, %v4189
      %v4266 = vadd.f32 %v3443, %v4192
      %v4270 = vrot.slane %v574, 1
      %v4271 = vrot.slane %v575, 1
      %v4272 = vsel %vm3476, %v4270, %v4271
      %v4273 = vrot.slane %v1767, 1
      %v4274 = vsel %vm3476, %v4271, %v4273
      %s4275 = scalar_lea.vmem %s1, 10
      %v4276 = vld [vmem:[%s4275] sm:$0x3]
      %v4278 = vsel %vm581, %v4272, 0
      %v4281 = vsel %vm581, %v4274, 0
      %v4284 = vsel %vm690, %v4276, 0
      %4286 = vmatprep.subr.bf16.mxu0 0
      %4287 = vmatpush1.bf16.msra.mxu0 %v4284
      %4288 = vmatprep.subr.bf16.mxu0 0
      %4289 = vmatpush1.bf16.msra.mxu0 0
      %4290 = vmatprep.subr.bf16.mxu0 0
      %4291 = vmatpush1.bf16.msra.mxu0 0
      %4292 = vmatprep.subr.bf16.mxu0 0
      %4293 = vmatpush1.bf16.msra.mxu0 0
      %4294 = vmatprep.subr.bf16.mxu0 0
      %4295 = vmatpush1.bf16.msra.mxu0 0
      %4296 = vmatprep.subr.bf16.mxu0 0
      %4297 = vmatpush1.bf16.msra.mxu0 0
      %4298 = vmatprep.subr.bf16.mxu0 0
      %4299 = vmatpush1.bf16.msra.mxu0 0
      %4300 = vmatprep.subr.bf16.mxu0 0
      %4301 = vmatpush1.bf16.msra.mxu0 0
      %4302 = vmatprep.subr.bf16.mxu0 0
      %4303 = vmatpush1.bf16.msra.mxu0 0
      %4304 = vmatprep.subr.bf16.mxu0 0
      %4305 = vmatpush1.bf16.msra.mxu0 0
      %4306 = vmatprep.subr.bf16.mxu0 0
      %4307 = vmatpush1.bf16.msra.mxu0 0
      %4308 = vmatprep.subr.bf16.mxu0 0
      %4309 = vmatpush1.bf16.msra.mxu0 0
      %4310 = vmatprep.subr.bf16.mxu0 0
      %4311 = vmatpush1.bf16.msra.mxu0 0
      %4312 = vmatprep.subr.bf16.mxu0 0
      %4313 = vmatpush1.bf16.msra.mxu0 0
      %4314 = vmatprep.subr.bf16.mxu0 0
      %4315 = vmatpush1.bf16.msra.mxu0 0
      %4316 = vmatprep.subr.bf16.mxu0 0
      %4317 = vmatpush1.bf16.msra.mxu0 0
      %4318 = vmatprep.mubr.bf16.mxu0 0
      %4319 = vmatmul.mubr.bf16.gmra.mrb[0].mxu0 %v3818
      %v4320 = vpop.f32.mrb[0].mxu0
      %v4321 = vadd.f32 0.0, %v4320
      %v4322 = vpop.f32.mrb[0].mxu0
      %v4323 = vpop.f32.mrb[0].mxu0
      %v4324 = vadd.f32 0.0, %v4323
      %v4325 = vpop.f32.mrb[0].mxu0
      %4326 = vmatprep.mubr.bf16.mxu0 0
      %4327 = vmatmul.mubr.bf16.gmra.mrb[0].mxu0 %v3821
      %v4328 = vpop.f32.mrb[0].mxu0
      %v4329 = vadd.f32 0.0, %v4328
      %v4330 = vpop.f32.mrb[0].mxu0
      %v4331 = vpop.f32.mrb[0].mxu0
      %v4332 = vadd.f32 0.0, %v4331
      %v4333 = vpop.f32.mrb[0].mxu0
      %4334 = vmatprep.mubr.bf16.mxu0 0
      %4335 = vmatmul.mubr.bf16.gmra.mrb[0].mxu0 %v3534
      %v4336 = vpop.f32.mrb[0].mxu0
      %v4337 = vadd.f32 0.0, %v4336
      %v4338 = vpop.f32.mrb[0].mxu0
      %v4339 = vpop.f32.mrb[0].mxu0
      %v4340 = vadd.f32 0.0, %v4339
      %v4341 = vpop.f32.mrb[0].mxu0
      %4342 = vmatprep.mubr.bf16.mxu0 0
      %4343 = vmatmul.mubr.bf16.gmra.mrb[0].mxu0 %v3824
      %v4344 = vpop.f32.mrb[0].mxu0
      %v4345 = vadd.f32 0.0, %v4344
      %v4346 = vpop.f32.mrb[0].mxu0
      %v4347 = vpop.f32.mrb[0].mxu0
      %v4348 = vadd.f32 0.0, %v4347
      %v4349 = vpop.f32.mrb[0].mxu0
      %4350 = vmatprep.mubr.bf16.mxu0 0
      %4351 = vmatmul.mubr.bf16.gmra.mrb[0].mxu0 %v3537
      %v4352 = vpop.f32.mrb[0].mxu0
      %v4353 = vadd.f32 0.0, %v4352
      %v4354 = vpop.f32.mrb[0].mxu0
      %v4355 = vpop.f32.mrb[0].mxu0
      %v4356 = vadd.f32 0.0, %v4355
      %v4357 = vpop.f32.mrb[0].mxu0
      %4358 = vmatprep.mubr.bf16.mxu0 0
      %4359 = vmatmul.mubr.bf16.gmra.mrb[0].mxu0 %v3827
      %v4360 = vpop.f32.mrb[0].mxu0
      %v4361 = vadd.f32 0.0, %v4360
      %v4362 = vpop.f32.mrb[0].mxu0
      %v4363 = vpop.f32.mrb[0].mxu0
      %v4364 = vadd.f32 0.0, %v4363
      %v4365 = vpop.f32.mrb[0].mxu0
      %4366 = vmatprep.mubr.bf16.mxu0 0
      %4367 = vmatmul.mubr.bf16.gmra.mrb[0].mxu0 %v3540
      %v4368 = vpop.f32.mrb[0].mxu0
      %v4369 = vadd.f32 0.0, %v4368
      %v4370 = vpop.f32.mrb[0].mxu0
      %v4371 = vpop.f32.mrb[0].mxu0
      %v4372 = vadd.f32 0.0, %v4371
      %v4373 = vpop.f32.mrb[0].mxu0
      %4374 = vmatprep.mubr.bf16.mxu0 0
      %4375 = vmatmul.mubr.bf16.gmra.mrb[0].mxu0 %v3830
      %v4376 = vpop.f32.mrb[0].mxu0
      %v4377 = vadd.f32 0.0, %v4376
      %v4378 = vpop.f32.mrb[0].mxu0
      %v4379 = vpop.f32.mrb[0].mxu0
      %v4380 = vadd.f32 0.0, %v4379
      %v4381 = vpop.f32.mrb[0].mxu0
      %4382 = vmatprep.mubr.bf16.mxu0 0
      %4383 = vmatmul.mubr.bf16.gmra.mrb[0].mxu0 %v3543
      %v4384 = vpop.f32.mrb[0].mxu0
      %v4385 = vadd.f32 0.0, %v4384
      %v4386 = vpop.f32.mrb[0].mxu0
      %v4387 = vpop.f32.mrb[0].mxu0
      %v4388 = vadd.f32 0.0, %v4387
      %v4389 = vpop.f32.mrb[0].mxu0
      %4390 = vmatprep.mubr.bf16.mxu0 0
      %4391 = vmatmul.mubr.bf16.gmra.mrb[0].mxu0 %v3833
      %v4392 = vpop.f32.mrb[0].mxu0
      %v4393 = vadd.f32 0.0, %v4392
      %v4394 = vpop.f32.mrb[0].mxu0
      %v4395 = vpop.f32.mrb[0].mxu0
      %v4396 = vadd.f32 0.0, %v4395
      %v4397 = vpop.f32.mrb[0].mxu0
      %4398 = vmatprep.mubr.bf16.mxu0 0
      %4399 = vmatmul.mubr.bf16.gmra.mrb[0].mxu0 %v3546
      %v4400 = vpop.f32.mrb[0].mxu0
      %v4401 = vadd.f32 0.0, %v4400
      %v4402 = vpop.f32.mrb[0].mxu0
      %v4403 = vpop.f32.mrb[0].mxu0
      %v4404 = vadd.f32 0.0, %v4403
      %v4405 = vpop.f32.mrb[0].mxu0
      %4406 = vmatprep.mubr.bf16.mxu0 0
      %4407 = vmatmul.mubr.bf16.gmra.mrb[0].mxu0 %v3836
      %v4408 = vpop.f32.mrb[0].mxu0
      %v4409 = vadd.f32 0.0, %v4408
      %v4410 = vpop.f32.mrb[0].mxu0
      %v4411 = vpop.f32.mrb[0].mxu0
      %v4412 = vadd.f32 0.0, %v4411
      %v4413 = vpop.f32.mrb[0].mxu0
      %4414 = vmatprep.mubr.bf16.mxu0 0
      %4415 = vmatmul.mubr.bf16.gmra.mrb[0].mxu0 %v3549
      %v4416 = vpop.f32.mrb[0].mxu0
      %v4417 = vadd.f32 0.0, %v4416
      %v4418 = vpop.f32.mrb[0].mxu0
      %v4419 = vpop.f32.mrb[0].mxu0
      %v4420 = vadd.f32 0.0, %v4419
      %v4421 = vpop.f32.mrb[0].mxu0
      %4422 = vmatprep.mubr.bf16.mxu0 0
      %4423 = vmatmul.mubr.bf16.gmra.mrb[0].mxu0 %v3839
      %v4424 = vpop.f32.mrb[0].mxu0
      %v4425 = vadd.f32 0.0, %v4424
      %v4426 = vpop.f32.mrb[0].mxu0
      %v4427 = vpop.f32.mrb[0].mxu0
      %v4428 = vadd.f32 0.0, %v4427
      %v4429 = vpop.f32.mrb[0].mxu0
      %4430 = vmatprep.mubr.bf16.mxu0 0
      %4431 = vmatmul.mubr.bf16.gmra.mrb[0].mxu0 %v3552
      %v4432 = vpop.f32.mrb[0].mxu0
      %v4433 = vadd.f32 0.0, %v4432
      %v4434 = vpop.f32.mrb[0].mxu0
      %v4435 = vpop.f32.mrb[0].mxu0
      %v4436 = vadd.f32 0.0, %v4435
      %v4437 = vpop.f32.mrb[0].mxu0
      %4438 = vmatprep.mubr.bf16.mxu0 0
      %4439 = vmatmul.mubr.bf16.gmra.mrb[0].mxu0 %v3842
      %v4440 = vpop.f32.mrb[0].mxu0
      %v4441 = vadd.f32 0.0, %v4440
      %v4442 = vpop.f32.mrb[0].mxu0
      %v4443 = vpop.f32.mrb[0].mxu0
      %v4444 = vadd.f32 0.0, %v4443
      %v4445 = vpop.f32.mrb[0].mxu0
      %4446 = vmatprep.mubr.bf16.mxu0 0
      %4447 = vmatmul.mubr.bf16.gmra.mrb[0].mxu0 %v3555
      %v4448 = vpop.f32.mrb[0].mxu0
      %v4449 = vadd.f32 0.0, %v4448
      %v4450 = vpop.f32.mrb[0].mxu0
      %v4451 = vpop.f32.mrb[0].mxu0
      %v4452 = vadd.f32 0.0, %v4451
      %v4453 = vpop.f32.mrb[0].mxu0
      %4454 = vmatprep.mubr.bf16.mxu0 0
      %4455 = vmatmul.mubr.bf16.gmra.mrb[0].mxu0 %v3845
      %v4456 = vpop.f32.mrb[0].mxu0
      %v4457 = vadd.f32 0.0, %v4456
      %v4458 = vpop.f32.mrb[0].mxu0
      %v4459 = vpop.f32.mrb[0].mxu0
      %v4460 = vadd.f32 0.0, %v4459
      %v4461 = vpop.f32.mrb[0].mxu0
      %4462 = vmatprep.mubr.bf16.mxu0 0
      %4463 = vmatmul.mubr.bf16.gmra.mrb[0].mxu0 %v3558
      %v4464 = vpop.f32.mrb[0].mxu0
      %v4465 = vadd.f32 0.0, %v4464
      %v4466 = vpop.f32.mrb[0].mxu0
      %v4467 = vpop.f32.mrb[0].mxu0
      %v4468 = vadd.f32 0.0, %v4467
      %v4469 = vpop.f32.mrb[0].mxu0
      %4470 = vmatprep.mubr.bf16.mxu0 0
      %4471 = vmatmul.mubr.bf16.gmra.mrb[0].mxu0 %v3848
      %v4472 = vpop.f32.mrb[0].mxu0
      %v4473 = vadd.f32 0.0, %v4472
      %v4474 = vpop.f32.mrb[0].mxu0
      %v4475 = vpop.f32.mrb[0].mxu0
      %v4476 = vadd.f32 0.0, %v4475
      %v4477 = vpop.f32.mrb[0].mxu0
      %4478 = vmatprep.mubr.bf16.mxu0 0
      %4479 = vmatmul.mubr.bf16.gmra.mrb[0].mxu0 %v3561
      %v4480 = vpop.f32.mrb[0].mxu0
      %v4481 = vadd.f32 0.0, %v4480
      %v4482 = vpop.f32.mrb[0].mxu0
      %v4483 = vpop.f32.mrb[0].mxu0
      %v4484 = vadd.f32 0.0, %v4483
      %v4485 = vpop.f32.mrb[0].mxu0
      %4486 = vmatprep.mubr.bf16.mxu0 0
      %4487 = vmatmul.mubr.bf16.gmra.mrb[0].mxu0 %v3851
      %v4488 = vpop.f32.mrb[0].mxu0
      %v4489 = vadd.f32 0.0, %v4488
      %v4490 = vpop.f32.mrb[0].mxu0
      %v4491 = vpop.f32.mrb[0].mxu0
      %v4492 = vadd.f32 0.0, %v4491
      %v4493 = vpop.f32.mrb[0].mxu0
      %4494 = vmatprep.mubr.bf16.mxu0 0
      %4495 = vmatmul.mubr.bf16.gmra.mrb[0].mxu0 %v3564
      %v4496 = vpop.f32.mrb[0].mxu0
      %v4497 = vadd.f32 0.0, %v4496
      %v4498 = vpop.f32.mrb[0].mxu0
      %v4499 = vpop.f32.mrb[0].mxu0
      %v4500 = vadd.f32 0.0, %v4499
      %v4501 = vpop.f32.mrb[0].mxu0
      %4502 = vmatprep.mubr.bf16.mxu0 0
      %4503 = vmatmul.mubr.bf16.gmra.mrb[0].mxu0 %v3854
      %v4504 = vpop.f32.mrb[0].mxu0
      %v4505 = vadd.f32 0.0, %v4504
      %v4506 = vpop.f32.mrb[0].mxu0
      %v4507 = vpop.f32.mrb[0].mxu0
      %v4508 = vadd.f32 0.0, %v4507
      %v4509 = vpop.f32.mrb[0].mxu0
      %4510 = vmatprep.mubr.bf16.mxu0 0
      %4511 = vmatmul.mubr.bf16.gmra.mrb[0].mxu0 %v3567
      %v4512 = vpop.f32.mrb[0].mxu0
      %v4513 = vadd.f32 0.0, %v4512
      %v4514 = vpop.f32.mrb[0].mxu0
      %v4515 = vpop.f32.mrb[0].mxu0
      %v4516 = vadd.f32 0.0, %v4515
      %v4517 = vpop.f32.mrb[0].mxu0
      %4518 = vmatprep.mubr.bf16.mxu0 0
      %4519 = vmatmul.mubr.bf16.gmra.mrb[0].mxu0 %v3857
      %v4520 = vpop.f32.mrb[0].mxu0
      %v4521 = vadd.f32 0.0, %v4520
      %v4522 = vpop.f32.mrb[0].mxu0
      %v4523 = vpop.f32.mrb[0].mxu0
      %v4524 = vadd.f32 0.0, %v4523
      %v4525 = vpop.f32.mrb[0].mxu0
      %4526 = vmatprep.mubr.bf16.mxu0 0
      %4527 = vmatmul.mubr.bf16.gmra.mrb[0].mxu0 %v3570
      %v4528 = vpop.f32.mrb[0].mxu0
      %v4529 = vadd.f32 0.0, %v4528
      %v4530 = vpop.f32.mrb[0].mxu0
      %v4531 = vpop.f32.mrb[0].mxu0
      %v4532 = vadd.f32 0.0, %v4531
      %v4533 = vpop.f32.mrb[0].mxu0
      %4534 = vmatprep.mubr.bf16.mxu0 0
      %4535 = vmatmul.mubr.bf16.gmra.mrb[0].mxu0 %v3860
      %v4536 = vpop.f32.mrb[0].mxu0
      %v4537 = vadd.f32 0.0, %v4536
      %v4538 = vpop.f32.mrb[0].mxu0
      %v4539 = vpop.f32.mrb[0].mxu0
      %v4540 = vadd.f32 0.0, %v4539
      %v4541 = vpop.f32.mrb[0].mxu0
      %4542 = vmatprep.mubr.bf16.mxu0 0
      %4543 = vmatmul.mubr.bf16.gmra.mrb[0].mxu0 %v3573
      %v4544 = vpop.f32.mrb[0].mxu0
      %v4545 = vadd.f32 0.0, %v4544
      %v4546 = vpop.f32.mrb[0].mxu0
      %v4547 = vpop.f32.mrb[0].mxu0
      %v4548 = vadd.f32 0.0, %v4547
      %v4549 = vpop.f32.mrb[0].mxu0
      %4550 = vmatprep.mubr.bf16.mxu0 0
      %4551 = vmatmul.mubr.bf16.gmra.mrb[0].mxu0 %v3863
      %v4552 = vpop.f32.mrb[0].mxu0
      %v4553 = vadd.f32 0.0, %v4552
      %v4554 = vpop.f32.mrb[0].mxu0
      %v4555 = vpop.f32.mrb[0].mxu0
      %v4556 = vadd.f32 0.0, %v4555
      %v4557 = vpop.f32.mrb[0].mxu0
      %4558 = vmatprep.mubr.bf16.mxu0 0
      %4559 = vmatmul.mubr.bf16.gmra.mrb[0].mxu0 %v3576
      %v4560 = vpop.f32.mrb[0].mxu0
      %v4561 = vadd.f32 0.0, %v4560
      %v4562 = vpop.f32.mrb[0].mxu0
      %v4563 = vpop.f32.mrb[0].mxu0
      %v4564 = vadd.f32 0.0, %v4563
      %v4565 = vpop.f32.mrb[0].mxu0
      %4566 = vmatprep.mubr.bf16.mxu0 0
      %4567 = vmatmul.mubr.bf16.gmra.mrb[0].mxu0 %v3866
      %v4568 = vpop.f32.mrb[0].mxu0
      %v4569 = vadd.f32 0.0, %v4568
      %v4570 = vpop.f32.mrb[0].mxu0
      %v4571 = vpop.f32.mrb[0].mxu0
      %v4572 = vadd.f32 0.0, %v4571
      %v4573 = vpop.f32.mrb[0].mxu0
      %4574 = vmatprep.mubr.bf16.mxu0 0
      %4575 = vmatmul.mubr.bf16.gmra.mrb[0].mxu0 %v3579
      %v4576 = vpop.f32.mrb[0].mxu0
      %v4577 = vadd.f32 0.0, %v4576
      %v4578 = vpop.f32.mrb[0].mxu0
      %v4579 = vpop.f32.mrb[0].mxu0
      %v4580 = vadd.f32 0.0, %v4579
      %v4581 = vpop.f32.mrb[0].mxu0
      %4582 = vmatprep.mubr.bf16.mxu0 0
      %4583 = vmatmul.mubr.bf16.gmra.mrb[0].mxu0 %v3869
      %v4584 = vpop.f32.mrb[0].mxu0
      %v4585 = vadd.f32 0.0, %v4584
      %v4586 = vpop.f32.mrb[0].mxu0
      %v4587 = vpop.f32.mrb[0].mxu0
      %v4588 = vadd.f32 0.0, %v4587
      %v4589 = vpop.f32.mrb[0].mxu0
      %4590 = vmatprep.mubr.bf16.mxu0 0
      %4591 = vmatmul.mubr.bf16.gmra.mrb[0].mxu0 %v4278
      %v4592 = vpop.f32.mrb[0].mxu0
      %v4593 = vadd.f32 0.0, %v4592
      %v4594 = vpop.f32.mrb[0].mxu0
      %v4595 = vpop.f32.mrb[0].mxu0
      %v4596 = vadd.f32 0.0, %v4595
      %v4597 = vpop.f32.mrb[0].mxu0
      %4598 = vmatprep.mubr.bf16.mxu0 0
      %4599 = vmatmul.mubr.bf16.gmra.mrb[0].mxu0 %v4281
      %v4600 = vpop.f32.mrb[0].mxu0
      %v4601 = vadd.f32 0.0, %v4600
      %v4602 = vpop.f32.mrb[0].mxu0
      %v4603 = vpop.f32.mrb[0].mxu0
      %v4604 = vadd.f32 0.0, %v4603
      %v4605 = vpop.f32.mrb[0].mxu0
      %4606 = vdwg.mxu0
      %v4607 = vadd.f32 %v4195, %v4321
      %v4608 = vadd.f32 %v4196, %v4324
      %v4609 = vadd.f32 %v4197, %v4329
      %v4610 = vadd.f32 %v4198, %v4332
      %v4611 = vadd.f32 %v4199, %v4337
      %v4612 = vadd.f32 %v4200, %v4340
      %v4613 = vadd.f32 %v4201, %v4345
      %v4614 = vadd.f32 %v4202, %v4348
      %v4615 = vadd.f32 %v4203, %v4353
      %v4616 = vadd.f32 %v4204, %v4356
      %v4617 = vadd.f32 %v4205, %v4361
      %v4618 = vadd.f32 %v4206, %v4364
      %v4619 = vadd.f32 %v4207, %v4369
      %v4620 = vadd.f32 %v4208, %v4372
      %v4621 = vadd.f32 %v4209, %v4377
      %v4622 = vadd.f32 %v4210, %v4380
      %v4623 = vadd.f32 %v4211, %v4385
      %v4624 = vadd.f32 %v4212, %v4388
      %v4625 = vadd.f32 %v4213, %v4393
      %v4626 = vadd.f32 %v4214, %v4396
      %v4627 = vadd.f32 %v4215, %v4401
      %v4628 = vadd.f32 %v4216, %v4404
      %v4629 = vadd.f32 %v4217, %v4409
      %v4630 = vadd.f32 %v4218, %v4412
      %v4631 = vadd.f32 %v4219, %v4417
      %v4632 = vadd.f32 %v4220, %v4420
      %v4633 = vadd.f32 %v4221, %v4425
      %v4634 = vadd.f32 %v4222, %v4428
      %v4635 = vadd.f32 %v4223, %v4433
      %v4636 = vadd.f32 %v4224, %v4436
      %v4637 = vadd.f32 %v4225, %v4441
      %v4638 = vadd.f32 %v4226, %v4444
      %v4639 = vadd.f32 %v4227, %v4449
      %v4640 = vadd.f32 %v4228, %v4452
      %v4641 = vadd.f32 %v4229, %v4457
      %v4642 = vadd.f32 %v4230, %v4460
      %v4643 = vadd.f32 %v4231, %v4465
      %v4644 = vadd.f32 %v4232, %v4468
      %v4645 = vadd.f32 %v4233, %v4473
      %v4646 = vadd.f32 %v4234, %v4476
      %v4647 = vadd.f32 %v4235, %v4481
      %v4648 = vadd.f32 %v4236, %v4484
      %v4649 = vadd.f32 %v4237, %v4489
      %v4650 = vadd.f32 %v4238, %v4492
      %v4651 = vadd.f32 %v4239, %v4497
      %v4652 = vadd.f32 %v4240, %v4500
      %v4653 = vadd.f32 %v4241, %v4505
      %v4654 = vadd.f32 %v4242, %v4508
      %v4655 = vadd.f32 %v4243, %v4513
      %v4656 = vadd.f32 %v4244, %v4516
      %v4657 = vadd.f32 %v4245, %v4521
      %v4658 = vadd.f32 %v4246, %v4524
      %v4659 = vadd.f32 %v4247, %v4529
      %v4660 = vadd.f32 %v4248, %v4532
      %v4661 = vadd.f32 %v4249, %v4537
      %v4662 = vadd.f32 %v4250, %v4540
      %v4663 = vadd.f32 %v4251, %v4545
      %v4664 = vadd.f32 %v4252, %v4548
      %v4665 = vadd.f32 %v4253, %v4553
      %v4666 = vadd.f32 %v4254, %v4556
      %v4667 = vadd.f32 %v4255, %v4561
      %v4668 = vadd.f32 %v4256, %v4564
      %v4669 = vadd.f32 %v4257, %v4569
      %v4670 = vadd.f32 %v4258, %v4572
      %v4671 = vadd.f32 %v4259, %v4577
      %v4672 = vadd.f32 %v4260, %v4580
      %v4673 = vadd.f32 %v4261, %v4585
      %v4674 = vadd.f32 %v4262, %v4588
      %v4675 = vadd.f32 %v4263, %v4593
      %v4676 = vadd.f32 %v4264, %v4596
      %v4677 = vadd.f32 %v4265, %v4601
      %v4678 = vadd.f32 %v4266, %v4604
      %v4682 = vrot.slane %v576, 1
      %v4683 = vrot.slane %v577, 1
      %v4684 = vsel %vm3476, %v4682, %v4683
      %v4685 = vrot.slane %v1768, 1
      %v4686 = vsel %vm3476, %v4683, %v4685
      %s4687 = scalar_lea.vmem %s1, 16
      %v4688 = vld [vmem:[%s4687] sm:$0x3]
      %v4690 = vsel %vm581, %v4684, 0
      %v4693 = vsel %vm581, %v4686, 0
      %v4696 = vsel %vm690, %v4688, 0
      %4698 = vmatprep.subr.bf16.mxu0 0
      %4699 = vmatpush1.bf16.msra.mxu0 %v4696
      %4700 = vmatprep.subr.bf16.mxu0 0
      %4701 = vmatpush1.bf16.msra.mxu0 0
      %4702 = vmatprep.subr.bf16.mxu0 0
      %4703 = vmatpush1.bf16.msra.mxu0 0
      %4704 = vmatprep.subr.bf16.mxu0 0
      %4705 = vmatpush1.bf16.msra.mxu0 0
      %4706 = vmatprep.subr.bf16.mxu0 0
      %4707 = vmatpush1.bf16.msra.mxu0 0
      %4708 = vmatprep.subr.bf16.mxu0 0
      %4709 = vmatpush1.bf16.msra.mxu0 0
      %4710 = vmatprep.subr.bf16.mxu0 0
      %4711 = vmatpush1.bf16.msra.mxu0 0
      %4712 = vmatprep.subr.bf16.mxu0 0
      %4713 = vmatpush1.bf16.msra.mxu0 0
      %4714 = vmatprep.subr.bf16.mxu0 0
      %4715 = vmatpush1.bf16.msra.mxu0 0
      %4716 = vmatprep.subr.bf16.mxu0 0
      %4717 = vmatpush1.bf16.msra.mxu0 0
      %4718 = vmatprep.subr.bf16.mxu0 0
      %4719 = vmatpush1.bf16.msra.mxu0 0
      %4720 = vmatprep.subr.bf16.mxu0 0
      %4721 = vmatpush1.bf16.msra.mxu0 0
      %4722 = vmatprep.subr.bf16.mxu0 0
      %4723 = vmatpush1.bf16.msra.mxu0 0
      %4724 = vmatprep.subr.bf16.mxu0 0
      %4725 = vmatpush1.bf16.msra.mxu0 0
      %4726 = vmatprep.subr.bf16.mxu0 0
      %4727 = vmatpush1.bf16.msra.mxu0 0
      %4728 = vmatprep.subr.bf16.mxu0 0
      %4729 = vmatpush1.bf16.msra.mxu0 0
      %4730 = vmatprep.mubr.bf16.mxu0 0
      %4731 = vmatmul.mubr.bf16.gmra.mrb[0].mxu0 %v3534
      %v4732 = vpop.f32.mrb[0].mxu0
      %v4733 = vadd.f32 0.0, %v4732
      %v4734 = vpop.f32.mrb[0].mxu0
      %v4735 = vpop.f32.mrb[0].mxu0
      %v4736 = vadd.f32 0.0, %v4735
      %v4737 = vpop.f32.mrb[0].mxu0
      %4738 = vmatprep.mubr.bf16.mxu0 0
      %4739 = vmatmul.mubr.bf16.gmra.mrb[0].mxu0 %v3824
      %v4740 = vpop.f32.mrb[0].mxu0
      %v4741 = vadd.f32 0.0, %v4740
      %v4742 = vpop.f32.mrb[0].mxu0
      %v4743 = vpop.f32.mrb[0].mxu0
      %v4744 = vadd.f32 0.0, %v4743
      %v4745 = vpop.f32.mrb[0].mxu0
      %4746 = vmatprep.mubr.bf16.mxu0 0
      %4747 = vmatmul.mubr.bf16.gmra.mrb[0].mxu0 %v3537
      %v4748 = vpop.f32.mrb[0].mxu0
      %v4749 = vadd.f32 0.0, %v4748
      %v4750 = vpop.f32.mrb[0].mxu0
      %v4751 = vpop.f32.mrb[0].mxu0
      %v4752 = vadd.f32 0.0, %v4751
      %v4753 = vpop.f32.mrb[0].mxu0
      %4754 = vmatprep.mubr.bf16.mxu0 0
      %4755 = vmatmul.mubr.bf16.gmra.mrb[0].mxu0 %v3827
      %v4756 = vpop.f32.mrb[0].mxu0
      %v4757 = vadd.f32 0.0, %v4756
      %v4758 = vpop.f32.mrb[0].mxu0
      %v4759 = vpop.f32.mrb[0].mxu0
      %v4760 = vadd.f32 0.0, %v4759
      %v4761 = vpop.f32.mrb[0].mxu0
      %4762 = vmatprep.mubr.bf16.mxu0 0
      %4763 = vmatmul.mubr.bf16.gmra.mrb[0].mxu0 %v3540
      %v4764 = vpop.f32.mrb[0].mxu0
      %v4765 = vadd.f32 0.0, %v4764
      %v4766 = vpop.f32.mrb[0].mxu0
      %v4767 = vpop.f32.mrb[0].mxu0
      %v4768 = vadd.f32 0.0, %v4767
      %v4769 = vpop.f32.mrb[0].mxu0
      %4770 = vmatprep.mubr.bf16.mxu0 0
      %4771 = vmatmul.mubr.bf16.gmra.mrb[0].mxu0 %v3830
      %v4772 = vpop.f32.mrb[0].mxu0
      %v4773 = vadd.f32 0.0, %v4772
      %v4774 = vpop.f32.mrb[0].mxu0
      %v4775 = vpop.f32.mrb[0].mxu0
      %v4776 = vadd.f32 0.0, %v4775
      %v4777 = vpop.f32.mrb[0].mxu0
      %4778 = vmatprep.mubr.bf16.mxu0 0
      %4779 = vmatmul.mubr.bf16.gmra.mrb[0].mxu0 %v3543
      %v4780 = vpop.f32.mrb[0].mxu0
      %v4781 = vadd.f32 0.0, %v4780
      %v4782 = vpop.f32.mrb[0].mxu0
      %v4783 = vpop.f32.mrb[0].mxu0
      %v4784 = vadd.f32 0.0, %v4783
      %v4785 = vpop.f32.mrb[0].mxu0
      %4786 = vmatprep.mubr.bf16.mxu0 0
      %4787 = vmatmul.mubr.bf16.gmra.mrb[0].mxu0 %v3833
      %v4788 = vpop.f32.mrb[0].mxu0
      %v4789 = vadd.f32 0.0, %v4788
      %v4790 = vpop.f32.mrb[0].mxu0
      %v4791 = vpop.f32.mrb[0].mxu0
      %v4792 = vadd.f32 0.0, %v4791
      %v4793 = vpop.f32.mrb[0].mxu0
      %4794 = vmatprep.mubr.bf16.mxu0 0
      %4795 = vmatmul.mubr.bf16.gmra.mrb[0].mxu0 %v3546
      %v4796 = vpop.f32.mrb[0].mxu0
      %v4797 = vadd.f32 0.0, %v4796
      %v4798 = vpop.f32.mrb[0].mxu0
      %v4799 = vpop.f32.mrb[0].mxu0
      %v4800 = vadd.f32 0.0, %v4799
      %v4801 = vpop.f32.mrb[0].mxu0
      %4802 = vmatprep.mubr.bf16.mxu0 0
      %4803 = vmatmul.mubr.bf16.gmra.mrb[0].mxu0 %v3836
      %v4804 = vpop.f32.mrb[0].mxu0
      %v4805 = vadd.f32 0.0, %v4804
      %v4806 = vpop.f32.mrb[0].mxu0
      %v4807 = vpop.f32.mrb[0].mxu0
      %v4808 = vadd.f32 0.0, %v4807
      %v4809 = vpop.f32.mrb[0].mxu0
      %4810 = vmatprep.mubr.bf16.mxu0 0
      %4811 = vmatmul.mubr.bf16.gmra.mrb[0].mxu0 %v3549
      %v4812 = vpop.f32.mrb[0].mxu0
      %v4813 = vadd.f32 0.0, %v4812
      %v4814 = vpop.f32.mrb[0].mxu0
      %v4815 = vpop.f32.mrb[0].mxu0
      %v4816 = vadd.f32 0.0, %v4815
      %v4817 = vpop.f32.mrb[0].mxu0
      %4818 = vmatprep.mubr.bf16.mxu0 0
      %4819 = vmatmul.mubr.bf16.gmra.mrb[0].mxu0 %v3839
      %v4820 = vpop.f32.mrb[0].mxu0
      %v4821 = vadd.f32 0.0, %v4820
      %v4822 = vpop.f32.mrb[0].mxu0
      %v4823 = vpop.f32.mrb[0].mxu0
      %v4824 = vadd.f32 0.0, %v4823
      %v4825 = vpop.f32.mrb[0].mxu0
      %4826 = vmatprep.mubr.bf16.mxu0 0
      %4827 = vmatmul.mubr.bf16.gmra.mrb[0].mxu0 %v3552
      %v4828 = vpop.f32.mrb[0].mxu0
      %v4829 = vadd.f32 0.0, %v4828
      %v4830 = vpop.f32.mrb[0].mxu0
      %v4831 = vpop.f32.mrb[0].mxu0
      %v4832 = vadd.f32 0.0, %v4831
      %v4833 = vpop.f32.mrb[0].mxu0
      %4834 = vmatprep.mubr.bf16.mxu0 0
      %4835 = vmatmul.mubr.bf16.gmra.mrb[0].mxu0 %v3842
      %v4836 = vpop.f32.mrb[0].mxu0
      %v4837 = vadd.f32 0.0, %v4836
      %v4838 = vpop.f32.mrb[0].mxu0
      %v4839 = vpop.f32.mrb[0].mxu0
      %v4840 = vadd.f32 0.0, %v4839
      %v4841 = vpop.f32.mrb[0].mxu0
      %4842 = vmatprep.mubr.bf16.mxu0 0
      %4843 = vmatmul.mubr.bf16.gmra.mrb[0].mxu0 %v3555
      %v4844 = vpop.f32.mrb[0].mxu0
      %v4845 = vadd.f32 0.0, %v4844
      %v4846 = vpop.f32.mrb[0].mxu0
      %v4847 = vpop.f32.mrb[0].mxu0
      %v4848 = vadd.f32 0.0, %v4847
      %v4849 = vpop.f32.mrb[0].mxu0
      %4850 = vmatprep.mubr.bf16.mxu0 0
      %4851 = vmatmul.mubr.bf16.gmra.mrb[0].mxu0 %v3845
      %v4852 = vpop.f32.mrb[0].mxu0
      %v4853 = vadd.f32 0.0, %v4852
      %v4854 = vpop.f32.mrb[0].mxu0
      %v4855 = vpop.f32.mrb[0].mxu0
      %v4856 = vadd.f32 0.0, %v4855
      %v4857 = vpop.f32.mrb[0].mxu0
      %4858 = vmatprep.mubr.bf16.mxu0 0
      %4859 = vmatmul.mubr.bf16.gmra.mrb[0].mxu0 %v3558
      %v4860 = vpop.f32.mrb[0].mxu0
      %v4861 = vadd.f32 0.0, %v4860
      %v4862 = vpop.f32.mrb[0].mxu0
      %v4863 = vpop.f32.mrb[0].mxu0
      %v4864 = vadd.f32 0.0, %v4863
      %v4865 = vpop.f32.mrb[0].mxu0
      %4866 = vmatprep.mubr.bf16.mxu0 0
      %4867 = vmatmul.mubr.bf16.gmra.mrb[0].mxu0 %v3848
      %v4868 = vpop.f32.mrb[0].mxu0
      %v4869 = vadd.f32 0.0, %v4868
      %v4870 = vpop.f32.mrb[0].mxu0
      %v4871 = vpop.f32.mrb[0].mxu0
      %v4872 = vadd.f32 0.0, %v4871
      %v4873 = vpop.f32.mrb[0].mxu0
      %4874 = vmatprep.mubr.bf16.mxu0 0
      %4875 = vmatmul.mubr.bf16.gmra.mrb[0].mxu0 %v3561
      %v4876 = vpop.f32.mrb[0].mxu0
      %v4877 = vadd.f32 0.0, %v4876
      %v4878 = vpop.f32.mrb[0].mxu0
      %v4879 = vpop.f32.mrb[0].mxu0
      %v4880 = vadd.f32 0.0, %v4879
      %v4881 = vpop.f32.mrb[0].mxu0
      %4882 = vmatprep.mubr.bf16.mxu0 0
      %4883 = vmatmul.mubr.bf16.gmra.mrb[0].mxu0 %v3851
      %v4884 = vpop.f32.mrb[0].mxu0
      %v4885 = vadd.f32 0.0, %v4884
      %v4886 = vpop.f32.mrb[0].mxu0
      %v4887 = vpop.f32.mrb[0].mxu0
      %v4888 = vadd.f32 0.0, %v4887
      %v4889 = vpop.f32.mrb[0].mxu0
      %4890 = vmatprep.mubr.bf16.mxu0 0
      %4891 = vmatmul.mubr.bf16.gmra.mrb[0].mxu0 %v3564
      %v4892 = vpop.f32.mrb[0].mxu0
      %v4893 = vadd.f32 0.0, %v4892
      %v4894 = vpop.f32.mrb[0].mxu0
      %v4895 = vpop.f32.mrb[0].mxu0
      %v4896 = vadd.f32 0.0, %v4895
      %v4897 = vpop.f32.mrb[0].mxu0
      %4898 = vmatprep.mubr.bf16.mxu0 0
      %4899 = vmatmul.mubr.bf16.gmra.mrb[0].mxu0 %v3854
      %v4900 = vpop.f32.mrb[0].mxu0
      %v4901 = vadd.f32 0.0, %v4900
      %v4902 = vpop.f32.mrb[0].mxu0
      %v4903 = vpop.f32.mrb[0].mxu0
      %v4904 = vadd.f32 0.0, %v4903
      %v4905 = vpop.f32.mrb[0].mxu0
      %4906 = vmatprep.mubr.bf16.mxu0 0
      %4907 = vmatmul.mubr.bf16.gmra.mrb[0].mxu0 %v3567
      %v4908 = vpop.f32.mrb[0].mxu0
      %v4909 = vadd.f32 0.0, %v4908
      %v4910 = vpop.f32.mrb[0].mxu0
      %v4911 = vpop.f32.mrb[0].mxu0
      %v4912 = vadd.f32 0.0, %v4911
      %v4913 = vpop.f32.mrb[0].mxu0
      %4914 = vmatprep.mubr.bf16.mxu0 0
      %4915 = vmatmul.mubr.bf16.gmra.mrb[0].mxu0 %v3857
      %v4916 = vpop.f32.mrb[0].mxu0
      %v4917 = vadd.f32 0.0, %v4916
      %v4918 = vpop.f32.mrb[0].mxu0
      %v4919 = vpop.f32.mrb[0].mxu0
      %v4920 = vadd.f32 0.0, %v4919
      %v4921 = vpop.f32.mrb[0].mxu0
      %4922 = vmatprep.mubr.bf16.mxu0 0
      %4923 = vmatmul.mubr.bf16.gmra.mrb[0].mxu0 %v3570
      %v4924 = vpop.f32.mrb[0].mxu0
      %v4925 = vadd.f32 0.0, %v4924
      %v4926 = vpop.f32.mrb[0].mxu0
      %v4927 = vpop.f32.mrb[0].mxu0
      %v4928 = vadd.f32 0.0, %v4927
      %v4929 = vpop.f32.mrb[0].mxu0
      %4930 = vmatprep.mubr.bf16.mxu0 0
      %4931 = vmatmul.mubr.bf16.gmra.mrb[0].mxu0 %v3860
      %v4932 = vpop.f32.mrb[0].mxu0
      %v4933 = vadd.f32 0.0, %v4932
      %v4934 = vpop.f32.mrb[0].mxu0
      %v4935 = vpop.f32.mrb[0].mxu0
      %v4936 = vadd.f32 0.0, %v4935
      %v4937 = vpop.f32.mrb[0].mxu0
      %4938 = vmatprep.mubr.bf16.mxu0 0
      %4939 = vmatmul.mubr.bf16.gmra.mrb[0].mxu0 %v3573
      %v4940 = vpop.f32.mrb[0].mxu0
      %v4941 = vadd.f32 0.0, %v4940
      %v4942 = vpop.f32.mrb[0].mxu0
      %v4943 = vpop.f32.mrb[0].mxu0
      %v4944 = vadd.f32 0.0, %v4943
      %v4945 = vpop.f32.mrb[0].mxu0
      %4946 = vmatprep.mubr.bf16.mxu0 0
      %4947 = vmatmul.mubr.bf16.gmra.mrb[0].mxu0 %v3863
      %v4948 = vpop.f32.mrb[0].mxu0
      %v4949 = vadd.f32 0.0, %v4948
      %v4950 = vpop.f32.mrb[0].mxu0
      %v4951 = vpop.f32.mrb[0].mxu0
      %v4952 = vadd.f32 0.0, %v4951
      %v4953 = vpop.f32.mrb[0].mxu0
      %4954 = vmatprep.mubr.bf16.mxu0 0
      %4955 = vmatmul.mubr.bf16.gmra.mrb[0].mxu0 %v3576
      %v4956 = vpop.f32.mrb[0].mxu0
      %v4957 = vadd.f32 0.0, %v4956
      %v4958 = vpop.f32.mrb[0].mxu0
      %v4959 = vpop.f32.mrb[0].mxu0
      %v4960 = vadd.f32 0.0, %v4959
      %v4961 = vpop.f32.mrb[0].mxu0
      %4962 = vmatprep.mubr.bf16.mxu0 0
      %4963 = vmatmul.mubr.bf16.gmra.mrb[0].mxu0 %v3866
      %v4964 = vpop.f32.mrb[0].mxu0
      %v4965 = vadd.f32 0.0, %v4964
      %v4966 = vpop.f32.mrb[0].mxu0
      %v4967 = vpop.f32.mrb[0].mxu0
      %v4968 = vadd.f32 0.0, %v4967
      %v4969 = vpop.f32.mrb[0].mxu0
      %4970 = vmatprep.mubr.bf16.mxu0 0
      %4971 = vmatmul.mubr.bf16.gmra.mrb[0].mxu0 %v3579
      %v4972 = vpop.f32.mrb[0].mxu0
      %v4973 = vadd.f32 0.0, %v4972
      %v4974 = vpop.f32.mrb[0].mxu0
      %v4975 = vpop.f32.mrb[0].mxu0
      %v4976 = vadd.f32 0.0, %v4975
      %v4977 = vpop.f32.mrb[0].mxu0
      %4978 = vmatprep.mubr.bf16.mxu0 0
      %4979 = vmatmul.mubr.bf16.gmra.mrb[0].mxu0 %v3869
      %v4980 = vpop.f32.mrb[0].mxu0
      %v4981 = vadd.f32 0.0, %v4980
      %v4982 = vpop.f32.mrb[0].mxu0
      %v4983 = vpop.f32.mrb[0].mxu0
      %v4984 = vadd.f32 0.0, %v4983
      %v4985 = vpop.f32.mrb[0].mxu0
      %4986 = vmatprep.mubr.bf16.mxu0 0
      %4987 = vmatmul.mubr.bf16.gmra.mrb[0].mxu0 %v4278
      %v4988 = vpop.f32.mrb[0].mxu0
      %v4989 = vadd.f32 0.0, %v4988
      %v4990 = vpop.f32.mrb[0].mxu0
      %v4991 = vpop.f32.mrb[0].mxu0
      %v4992 = vadd.f32 0.0, %v4991
      %v4993 = vpop.f32.mrb[0].mxu0
      %4994 = vmatprep.mubr.bf16.mxu0 0
      %4995 = vmatmul.mubr.bf16.gmra.mrb[0].mxu0 %v4281
      %v4996 = vpop.f32.mrb[0].mxu0
      %v4997 = vadd.f32 0.0, %v4996
      %v4998 = vpop.f32.mrb[0].mxu0
      %v4999 = vpop.f32.mrb[0].mxu0
      %v5000 = vadd.f32 0.0, %v4999
      %v5001 = vpop.f32.mrb[0].mxu0
      %5002 = vmatprep.mubr.bf16.mxu0 0
      %5003 = vmatmul.mubr.bf16.gmra.mrb[0].mxu0 %v4690
      %v5004 = vpop.f32.mrb[0].mxu0
      %v5005 = vadd.f32 0.0, %v5004
      %v5006 = vpop.f32.mrb[0].mxu0
      %v5007 = vpop.f32.mrb[0].mxu0
      %v5008 = vadd.f32 0.0, %v5007
      %v5009 = vpop.f32.mrb[0].mxu0
      %5010 = vmatprep.mubr.bf16.mxu0 0
      %5011 = vmatmul.mubr.bf16.gmra.mrb[0].mxu0 %v4693
      %v5012 = vpop.f32.mrb[0].mxu0
      %v5013 = vadd.f32 0.0, %v5012
      %v5014 = vpop.f32.mrb[0].mxu0
      %v5015 = vpop.f32.mrb[0].mxu0
      %v5016 = vadd.f32 0.0, %v5015
      %v5017 = vpop.f32.mrb[0].mxu0
      %5018 = vdwg.mxu0
      %v5019 = vadd.f32 %v4607, %v4733
      %v5020 = vadd.f32 %v4608, %v4736
      %v5021 = vadd.f32 %v4609, %v4741
      %v5022 = vadd.f32 %v4610, %v4744
      %v5023 = vadd.f32 %v4611, %v4749
      %v5024 = vadd.f32 %v4612, %v4752
      %v5025 = vadd.f32 %v4613, %v4757
      %v5026 = vadd.f32 %v4614, %v4760
      %v5027 = vadd.f32 %v4615, %v4765
      %v5028 = vadd.f32 %v4616, %v4768
      %v5029 = vadd.f32 %v4617, %v4773
      %v5030 = vadd.f32 %v4618, %v4776
      %v5031 = vadd.f32 %v4619, %v4781
      %v5032 = vadd.f32 %v4620, %v4784
      %v5033 = vadd.f32 %v4621, %v4789
      %v5034 = vadd.f32 %v4622, %v4792
      %v5035 = vadd.f32 %v4623, %v4797
      %v5036 = vadd.f32 %v4624, %v4800
      %v5037 = vadd.f32 %v4625, %v4805
      %v5038 = vadd.f32 %v4626, %v4808
      %v5039 = vadd.f32 %v4627, %v4813
      %v5040 = vadd.f32 %v4628, %v4816
      %v5041 = vadd.f32 %v4629, %v4821
      %v5042 = vadd.f32 %v4630, %v4824
      %v5043 = vadd.f32 %v4631, %v4829
      %v5044 = vadd.f32 %v4632, %v4832
      %v5045 = vadd.f32 %v4633, %v4837
      %v5046 = vadd.f32 %v4634, %v4840
      %v5047 = vadd.f32 %v4635, %v4845
      %v5048 = vadd.f32 %v4636, %v4848
      %v5049 = vadd.f32 %v4637, %v4853
      %v5050 = vadd.f32 %v4638, %v4856
      %v5051 = vadd.f32 %v4639, %v4861
      %v5052 = vadd.f32 %v4640, %v4864
      %v5053 = vadd.f32 %v4641, %v4869
      %v5054 = vadd.f32 %v4642, %v4872
      %v5055 = vadd.f32 %v4643, %v4877
      %v5056 = vadd.f32 %v4644, %v4880
      %v5057 = vadd.f32 %v4645, %v4885
      %v5058 = vadd.f32 %v4646, %v4888
      %v5059 = vadd.f32 %v4647, %v4893
      %v5060 = vadd.f32 %v4648, %v4896
      %v5061 = vadd.f32 %v4649, %v4901
      %v5062 = vadd.f32 %v4650, %v4904
      %v5063 = vadd.f32 %v4651, %v4909
      %v5064 = vadd.f32 %v4652, %v4912
      %v5065 = vadd.f32 %v4653, %v4917
      %v5066 = vadd.f32 %v4654, %v4920
      %v5067 = vadd.f32 %v4655, %v4925
      %v5068 = vadd.f32 %v4656, %v4928
      %v5069 = vadd.f32 %v4657, %v4933
      %v5070 = vadd.f32 %v4658, %v4936
      %v5071 = vadd.f32 %v4659, %v4941
      %v5072 = vadd.f32 %v4660, %v4944
      %v5073 = vadd.f32 %v4661, %v4949
      %v5074 = vadd.f32 %v4662, %v4952
      %v5075 = vadd.f32 %v4663, %v4957
      %v5076 = vadd.f32 %v4664, %v4960
      %v5077 = vadd.f32 %v4665, %v4965
      %v5078 = vadd.f32 %v4666, %v4968
      %v5079 = vadd.f32 %v4667, %v4973
      %v5080 = vadd.f32 %v4668, %v4976
      %v5081 = vadd.f32 %v4669, %v4981
      %v5082 = vadd.f32 %v4670, %v4984
      %v5083 = vadd.f32 %v4671, %v4989
      %v5084 = vadd.f32 %v4672, %v4992
      %v5085 = vadd.f32 %v4673, %v4997
      %v5086 = vadd.f32 %v4674, %v5000
      %v5087 = vadd.f32 %v4675, %v5005
      %v5088 = vadd.f32 %v4676, %v5008
      %v5089 = vadd.f32 %v4677, %v5013
      %v5090 = vadd.f32 %v4678, %v5016
      %v5092 = vlaneseq
      %v5093 = vshrl.u32 %v5092, 7
      %v5094 = vsub.s32 0, %v5093
      %v5095 = vrot.slane %v534, %v5094
      %v5097 = vmul.f32 %v5019, %v5095
      %v5098 = vmul.f32 %v5020, %v5095
      %v5099 = vmul.f32 %v5021, %v5095
      %v5100 = vmul.f32 %v5022, %v5095
      %v5101 = vmul.f32 %v5023, %v5095
      %v5102 = vmul.f32 %v5024, %v5095
      %v5103 = vmul.f32 %v5025, %v5095
      %v5104 = vmul.f32 %v5026, %v5095
      %v5105 = vmul.f32 %v5027, %v5095
      %v5106 = vmul.f32 %v5028, %v5095
      %v5107 = vmul.f32 %v5029, %v5095
      %v5108 = vmul.f32 %v5030, %v5095
      %v5109 = vmul.f32 %v5031, %v5095
      %v5110 = vmul.f32 %v5032, %v5095
      %v5111 = vmul.f32 %v5033, %v5095
      %v5112 = vmul.f32 %v5034, %v5095
      %v5113 = vmul.f32 %v5035, %v5095
      %v5114 = vmul.f32 %v5036, %v5095
      %v5115 = vmul.f32 %v5037, %v5095
      %v5116 = vmul.f32 %v5038, %v5095
      %v5117 = vmul.f32 %v5039, %v5095
      %v5118 = vmul.f32 %v5040, %v5095
      %v5119 = vmul.f32 %v5041, %v5095
      %v5120 = vmul.f32 %v5042, %v5095
      %v5121 = vmul.f32 %v5043, %v5095
      %v5122 = vmul.f32 %v5044, %v5095
      %v5123 = vmul.f32 %v5045, %v5095
      %v5124 = vmul.f32 %v5046, %v5095
      %v5125 = vmul.f32 %v5047, %v5095
      %v5126 = vmul.f32 %v5048, %v5095
      %v5127 = vmul.f32 %v5049, %v5095
      %v5128 = vmul.f32 %v5050, %v5095
      %v5129 = vmul.f32 %v5051, %v5095
      %v5130 = vmul.f32 %v5052, %v5095
      %v5131 = vmul.f32 %v5053, %v5095
      %v5132 = vmul.f32 %v5054, %v5095
      %v5133 = vmul.f32 %v5055, %v5095
      %v5134 = vmul.f32 %v5056, %v5095
      %v5135 = vmul.f32 %v5057, %v5095
      %v5136 = vmul.f32 %v5058, %v5095
      %v5137 = vmul.f32 %v5059, %v5095
      %v5138 = vmul.f32 %v5060, %v5095
      %v5139 = vmul.f32 %v5061, %v5095
      %v5140 = vmul.f32 %v5062, %v5095
      %v5141 = vmul.f32 %v5063, %v5095
      %v5142 = vmul.f32 %v5064, %v5095
      %v5143 = vmul.f32 %v5065, %v5095
      %v5144 = vmul.f32 %v5066, %v5095
      %v5145 = vmul.f32 %v5067, %v5095
      %v5146 = vmul.f32 %v5068, %v5095
      %v5147 = vmul.f32 %v5069, %v5095
      %v5148 = vmul.f32 %v5070, %v5095
      %v5149 = vmul.f32 %v5071, %v5095
      %v5150 = vmul.f32 %v5072, %v5095
      %v5151 = vmul.f32 %v5073, %v5095
      %v5152 = vmul.f32 %v5074, %v5095
      %v5153 = vmul.f32 %v5075, %v5095
      %v5154 = vmul.f32 %v5076, %v5095
      %v5155 = vmul.f32 %v5077, %v5095
      %v5156 = vmul.f32 %v5078, %v5095
      %v5157 = vmul.f32 %v5079, %v5095
      %v5158 = vmul.f32 %v5080, %v5095
      %v5159 = vmul.f32 %v5081, %v5095
      %v5160 = vmul.f32 %v5082, %v5095
      %v5161 = vmul.f32 %v5083, %v5095
      %v5162 = vmul.f32 %v5084, %v5095
      %v5163 = vmul.f32 %v5085, %v5095
      %v5164 = vmul.f32 %v5086, %v5095
      %v5165 = vmul.f32 %v5087, %v5095
      %v5166 = vmul.f32 %v5088, %v5095
      %v5167 = vmul.f32 %v5089, %v5095
      %v5168 = vmul.f32 %v5090, %v5095
      %v5170 = vlaneseq
      %v5171 = vshrl.u32 %v5170, 7
      %v5172 = vsub.s32 0, %v5171
      %v5173 = vrot.slane %v535, %v5172
      %v5175 = vadd.f32 %v5097, %v5173
      %v5176 = vadd.f32 %v5098, %v5173
      %v5177 = vadd.f32 %v5099, %v5173
      %v5178 = vadd.f32 %v5100, %v5173
      %v5179 = vadd.f32 %v5101, %v5173
      %v5180 = vadd.f32 %v5102, %v5173
      %v5181 = vadd.f32 %v5103, %v5173
      %v5182 = vadd.f32 %v5104, %v5173
      %v5183 = vadd.f32 %v5105, %v5173
      %v5184 = vadd.f32 %v5106, %v5173
      %v5185 = vadd.f32 %v5107, %v5173
      %v5186 = vadd.f32 %v5108, %v5173
      %v5187 = vadd.f32 %v5109, %v5173
      %v5188 = vadd.f32 %v5110, %v5173
      %v5189 = vadd.f32 %v5111, %v5173
      %v5190 = vadd.f32 %v5112, %v5173
      %v5191 = vadd.f32 %v5113, %v5173
      %v5192 = vadd.f32 %v5114, %v5173
      %v5193 = vadd.f32 %v5115, %v5173
      %v5194 = vadd.f32 %v5116, %v5173
      %v5195 = vadd.f32 %v5117, %v5173
      %v5196 = vadd.f32 %v5118, %v5173
      %v5197 = vadd.f32 %v5119, %v5173
      %v5198 = vadd.f32 %v5120, %v5173
      %v5199 = vadd.f32 %v5121, %v5173
      %v5200 = vadd.f32 %v5122, %v5173
      %v5201 = vadd.f32 %v5123, %v5173
      %v5202 = vadd.f32 %v5124, %v5173
      %v5203 = vadd.f32 %v5125, %v5173
      %v5204 = vadd.f32 %v5126, %v5173
      %v5205 = vadd.f32 %v5127, %v5173
      %v5206 = vadd.f32 %v5128, %v5173
      %v5207 = vadd.f32 %v5129, %v5173
      %v5208 = vadd.f32 %v5130, %v5173
      %v5209 = vadd.f32 %v5131, %v5173
      %v5210 = vadd.f32 %v5132, %v5173
      %v5211 = vadd.f32 %v5133, %v5173
      %v5212 = vadd.f32 %v5134, %v5173
      %v5213 = vadd.f32 %v5135, %v5173
      %v5214 = vadd.f32 %v5136, %v5173
      %v5215 = vadd.f32 %v5137, %v5173
      %v5216 = vadd.f32 %v5138, %v5173
      %v5217 = vadd.f32 %v5139, %v5173
      %v5218 = vadd.f32 %v5140, %v5173
      %v5219 = vadd.f32 %v5141, %v5173
      %v5220 = vadd.f32 %v5142, %v5173
      %v5221 = vadd.f32 %v5143, %v5173
      %v5222 = vadd.f32 %v5144, %v5173
      %v5223 = vadd.f32 %v5145, %v5173
      %v5224 = vadd.f32 %v5146, %v5173
      %v5225 = vadd.f32 %v5147, %v5173
      %v5226 = vadd.f32 %v5148, %v5173
      %v5227 = vadd.f32 %v5149, %v5173
      %v5228 = vadd.f32 %v5150, %v5173
      %v5229 = vadd.f32 %v5151, %v5173
      %v5230 = vadd.f32 %v5152, %v5173
      %v5231 = vadd.f32 %v5153, %v5173
      %v5232 = vadd.f32 %v5154, %v5173
      %v5233 = vadd.f32 %v5155, %v5173
      %v5234 = vadd.f32 %v5156, %v5173
      %v5235 = vadd.f32 %v5157, %v5173
      %v5236 = vadd.f32 %v5158, %v5173
      %v5237 = vadd.f32 %v5159, %v5173
      %v5238 = vadd.f32 %v5160, %v5173
      %v5239 = vadd.f32 %v5161, %v5173
      %v5240 = vadd.f32 %v5162, %v5173
      %v5241 = vadd.f32 %v5163, %v5173
      %v5242 = vadd.f32 %v5164, %v5173
      %v5243 = vadd.f32 %v5165, %v5173
      %v5244 = vadd.f32 %v5166, %v5173
      %v5245 = vadd.f32 %v5167, %v5173
      %v5246 = vadd.f32 %v5168, %v5173
      %v5247 = vmax.f32 %v5175, 0.0
      %v5248 = vmax.f32 %v5176, 0.0
      %v5249 = vmax.f32 %v5177, 0.0
      %v5250 = vmax.f32 %v5178, 0.0
      %v5251 = vmax.f32 %v5179, 0.0
      %v5252 = vmax.f32 %v5180, 0.0
      %v5253 = vmax.f32 %v5181, 0.0
      %v5254 = vmax.f32 %v5182, 0.0
      %v5255 = vmax.f32 %v5183, 0.0
      %v5256 = vmax.f32 %v5184, 0.0
      %v5257 = vmax.f32 %v5185, 0.0
      %v5258 = vmax.f32 %v5186, 0.0
      %v5259 = vmax.f32 %v5187, 0.0
      %v5260 = vmax.f32 %v5188, 0.0
      %v5261 = vmax.f32 %v5189, 0.0
      %v5262 = vmax.f32 %v5190, 0.0
      %v5263 = vmax.f32 %v5191, 0.0
      %v5264 = vmax.f32 %v5192, 0.0
      %v5265 = vmax.f32 %v5193, 0.0
      %v5266 = vmax.f32 %v5194, 0.0
      %v5267 = vmax.f32 %v5195, 0.0
      %v5268 = vmax.f32 %v5196, 0.0
      %v5269 = vmax.f32 %v5197, 0.0
      %v5270 = vmax.f32 %v5198, 0.0
      %v5271 = vmax.f32 %v5199, 0.0
      %v5272 = vmax.f32 %v5200, 0.0
      %v5273 = vmax.f32 %v5201, 0.0
      %v5274 = vmax.f32 %v5202, 0.0
      %v5275 = vmax.f32 %v5203, 0.0
      %v5276 = vmax.f32 %v5204, 0.0
      %v5277 = vmax.f32 %v5205, 0.0
      %v5278 = vmax.f32 %v5206, 0.0
      %v5279 = vmax.f32 %v5207, 0.0
      %v5280 = vmax.f32 %v5208, 0.0
      %v5281 = vmax.f32 %v5209, 0.0
      %v5282 = vmax.f32 %v5210, 0.0
      %v5283 = vmax.f32 %v5211, 0.0
      %v5284 = vmax.f32 %v5212, 0.0
      %v5285 = vmax.f32 %v5213, 0.0
      %v5286 = vmax.f32 %v5214, 0.0
      %v5287 = vmax.f32 %v5215, 0.0
      %v5288 = vmax.f32 %v5216, 0.0
      %v5289 = vmax.f32 %v5217, 0.0
      %v5290 = vmax.f32 %v5218, 0.0
      %v5291 = vmax.f32 %v5219, 0.0
      %v5292 = vmax.f32 %v5220, 0.0
      %v5293 = vmax.f32 %v5221, 0.0
      %v5294 = vmax.f32 %v5222, 0.0
      %v5295 = vmax.f32 %v5223, 0.0
      %v5296 = vmax.f32 %v5224, 0.0
      %v5297 = vmax.f32 %v5225, 0.0
      %v5298 = vmax.f32 %v5226, 0.0
      %v5299 = vmax.f32 %v5227, 0.0
      %v5300 = vmax.f32 %v5228, 0.0
      %v5301 = vmax.f32 %v5229, 0.0
      %v5302 = vmax.f32 %v5230, 0.0
      %v5303 = vmax.f32 %v5231, 0.0
      %v5304 = vmax.f32 %v5232, 0.0
      %v5305 = vmax.f32 %v5233, 0.0
      %v5306 = vmax.f32 %v5234, 0.0
      %v5307 = vmax.f32 %v5235, 0.0
      %v5308 = vmax.f32 %v5236, 0.0
      %v5309 = vmax.f32 %v5237, 0.0
      %v5310 = vmax.f32 %v5238, 0.0
      %v5311 = vmax.f32 %v5239, 0.0
      %v5312 = vmax.f32 %v5240, 0.0
      %v5313 = vmax.f32 %v5241, 0.0
      %v5314 = vmax.f32 %v5242, 0.0
      %v5315 = vmax.f32 %v5243, 0.0
      %v5316 = vmax.f32 %v5244, 0.0
      %v5317 = vmax.f32 %v5245, 0.0
      %v5318 = vmax.f32 %v5246, 0.0
      %v5319 = vlaneseq
      %v5320 = vshrl.u32 %v5319, 7
      %v5321 = vadd.s32 %v5320, 8
      %v5322 = vadd.s32 %v5320, 16
      %v5323 = vadd.s32 %v5320, 24
      %vm5324 = vcmp.ge.s32.totalorder %v5320, 1
      %vm5325 = vcmp.ge.s32.totalorder %v5321, 1
      %vm5326 = vcmp.ge.s32.totalorder %v5322, 1
      %vm5327 = vcmp.ge.s32.totalorder %v5323, 1
      %vm5328 = vmand 0, %vm5324
      %vm5329 = vmand 0, %vm5325
      %vm5330 = vmand 0, %vm5326
      %vm5331 = vmand 0, %vm5327
      %vm5332 = vmand 1, %vm5324
      %vm5333 = vmand 1, %vm5325
      %vm5334 = vmand 1, %vm5326
      %vm5335 = vmand 1, %vm5327
      %vm5336 = vcmp.le.s32.totalorder %v5320, 16
      %vm5337 = vcmp.le.s32.totalorder %v5321, 16
      %vm5338 = vcmp.le.s32.totalorder %v5322, 16
      %vm5339 = vcmp.le.s32.totalorder %v5323, 16
      %vm5340 = vmand %vm5328, %vm5336
      %vm5341 = vmand %vm5329, %vm5337
      %vm5342 = vmand %vm5330, %vm5338
      %vm5343 = vmand %vm5331, %vm5339
      %vm5344 = vmand %vm5332, %vm5336
      %vm5345 = vmand %vm5333, %vm5337
      %vm5346 = vmand %vm5334, %vm5338
      %vm5347 = vmand %vm5335, %vm5339
      %v5348 = vsel %vm5340, %v5247, 0.0
      %v5349 = vsel %vm5341, %v5248, 0.0
      %v5350 = vsel %vm5342, %v5249, 0.0
      %v5351 = vsel %vm5343, %v5250, 0.0
      %v5352 = vsel %vm5344, %v5251, 0.0
      %v5353 = vsel %vm5345, %v5252, 0.0
      %v5354 = vsel %vm5346, %v5253, 0.0
      %v5355 = vsel %vm5347, %v5254, 0.0
      %v5356 = vsel %vm5344, %v5255, 0.0
      %v5357 = vsel %vm5345, %v5256, 0.0
      %v5358 = vsel %vm5346, %v5257, 0.0
      %v5359 = vsel %vm5347, %v5258, 0.0
      %v5360 = vsel %vm5344, %v5259, 0.0
      %v5361 = vsel %vm5345, %v5260, 0.0
      %v5362 = vsel %vm5346, %v5261, 0.0
      %v5363 = vsel %vm5347, %v5262, 0.0
      %v5364 = vsel %vm5344, %v5263, 0.0
      %v5365 = vsel %vm5345, %v5264, 0.0
      %v5366 = vsel %vm5346, %v5265, 0.0
      %v5367 = vsel %vm5347, %v5266, 0.0
      %v5368 = vsel %vm5344, %v5267, 0.0
      %v5369 = vsel %vm5345, %v5268, 0.0
      %v5370 = vsel %vm5346, %v5269, 0.0
      %v5371 = vsel %vm5347, %v5270, 0.0
      %v5372 = vsel %vm5344, %v5271, 0.0
      %v5373 = vsel %vm5345, %v5272, 0.0
      %v5374 = vsel %vm5346, %v5273, 0.0
      %v5375 = vsel %vm5347, %v5274, 0.0
      %v5376 = vsel %vm5344, %v5275, 0.0
      %v5377 = vsel %vm5345, %v5276, 0.0
      %v5378 = vsel %vm5346, %v5277, 0.0
      %v5379 = vsel %vm5347, %v5278, 0.0
      %v5380 = vsel %vm5344, %v5279, 0.0
      %v5381 = vsel %vm5345, %v5280, 0.0
      %v5382 = vsel %vm5346, %v5281, 0.0
      %v5383 = vsel %vm5347, %v5282, 0.0
      %v5384 = vsel %vm5344, %v5283, 0.0
      %v5385 = vsel %vm5345, %v5284, 0.0
      %v5386 = vsel %vm5346, %v5285, 0.0
      %v5387 = vsel %vm5347, %v5286, 0.0
      %v5388 = vsel %vm5344, %v5287, 0.0
      %v5389 = vsel %vm5345, %v5288, 0.0
      %v5390 = vsel %vm5346, %v5289, 0.0
      %v5391 = vsel %vm5347, %v5290, 0.0
      %v5392 = vsel %vm5344, %v5291, 0.0
      %v5393 = vsel %vm5345, %v5292, 0.0
      %v5394 = vsel %vm5346, %v5293, 0.0
      %v5395 = vsel %vm5347, %v5294, 0.0
      %v5396 = vsel %vm5344, %v5295, 0.0
      %v5397 = vsel %vm5345, %v5296, 0.0
      %v5398 = vsel %vm5346, %v5297, 0.0
      %v5399 = vsel %vm5347, %v5298, 0.0
      %v5400 = vsel %vm5344, %v5299, 0.0
      %v5401 = vsel %vm5345, %v5300, 0.0
      %v5402 = vsel %vm5346, %v5301, 0.0
      %v5403 = vsel %vm5347, %v5302, 0.0
      %v5404 = vsel %vm5344, %v5303, 0.0
      %v5405 = vsel %vm5345, %v5304, 0.0
      %v5406 = vsel %vm5346, %v5305, 0.0
      %v5407 = vsel %vm5347, %v5306, 0.0
      %v5408 = vsel %vm5344, %v5307, 0.0
      %v5409 = vsel %vm5345, %v5308, 0.0
      %v5410 = vsel %vm5346, %v5309, 0.0
      %v5411 = vsel %vm5347, %v5310, 0.0
      %v5412 = vsel %vm5344, %v5311, 0.0
      %v5413 = vsel %vm5345, %v5312, 0.0
      %v5414 = vsel %vm5346, %v5313, 0.0
      %v5415 = vsel %vm5347, %v5314, 0.0
      %v5416 = vsel %vm5340, %v5315, 0.0
      %v5417 = vsel %vm5341, %v5316, 0.0
      %v5418 = vsel %vm5342, %v5317, 0.0
      %v5419 = vsel %vm5343, %v5318, 0.0
      %vm5420 = vcmask 64512
      %5421 = vst.msk [vmem:[#allocation2] sm:$0xff] %vm5420, %v5348
      %5422 = vst.msk [vmem:[#allocation2 + $0x8] sm:$0xff] %vm5420, %v5349
      %5423 = vst.msk [vmem:[#allocation2 + $0x10] sm:$0xff] %vm5420, %v5350
      %5424 = vst.msk [vmem:[#allocation2 + $0x18] sm:$0xff] %vm5420, %v5351
      %5425 = vst.msk [vmem:[#allocation2 + $0x20] sm:$0xff] %vm5420, %v5352
      %5426 = vst.msk [vmem:[#allocation2 + $0x28] sm:$0xff] %vm5420, %v5353
      %5427 = vst.msk [vmem:[#allocation2 + $0x30] sm:$0xff] %vm5420, %v5354
      %5428 = vst.msk [vmem:[#allocation2 + $0x38] sm:$0xff] %vm5420, %v5355
      %5429 = vst.msk [vmem:[#allocation2 + $0x40] sm:$0xff] %vm5420, %v5356
      %5430 = vst.msk [vmem:[#allocation2 + $0x48] sm:$0xff] %vm5420, %v5357
      %5431 = vst.msk [vmem:[#allocation2 + $0x50] sm:$0xff] %vm5420, %v5358
      %5432 = vst.msk [vmem:[#allocation2 + $0x58] sm:$0xff] %vm5420, %v5359
      %5433 = vst.msk [vmem:[#allocation2 + $0x60] sm:$0xff] %vm5420, %v5360
      %5434 = vst.msk [vmem:[#allocation2 + $0x68] sm:$0xff] %vm5420, %v5361
      %5435 = vst.msk [vmem:[#allocation2 + $0x70] sm:$0xff] %vm5420, %v5362
      %5436 = vst.msk [vmem:[#allocation2 + $0x78] sm:$0xff] %vm5420, %v5363
      %5437 = vst.msk [vmem:[#allocation2 + $0x80] sm:$0xff] %vm5420, %v5364
      %5438 = vst.msk [vmem:[#allocation2 + $0x88] sm:$0xff] %vm5420, %v5365
      %5439 = vst.msk [vmem:[#allocation2 + $0x90] sm:$0xff] %vm5420, %v5366
      %5440 = vst.msk [vmem:[#allocation2 + $0x98] sm:$0xff] %vm5420, %v5367
      %5441 = vst.msk [vmem:[#allocation2 + $0xa0] sm:$0xff] %vm5420, %v5368
      %5442 = vst.msk [vmem:[#allocation2 + $0xa8] sm:$0xff] %vm5420, %v5369
      %5443 = vst.msk [vmem:[#allocation2 + $0xb0] sm:$0xff] %vm5420, %v5370
      %5444 = vst.msk [vmem:[#allocation2 + $0xb8] sm:$0xff] %vm5420, %v5371
      %5445 = vst.msk [vmem:[#allocation2 + $0xc0] sm:$0xff] %vm5420, %v5372
      %5446 = vst.msk [vmem:[#allocation2 + $0xc8] sm:$0xff] %vm5420, %v5373
      %5447 = vst.msk [vmem:[#allocation2 + $0xd0] sm:$0xff] %vm5420, %v5374
      %5448 = vst.msk [vmem:[#allocation2 + $0xd8] sm:$0xff] %vm5420, %v5375
      %5449 = vst.msk [vmem:[#allocation2 + $0xe0] sm:$0xff] %vm5420, %v5376
      %5450 = vst.msk [vmem:[#allocation2 + $0xe8] sm:$0xff] %vm5420, %v5377
      %5451 = vst.msk [vmem:[#allocation2 + $0xf0] sm:$0xff] %vm5420, %v5378
      %5452 = vst.msk [vmem:[#allocation2 + $0xf8] sm:$0xff] %vm5420, %v5379
      %5453 = vst.msk [vmem:[#allocation2 + $0x100] sm:$0xff] %vm5420, %v5380
      %5454 = vst.msk [vmem:[#allocation2 + $0x108] sm:$0xff] %vm5420, %v5381
      %5455 = vst.msk [vmem:[#allocation2 + $0x110] sm:$0xff] %vm5420, %v5382
      %5456 = vst.msk [vmem:[#allocation2 + $0x118] sm:$0xff] %vm5420, %v5383
      %5457 = vst.msk [vmem:[#allocation2 + $0x120] sm:$0xff] %vm5420, %v5384
      %5458 = vst.msk [vmem:[#allocation2 + $0x128] sm:$0xff] %vm5420, %v5385
      %5459 = vst.msk [vmem:[#allocation2 + $0x130] sm:$0xff] %vm5420, %v5386
      %5460 = vst.msk [vmem:[#allocation2 + $0x138] sm:$0xff] %vm5420, %v5387
      %5461 = vst.msk [vmem:[#allocation2 + $0x140] sm:$0xff] %vm5420, %v5388
      %5462 = vst.msk [vmem:[#allocation2 + $0x148] sm:$0xff] %vm5420, %v5389
      %5463 = vst.msk [vmem:[#allocation2 + $0x150] sm:$0xff] %vm5420, %v5390
      %5464 = vst.msk [vmem:[#allocation2 + $0x158] sm:$0xff] %vm5420, %v5391
      %5465 = vst.msk [vmem:[#allocation2 + $0x160] sm:$0xff] %vm5420, %v5392
      %5466 = vst.msk [vmem:[#allocation2 + $0x168] sm:$0xff] %vm5420, %v5393
      %5467 = vst.msk [vmem:[#allocation2 + $0x170] sm:$0xff] %vm5420, %v5394
      %5468 = vst.msk [vmem:[#allocation2 + $0x178] sm:$0xff] %vm5420, %v5395
      %5469 = vst.msk [vmem:[#allocation2 + $0x180] sm:$0xff] %vm5420, %v5396
      %5470 = vst.msk [vmem:[#allocation2 + $0x188] sm:$0xff] %vm5420, %v5397
      %5471 = vst.msk [vmem:[#allocation2 + $0x190] sm:$0xff] %vm5420, %v5398
      %5472 = vst.msk [vmem:[#allocation2 + $0x198] sm:$0xff] %vm5420, %v5399
      %5473 = vst.msk [vmem:[#allocation2 + $0x1a0] sm:$0xff] %vm5420, %v5400
      %5474 = vst.msk [vmem:[#allocation2 + $0x1a8] sm:$0xff] %vm5420, %v5401
      %5475 = vst.msk [vmem:[#allocation2 + $0x1b0] sm:$0xff] %vm5420, %v5402
      %5476 = vst.msk [vmem:[#allocation2 + $0x1b8] sm:$0xff] %vm5420, %v5403
      %5477 = vst.msk [vmem:[#allocation2 + $0x1c0] sm:$0xff] %vm5420, %v5404
      %5478 = vst.msk [vmem:[#allocation2 + $0x1c8] sm:$0xff] %vm5420, %v5405
      %5479 = vst.msk [vmem:[#allocation2 + $0x1d0] sm:$0xff] %vm5420, %v5406
      %5480 = vst.msk [vmem:[#allocation2 + $0x1d8] sm:$0xff] %vm5420, %v5407
      %5481 = vst.msk [vmem:[#allocation2 + $0x1e0] sm:$0xff] %vm5420, %v5408
      %5482 = vst.msk [vmem:[#allocation2 + $0x1e8] sm:$0xff] %vm5420, %v5409
      %5483 = vst.msk [vmem:[#allocation2 + $0x1f0] sm:$0xff] %vm5420, %v5410
      %5484 = vst.msk [vmem:[#allocation2 + $0x1f8] sm:$0xff] %vm5420, %v5411
      %5485 = vst.msk [vmem:[#allocation2 + $0x200] sm:$0xff] %vm5420, %v5412
      %5486 = vst.msk [vmem:[#allocation2 + $0x208] sm:$0xff] %vm5420, %v5413
      %5487 = vst.msk [vmem:[#allocation2 + $0x210] sm:$0xff] %vm5420, %v5414
      %5488 = vst.msk [vmem:[#allocation2 + $0x218] sm:$0xff] %vm5420, %v5415
      %5489 = vst.msk [vmem:[#allocation2 + $0x220] sm:$0xff] %vm5420, %v5416
      %5490 = vst.msk [vmem:[#allocation2 + $0x228] sm:$0xff] %vm5420, %v5417
      %5491 = vst.msk [vmem:[#allocation2 + $0x230] sm:$0xff] %vm5420, %v5418
      %5492 = vst.msk [vmem:[#allocation2 + $0x238] sm:$0xff] %vm5420, %v5419
      %v5493 = vld [vmem:[#allocation2] sm:$0xff]
      %v5494 = vld [vmem:[#allocation2 + $0x8] sm:$0xff]
      %v5495 = vld [vmem:[#allocation2 + $0x20] sm:$0xff]
      %v5496 = vld [vmem:[#allocation2 + $0x28] sm:$0xff]
      %v5497 = vld [vmem:[#allocation2 + $0x40] sm:$0xff]
      %v5498 = vld [vmem:[#allocation2 + $0x48] sm:$0xff]
      %v5499 = vld [vmem:[#allocation2 + $0x60] sm:$0xff]
      %v5500 = vld [vmem:[#allocation2 + $0x68] sm:$0xff]
      %v5501 = vld [vmem:[#allocation2 + $0x80] sm:$0xff]
      %v5502 = vld [vmem:[#allocation2 + $0x88] sm:$0xff]
      %v5503 = vld [vmem:[#allocation2 + $0xa0] sm:$0xff]
      %v5504 = vld [vmem:[#allocation2 + $0xa8] sm:$0xff]
      %v5505 = vld [vmem:[#allocation2 + $0xc0] sm:$0xff]
      %v5506 = vld [vmem:[#allocation2 + $0xc8] sm:$0xff]
      %v5507 = vld [vmem:[#allocation2 + $0xe0] sm:$0xff]
      %v5508 = vld [vmem:[#allocation2 + $0xe8] sm:$0xff]
      %v5509 = vld [vmem:[#allocation2 + $0x100] sm:$0xff]
      %v5510 = vld [vmem:[#allocation2 + $0x108] sm:$0xff]
      %v5511 = vld [vmem:[#allocation2 + $0x120] sm:$0xff]
      %v5512 = vld [vmem:[#allocation2 + $0x128] sm:$0xff]
      %v5513 = vld [vmem:[#allocation2 + $0x140] sm:$0xff]
      %v5514 = vld [vmem:[#allocation2 + $0x148] sm:$0xff]
      %v5515 = vld [vmem:[#allocation2 + $0x160] sm:$0xff]
      %v5516 = vld [vmem:[#allocation2 + $0x168] sm:$0xff]
      %v5517 = vld [vmem:[#allocation2 + $0x180] sm:$0xff]
      %v5518 = vld [vmem:[#allocation2 + $0x188] sm:$0xff]
      %v5519 = vld [vmem:[#allocation2 + $0x1a0] sm:$0xff]
      %v5520 = vld [vmem:[#allocation2 + $0x1a8] sm:$0xff]
      %v5521 = vld [vmem:[#allocation2 + $0x1c0] sm:$0xff]
      %v5522 = vld [vmem:[#allocation2 + $0x1c8] sm:$0xff]
      %v5523 = vld [vmem:[#allocation2 + $0x1e0] sm:$0xff]
      %v5524 = vld [vmem:[#allocation2 + $0x1e8] sm:$0xff]
      %v5525 = vld [vmem:[#allocation2 + $0x200] sm:$0xff]
      %v5526 = vld [vmem:[#allocation2 + $0x208] sm:$0xff]
      %v5527 = vld [vmem:[#allocation2 + $0x220] sm:$0xff]
      %v5528 = vld [vmem:[#allocation2 + $0x228] sm:$0xff]
      %v5529 = vpack.c.bf16 %v5494, %v5493
      %v5530 = vpack.c.bf16 %v5496, %v5495
      %v5531 = vpack.c.bf16 %v5498, %v5497
      %v5532 = vpack.c.bf16 %v5500, %v5499
      %v5533 = vpack.c.bf16 %v5502, %v5501
      %v5534 = vpack.c.bf16 %v5504, %v5503
      %v5535 = vpack.c.bf16 %v5506, %v5505
      %v5536 = vpack.c.bf16 %v5508, %v5507
      %v5537 = vpack.c.bf16 %v5510, %v5509
      %v5538 = vpack.c.bf16 %v5512, %v5511
      %v5539 = vpack.c.bf16 %v5514, %v5513
      %v5540 = vpack.c.bf16 %v5516, %v5515
      %v5541 = vpack.c.bf16 %v5518, %v5517
      %v5542 = vpack.c.bf16 %v5520, %v5519
      %v5543 = vpack.c.bf16 %v5522, %v5521
      %v5544 = vpack.c.bf16 %v5524, %v5523
      %v5545 = vpack.c.bf16 %v5526, %v5525
      %v5546 = vpack.c.bf16 %v5528, %v5527
      %v5547 = vld [vmem:[%s4] sm:$0xf]
      %s5548 = scalar_lea.vmem %s4, 12
      %v5549 = vld [vmem:[%s5548] sm:$0xf]
      %v5551 = vsel %vm5420, %v5530, 0
      %v5554 = vsel %vm5420, %v5531, 0
      %v5557 = vsel %vm5420, %v5532, 0
      %v5560 = vsel %vm5420, %v5533, 0
      %v5563 = vsel %vm5420, %v5534, 0
      %v5566 = vsel %vm5420, %v5535, 0
      %v5569 = vsel %vm5420, %v5536, 0
      %v5572 = vsel %vm5420, %v5537, 0
      %v5575 = vsel %vm5420, %v5538, 0
      %v5578 = vsel %vm5420, %v5539, 0
      %v5581 = vsel %vm5420, %v5540, 0
      %v5584 = vsel %vm5420, %v5541, 0
      %v5587 = vsel %vm5420, %v5542, 0
      %v5590 = vsel %vm5420, %v5543, 0
      %v5593 = vsel %vm5420, %v5544, 0
      %v5596 = vsel %vm5420, %v5545, 0
      %vm5598 = vcmask 1043456
      %v5600 = vsel %vm5598, %v5549, 0
      %5602 = vmatprep.subr.bf16.mxu0 0
      %5603 = vmatpush1.bf16.msra.mxu0 %v5600
      %5604 = vmatprep.subr.bf16.mxu0 0
      %5605 = vmatpush1.bf16.msra.mxu0 0
      %5606 = vmatprep.subr.bf16.mxu0 0
      %5607 = vmatpush1.bf16.msra.mxu0 0
      %5608 = vmatprep.subr.bf16.mxu0 0
      %5609 = vmatpush1.bf16.msra.mxu0 0
      %5610 = vmatprep.subr.bf16.mxu0 0
      %5611 = vmatpush1.bf16.msra.mxu0 0
      %5612 = vmatprep.subr.bf16.mxu0 0
      %5613 = vmatpush1.bf16.msra.mxu0 0
      %5614 = vmatprep.subr.bf16.mxu0 0
      %5615 = vmatpush1.bf16.msra.mxu0 0
      %5616 = vmatprep.subr.bf16.mxu0 0
      %5617 = vmatpush1.bf16.msra.mxu0 0
      %5618 = vmatprep.subr.bf16.mxu0 0
      %5619 = vmatpush1.bf16.msra.mxu0 0
      %5620 = vmatprep.subr.bf16.mxu0 0
      %5621 = vmatpush1.bf16.msra.mxu0 0
      %5622 = vmatprep.subr.bf16.mxu0 0
      %5623 = vmatpush1.bf16.msra.mxu0 0
      %5624 = vmatprep.subr.bf16.mxu0 0
      %5625 = vmatpush1.bf16.msra.mxu0 0
      %5626 = vmatprep.subr.bf16.mxu0 0
      %5627 = vmatpush1.bf16.msra.mxu0 0
      %5628 = vmatprep.subr.bf16.mxu0 0
      %5629 = vmatpush1.bf16.msra.mxu0 0
      %5630 = vmatprep.subr.bf16.mxu0 0
      %5631 = vmatpush1.bf16.msra.mxu0 0
      %5632 = vmatprep.subr.bf16.mxu0 0
      %5633 = vmatpush1.bf16.msra.mxu0 0
      %5634 = vmatprep.mubr.bf16.mxu0 0
      %5635 = vmatmul.mubr.bf16.gmra.mrb[0].mxu0 %v5551
      %v5636 = vpop.f32.mrb[0].mxu0
      %v5637 = vadd.f32 0.0, %v5636
      %v5638 = vpop.f32.mrb[0].mxu0
      %v5639 = vpop.f32.mrb[0].mxu0
      %v5640 = vadd.f32 0.0, %v5639
      %v5641 = vpop.f32.mrb[0].mxu0
      %5642 = vmatprep.mubr.bf16.mxu0 0
      %5643 = vmatmul.mubr.bf16.gmra.mrb[0].mxu0 %v5554
      %v5644 = vpop.f32.mrb[0].mxu0
      %v5645 = vadd.f32 0.0, %v5644
      %v5646 = vpop.f32.mrb[0].mxu0
      %v5647 = vpop.f32.mrb[0].mxu0
      %v5648 = vadd.f32 0.0, %v5647
      %v5649 = vpop.f32.mrb[0].mxu0
      %5650 = vmatprep.mubr.bf16.mxu0 0
      %5651 = vmatmul.mubr.bf16.gmra.mrb[0].mxu0 %v5557
      %v5652 = vpop.f32.mrb[0].mxu0
      %v5653 = vadd.f32 0.0, %v5652
      %v5654 = vpop.f32.mrb[0].mxu0
      %v5655 = vpop.f32.mrb[0].mxu0
      %v5656 = vadd.f32 0.0, %v5655
      %v5657 = vpop.f32.mrb[0].mxu0
      %5658 = vmatprep.mubr.bf16.mxu0 0
      %5659 = vmatmul.mubr.bf16.gmra.mrb[0].mxu0 %v5560
      %v5660 = vpop.f32.mrb[0].mxu0
      %v5661 = vadd.f32 0.0, %v5660
      %v5662 = vpop.f32.mrb[0].mxu0
      %v5663 = vpop.f32.mrb[0].mxu0
      %v5664 = vadd.f32 0.0, %v5663
      %v5665 = vpop.f32.mrb[0].mxu0
      %5666 = vmatprep.mubr.bf16.mxu0 0
      %5667 = vmatmul.mubr.bf16.gmra.mrb[0].mxu0 %v5563
      %v5668 = vpop.f32.mrb[0].mxu0
      %v5669 = vadd.f32 0.0, %v5668
      %v5670 = vpop.f32.mrb[0].mxu0
      %v5671 = vpop.f32.mrb[0].mxu0
      %v5672 = vadd.f32 0.0, %v5671
      %v5673 = vpop.f32.mrb[0].mxu0
      %5674 = vmatprep.mubr.bf16.mxu0 0
      %5675 = vmatmul.mubr.bf16.gmra.mrb[0].mxu0 %v5566
      %v5676 = vpop.f32.mrb[0].mxu0
      %v5677 = vadd.f32 0.0, %v5676
      %v5678 = vpop.f32.mrb[0].mxu0
      %v5679 = vpop.f32.mrb[0].mxu0
      %v5680 = vadd.f32 0.0, %v5679
      %v5681 = vpop.f32.mrb[0].mxu0
      %5682 = vmatprep.mubr.bf16.mxu0 0
      %5683 = vmatmul.mubr.bf16.gmra.mrb[0].mxu0 %v5569
      %v5684 = vpop.f32.mrb[0].mxu0
      %v5685 = vadd.f32 0.0, %v5684
      %v5686 = vpop.f32.mrb[0].mxu0
      %v5687 = vpop.f32.mrb[0].mxu0
      %v5688 = vadd.f32 0.0, %v5687
      %v5689 = vpop.f32.mrb[0].mxu0
      %5690 = vmatprep.mubr.bf16.mxu0 0
      %5691 = vmatmul.mubr.bf16.gmra.mrb[0].mxu0 %v5572
      %v5692 = vpop.f32.mrb[0].mxu0
      %v5693 = vadd.f32 0.0, %v5692
      %v5694 = vpop.f32.mrb[0].mxu0
      %v5695 = vpop.f32.mrb[0].mxu0
      %v5696 = vadd.f32 0.0, %v5695
      %v5697 = vpop.f32.mrb[0].mxu0
      %5698 = vmatprep.mubr.bf16.mxu0 0
      %5699 = vmatmul.mubr.bf16.gmra.mrb[0].mxu0 %v5575
      %v5700 = vpop.f32.mrb[0].mxu0
      %v5701 = vadd.f32 0.0, %v5700
      %v5702 = vpop.f32.mrb[0].mxu0
      %v5703 = vpop.f32.mrb[0].mxu0
      %v5704 = vadd.f32 0.0, %v5703
      %v5705 = vpop.f32.mrb[0].mxu0
      %5706 = vmatprep.mubr.bf16.mxu0 0
      %5707 = vmatmul.mubr.bf16.gmra.mrb[0].mxu0 %v5578
      %v5708 = vpop.f32.mrb[0].mxu0
      %v5709 = vadd.f32 0.0, %v5708
      %v5710 = vpop.f32.mrb[0].mxu0
      %v5711 = vpop.f32.mrb[0].mxu0
      %v5712 = vadd.f32 0.0, %v5711
      %v5713 = vpop.f32.mrb[0].mxu0
      %5714 = vmatprep.mubr.bf16.mxu0 0
      %5715 = vmatmul.mubr.bf16.gmra.mrb[0].mxu0 %v5581
      %v5716 = vpop.f32.mrb[0].mxu0
      %v5717 = vadd.f32 0.0, %v5716
      %v5718 = vpop.f32.mrb[0].mxu0
      %v5719 = vpop.f32.mrb[0].mxu0
      %v5720 = vadd.f32 0.0, %v5719
      %v5721 = vpop.f32.mrb[0].mxu0
      %5722 = vmatprep.mubr.bf16.mxu0 0
      %5723 = vmatmul.mubr.bf16.gmra.mrb[0].mxu0 %v5584
      %v5724 = vpop.f32.mrb[0].mxu0
      %v5725 = vadd.f32 0.0, %v5724
      %v5726 = vpop.f32.mrb[0].mxu0
      %v5727 = vpop.f32.mrb[0].mxu0
      %v5728 = vadd.f32 0.0, %v5727
      %v5729 = vpop.f32.mrb[0].mxu0
      %5730 = vmatprep.mubr.bf16.mxu0 0
      %5731 = vmatmul.mubr.bf16.gmra.mrb[0].mxu0 %v5587
      %v5732 = vpop.f32.mrb[0].mxu0
      %v5733 = vadd.f32 0.0, %v5732
      %v5734 = vpop.f32.mrb[0].mxu0
      %v5735 = vpop.f32.mrb[0].mxu0
      %v5736 = vadd.f32 0.0, %v5735
      %v5737 = vpop.f32.mrb[0].mxu0
      %5738 = vmatprep.mubr.bf16.mxu0 0
      %5739 = vmatmul.mubr.bf16.gmra.mrb[0].mxu0 %v5590
      %v5740 = vpop.f32.mrb[0].mxu0
      %v5741 = vadd.f32 0.0, %v5740
      %v5742 = vpop.f32.mrb[0].mxu0
      %v5743 = vpop.f32.mrb[0].mxu0
      %v5744 = vadd.f32 0.0, %v5743
      %v5745 = vpop.f32.mrb[0].mxu0
      %5746 = vmatprep.mubr.bf16.mxu0 0
      %5747 = vmatmul.mubr.bf16.gmra.mrb[0].mxu0 %v5593
      %v5748 = vpop.f32.mrb[0].mxu0
      %v5749 = vadd.f32 0.0, %v5748
      %v5750 = vpop.f32.mrb[0].mxu0
      %v5751 = vpop.f32.mrb[0].mxu0
      %v5752 = vadd.f32 0.0, %v5751
      %v5753 = vpop.f32.mrb[0].mxu0
      %5754 = vmatprep.mubr.bf16.mxu0 0
      %5755 = vmatmul.mubr.bf16.gmra.mrb[0].mxu0 %v5596
      %v5756 = vpop.f32.mrb[0].mxu0
      %v5757 = vadd.f32 0.0, %v5756
      %v5758 = vpop.f32.mrb[0].mxu0
      %v5759 = vpop.f32.mrb[0].mxu0
      %v5760 = vadd.f32 0.0, %v5759
      %v5761 = vpop.f32.mrb[0].mxu0
      %5762 = vdwg.mxu0
      %v5764 = vsel %vm5420, %v5529, 0
      %v5767 = vsel %vm5598, %v5547, 0
      %5769 = vmatprep.subr.bf16.mxu0 0
      %5770 = vmatpush1.bf16.msra.mxu0 %v5767
      %5771 = vmatprep.subr.bf16.mxu0 0
      %5772 = vmatpush1.bf16.msra.mxu0 0
      %5773 = vmatprep.subr.bf16.mxu0 0
      %5774 = vmatpush1.bf16.msra.mxu0 0
      %5775 = vmatprep.subr.bf16.mxu0 0
      %5776 = vmatpush1.bf16.msra.mxu0 0
      %5777 = vmatprep.subr.bf16.mxu0 0
      %5778 = vmatpush1.bf16.msra.mxu0 0
      %5779 = vmatprep.subr.bf16.mxu0 0
      %5780 = vmatpush1.bf16.msra.mxu0 0
      %5781 = vmatprep.subr.bf16.mxu0 0
      %5782 = vmatpush1.bf16.msra.mxu0 0
      %5783 = vmatprep.subr.bf16.mxu0 0
      %5784 = vmatpush1.bf16.msra.mxu0 0
      %5785 = vmatprep.subr.bf16.mxu0 0
      %5786 = vmatpush1.bf16.msra.mxu0 0
      %5787 = vmatprep.subr.bf16.mxu0 0
      %5788 = vmatpush1.bf16.msra.mxu0 0
      %5789 = vmatprep.subr.bf16.mxu0 0
      %5790 = vmatpush1.bf16.msra.mxu0 0
      %5791 = vmatprep.subr.bf16.mxu0 0
      %5792 = vmatpush1.bf16.msra.mxu0 0
      %5793 = vmatprep.subr.bf16.mxu0 0
      %5794 = vmatpush1.bf16.msra.mxu0 0
      %5795 = vmatprep.subr.bf16.mxu0 0
      %5796 = vmatpush1.bf16.msra.mxu0 0
      %5797 = vmatprep.subr.bf16.mxu0 0
      %5798 = vmatpush1.bf16.msra.mxu0 0
      %5799 = vmatprep.subr.bf16.mxu0 0
      %5800 = vmatpush1.bf16.msra.mxu0 0
      %5801 = vmatprep.mubr.bf16.mxu0 0
      %5802 = vmatmul.mubr.bf16.gmra.mrb[0].mxu0 %v5764
      %v5803 = vpop.f32.mrb[0].mxu0
      %v5804 = vadd.f32 %v5637, %v5803
      %v5805 = vpop.f32.mrb[0].mxu0
      %v5806 = vpop.f32.mrb[0].mxu0
      %v5807 = vadd.f32 %v5640, %v5806
      %v5808 = vpop.f32.mrb[0].mxu0
      %5809 = vmatprep.mubr.bf16.mxu0 0
      %5810 = vmatmul.mubr.bf16.gmra.mrb[0].mxu0 %v5551
      %v5811 = vpop.f32.mrb[0].mxu0
      %v5812 = vadd.f32 %v5645, %v5811
      %v5813 = vpop.f32.mrb[0].mxu0
      %v5814 = vpop.f32.mrb[0].mxu0
      %v5815 = vadd.f32 %v5648, %v5814
      %v5816 = vpop.f32.mrb[0].mxu0
      %5817 = vmatprep.mubr.bf16.mxu0 0
      %5818 = vmatmul.mubr.bf16.gmra.mrb[0].mxu0 %v5554
      %v5819 = vpop.f32.mrb[0].mxu0
      %v5820 = vadd.f32 %v5653, %v5819
      %v5821 = vpop.f32.mrb[0].mxu0
      %v5822 = vpop.f32.mrb[0].mxu0
      %v5823 = vadd.f32 %v5656, %v5822
      %v5824 = vpop.f32.mrb[0].mxu0
      %5825 = vmatprep.mubr.bf16.mxu0 0
      %5826 = vmatmul.mubr.bf16.gmra.mrb[0].mxu0 %v5557
      %v5827 = vpop.f32.mrb[0].mxu0
      %v5828 = vadd.f32 %v5661, %v5827
      %v5829 = vpop.f32.mrb[0].mxu0
      %v5830 = vpop.f32.mrb[0].mxu0
      %v5831 = vadd.f32 %v5664, %v5830
      %v5832 = vpop.f32.mrb[0].mxu0
      %5833 = vmatprep.mubr.bf16.mxu0 0
      %5834 = vmatmul.mubr.bf16.gmra.mrb[0].mxu0 %v5560
      %v5835 = vpop.f32.mrb[0].mxu0
      %v5836 = vadd.f32 %v5669, %v5835
      %v5837 = vpop.f32.mrb[0].mxu0
      %v5838 = vpop.f32.mrb[0].mxu0
      %v5839 = vadd.f32 %v5672, %v5838
      %v5840 = vpop.f32.mrb[0].mxu0
      %5841 = vmatprep.mubr.bf16.mxu0 0
      %5842 = vmatmul.mubr.bf16.gmra.mrb[0].mxu0 %v5563
      %v5843 = vpop.f32.mrb[0].mxu0
      %v5844 = vadd.f32 %v5677, %v5843
      %v5845 = vpop.f32.mrb[0].mxu0
      %v5846 = vpop.f32.mrb[0].mxu0
      %v5847 = vadd.f32 %v5680, %v5846
      %v5848 = vpop.f32.mrb[0].mxu0
      %5849 = vmatprep.mubr.bf16.mxu0 0
      %5850 = vmatmul.mubr.bf16.gmra.mrb[0].mxu0 %v5566
      %v5851 = vpop.f32.mrb[0].mxu0
      %v5852 = vadd.f32 %v5685, %v5851
      %v5853 = vpop.f32.mrb[0].mxu0
      %v5854 = vpop.f32.mrb[0].mxu0
      %v5855 = vadd.f32 %v5688, %v5854
      %v5856 = vpop.f32.mrb[0].mxu0
      %5857 = vmatprep.mubr.bf16.mxu0 0
      %5858 = vmatmul.mubr.bf16.gmra.mrb[0].mxu0 %v5569
      %v5859 = vpop.f32.mrb[0].mxu0
      %v5860 = vadd.f32 %v5693, %v5859
      %v5861 = vpop.f32.mrb[0].mxu0
      %v5862 = vpop.f32.mrb[0].mxu0
      %v5863 = vadd.f32 %v5696, %v5862
      %v5864 = vpop.f32.mrb[0].mxu0
      %5865 = vmatprep.mubr.bf16.mxu0 0
      %5866 = vmatmul.mubr.bf16.gmra.mrb[0].mxu0 %v5572
      %v5867 = vpop.f32.mrb[0].mxu0
      %v5868 = vadd.f32 %v5701, %v5867
      %v5869 = vpop.f32.mrb[0].mxu0
      %v5870 = vpop.f32.mrb[0].mxu0
      %v5871 = vadd.f32 %v5704, %v5870
      %v5872 = vpop.f32.mrb[0].mxu0
      %5873 = vmatprep.mubr.bf16.mxu0 0
      %5874 = vmatmul.mubr.bf16.gmra.mrb[0].mxu0 %v5575
      %v5875 = vpop.f32.mrb[0].mxu0
      %v5876 = vadd.f32 %v5709, %v5875
      %v5877 = vpop.f32.mrb[0].mxu0
      %v5878 = vpop.f32.mrb[0].mxu0
      %v5879 = vadd.f32 %v5712, %v5878
      %v5880 = vpop.f32.mrb[0].mxu0
      %5881 = vmatprep.mubr.bf16.mxu0 0
      %5882 = vmatmul.mubr.bf16.gmra.mrb[0].mxu0 %v5578
      %v5883 = vpop.f32.mrb[0].mxu0
      %v5884 = vadd.f32 %v5717, %v5883
      %v5885 = vpop.f32.mrb[0].mxu0
      %v5886 = vpop.f32.mrb[0].mxu0
      %v5887 = vadd.f32 %v5720, %v5886
      %v5888 = vpop.f32.mrb[0].mxu0
      %5889 = vmatprep.mubr.bf16.mxu0 0
      %5890 = vmatmul.mubr.bf16.gmra.mrb[0].mxu0 %v5581
      %v5891 = vpop.f32.mrb[0].mxu0
      %v5892 = vadd.f32 %v5725, %v5891
      %v5893 = vpop.f32.mrb[0].mxu0
      %v5894 = vpop.f32.mrb[0].mxu0
      %v5895 = vadd.f32 %v5728, %v5894
      %v5896 = vpop.f32.mrb[0].mxu0
      %5897 = vmatprep.mubr.bf16.mxu0 0
      %5898 = vmatmul.mubr.bf16.gmra.mrb[0].mxu0 %v5584
      %v5899 = vpop.f32.mrb[0].mxu0
      %v5900 = vadd.f32 %v5733, %v5899
      %v5901 = vpop.f32.mrb[0].mxu0
      %v5902 = vpop.f32.mrb[0].mxu0
      %v5903 = vadd.f32 %v5736, %v5902
      %v5904 = vpop.f32.mrb[0].mxu0
      %5905 = vmatprep.mubr.bf16.mxu0 0
      %5906 = vmatmul.mubr.bf16.gmra.mrb[0].mxu0 %v5587
      %v5907 = vpop.f32.mrb[0].mxu0
      %v5908 = vadd.f32 %v5741, %v5907
      %v5909 = vpop.f32.mrb[0].mxu0
      %v5910 = vpop.f32.mrb[0].mxu0
      %v5911 = vadd.f32 %v5744, %v5910
      %v5912 = vpop.f32.mrb[0].mxu0
      %5913 = vmatprep.mubr.bf16.mxu0 0
      %5914 = vmatmul.mubr.bf16.gmra.mrb[0].mxu0 %v5590
      %v5915 = vpop.f32.mrb[0].mxu0
      %v5916 = vadd.f32 %v5749, %v5915
      %v5917 = vpop.f32.mrb[0].mxu0
      %v5918 = vpop.f32.mrb[0].mxu0
      %v5919 = vadd.f32 %v5752, %v5918
      %v5920 = vpop.f32.mrb[0].mxu0
      %5921 = vmatprep.mubr.bf16.mxu0 0
      %5922 = vmatmul.mubr.bf16.gmra.mrb[0].mxu0 %v5593
      %v5923 = vpop.f32.mrb[0].mxu0
      %v5924 = vadd.f32 %v5757, %v5923
      %v5925 = vpop.f32.mrb[0].mxu0
      %v5926 = vpop.f32.mrb[0].mxu0
      %v5927 = vadd.f32 %v5760, %v5926
      %v5928 = vpop.f32.mrb[0].mxu0
      %5929 = vdwg.mxu0
      %s5930 = scalar_lea.vmem %s4, 24
      %v5931 = vld [vmem:[%s5930] sm:$0xf]
      %v5933 = vsel %vm5420, %v5546, 0
      %v5936 = vsel %vm5598, %v5931, 0
      %5938 = vmatprep.subr.bf16.mxu0 0
      %5939 = vmatpush1.bf16.msra.mxu0 %v5936
      %5940 = vmatprep.subr.bf16.mxu0 0
      %5941 = vmatpush1.bf16.msra.mxu0 0
      %5942 = vmatprep.subr.bf16.mxu0 0
      %5943 = vmatpush1.bf16.msra.mxu0 0
      %5944 = vmatprep.subr.bf16.mxu0 0
      %5945 = vmatpush1.bf16.msra.mxu0 0
      %5946 = vmatprep.subr.bf16.mxu0 0
      %5947 = vmatpush1.bf16.msra.mxu0 0
      %5948 = vmatprep.subr.bf16.mxu0 0
      %5949 = vmatpush1.bf16.msra.mxu0 0
      %5950 = vmatprep.subr.bf16.mxu0 0
      %5951 = vmatpush1.bf16.msra.mxu0 0
      %5952 = vmatprep.subr.bf16.mxu0 0
      %5953 = vmatpush1.bf16.msra.mxu0 0
      %5954 = vmatprep.subr.bf16.mxu0 0
      %5955 = vmatpush1.bf16.msra.mxu0 0
      %5956 = vmatprep.subr.bf16.mxu0 0
      %5957 = vmatpush1.bf16.msra.mxu0 0
      %5958 = vmatprep.subr.bf16.mxu0 0
      %5959 = vmatpush1.bf16.msra.mxu0 0
      %5960 = vmatprep.subr.bf16.mxu0 0
      %5961 = vmatpush1.bf16.msra.mxu0 0
      %5962 = vmatprep.subr.bf16.mxu0 0
      %5963 = vmatpush1.bf16.msra.mxu0 0
      %5964 = vmatprep.subr.bf16.mxu0 0
      %5965 = vmatpush1.bf16.msra.mxu0 0
      %5966 = vmatprep.subr.bf16.mxu0 0
      %5967 = vmatpush1.bf16.msra.mxu0 0
      %5968 = vmatprep.subr.bf16.mxu0 0
      %5969 = vmatpush1.bf16.msra.mxu0 0
      %5970 = vmatprep.mubr.bf16.mxu0 0
      %5971 = vmatmul.mubr.bf16.gmra.mrb[0].mxu0 %v5554
      %v5972 = vpop.f32.mrb[0].mxu0
      %v5973 = vadd.f32 0.0, %v5972
      %v5974 = vpop.f32.mrb[0].mxu0
      %v5975 = vpop.f32.mrb[0].mxu0
      %v5976 = vadd.f32 0.0, %v5975
      %v5977 = vpop.f32.mrb[0].mxu0
      %5978 = vmatprep.mubr.bf16.mxu0 0
      %5979 = vmatmul.mubr.bf16.gmra.mrb[0].mxu0 %v5557
      %v5980 = vpop.f32.mrb[0].mxu0
      %v5981 = vadd.f32 0.0, %v5980
      %v5982 = vpop.f32.mrb[0].mxu0
      %v5983 = vpop.f32.mrb[0].mxu0
      %v5984 = vadd.f32 0.0, %v5983
      %v5985 = vpop.f32.mrb[0].mxu0
      %5986 = vmatprep.mubr.bf16.mxu0 0
      %5987 = vmatmul.mubr.bf16.gmra.mrb[0].mxu0 %v5560
      %v5988 = vpop.f32.mrb[0].mxu0
      %v5989 = vadd.f32 0.0, %v5988
      %v5990 = vpop.f32.mrb[0].mxu0
      %v5991 = vpop.f32.mrb[0].mxu0
      %v5992 = vadd.f32 0.0, %v5991
      %v5993 = vpop.f32.mrb[0].mxu0
      %5994 = vmatprep.mubr.bf16.mxu0 0
      %5995 = vmatmul.mubr.bf16.gmra.mrb[0].mxu0 %v5563
      %v5996 = vpop.f32.mrb[0].mxu0
      %v5997 = vadd.f32 0.0, %v5996
      %v5998 = vpop.f32.mrb[0].mxu0
      %v5999 = vpop.f32.mrb[0].mxu0
      %v6000 = vadd.f32 0.0, %v5999
      %v6001 = vpop.f32.mrb[0].mxu0
      %6002 = vmatprep.mubr.bf16.mxu0 0
      %6003 = vmatmul.mubr.bf16.gmra.mrb[0].mxu0 %v5566
      %v6004 = vpop.f32.mrb[0].mxu0
      %v6005 = vadd.f32 0.0, %v6004
      %v6006 = vpop.f32.mrb[0].mxu0
      %v6007 = vpop.f32.mrb[0].mxu0
      %v6008 = vadd.f32 0.0, %v6007
      %v6009 = vpop.f32.mrb[0].mxu0
      %6010 = vmatprep.mubr.bf16.mxu0 0
      %6011 = vmatmul.mubr.bf16.gmra.mrb[0].mxu0 %v5569
      %v6012 = vpop.f32.mrb[0].mxu0
      %v6013 = vadd.f32 0.0, %v6012
      %v6014 = vpop.f32.mrb[0].mxu0
      %v6015 = vpop.f32.mrb[0].mxu0
      %v6016 = vadd.f32 0.0, %v6015
      %v6017 = vpop.f32.mrb[0].mxu0
      %6018 = vmatprep.mubr.bf16.mxu0 0
      %6019 = vmatmul.mubr.bf16.gmra.mrb[0].mxu0 %v5572
      %v6020 = vpop.f32.mrb[0].mxu0
      %v6021 = vadd.f32 0.0, %v6020
      %v6022 = vpop.f32.mrb[0].mxu0
      %v6023 = vpop.f32.mrb[0].mxu0
      %v6024 = vadd.f32 0.0, %v6023
      %v6025 = vpop.f32.mrb[0].mxu0
      %6026 = vmatprep.mubr.bf16.mxu0 0
      %6027 = vmatmul.mubr.bf16.gmra.mrb[0].mxu0 %v5575
      %v6028 = vpop.f32.mrb[0].mxu0
      %v6029 = vadd.f32 0.0, %v6028
      %v6030 = vpop.f32.mrb[0].mxu0
      %v6031 = vpop.f32.mrb[0].mxu0
      %v6032 = vadd.f32 0.0, %v6031
      %v6033 = vpop.f32.mrb[0].mxu0
      %6034 = vmatprep.mubr.bf16.mxu0 0
      %6035 = vmatmul.mubr.bf16.gmra.mrb[0].mxu0 %v5578
      %v6036 = vpop.f32.mrb[0].mxu0
      %v6037 = vadd.f32 0.0, %v6036
      %v6038 = vpop.f32.mrb[0].mxu0
      %v6039 = vpop.f32.mrb[0].mxu0
      %v6040 = vadd.f32 0.0, %v6039
      %v6041 = vpop.f32.mrb[0].mxu0
      %6042 = vmatprep.mubr.bf16.mxu0 0
      %6043 = vmatmul.mubr.bf16.gmra.mrb[0].mxu0 %v5581
      %v6044 = vpop.f32.mrb[0].mxu0
      %v6045 = vadd.f32 0.0, %v6044
      %v6046 = vpop.f32.mrb[0].mxu0
      %v6047 = vpop.f32.mrb[0].mxu0
      %v6048 = vadd.f32 0.0, %v6047
      %v6049 = vpop.f32.mrb[0].mxu0
      %6050 = vmatprep.mubr.bf16.mxu0 0
      %6051 = vmatmul.mubr.bf16.gmra.mrb[0].mxu0 %v5584
      %v6052 = vpop.f32.mrb[0].mxu0
      %v6053 = vadd.f32 0.0, %v6052
      %v6054 = vpop.f32.mrb[0].mxu0
      %v6055 = vpop.f32.mrb[0].mxu0
      %v6056 = vadd.f32 0.0, %v6055
      %v6057 = vpop.f32.mrb[0].mxu0
      %6058 = vmatprep.mubr.bf16.mxu0 0
      %6059 = vmatmul.mubr.bf16.gmra.mrb[0].mxu0 %v5587
      %v6060 = vpop.f32.mrb[0].mxu0
      %v6061 = vadd.f32 0.0, %v6060
      %v6062 = vpop.f32.mrb[0].mxu0
      %v6063 = vpop.f32.mrb[0].mxu0
      %v6064 = vadd.f32 0.0, %v6063
      %v6065 = vpop.f32.mrb[0].mxu0
      %6066 = vmatprep.mubr.bf16.mxu0 0
      %6067 = vmatmul.mubr.bf16.gmra.mrb[0].mxu0 %v5590
      %v6068 = vpop.f32.mrb[0].mxu0
      %v6069 = vadd.f32 0.0, %v6068
      %v6070 = vpop.f32.mrb[0].mxu0
      %v6071 = vpop.f32.mrb[0].mxu0
      %v6072 = vadd.f32 0.0, %v6071
      %v6073 = vpop.f32.mrb[0].mxu0
      %6074 = vmatprep.mubr.bf16.mxu0 0
      %6075 = vmatmul.mubr.bf16.gmra.mrb[0].mxu0 %v5593
      %v6076 = vpop.f32.mrb[0].mxu0
      %v6077 = vadd.f32 0.0, %v6076
      %v6078 = vpop.f32.mrb[0].mxu0
      %v6079 = vpop.f32.mrb[0].mxu0
      %v6080 = vadd.f32 0.0, %v6079
      %v6081 = vpop.f32.mrb[0].mxu0
      %6082 = vmatprep.mubr.bf16.mxu0 0
      %6083 = vmatmul.mubr.bf16.gmra.mrb[0].mxu0 %v5596
      %v6084 = vpop.f32.mrb[0].mxu0
      %v6085 = vadd.f32 0.0, %v6084
      %v6086 = vpop.f32.mrb[0].mxu0
      %v6087 = vpop.f32.mrb[0].mxu0
      %v6088 = vadd.f32 0.0, %v6087
      %v6089 = vpop.f32.mrb[0].mxu0
      %6090 = vmatprep.mubr.bf16.mxu0 0
      %6091 = vmatmul.mubr.bf16.gmra.mrb[0].mxu0 %v5933
      %v6092 = vpop.f32.mrb[0].mxu0
      %v6093 = vadd.f32 0.0, %v6092
      %v6094 = vpop.f32.mrb[0].mxu0
      %v6095 = vpop.f32.mrb[0].mxu0
      %v6096 = vadd.f32 0.0, %v6095
      %v6097 = vpop.f32.mrb[0].mxu0
      %6098 = vdwg.mxu0
      %v6099 = vadd.f32 %v5804, %v5973
      %v6100 = vadd.f32 %v5807, %v5976
      %v6101 = vadd.f32 %v5812, %v5981
      %v6102 = vadd.f32 %v5815, %v5984
      %v6103 = vadd.f32 %v5820, %v5989
      %v6104 = vadd.f32 %v5823, %v5992
      %v6105 = vadd.f32 %v5828, %v5997
      %v6106 = vadd.f32 %v5831, %v6000
      %v6107 = vadd.f32 %v5836, %v6005
      %v6108 = vadd.f32 %v5839, %v6008
      %v6109 = vadd.f32 %v5844, %v6013
      %v6110 = vadd.f32 %v5847, %v6016
      %v6111 = vadd.f32 %v5852, %v6021
      %v6112 = vadd.f32 %v5855, %v6024
      %v6113 = vadd.f32 %v5860, %v6029
      %v6114 = vadd.f32 %v5863, %v6032
      %v6115 = vadd.f32 %v5868, %v6037
      %v6116 = vadd.f32 %v5871, %v6040
      %v6117 = vadd.f32 %v5876, %v6045
      %v6118 = vadd.f32 %v5879, %v6048
      %v6119 = vadd.f32 %v5884, %v6053
      %v6120 = vadd.f32 %v5887, %v6056
      %v6121 = vadd.f32 %v5892, %v6061
      %v6122 = vadd.f32 %v5895, %v6064
      %v6123 = vadd.f32 %v5900, %v6069
      %v6124 = vadd.f32 %v5903, %v6072
      %v6125 = vadd.f32 %v5908, %v6077
      %v6126 = vadd.f32 %v5911, %v6080
      %v6127 = vadd.f32 %v5916, %v6085
      %v6128 = vadd.f32 %v5919, %v6088
      %v6129 = vadd.f32 %v5924, %v6093
      %v6130 = vadd.f32 %v5927, %v6096
      %v6131 = vld [vmem:[#allocation2 + $0x1] sm:$0xff]
      %v6132 = vld [vmem:[#allocation2 + $0x9] sm:$0xff]
      %v6133 = vld [vmem:[#allocation2 + $0x21] sm:$0xff]
      %v6134 = vld [vmem:[#allocation2 + $0x29] sm:$0xff]
      %v6135 = vld [vmem:[#allocation2 + $0x41] sm:$0xff]
      %v6136 = vld [vmem:[#allocation2 + $0x49] sm:$0xff]
      %v6137 = vld [vmem:[#allocation2 + $0x61] sm:$0xff]
      %v6138 = vld [vmem:[#allocation2 + $0x69] sm:$0xff]
      %v6139 = vld [vmem:[#allocation2 + $0x81] sm:$0xff]
      %v6140 = vld [vmem:[#allocation2 + $0x89] sm:$0xff]
      %v6141 = vld [vmem:[#allocation2 + $0xa1] sm:$0xff]
      %v6142 = vld [vmem:[#allocation2 + $0xa9] sm:$0xff]
      %v6143 = vld [vmem:[#allocation2 + $0xc1] sm:$0xff]
      %v6144 = vld [vmem:[#allocation2 + $0xc9] sm:$0xff]
      %v6145 = vld [vmem:[#allocation2 + $0xe1] sm:$0xff]
      %v6146 = vld [vmem:[#allocation2 + $0xe9] sm:$0xff]
      %v6147 = vld [vmem:[#allocation2 + $0x101] sm:$0xff]
      %v6148 = vld [vmem:[#allocation2 + $0x109] sm:$0xff]
      %v6149 = vld [vmem:[#allocation2 + $0x121] sm:$0xff]
      %v6150 = vld [vmem:[#allocation2 + $0x129] sm:$0xff]
      %v6151 = vld [vmem:[#allocation2 + $0x141] sm:$0xff]
      %v6152 = vld [vmem:[#allocation2 + $0x149] sm:$0xff]
      %v6153 = vld [vmem:[#allocation2 + $0x161] sm:$0xff]
      %v6154 = vld [vmem:[#allocation2 + $0x169] sm:$0xff]
      %v6155 = vld [vmem:[#allocation2 + $0x181] sm:$0xff]
      %v6156 = vld [vmem:[#allocation2 + $0x189] sm:$0xff]
      %v6157 = vld [vmem:[#allocation2 + $0x1a1] sm:$0xff]
      %v6158 = vld [vmem:[#allocation2 + $0x1a9] sm:$0xff]
      %v6159 = vld [vmem:[#allocation2 + $0x1c1] sm:$0xff]
      %v6160 = vld [vmem:[#allocation2 + $0x1c9] sm:$0xff]
      %v6161 = vld [vmem:[#allocation2 + $0x1e1] sm:$0xff]
      %v6162 = vld [vmem:[#allocation2 + $0x1e9] sm:$0xff]
      %v6163 = vld [vmem:[#allocation2 + $0x201] sm:$0xff]
      %v6164 = vld [vmem:[#allocation2 + $0x209] sm:$0xff]
      %v6165 = vld [vmem:[#allocation2 + $0x221] sm:$0xff]
      %v6166 = vld [vmem:[#allocation2 + $0x229] sm:$0xff]
      %v6167 = vpack.c.bf16 %v6132, %v6131
      %v6168 = vpack.c.bf16 %v6134, %v6133
      %v6169 = vpack.c.bf16 %v6136, %v6135
      %v6170 = vpack.c.bf16 %v6138, %v6137
      %v6171 = vpack.c.bf16 %v6140, %v6139
      %v6172 = vpack.c.bf16 %v6142, %v6141
      %v6173 = vpack.c.bf16 %v6144, %v6143
      %v6174 = vpack.c.bf16 %v6146, %v6145
      %v6175 = vpack.c.bf16 %v6148, %v6147
      %v6176 = vpack.c.bf16 %v6150, %v6149
      %v6177 = vpack.c.bf16 %v6152, %v6151
      %v6178 = vpack.c.bf16 %v6154, %v6153
      %v6179 = vpack.c.bf16 %v6156, %v6155
      %v6180 = vpack.c.bf16 %v6158, %v6157
      %v6181 = vpack.c.bf16 %v6160, %v6159
      %v6182 = vpack.c.bf16 %v6162, %v6161
      %v6183 = vpack.c.bf16 %v6164, %v6163
      %v6184 = vpack.c.bf16 %v6166, %v6165
      %s6185 = scalar_lea.vmem %s4, 4
      %v6186 = vld [vmem:[%s6185] sm:$0xf]
      %v6188 = vsel %vm5420, %v6167, 0
      %v6191 = vsel %vm5420, %v6168, 0
      %v6194 = vsel %vm5420, %v6169, 0
      %v6197 = vsel %vm5420, %v6170, 0
      %v6200 = vsel %vm5420, %v6171, 0
      %v6203 = vsel %vm5420, %v6172, 0
      %v6206 = vsel %vm5420, %v6173, 0
      %v6209 = vsel %vm5420, %v6174, 0
      %v6212 = vsel %vm5420, %v6175, 0
      %v6215 = vsel %vm5420, %v6176, 0
      %v6218 = vsel %vm5420, %v6177, 0
      %v6221 = vsel %vm5420, %v6178, 0
      %v6224 = vsel %vm5420, %v6179, 0
      %v6227 = vsel %vm5420, %v6180, 0
      %v6230 = vsel %vm5420, %v6181, 0
      %v6233 = vsel %vm5420, %v6182, 0
      %v6236 = vsel %vm5598, %v6186, 0
      %6238 = vmatprep.subr.bf16.mxu0 0
      %6239 = vmatpush1.bf16.msra.mxu0 %v6236
      %6240 = vmatprep.subr.bf16.mxu0 0
      %6241 = vmatpush1.bf16.msra.mxu0 0
      %6242 = vmatprep.subr.bf16.mxu0 0
      %6243 = vmatpush1.bf16.msra.mxu0 0
      %6244 = vmatprep.subr.bf16.mxu0 0
      %6245 = vmatpush1.bf16.msra.mxu0 0
      %6246 = vmatprep.subr.bf16.mxu0 0
      %6247 = vmatpush1.bf16.msra.mxu0 0
      %6248 = vmatprep.subr.bf16.mxu0 0
      %6249 = vmatpush1.bf16.msra.mxu0 0
      %6250 = vmatprep.subr.bf16.mxu0 0
      %6251 = vmatpush1.bf16.msra.mxu0 0
      %6252 = vmatprep.subr.bf16.mxu0 0
      %6253 = vmatpush1.bf16.msra.mxu0 0
      %6254 = vmatprep.subr.bf16.mxu0 0
      %6255 = vmatpush1.bf16.msra.mxu0 0
      %6256 = vmatprep.subr.bf16.mxu0 0
      %6257 = vmatpush1.bf16.msra.mxu0 0
      %6258 = vmatprep.subr.bf16.mxu0 0
      %6259 = vmatpush1.bf16.msra.mxu0 0
      %6260 = vmatprep.subr.bf16.mxu0 0
      %6261 = vmatpush1.bf16.msra.mxu0 0
      %6262 = vmatprep.subr.bf16.mxu0 0
      %6263 = vmatpush1.bf16.msra.mxu0 0
      %6264 = vmatprep.subr.bf16.mxu0 0
      %6265 = vmatpush1.bf16.msra.mxu0 0
      %6266 = vmatprep.subr.bf16.mxu0 0
      %6267 = vmatpush1.bf16.msra.mxu0 0
      %6268 = vmatprep.subr.bf16.mxu0 0
      %6269 = vmatpush1.bf16.msra.mxu0 0
      %6270 = vmatprep.mubr.bf16.mxu0 0
      %6271 = vmatmul.mubr.bf16.gmra.mrb[0].mxu0 %v6188
      %v6272 = vpop.f32.mrb[0].mxu0
      %v6273 = vadd.f32 0.0, %v6272
      %v6274 = vpop.f32.mrb[0].mxu0
      %v6275 = vpop.f32.mrb[0].mxu0
      %v6276 = vadd.f32 0.0, %v6275
      %v6277 = vpop.f32.mrb[0].mxu0
      %6278 = vmatprep.mubr.bf16.mxu0 0
      %6279 = vmatmul.mubr.bf16.gmra.mrb[0].mxu0 %v6191
      %v6280 = vpop.f32.mrb[0].mxu0
      %v6281 = vadd.f32 0.0, %v6280
      %v6282 = vpop.f32.mrb[0].mxu0
      %v6283 = vpop.f32.mrb[0].mxu0
      %v6284 = vadd.f32 0.0, %v6283
      %v6285 = vpop.f32.mrb[0].mxu0
      %6286 = vmatprep.mubr.bf16.mxu0 0
      %6287 = vmatmul.mubr.bf16.gmra.mrb[0].mxu0 %v6194
      %v6288 = vpop.f32.mrb[0].mxu0
      %v6289 = vadd.f32 0.0, %v6288
      %v6290 = vpop.f32.mrb[0].mxu0
      %v6291 = vpop.f32.mrb[0].mxu0
      %v6292 = vadd.f32 0.0, %v6291
      %v6293 = vpop.f32.mrb[0].mxu0
      %6294 = vmatprep.mubr.bf16.mxu0 0
      %6295 = vmatmul.mubr.bf16.gmra.mrb[0].mxu0 %v6197
      %v6296 = vpop.f32.mrb[0].mxu0
      %v6297 = vadd.f32 0.0, %v6296
      %v6298 = vpop.f32.mrb[0].mxu0
      %v6299 = vpop.f32.mrb[0].mxu0
      %v6300 = vadd.f32 0.0, %v6299
      %v6301 = vpop.f32.mrb[0].mxu0
      %6302 = vmatprep.mubr.bf16.mxu0 0
      %6303 = vmatmul.mubr.bf16.gmra.mrb[0].mxu0 %v6200
      %v6304 = vpop.f32.mrb[0].mxu0
      %v6305 = vadd.f32 0.0, %v6304
      %v6306 = vpop.f32.mrb[0].mxu0
      %v6307 = vpop.f32.mrb[0].mxu0
      %v6308 = vadd.f32 0.0, %v6307
      %v6309 = vpop.f32.mrb[0].mxu0
      %6310 = vmatprep.mubr.bf16.mxu0 0
      %6311 = vmatmul.mubr.bf16.gmra.mrb[0].mxu0 %v6203
      %v6312 = vpop.f32.mrb[0].mxu0
      %v6313 = vadd.f32 0.0, %v6312
      %v6314 = vpop.f32.mrb[0].mxu0
      %v6315 = vpop.f32.mrb[0].mxu0
      %v6316 = vadd.f32 0.0, %v6315
      %v6317 = vpop.f32.mrb[0].mxu0
      %6318 = vmatprep.mubr.bf16.mxu0 0
      %6319 = vmatmul.mubr.bf16.gmra.mrb[0].mxu0 %v6206
      %v6320 = vpop.f32.mrb[0].mxu0
      %v6321 = vadd.f32 0.0, %v6320
      %v6322 = vpop.f32.mrb[0].mxu0
      %v6323 = vpop.f32.mrb[0].mxu0
      %v6324 = vadd.f32 0.0, %v6323
      %v6325 = vpop.f32.mrb[0].mxu0
      %6326 = vmatprep.mubr.bf16.mxu0 0
      %6327 = vmatmul.mubr.bf16.gmra.mrb[0].mxu0 %v6209
      %v6328 = vpop.f32.mrb[0].mxu0
      %v6329 = vadd.f32 0.0, %v6328
      %v6330 = vpop.f32.mrb[0].mxu0
      %v6331 = vpop.f32.mrb[0].mxu0
      %v6332 = vadd.f32 0.0, %v6331
      %v6333 = vpop.f32.mrb[0].mxu0
      %6334 = vmatprep.mubr.bf16.mxu0 0
      %6335 = vmatmul.mubr.bf16.gmra.mrb[0].mxu0 %v6212
      %v6336 = vpop.f32.mrb[0].mxu0
      %v6337 = vadd.f32 0.0, %v6336
      %v6338 = vpop.f32.mrb[0].mxu0
      %v6339 = vpop.f32.mrb[0].mxu0
      %v6340 = vadd.f32 0.0, %v6339
      %v6341 = vpop.f32.mrb[0].mxu0
      %6342 = vmatprep.mubr.bf16.mxu0 0
      %6343 = vmatmul.mubr.bf16.gmra.mrb[0].mxu0 %v6215
      %v6344 = vpop.f32.mrb[0].mxu0
      %v6345 = vadd.f32 0.0, %v6344
      %v6346 = vpop.f32.mrb[0].mxu0
      %v6347 = vpop.f32.mrb[0].mxu0
      %v6348 = vadd.f32 0.0, %v6347
      %v6349 = vpop.f32.mrb[0].mxu0
      %6350 = vmatprep.mubr.bf16.mxu0 0
      %6351 = vmatmul.mubr.bf16.gmra.mrb[0].mxu0 %v6218
      %v6352 = vpop.f32.mrb[0].mxu0
      %v6353 = vadd.f32 0.0, %v6352
      %v6354 = vpop.f32.mrb[0].mxu0
      %v6355 = vpop.f32.mrb[0].mxu0
      %v6356 = vadd.f32 0.0, %v6355
      %v6357 = vpop.f32.mrb[0].mxu0
      %6358 = vmatprep.mubr.bf16.mxu0 0
      %6359 = vmatmul.mubr.bf16.gmra.mrb[0].mxu0 %v6221
      %v6360 = vpop.f32.mrb[0].mxu0
      %v6361 = vadd.f32 0.0, %v6360
      %v6362 = vpop.f32.mrb[0].mxu0
      %v6363 = vpop.f32.mrb[0].mxu0
      %v6364 = vadd.f32 0.0, %v6363
      %v6365 = vpop.f32.mrb[0].mxu0
      %6366 = vmatprep.mubr.bf16.mxu0 0
      %6367 = vmatmul.mubr.bf16.gmra.mrb[0].mxu0 %v6224
      %v6368 = vpop.f32.mrb[0].mxu0
      %v6369 = vadd.f32 0.0, %v6368
      %v6370 = vpop.f32.mrb[0].mxu0
      %v6371 = vpop.f32.mrb[0].mxu0
      %v6372 = vadd.f32 0.0, %v6371
      %v6373 = vpop.f32.mrb[0].mxu0
      %6374 = vmatprep.mubr.bf16.mxu0 0
      %6375 = vmatmul.mubr.bf16.gmra.mrb[0].mxu0 %v6227
      %v6376 = vpop.f32.mrb[0].mxu0
      %v6377 = vadd.f32 0.0, %v6376
      %v6378 = vpop.f32.mrb[0].mxu0
      %v6379 = vpop.f32.mrb[0].mxu0
      %v6380 = vadd.f32 0.0, %v6379
      %v6381 = vpop.f32.mrb[0].mxu0
      %6382 = vmatprep.mubr.bf16.mxu0 0
      %6383 = vmatmul.mubr.bf16.gmra.mrb[0].mxu0 %v6230
      %v6384 = vpop.f32.mrb[0].mxu0
      %v6385 = vadd.f32 0.0, %v6384
      %v6386 = vpop.f32.mrb[0].mxu0
      %v6387 = vpop.f32.mrb[0].mxu0
      %v6388 = vadd.f32 0.0, %v6387
      %v6389 = vpop.f32.mrb[0].mxu0
      %6390 = vmatprep.mubr.bf16.mxu0 0
      %6391 = vmatmul.mubr.bf16.gmra.mrb[0].mxu0 %v6233
      %v6392 = vpop.f32.mrb[0].mxu0
      %v6393 = vadd.f32 0.0, %v6392
      %v6394 = vpop.f32.mrb[0].mxu0
      %v6395 = vpop.f32.mrb[0].mxu0
      %v6396 = vadd.f32 0.0, %v6395
      %v6397 = vpop.f32.mrb[0].mxu0
      %6398 = vdwg.mxu0
      %v6399 = vadd.f32 %v6099, %v6273
      %v6400 = vadd.f32 %v6100, %v6276
      %v6401 = vadd.f32 %v6101, %v6281
      %v6402 = vadd.f32 %v6102, %v6284
      %v6403 = vadd.f32 %v6103, %v6289
      %v6404 = vadd.f32 %v6104, %v6292
      %v6405 = vadd.f32 %v6105, %v6297
      %v6406 = vadd.f32 %v6106, %v6300
      %v6407 = vadd.f32 %v6107, %v6305
      %v6408 = vadd.f32 %v6108, %v6308
      %v6409 = vadd.f32 %v6109, %v6313
      %v6410 = vadd.f32 %v6110, %v6316
      %v6411 = vadd.f32 %v6111, %v6321
      %v6412 = vadd.f32 %v6112, %v6324
      %v6413 = vadd.f32 %v6113, %v6329
      %v6414 = vadd.f32 %v6114, %v6332
      %v6415 = vadd.f32 %v6115, %v6337
      %v6416 = vadd.f32 %v6116, %v6340
      %v6417 = vadd.f32 %v6117, %v6345
      %v6418 = vadd.f32 %v6118, %v6348
      %v6419 = vadd.f32 %v6119, %v6353
      %v6420 = vadd.f32 %v6120, %v6356
      %v6421 = vadd.f32 %v6121, %v6361
      %v6422 = vadd.f32 %v6122, %v6364
      %v6423 = vadd.f32 %v6123, %v6369
      %v6424 = vadd.f32 %v6124, %v6372
      %v6425 = vadd.f32 %v6125, %v6377
      %v6426 = vadd.f32 %v6126, %v6380
      %v6427 = vadd.f32 %v6127, %v6385
      %v6428 = vadd.f32 %v6128, %v6388
      %v6429 = vadd.f32 %v6129, %v6393
      %v6430 = vadd.f32 %v6130, %v6396
      %s6431 = scalar_lea.vmem %s4, 16
      %v6432 = vld [vmem:[%s6431] sm:$0xf]
      %v6434 = vsel %vm5420, %v6183, 0
      %v6437 = vsel %vm5598, %v6432, 0
      %6439 = vmatprep.subr.bf16.mxu0 0
      %6440 = vmatpush1.bf16.msra.mxu0 %v6437
      %6441 = vmatprep.subr.bf16.mxu0 0
      %6442 = vmatpush1.bf16.msra.mxu0 0
      %6443 = vmatprep.subr.bf16.mxu0 0
      %6444 = vmatpush1.bf16.msra.mxu0 0
      %6445 = vmatprep.subr.bf16.mxu0 0
      %6446 = vmatpush1.bf16.msra.mxu0 0
      %6447 = vmatprep.subr.bf16.mxu0 0
      %6448 = vmatpush1.bf16.msra.mxu0 0
      %6449 = vmatprep.subr.bf16.mxu0 0
      %6450 = vmatpush1.bf16.msra.mxu0 0
      %6451 = vmatprep.subr.bf16.mxu0 0
      %6452 = vmatpush1.bf16.msra.mxu0 0
      %6453 = vmatprep.subr.bf16.mxu0 0
      %6454 = vmatpush1.bf16.msra.mxu0 0
      %6455 = vmatprep.subr.bf16.mxu0 0
      %6456 = vmatpush1.bf16.msra.mxu0 0
      %6457 = vmatprep.subr.bf16.mxu0 0
      %6458 = vmatpush1.bf16.msra.mxu0 0
      %6459 = vmatprep.subr.bf16.mxu0 0
      %6460 = vmatpush1.bf16.msra.mxu0 0
      %6461 = vmatprep.subr.bf16.mxu0 0
      %6462 = vmatpush1.bf16.msra.mxu0 0
      %6463 = vmatprep.subr.bf16.mxu0 0
      %6464 = vmatpush1.bf16.msra.mxu0 0
      %6465 = vmatprep.subr.bf16.mxu0 0
      %6466 = vmatpush1.bf16.msra.mxu0 0
      %6467 = vmatprep.subr.bf16.mxu0 0
      %6468 = vmatpush1.bf16.msra.mxu0 0
      %6469 = vmatprep.subr.bf16.mxu0 0
      %6470 = vmatpush1.bf16.msra.mxu0 0
      %6471 = vmatprep.mubr.bf16.mxu0 0
      %6472 = vmatmul.mubr.bf16.gmra.mrb[0].mxu0 %v6191
      %v6473 = vpop.f32.mrb[0].mxu0
      %v6474 = vadd.f32 0.0, %v6473
      %v6475 = vpop.f32.mrb[0].mxu0
      %v6476 = vpop.f32.mrb[0].mxu0
      %v6477 = vadd.f32 0.0, %v6476
      %v6478 = vpop.f32.mrb[0].mxu0
      %6479 = vmatprep.mubr.bf16.mxu0 0
      %6480 = vmatmul.mubr.bf16.gmra.mrb[0].mxu0 %v6194
      %v6481 = vpop.f32.mrb[0].mxu0
      %v6482 = vadd.f32 0.0, %v6481
      %v6483 = vpop.f32.mrb[0].mxu0
      %v6484 = vpop.f32.mrb[0].mxu0
      %v6485 = vadd.f32 0.0, %v6484
      %v6486 = vpop.f32.mrb[0].mxu0
      %6487 = vmatprep.mubr.bf16.mxu0 0
      %6488 = vmatmul.mubr.bf16.gmra.mrb[0].mxu0 %v6197
      %v6489 = vpop.f32.mrb[0].mxu0
      %v6490 = vadd.f32 0.0, %v6489
      %v6491 = vpop.f32.mrb[0].mxu0
      %v6492 = vpop.f32.mrb[0].mxu0
      %v6493 = vadd.f32 0.0, %v6492
      %v6494 = vpop.f32.mrb[0].mxu0
      %6495 = vmatprep.mubr.bf16.mxu0 0
      %6496 = vmatmul.mubr.bf16.gmra.mrb[0].mxu0 %v6200
      %v6497 = vpop.f32.mrb[0].mxu0
      %v6498 = vadd.f32 0.0, %v6497
      %v6499 = vpop.f32.mrb[0].mxu0
      %v6500 = vpop.f32.mrb[0].mxu0
      %v6501 = vadd.f32 0.0, %v6500
      %v6502 = vpop.f32.mrb[0].mxu0
      %6503 = vmatprep.mubr.bf16.mxu0 0
      %6504 = vmatmul.mubr.bf16.gmra.mrb[0].mxu0 %v6203
      %v6505 = vpop.f32.mrb[0].mxu0
      %v6506 = vadd.f32 0.0, %v6505
      %v6507 = vpop.f32.mrb[0].mxu0
      %v6508 = vpop.f32.mrb[0].mxu0
      %v6509 = vadd.f32 0.0, %v6508
      %v6510 = vpop.f32.mrb[0].mxu0
      %6511 = vmatprep.mubr.bf16.mxu0 0
      %6512 = vmatmul.mubr.bf16.gmra.mrb[0].mxu0 %v6206
      %v6513 = vpop.f32.mrb[0].mxu0
      %v6514 = vadd.f32 0.0, %v6513
      %v6515 = vpop.f32.mrb[0].mxu0
      %v6516 = vpop.f32.mrb[0].mxu0
      %v6517 = vadd.f32 0.0, %v6516
      %v6518 = vpop.f32.mrb[0].mxu0
      %6519 = vmatprep.mubr.bf16.mxu0 0
      %6520 = vmatmul.mubr.bf16.gmra.mrb[0].mxu0 %v6209
      %v6521 = vpop.f32.mrb[0].mxu0
      %v6522 = vadd.f32 0.0, %v6521
      %v6523 = vpop.f32.mrb[0].mxu0
      %v6524 = vpop.f32.mrb[0].mxu0
      %v6525 = vadd.f32 0.0, %v6524
      %v6526 = vpop.f32.mrb[0].mxu0
      %6527 = vmatprep.mubr.bf16.mxu0 0
      %6528 = vmatmul.mubr.bf16.gmra.mrb[0].mxu0 %v6212
      %v6529 = vpop.f32.mrb[0].mxu0
      %v6530 = vadd.f32 0.0, %v6529
      %v6531 = vpop.f32.mrb[0].mxu0
      %v6532 = vpop.f32.mrb[0].mxu0
      %v6533 = vadd.f32 0.0, %v6532
      %v6534 = vpop.f32.mrb[0].mxu0
      %6535 = vmatprep.mubr.bf16.mxu0 0
      %6536 = vmatmul.mubr.bf16.gmra.mrb[0].mxu0 %v6215
      %v6537 = vpop.f32.mrb[0].mxu0
      %v6538 = vadd.f32 0.0, %v6537
      %v6539 = vpop.f32.mrb[0].mxu0
      %v6540 = vpop.f32.mrb[0].mxu0
      %v6541 = vadd.f32 0.0, %v6540
      %v6542 = vpop.f32.mrb[0].mxu0
      %6543 = vmatprep.mubr.bf16.mxu0 0
      %6544 = vmatmul.mubr.bf16.gmra.mrb[0].mxu0 %v6218
      %v6545 = vpop.f32.mrb[0].mxu0
      %v6546 = vadd.f32 0.0, %v6545
      %v6547 = vpop.f32.mrb[0].mxu0
      %v6548 = vpop.f32.mrb[0].mxu0
      %v6549 = vadd.f32 0.0, %v6548
      %v6550 = vpop.f32.mrb[0].mxu0
      %6551 = vmatprep.mubr.bf16.mxu0 0
      %6552 = vmatmul.mubr.bf16.gmra.mrb[0].mxu0 %v6221
      %v6553 = vpop.f32.mrb[0].mxu0
      %v6554 = vadd.f32 0.0, %v6553
      %v6555 = vpop.f32.mrb[0].mxu0
      %v6556 = vpop.f32.mrb[0].mxu0
      %v6557 = vadd.f32 0.0, %v6556
      %v6558 = vpop.f32.mrb[0].mxu0
      %6559 = vmatprep.mubr.bf16.mxu0 0
      %6560 = vmatmul.mubr.bf16.gmra.mrb[0].mxu0 %v6224
      %v6561 = vpop.f32.mrb[0].mxu0
      %v6562 = vadd.f32 0.0, %v6561
      %v6563 = vpop.f32.mrb[0].mxu0
      %v6564 = vpop.f32.mrb[0].mxu0
      %v6565 = vadd.f32 0.0, %v6564
      %v6566 = vpop.f32.mrb[0].mxu0
      %6567 = vmatprep.mubr.bf16.mxu0 0
      %6568 = vmatmul.mubr.bf16.gmra.mrb[0].mxu0 %v6227
      %v6569 = vpop.f32.mrb[0].mxu0
      %v6570 = vadd.f32 0.0, %v6569
      %v6571 = vpop.f32.mrb[0].mxu0
      %v6572 = vpop.f32.mrb[0].mxu0
      %v6573 = vadd.f32 0.0, %v6572
      %v6574 = vpop.f32.mrb[0].mxu0
      %6575 = vmatprep.mubr.bf16.mxu0 0
      %6576 = vmatmul.mubr.bf16.gmra.mrb[0].mxu0 %v6230
      %v6577 = vpop.f32.mrb[0].mxu0
      %v6578 = vadd.f32 0.0, %v6577
      %v6579 = vpop.f32.mrb[0].mxu0
      %v6580 = vpop.f32.mrb[0].mxu0
      %v6581 = vadd.f32 0.0, %v6580
      %v6582 = vpop.f32.mrb[0].mxu0
      %6583 = vmatprep.mubr.bf16.mxu0 0
      %6584 = vmatmul.mubr.bf16.gmra.mrb[0].mxu0 %v6233
      %v6585 = vpop.f32.mrb[0].mxu0
      %v6586 = vadd.f32 0.0, %v6585
      %v6587 = vpop.f32.mrb[0].mxu0
      %v6588 = vpop.f32.mrb[0].mxu0
      %v6589 = vadd.f32 0.0, %v6588
      %v6590 = vpop.f32.mrb[0].mxu0
      %6591 = vmatprep.mubr.bf16.mxu0 0
      %6592 = vmatmul.mubr.bf16.gmra.mrb[0].mxu0 %v6434
      %v6593 = vpop.f32.mrb[0].mxu0
      %v6594 = vadd.f32 0.0, %v6593
      %v6595 = vpop.f32.mrb[0].mxu0
      %v6596 = vpop.f32.mrb[0].mxu0
      %v6597 = vadd.f32 0.0, %v6596
      %v6598 = vpop.f32.mrb[0].mxu0
      %6599 = vdwg.mxu0
      %v6600 = vadd.f32 %v6399, %v6474
      %v6601 = vadd.f32 %v6400, %v6477
      %v6602 = vadd.f32 %v6401, %v6482
      %v6603 = vadd.f32 %v6402, %v6485
      %v6604 = vadd.f32 %v6403, %v6490
      %v6605 = vadd.f32 %v6404, %v6493
      %v6606 = vadd.f32 %v6405, %v6498
      %v6607 = vadd.f32 %v6406, %v6501
      %v6608 = vadd.f32 %v6407, %v6506
      %v6609 = vadd.f32 %v6408, %v6509
      %v6610 = vadd.f32 %v6409, %v6514
      %v6611 = vadd.f32 %v6410, %v6517
      %v6612 = vadd.f32 %v6411, %v6522
      %v6613 = vadd.f32 %v6412, %v6525
      %v6614 = vadd.f32 %v6413, %v6530
      %v6615 = vadd.f32 %v6414, %v6533
      %v6616 = vadd.f32 %v6415, %v6538
      %v6617 = vadd.f32 %v6416, %v6541
      %v6618 = vadd.f32 %v6417, %v6546
      %v6619 = vadd.f32 %v6418, %v6549
      %v6620 = vadd.f32 %v6419, %v6554
      %v6621 = vadd.f32 %v6420, %v6557
      %v6622 = vadd.f32 %v6421, %v6562
      %v6623 = vadd.f32 %v6422, %v6565
      %v6624 = vadd.f32 %v6423, %v6570
      %v6625 = vadd.f32 %v6424, %v6573
      %v6626 = vadd.f32 %v6425, %v6578
      %v6627 = vadd.f32 %v6426, %v6581
      %v6628 = vadd.f32 %v6427, %v6586
      %v6629 = vadd.f32 %v6428, %v6589
      %v6630 = vadd.f32 %v6429, %v6594
      %v6631 = vadd.f32 %v6430, %v6597
      %s6632 = scalar_lea.vmem %s4, 28
      %v6633 = vld [vmem:[%s6632] sm:$0xf]
      %v6635 = vsel %vm5420, %v6184, 0
      %v6638 = vsel %vm5598, %v6633, 0
      %6640 = vmatprep.subr.bf16.mxu0 0
      %6641 = vmatpush1.bf16.msra.mxu0 %v6638
      %6642 = vmatprep.subr.bf16.mxu0 0
      %6643 = vmatpush1.bf16.msra.mxu0 0
      %6644 = vmatprep.subr.bf16.mxu0 0
      %6645 = vmatpush1.bf16.msra.mxu0 0
      %6646 = vmatprep.subr.bf16.mxu0 0
      %6647 = vmatpush1.bf16.msra.mxu0 0
      %6648 = vmatprep.subr.bf16.mxu0 0
      %6649 = vmatpush1.bf16.msra.mxu0 0
      %6650 = vmatprep.subr.bf16.mxu0 0
      %6651 = vmatpush1.bf16.msra.mxu0 0
      %6652 = vmatprep.subr.bf16.mxu0 0
      %6653 = vmatpush1.bf16.msra.mxu0 0
      %6654 = vmatprep.subr.bf16.mxu0 0
      %6655 = vmatpush1.bf16.msra.mxu0 0
      %6656 = vmatprep.subr.bf16.mxu0 0
      %6657 = vmatpush1.bf16.msra.mxu0 0
      %6658 = vmatprep.subr.bf16.mxu0 0
      %6659 = vmatpush1.bf16.msra.mxu0 0
      %6660 = vmatprep.subr.bf16.mxu0 0
      %6661 = vmatpush1.bf16.msra.mxu0 0
      %6662 = vmatprep.subr.bf16.mxu0 0
      %6663 = vmatpush1.bf16.msra.mxu0 0
      %6664 = vmatprep.subr.bf16.mxu0 0
      %6665 = vmatpush1.bf16.msra.mxu0 0
      %6666 = vmatprep.subr.bf16.mxu0 0
      %6667 = vmatpush1.bf16.msra.mxu0 0
      %6668 = vmatprep.subr.bf16.mxu0 0
      %6669 = vmatpush1.bf16.msra.mxu0 0
      %6670 = vmatprep.subr.bf16.mxu0 0
      %6671 = vmatpush1.bf16.msra.mxu0 0
      %6672 = vmatprep.mubr.bf16.mxu0 0
      %6673 = vmatmul.mubr.bf16.gmra.mrb[0].mxu0 %v6194
      %v6674 = vpop.f32.mrb[0].mxu0
      %v6675 = vadd.f32 0.0, %v6674
      %v6676 = vpop.f32.mrb[0].mxu0
      %v6677 = vpop.f32.mrb[0].mxu0
      %v6678 = vadd.f32 0.0, %v6677
      %v6679 = vpop.f32.mrb[0].mxu0
      %6680 = vmatprep.mubr.bf16.mxu0 0
      %6681 = vmatmul.mubr.bf16.gmra.mrb[0].mxu0 %v6197
      %v6682 = vpop.f32.mrb[0].mxu0
      %v6683 = vadd.f32 0.0, %v6682
      %v6684 = vpop.f32.mrb[0].mxu0
      %v6685 = vpop.f32.mrb[0].mxu0
      %v6686 = vadd.f32 0.0, %v6685
      %v6687 = vpop.f32.mrb[0].mxu0
      %6688 = vmatprep.mubr.bf16.mxu0 0
      %6689 = vmatmul.mubr.bf16.gmra.mrb[0].mxu0 %v6200
      %v6690 = vpop.f32.mrb[0].mxu0
      %v6691 = vadd.f32 0.0, %v6690
      %v6692 = vpop.f32.mrb[0].mxu0
      %v6693 = vpop.f32.mrb[0].mxu0
      %v6694 = vadd.f32 0.0, %v6693
      %v6695 = vpop.f32.mrb[0].mxu0
      %6696 = vmatprep.mubr.bf16.mxu0 0
      %6697 = vmatmul.mubr.bf16.gmra.mrb[0].mxu0 %v6203
      %v6698 = vpop.f32.mrb[0].mxu0
      %v6699 = vadd.f32 0.0, %v6698
      %v6700 = vpop.f32.mrb[0].mxu0
      %v6701 = vpop.f32.mrb[0].mxu0
      %v6702 = vadd.f32 0.0, %v6701
      %v6703 = vpop.f32.mrb[0].mxu0
      %6704 = vmatprep.mubr.bf16.mxu0 0
      %6705 = vmatmul.mubr.bf16.gmra.mrb[0].mxu0 %v6206
      %v6706 = vpop.f32.mrb[0].mxu0
      %v6707 = vadd.f32 0.0, %v6706
      %v6708 = vpop.f32.mrb[0].mxu0
      %v6709 = vpop.f32.mrb[0].mxu0
      %v6710 = vadd.f32 0.0, %v6709
      %v6711 = vpop.f32.mrb[0].mxu0
      %6712 = vmatprep.mubr.bf16.mxu0 0
      %6713 = vmatmul.mubr.bf16.gmra.mrb[0].mxu0 %v6209
      %v6714 = vpop.f32.mrb[0].mxu0
      %v6715 = vadd.f32 0.0, %v6714
      %v6716 = vpop.f32.mrb[0].mxu0
      %v6717 = vpop.f32.mrb[0].mxu0
      %v6718 = vadd.f32 0.0, %v6717
      %v6719 = vpop.f32.mrb[0].mxu0
      %6720 = vmatprep.mubr.bf16.mxu0 0
      %6721 = vmatmul.mubr.bf16.gmra.mrb[0].mxu0 %v6212
      %v6722 = vpop.f32.mrb[0].mxu0
      %v6723 = vadd.f32 0.0, %v6722
      %v6724 = vpop.f32.mrb[0].mxu0
      %v6725 = vpop.f32.mrb[0].mxu0
      %v6726 = vadd.f32 0.0, %v6725
      %v6727 = vpop.f32.mrb[0].mxu0
      %6728 = vmatprep.mubr.bf16.mxu0 0
      %6729 = vmatmul.mubr.bf16.gmra.mrb[0].mxu0 %v6215
      %v6730 = vpop.f32.mrb[0].mxu0
      %v6731 = vadd.f32 0.0, %v6730
      %v6732 = vpop.f32.mrb[0].mxu0
      %v6733 = vpop.f32.mrb[0].mxu0
      %v6734 = vadd.f32 0.0, %v6733
      %v6735 = vpop.f32.mrb[0].mxu0
      %6736 = vmatprep.mubr.bf16.mxu0 0
      %6737 = vmatmul.mubr.bf16.gmra.mrb[0].mxu0 %v6218
      %v6738 = vpop.f32.mrb[0].mxu0
      %v6739 = vadd.f32 0.0, %v6738
      %v6740 = vpop.f32.mrb[0].mxu0
      %v6741 = vpop.f32.mrb[0].mxu0
      %v6742 = vadd.f32 0.0, %v6741
      %v6743 = vpop.f32.mrb[0].mxu0
      %6744 = vmatprep.mubr.bf16.mxu0 0
      %6745 = vmatmul.mubr.bf16.gmra.mrb[0].mxu0 %v6221
      %v6746 = vpop.f32.mrb[0].mxu0
      %v6747 = vadd.f32 0.0, %v6746
      %v6748 = vpop.f32.mrb[0].mxu0
      %v6749 = vpop.f32.mrb[0].mxu0
      %v6750 = vadd.f32 0.0, %v6749
      %v6751 = vpop.f32.mrb[0].mxu0
      %6752 = vmatprep.mubr.bf16.mxu0 0
      %6753 = vmatmul.mubr.bf16.gmra.mrb[0].mxu0 %v6224
      %v6754 = vpop.f32.mrb[0].mxu0
      %v6755 = vadd.f32 0.0, %v6754
      %v6756 = vpop.f32.mrb[0].mxu0
      %v6757 = vpop.f32.mrb[0].mxu0
      %v6758 = vadd.f32 0.0, %v6757
      %v6759 = vpop.f32.mrb[0].mxu0
      %6760 = vmatprep.mubr.bf16.mxu0 0
      %6761 = vmatmul.mubr.bf16.gmra.mrb[0].mxu0 %v6227
      %v6762 = vpop.f32.mrb[0].mxu0
      %v6763 = vadd.f32 0.0, %v6762
      %v6764 = vpop.f32.mrb[0].mxu0
      %v6765 = vpop.f32.mrb[0].mxu0
      %v6766 = vadd.f32 0.0, %v6765
      %v6767 = vpop.f32.mrb[0].mxu0
      %6768 = vmatprep.mubr.bf16.mxu0 0
      %6769 = vmatmul.mubr.bf16.gmra.mrb[0].mxu0 %v6230
      %v6770 = vpop.f32.mrb[0].mxu0
      %v6771 = vadd.f32 0.0, %v6770
      %v6772 = vpop.f32.mrb[0].mxu0
      %v6773 = vpop.f32.mrb[0].mxu0
      %v6774 = vadd.f32 0.0, %v6773
      %v6775 = vpop.f32.mrb[0].mxu0
      %6776 = vmatprep.mubr.bf16.mxu0 0
      %6777 = vmatmul.mubr.bf16.gmra.mrb[0].mxu0 %v6233
      %v6778 = vpop.f32.mrb[0].mxu0
      %v6779 = vadd.f32 0.0, %v6778
      %v6780 = vpop.f32.mrb[0].mxu0
      %v6781 = vpop.f32.mrb[0].mxu0
      %v6782 = vadd.f32 0.0, %v6781
      %v6783 = vpop.f32.mrb[0].mxu0
      %6784 = vmatprep.mubr.bf16.mxu0 0
      %6785 = vmatmul.mubr.bf16.gmra.mrb[0].mxu0 %v6434
      %v6786 = vpop.f32.mrb[0].mxu0
      %v6787 = vadd.f32 0.0, %v6786
      %v6788 = vpop.f32.mrb[0].mxu0
      %v6789 = vpop.f32.mrb[0].mxu0
      %v6790 = vadd.f32 0.0, %v6789
      %v6791 = vpop.f32.mrb[0].mxu0
      %6792 = vmatprep.mubr.bf16.mxu0 0
      %6793 = vmatmul.mubr.bf16.gmra.mrb[0].mxu0 %v6635
      %v6794 = vpop.f32.mrb[0].mxu0
      %v6795 = vadd.f32 0.0, %v6794
      %v6796 = vpop.f32.mrb[0].mxu0
      %v6797 = vpop.f32.mrb[0].mxu0
      %v6798 = vadd.f32 0.0, %v6797
      %v6799 = vpop.f32.mrb[0].mxu0
      %6800 = vdwg.mxu0
      %v6801 = vadd.f32 %v6600, %v6675
      %v6802 = vadd.f32 %v6601, %v6678
      %v6803 = vadd.f32 %v6602, %v6683
      %v6804 = vadd.f32 %v6603, %v6686
      %v6805 = vadd.f32 %v6604, %v6691
      %v6806 = vadd.f32 %v6605, %v6694
      %v6807 = vadd.f32 %v6606, %v6699
      %v6808 = vadd.f32 %v6607, %v6702
      %v6809 = vadd.f32 %v6608, %v6707
      %v6810 = vadd.f32 %v6609, %v6710
      %v6811 = vadd.f32 %v6610, %v6715
      %v6812 = vadd.f32 %v6611, %v6718
      %v6813 = vadd.f32 %v6612, %v6723
      %v6814 = vadd.f32 %v6613, %v6726
      %v6815 = vadd.f32 %v6614, %v6731
      %v6816 = vadd.f32 %v6615, %v6734
      %v6817 = vadd.f32 %v6616, %v6739
      %v6818 = vadd.f32 %v6617, %v6742
      %v6819 = vadd.f32 %v6618, %v6747
      %v6820 = vadd.f32 %v6619, %v6750
      %v6821 = vadd.f32 %v6620, %v6755
      %v6822 = vadd.f32 %v6621, %v6758
      %v6823 = vadd.f32 %v6622, %v6763
      %v6824 = vadd.f32 %v6623, %v6766
      %v6825 = vadd.f32 %v6624, %v6771
      %v6826 = vadd.f32 %v6625, %v6774
      %v6827 = vadd.f32 %v6626, %v6779
      %v6828 = vadd.f32 %v6627, %v6782
      %v6829 = vadd.f32 %v6628, %v6787
      %v6830 = vadd.f32 %v6629, %v6790
      %v6831 = vadd.f32 %v6630, %v6795
      %v6832 = vadd.f32 %v6631, %v6798
      %v6833 = vld [vmem:[#allocation2 + $0x2] sm:$0xff]
      %v6834 = vld [vmem:[#allocation2 + $0xa] sm:$0xff]
      %v6835 = vld [vmem:[#allocation2 + $0x22] sm:$0xff]
      %v6836 = vld [vmem:[#allocation2 + $0x2a] sm:$0xff]
      %v6837 = vld [vmem:[#allocation2 + $0x42] sm:$0xff]
      %v6838 = vld [vmem:[#allocation2 + $0x4a] sm:$0xff]
      %v6839 = vld [vmem:[#allocation2 + $0x62] sm:$0xff]
      %v6840 = vld [vmem:[#allocation2 + $0x6a] sm:$0xff]
      %v6841 = vld [vmem:[#allocation2 + $0x82] sm:$0xff]
      %v6842 = vld [vmem:[#allocation2 + $0x8a] sm:$0xff]
      %v6843 = vld [vmem:[#allocation2 + $0xa2] sm:$0xff]
      %v6844 = vld [vmem:[#allocation2 + $0xaa] sm:$0xff]
      %v6845 = vld [vmem:[#allocation2 + $0xc2] sm:$0xff]
      %v6846 = vld [vmem:[#allocation2 + $0xca] sm:$0xff]
      %v6847 = vld [vmem:[#allocation2 + $0xe2] sm:$0xff]
      %v6848 = vld [vmem:[#allocation2 + $0xea] sm:$0xff]
      %v6849 = vld [vmem:[#allocation2 + $0x102] sm:$0xff]
      %v6850 = vld [vmem:[#allocation2 + $0x10a] sm:$0xff]
      %v6851 = vld [vmem:[#allocation2 + $0x122] sm:$0xff]
      %v6852 = vld [vmem:[#allocation2 + $0x12a] sm:$0xff]
      %v6853 = vld [vmem:[#allocation2 + $0x142] sm:$0xff]
      %v6854 = vld [vmem:[#allocation2 + $0x14a] sm:$0xff]
      %v6855 = vld [vmem:[#allocation2 + $0x162] sm:$0xff]
      %v6856 = vld [vmem:[#allocation2 + $0x16a] sm:$0xff]
      %v6857 = vld [vmem:[#allocation2 + $0x182] sm:$0xff]
      %v6858 = vld [vmem:[#allocation2 + $0x18a] sm:$0xff]
      %v6859 = vld [vmem:[#allocation2 + $0x1a2] sm:$0xff]
      %v6860 = vld [vmem:[#allocation2 + $0x1aa] sm:$0xff]
      %v6861 = vld [vmem:[#allocation2 + $0x1c2] sm:$0xff]
      %v6862 = vld [vmem:[#allocation2 + $0x1ca] sm:$0xff]
      %v6863 = vld [vmem:[#allocation2 + $0x1e2] sm:$0xff]
      %v6864 = vld [vmem:[#allocation2 + $0x1ea] sm:$0xff]
      %v6865 = vld [vmem:[#allocation2 + $0x202] sm:$0xff]
      %v6866 = vld [vmem:[#allocation2 + $0x20a] sm:$0xff]
      %v6867 = vld [vmem:[#allocation2 + $0x222] sm:$0xff]
      %v6868 = vld [vmem:[#allocation2 + $0x22a] sm:$0xff]
      %v6869 = vpack.c.bf16 %v6834, %v6833
      %v6870 = vpack.c.bf16 %v6836, %v6835
      %v6871 = vpack.c.bf16 %v6838, %v6837
      %v6872 = vpack.c.bf16 %v6840, %v6839
      %v6873 = vpack.c.bf16 %v6842, %v6841
      %v6874 = vpack.c.bf16 %v6844, %v6843
      %v6875 = vpack.c.bf16 %v6846, %v6845
      %v6876 = vpack.c.bf16 %v6848, %v6847
      %v6877 = vpack.c.bf16 %v6850, %v6849
      %v6878 = vpack.c.bf16 %v6852, %v6851
      %v6879 = vpack.c.bf16 %v6854, %v6853
      %v6880 = vpack.c.bf16 %v6856, %v6855
      %v6881 = vpack.c.bf16 %v6858, %v6857
      %v6882 = vpack.c.bf16 %v6860, %v6859
      %v6883 = vpack.c.bf16 %v6862, %v6861
      %v6884 = vpack.c.bf16 %v6864, %v6863
      %v6885 = vpack.c.bf16 %v6866, %v6865
      %v6886 = vpack.c.bf16 %v6868, %v6867
      %s6887 = scalar_lea.vmem %s4, 8
      %v6888 = vld [vmem:[%s6887] sm:$0xf]
      %v6890 = vsel %vm5420, %v6869, 0
      %v6893 = vsel %vm5420, %v6870, 0
      %v6896 = vsel %vm5420, %v6871, 0
      %v6899 = vsel %vm5420, %v6872, 0
      %v6902 = vsel %vm5420, %v6873, 0
      %v6905 = vsel %vm5420, %v6874, 0
      %v6908 = vsel %vm5420, %v6875, 0
      %v6911 = vsel %vm5420, %v6876, 0
      %v6914 = vsel %vm5420, %v6877, 0
      %v6917 = vsel %vm5420, %v6878, 0
      %v6920 = vsel %vm5420, %v6879, 0
      %v6923 = vsel %vm5420, %v6880, 0
      %v6926 = vsel %vm5420, %v6881, 0
      %v6929 = vsel %vm5420, %v6882, 0
      %v6932 = vsel %vm5420, %v6883, 0
      %v6935 = vsel %vm5420, %v6884, 0
      %v6938 = vsel %vm5598, %v6888, 0
      %6940 = vmatprep.subr.bf16.mxu0 0
      %6941 = vmatpush1.bf16.msra.mxu0 %v6938
      %6942 = vmatprep.subr.bf16.mxu0 0
      %6943 = vmatpush1.bf16.msra.mxu0 0
      %6944 = vmatprep.subr.bf16.mxu0 0
      %6945 = vmatpush1.bf16.msra.mxu0 0
      %6946 = vmatprep.subr.bf16.mxu0 0
      %6947 = vmatpush1.bf16.msra.mxu0 0
      %6948 = vmatprep.subr.bf16.mxu0 0
      %6949 = vmatpush1.bf16.msra.mxu0 0
      %6950 = vmatprep.subr.bf16.mxu0 0
      %6951 = vmatpush1.bf16.msra.mxu0 0
      %6952 = vmatprep.subr.bf16.mxu0 0
      %6953 = vmatpush1.bf16.msra.mxu0 0
      %6954 = vmatprep.subr.bf16.mxu0 0
      %6955 = vmatpush1.bf16.msra.mxu0 0
      %6956 = vmatprep.subr.bf16.mxu0 0
      %6957 = vmatpush1.bf16.msra.mxu0 0
      %6958 = vmatprep.subr.bf16.mxu0 0
      %6959 = vmatpush1.bf16.msra.mxu0 0
      %6960 = vmatprep.subr.bf16.mxu0 0
      %6961 = vmatpush1.bf16.msra.mxu0 0
      %6962 = vmatprep.subr.bf16.mxu0 0
      %6963 = vmatpush1.bf16.msra.mxu0 0
      %6964 = vmatprep.subr.bf16.mxu0 0
      %6965 = vmatpush1.bf16.msra.mxu0 0
      %6966 = vmatprep.subr.bf16.mxu0 0
      %6967 = vmatpush1.bf16.msra.mxu0 0
      %6968 = vmatprep.subr.bf16.mxu0 0
      %6969 = vmatpush1.bf16.msra.mxu0 0
      %6970 = vmatprep.subr.bf16.mxu0 0
      %6971 = vmatpush1.bf16.msra.mxu0 0
      %6972 = vmatprep.mubr.bf16.mxu0 0
      %6973 = vmatmul.mubr.bf16.gmra.mrb[0].mxu0 %v6890
      %v6974 = vpop.f32.mrb[0].mxu0
      %v6975 = vadd.f32 0.0, %v6974
      %v6976 = vpop.f32.mrb[0].mxu0
      %v6977 = vpop.f32.mrb[0].mxu0
      %v6978 = vadd.f32 0.0, %v6977
      %v6979 = vpop.f32.mrb[0].mxu0
      %6980 = vmatprep.mubr.bf16.mxu0 0
      %6981 = vmatmul.mubr.bf16.gmra.mrb[0].mxu0 %v6893
      %v6982 = vpop.f32.mrb[0].mxu0
      %v6983 = vadd.f32 0.0, %v6982
      %v6984 = vpop.f32.mrb[0].mxu0
      %v6985 = vpop.f32.mrb[0].mxu0
      %v6986 = vadd.f32 0.0, %v6985
      %v6987 = vpop.f32.mrb[0].mxu0
      %6988 = vmatprep.mubr.bf16.mxu0 0
      %6989 = vmatmul.mubr.bf16.gmra.mrb[0].mxu0 %v6896
      %v6990 = vpop.f32.mrb[0].mxu0
      %v6991 = vadd.f32 0.0, %v6990
      %v6992 = vpop.f32.mrb[0].mxu0
      %v6993 = vpop.f32.mrb[0].mxu0
      %v6994 = vadd.f32 0.0, %v6993
      %v6995 = vpop.f32.mrb[0].mxu0
      %6996 = vmatprep.mubr.bf16.mxu0 0
      %6997 = vmatmul.mubr.bf16.gmra.mrb[0].mxu0 %v6899
      %v6998 = vpop.f32.mrb[0].mxu0
      %v6999 = vadd.f32 0.0, %v6998
      %v7000 = vpop.f32.mrb[0].mxu0
      %v7001 = vpop.f32.mrb[0].mxu0
      %v7002 = vadd.f32 0.0, %v7001
      %v7003 = vpop.f32.mrb[0].mxu0
      %7004 = vmatprep.mubr.bf16.mxu0 0
      %7005 = vmatmul.mubr.bf16.gmra.mrb[0].mxu0 %v6902
      %v7006 = vpop.f32.mrb[0].mxu0
      %v7007 = vadd.f32 0.0, %v7006
      %v7008 = vpop.f32.mrb[0].mxu0
      %v7009 = vpop.f32.mrb[0].mxu0
      %v7010 = vadd.f32 0.0, %v7009
      %v7011 = vpop.f32.mrb[0].mxu0
      %7012 = vmatprep.mubr.bf16.mxu0 0
      %7013 = vmatmul.mubr.bf16.gmra.mrb[0].mxu0 %v6905
      %v7014 = vpop.f32.mrb[0].mxu0
      %v7015 = vadd.f32 0.0, %v7014
      %v7016 = vpop.f32.mrb[0].mxu0
      %v7017 = vpop.f32.mrb[0].mxu0
      %v7018 = vadd.f32 0.0, %v7017
      %v7019 = vpop.f32.mrb[0].mxu0
      %7020 = vmatprep.mubr.bf16.mxu0 0
      %7021 = vmatmul.mubr.bf16.gmra.mrb[0].mxu0 %v6908
      %v7022 = vpop.f32.mrb[0].mxu0
      %v7023 = vadd.f32 0.0, %v7022
      %v7024 = vpop.f32.mrb[0].mxu0
      %v7025 = vpop.f32.mrb[0].mxu0
      %v7026 = vadd.f32 0.0, %v7025
      %v7027 = vpop.f32.mrb[0].mxu0
      %7028 = vmatprep.mubr.bf16.mxu0 0
      %7029 = vmatmul.mubr.bf16.gmra.mrb[0].mxu0 %v6911
      %v7030 = vpop.f32.mrb[0].mxu0
      %v7031 = vadd.f32 0.0, %v7030
      %v7032 = vpop.f32.mrb[0].mxu0
      %v7033 = vpop.f32.mrb[0].mxu0
      %v7034 = vadd.f32 0.0, %v7033
      %v7035 = vpop.f32.mrb[0].mxu0
      %7036 = vmatprep.mubr.bf16.mxu0 0
      %7037 = vmatmul.mubr.bf16.gmra.mrb[0].mxu0 %v6914
      %v7038 = vpop.f32.mrb[0].mxu0
      %v7039 = vadd.f32 0.0, %v7038
      %v7040 = vpop.f32.mrb[0].mxu0
      %v7041 = vpop.f32.mrb[0].mxu0
      %v7042 = vadd.f32 0.0, %v7041
      %v7043 = vpop.f32.mrb[0].mxu0
      %7044 = vmatprep.mubr.bf16.mxu0 0
      %7045 = vmatmul.mubr.bf16.gmra.mrb[0].mxu0 %v6917
      %v7046 = vpop.f32.mrb[0].mxu0
      %v7047 = vadd.f32 0.0, %v7046
      %v7048 = vpop.f32.mrb[0].mxu0
      %v7049 = vpop.f32.mrb[0].mxu0
      %v7050 = vadd.f32 0.0, %v7049
      %v7051 = vpop.f32.mrb[0].mxu0
      %7052 = vmatprep.mubr.bf16.mxu0 0
      %7053 = vmatmul.mubr.bf16.gmra.mrb[0].mxu0 %v6920
      %v7054 = vpop.f32.mrb[0].mxu0
      %v7055 = vadd.f32 0.0, %v7054
      %v7056 = vpop.f32.mrb[0].mxu0
      %v7057 = vpop.f32.mrb[0].mxu0
      %v7058 = vadd.f32 0.0, %v7057
      %v7059 = vpop.f32.mrb[0].mxu0
      %7060 = vmatprep.mubr.bf16.mxu0 0
      %7061 = vmatmul.mubr.bf16.gmra.mrb[0].mxu0 %v6923
      %v7062 = vpop.f32.mrb[0].mxu0
      %v7063 = vadd.f32 0.0, %v7062
      %v7064 = vpop.f32.mrb[0].mxu0
      %v7065 = vpop.f32.mrb[0].mxu0
      %v7066 = vadd.f32 0.0, %v7065
      %v7067 = vpop.f32.mrb[0].mxu0
      %7068 = vmatprep.mubr.bf16.mxu0 0
      %7069 = vmatmul.mubr.bf16.gmra.mrb[0].mxu0 %v6926
      %v7070 = vpop.f32.mrb[0].mxu0
      %v7071 = vadd.f32 0.0, %v7070
      %v7072 = vpop.f32.mrb[0].mxu0
      %v7073 = vpop.f32.mrb[0].mxu0
      %v7074 = vadd.f32 0.0, %v7073
      %v7075 = vpop.f32.mrb[0].mxu0
      %7076 = vmatprep.mubr.bf16.mxu0 0
      %7077 = vmatmul.mubr.bf16.gmra.mrb[0].mxu0 %v6929
      %v7078 = vpop.f32.mrb[0].mxu0
      %v7079 = vadd.f32 0.0, %v7078
      %v7080 = vpop.f32.mrb[0].mxu0
      %v7081 = vpop.f32.mrb[0].mxu0
      %v7082 = vadd.f32 0.0, %v7081
      %v7083 = vpop.f32.mrb[0].mxu0
      %7084 = vmatprep.mubr.bf16.mxu0 0
      %7085 = vmatmul.mubr.bf16.gmra.mrb[0].mxu0 %v6932
      %v7086 = vpop.f32.mrb[0].mxu0
      %v7087 = vadd.f32 0.0, %v7086
      %v7088 = vpop.f32.mrb[0].mxu0
      %v7089 = vpop.f32.mrb[0].mxu0
      %v7090 = vadd.f32 0.0, %v7089
      %v7091 = vpop.f32.mrb[0].mxu0
      %7092 = vmatprep.mubr.bf16.mxu0 0
      %7093 = vmatmul.mubr.bf16.gmra.mrb[0].mxu0 %v6935
      %v7094 = vpop.f32.mrb[0].mxu0
      %v7095 = vadd.f32 0.0, %v7094
      %v7096 = vpop.f32.mrb[0].mxu0
      %v7097 = vpop.f32.mrb[0].mxu0
      %v7098 = vadd.f32 0.0, %v7097
      %v7099 = vpop.f32.mrb[0].mxu0
      %7100 = vdwg.mxu0
      %v7101 = vadd.f32 %v6801, %v6975
      %v7102 = vadd.f32 %v6802, %v6978
      %v7103 = vadd.f32 %v6803, %v6983
      %v7104 = vadd.f32 %v6804, %v6986
      %v7105 = vadd.f32 %v6805, %v6991
      %v7106 = vadd.f32 %v6806, %v6994
      %v7107 = vadd.f32 %v6807, %v6999
      %v7108 = vadd.f32 %v6808, %v7002
      %v7109 = vadd.f32 %v6809, %v7007
      %v7110 = vadd.f32 %v6810, %v7010
      %v7111 = vadd.f32 %v6811, %v7015
      %v7112 = vadd.f32 %v6812, %v7018
      %v7113 = vadd.f32 %v6813, %v7023
      %v7114 = vadd.f32 %v6814, %v7026
      %v7115 = vadd.f32 %v6815, %v7031
      %v7116 = vadd.f32 %v6816, %v7034
      %v7117 = vadd.f32 %v6817, %v7039
      %v7118 = vadd.f32 %v6818, %v7042
      %v7119 = vadd.f32 %v6819, %v7047
      %v7120 = vadd.f32 %v6820, %v7050
      %v7121 = vadd.f32 %v6821, %v7055
      %v7122 = vadd.f32 %v6822, %v7058
      %v7123 = vadd.f32 %v6823, %v7063
      %v7124 = vadd.f32 %v6824, %v7066
      %v7125 = vadd.f32 %v6825, %v7071
      %v7126 = vadd.f32 %v6826, %v7074
      %v7127 = vadd.f32 %v6827, %v7079
      %v7128 = vadd.f32 %v6828, %v7082
      %v7129 = vadd.f32 %v6829, %v7087
      %v7130 = vadd.f32 %v6830, %v7090
      %v7131 = vadd.f32 %v6831, %v7095
      %v7132 = vadd.f32 %v6832, %v7098
      %s7133 = scalar_lea.vmem %s4, 20
      %v7134 = vld [vmem:[%s7133] sm:$0xf]
      %v7136 = vsel %vm5420, %v6885, 0
      %v7139 = vsel %vm5598, %v7134, 0
      %7141 = vmatprep.subr.bf16.mxu0 0
      %7142 = vmatpush1.bf16.msra.mxu0 %v7139
      %7143 = vmatprep.subr.bf16.mxu0 0
      %7144 = vmatpush1.bf16.msra.mxu0 0
      %7145 = vmatprep.subr.bf16.mxu0 0
      %7146 = vmatpush1.bf16.msra.mxu0 0
      %7147 = vmatprep.subr.bf16.mxu0 0
      %7148 = vmatpush1.bf16.msra.mxu0 0
      %7149 = vmatprep.subr.bf16.mxu0 0
      %7150 = vmatpush1.bf16.msra.mxu0 0
      %7151 = vmatprep.subr.bf16.mxu0 0
      %7152 = vmatpush1.bf16.msra.mxu0 0
      %7153 = vmatprep.subr.bf16.mxu0 0
      %7154 = vmatpush1.bf16.msra.mxu0 0
      %7155 = vmatprep.subr.bf16.mxu0 0
      %7156 = vmatpush1.bf16.msra.mxu0 0
      %7157 = vmatprep.subr.bf16.mxu0 0
      %7158 = vmatpush1.bf16.msra.mxu0 0
      %7159 = vmatprep.subr.bf16.mxu0 0
      %7160 = vmatpush1.bf16.msra.mxu0 0
      %7161 = vmatprep.subr.bf16.mxu0 0
      %7162 = vmatpush1.bf16.msra.mxu0 0
      %7163 = vmatprep.subr.bf16.mxu0 0
      %7164 = vmatpush1.bf16.msra.mxu0 0
      %7165 = vmatprep.subr.bf16.mxu0 0
      %7166 = vmatpush1.bf16.msra.mxu0 0
      %7167 = vmatprep.subr.bf16.mxu0 0
      %7168 = vmatpush1.bf16.msra.mxu0 0
      %7169 = vmatprep.subr.bf16.mxu0 0
      %7170 = vmatpush1.bf16.msra.mxu0 0
      %7171 = vmatprep.subr.bf16.mxu0 0
      %7172 = vmatpush1.bf16.msra.mxu0 0
      %7173 = vmatprep.mubr.bf16.mxu0 0
      %7174 = vmatmul.mubr.bf16.gmra.mrb[0].mxu0 %v6893
      %v7175 = vpop.f32.mrb[0].mxu0
      %v7176 = vadd.f32 0.0, %v7175
      %v7177 = vpop.f32.mrb[0].mxu0
      %v7178 = vpop.f32.mrb[0].mxu0
      %v7179 = vadd.f32 0.0, %v7178
      %v7180 = vpop.f32.mrb[0].mxu0
      %7181 = vmatprep.mubr.bf16.mxu0 0
      %7182 = vmatmul.mubr.bf16.gmra.mrb[0].mxu0 %v6896
      %v7183 = vpop.f32.mrb[0].mxu0
      %v7184 = vadd.f32 0.0, %v7183
      %v7185 = vpop.f32.mrb[0].mxu0
      %v7186 = vpop.f32.mrb[0].mxu0
      %v7187 = vadd.f32 0.0, %v7186
      %v7188 = vpop.f32.mrb[0].mxu0
      %7189 = vmatprep.mubr.bf16.mxu0 0
      %7190 = vmatmul.mubr.bf16.gmra.mrb[0].mxu0 %v6899
      %v7191 = vpop.f32.mrb[0].mxu0
      %v7192 = vadd.f32 0.0, %v7191
      %v7193 = vpop.f32.mrb[0].mxu0
      %v7194 = vpop.f32.mrb[0].mxu0
      %v7195 = vadd.f32 0.0, %v7194
      %v7196 = vpop.f32.mrb[0].mxu0
      %7197 = vmatprep.mubr.bf16.mxu0 0
      %7198 = vmatmul.mubr.bf16.gmra.mrb[0].mxu0 %v6902
      %v7199 = vpop.f32.mrb[0].mxu0
      %v7200 = vadd.f32 0.0, %v7199
      %v7201 = vpop.f32.mrb[0].mxu0
      %v7202 = vpop.f32.mrb[0].mxu0
      %v7203 = vadd.f32 0.0, %v7202
      %v7204 = vpop.f32.mrb[0].mxu0
      %7205 = vmatprep.mubr.bf16.mxu0 0
      %7206 = vmatmul.mubr.bf16.gmra.mrb[0].mxu0 %v6905
      %v7207 = vpop.f32.mrb[0].mxu0
      %v7208 = vadd.f32 0.0, %v7207
      %v7209 = vpop.f32.mrb[0].mxu0
      %v7210 = vpop.f32.mrb[0].mxu0
      %v7211 = vadd.f32 0.0, %v7210
      %v7212 = vpop.f32.mrb[0].mxu0
      %7213 = vmatprep.mubr.bf16.mxu0 0
      %7214 = vmatmul.mubr.bf16.gmra.mrb[0].mxu0 %v6908
      %v7215 = vpop.f32.mrb[0].mxu0
      %v7216 = vadd.f32 0.0, %v7215
      %v7217 = vpop.f32.mrb[0].mxu0
      %v7218 = vpop.f32.mrb[0].mxu0
      %v7219 = vadd.f32 0.0, %v7218
      %v7220 = vpop.f32.mrb[0].mxu0
      %7221 = vmatprep.mubr.bf16.mxu0 0
      %7222 = vmatmul.mubr.bf16.gmra.mrb[0].mxu0 %v6911
      %v7223 = vpop.f32.mrb[0].mxu0
      %v7224 = vadd.f32 0.0, %v7223
      %v7225 = vpop.f32.mrb[0].mxu0
      %v7226 = vpop.f32.mrb[0].mxu0
      %v7227 = vadd.f32 0.0, %v7226
      %v7228 = vpop.f32.mrb[0].mxu0
      %7229 = vmatprep.mubr.bf16.mxu0 0
      %7230 = vmatmul.mubr.bf16.gmra.mrb[0].mxu0 %v6914
      %v7231 = vpop.f32.mrb[0].mxu0
      %v7232 = vadd.f32 0.0, %v7231
      %v7233 = vpop.f32.mrb[0].mxu0
      %v7234 = vpop.f32.mrb[0].mxu0
      %v7235 = vadd.f32 0.0, %v7234
      %v7236 = vpop.f32.mrb[0].mxu0
      %7237 = vmatprep.mubr.bf16.mxu0 0
      %7238 = vmatmul.mubr.bf16.gmra.mrb[0].mxu0 %v6917
      %v7239 = vpop.f32.mrb[0].mxu0
      %v7240 = vadd.f32 0.0, %v7239
      %v7241 = vpop.f32.mrb[0].mxu0
      %v7242 = vpop.f32.mrb[0].mxu0
      %v7243 = vadd.f32 0.0, %v7242
      %v7244 = vpop.f32.mrb[0].mxu0
      %7245 = vmatprep.mubr.bf16.mxu0 0
      %7246 = vmatmul.mubr.bf16.gmra.mrb[0].mxu0 %v6920
      %v7247 = vpop.f32.mrb[0].mxu0
      %v7248 = vadd.f32 0.0, %v7247
      %v7249 = vpop.f32.mrb[0].mxu0
      %v7250 = vpop.f32.mrb[0].mxu0
      %v7251 = vadd.f32 0.0, %v7250
      %v7252 = vpop.f32.mrb[0].mxu0
      %7253 = vmatprep.mubr.bf16.mxu0 0
      %7254 = vmatmul.mubr.bf16.gmra.mrb[0].mxu0 %v6923
      %v7255 = vpop.f32.mrb[0].mxu0
      %v7256 = vadd.f32 0.0, %v7255
      %v7257 = vpop.f32.mrb[0].mxu0
      %v7258 = vpop.f32.mrb[0].mxu0
      %v7259 = vadd.f32 0.0, %v7258
      %v7260 = vpop.f32.mrb[0].mxu0
      %7261 = vmatprep.mubr.bf16.mxu0 0
      %7262 = vmatmul.mubr.bf16.gmra.mrb[0].mxu0 %v6926
      %v7263 = vpop.f32.mrb[0].mxu0
      %v7264 = vadd.f32 0.0, %v7263
      %v7265 = vpop.f32.mrb[0].mxu0
      %v7266 = vpop.f32.mrb[0].mxu0
      %v7267 = vadd.f32 0.0, %v7266
      %v7268 = vpop.f32.mrb[0].mxu0
      %7269 = vmatprep.mubr.bf16.mxu0 0
      %7270 = vmatmul.mubr.bf16.gmra.mrb[0].mxu0 %v6929
      %v7271 = vpop.f32.mrb[0].mxu0
      %v7272 = vadd.f32 0.0, %v7271
      %v7273 = vpop.f32.mrb[0].mxu0
      %v7274 = vpop.f32.mrb[0].mxu0
      %v7275 = vadd.f32 0.0, %v7274
      %v7276 = vpop.f32.mrb[0].mxu0
      %7277 = vmatprep.mubr.bf16.mxu0 0
      %7278 = vmatmul.mubr.bf16.gmra.mrb[0].mxu0 %v6932
      %v7279 = vpop.f32.mrb[0].mxu0
      %v7280 = vadd.f32 0.0, %v7279
      %v7281 = vpop.f32.mrb[0].mxu0
      %v7282 = vpop.f32.mrb[0].mxu0
      %v7283 = vadd.f32 0.0, %v7282
      %v7284 = vpop.f32.mrb[0].mxu0
      %7285 = vmatprep.mubr.bf16.mxu0 0
      %7286 = vmatmul.mubr.bf16.gmra.mrb[0].mxu0 %v6935
      %v7287 = vpop.f32.mrb[0].mxu0
      %v7288 = vadd.f32 0.0, %v7287
      %v7289 = vpop.f32.mrb[0].mxu0
      %v7290 = vpop.f32.mrb[0].mxu0
      %v7291 = vadd.f32 0.0, %v7290
      %v7292 = vpop.f32.mrb[0].mxu0
      %7293 = vmatprep.mubr.bf16.mxu0 0
      %7294 = vmatmul.mubr.bf16.gmra.mrb[0].mxu0 %v7136
      %v7295 = vpop.f32.mrb[0].mxu0
      %v7296 = vadd.f32 0.0, %v7295
      %v7297 = vpop.f32.mrb[0].mxu0
      %v7298 = vpop.f32.mrb[0].mxu0
      %v7299 = vadd.f32 0.0, %v7298
      %v7300 = vpop.f32.mrb[0].mxu0
      %7301 = vdwg.mxu0
      %v7302 = vadd.f32 %v7101, %v7176
      %v7303 = vadd.f32 %v7102, %v7179
      %v7304 = vadd.f32 %v7103, %v7184
      %v7305 = vadd.f32 %v7104, %v7187
      %v7306 = vadd.f32 %v7105, %v7192
      %v7307 = vadd.f32 %v7106, %v7195
      %v7308 = vadd.f32 %v7107, %v7200
      %v7309 = vadd.f32 %v7108, %v7203
      %v7310 = vadd.f32 %v7109, %v7208
      %v7311 = vadd.f32 %v7110, %v7211
      %v7312 = vadd.f32 %v7111, %v7216
      %v7313 = vadd.f32 %v7112, %v7219
      %v7314 = vadd.f32 %v7113, %v7224
      %v7315 = vadd.f32 %v7114, %v7227
      %v7316 = vadd.f32 %v7115, %v7232
      %v7317 = vadd.f32 %v7116, %v7235
      %v7318 = vadd.f32 %v7117, %v7240
      %v7319 = vadd.f32 %v7118, %v7243
      %v7320 = vadd.f32 %v7119, %v7248
      %v7321 = vadd.f32 %v7120, %v7251
      %v7322 = vadd.f32 %v7121, %v7256
      %v7323 = vadd.f32 %v7122, %v7259
      %v7324 = vadd.f32 %v7123, %v7264
      %v7325 = vadd.f32 %v7124, %v7267
      %v7326 = vadd.f32 %v7125, %v7272
      %v7327 = vadd.f32 %v7126, %v7275
      %v7328 = vadd.f32 %v7127, %v7280
      %v7329 = vadd.f32 %v7128, %v7283
      %v7330 = vadd.f32 %v7129, %v7288
      %v7331 = vadd.f32 %v7130, %v7291
      %v7332 = vadd.f32 %v7131, %v7296
      %v7333 = vadd.f32 %v7132, %v7299
      %s7334 = scalar_lea.vmem %s4, 32
      %v7335 = vld [vmem:[%s7334] sm:$0xf]
      %v7337 = vsel %vm5420, %v6886, 0
      %v7340 = vsel %vm5598, %v7335, 0
      %7342 = vmatprep.subr.bf16.mxu0 0
      %7343 = vmatpush1.bf16.msra.mxu0 %v7340
      %7344 = vmatprep.subr.bf16.mxu0 0
      %7345 = vmatpush1.bf16.msra.mxu0 0
      %7346 = vmatprep.subr.bf16.mxu0 0
      %7347 = vmatpush1.bf16.msra.mxu0 0
      %7348 = vmatprep.subr.bf16.mxu0 0
      %7349 = vmatpush1.bf16.msra.mxu0 0
      %7350 = vmatprep.subr.bf16.mxu0 0
      %7351 = vmatpush1.bf16.msra.mxu0 0
      %7352 = vmatprep.subr.bf16.mxu0 0
      %7353 = vmatpush1.bf16.msra.mxu0 0
      %7354 = vmatprep.subr.bf16.mxu0 0
      %7355 = vmatpush1.bf16.msra.mxu0 0
      %7356 = vmatprep.subr.bf16.mxu0 0
      %7357 = vmatpush1.bf16.msra.mxu0 0
      %7358 = vmatprep.subr.bf16.mxu0 0
      %7359 = vmatpush1.bf16.msra.mxu0 0
      %7360 = vmatprep.subr.bf16.mxu0 0
      %7361 = vmatpush1.bf16.msra.mxu0 0
      %7362 = vmatprep.subr.bf16.mxu0 0
      %7363 = vmatpush1.bf16.msra.mxu0 0
      %7364 = vmatprep.subr.bf16.mxu0 0
      %7365 = vmatpush1.bf16.msra.mxu0 0
      %7366 = vmatprep.subr.bf16.mxu0 0
      %7367 = vmatpush1.bf16.msra.mxu0 0
      %7368 = vmatprep.subr.bf16.mxu0 0
      %7369 = vmatpush1.bf16.msra.mxu0 0
      %7370 = vmatprep.subr.bf16.mxu0 0
      %7371 = vmatpush1.bf16.msra.mxu0 0
      %7372 = vmatprep.subr.bf16.mxu0 0
      %7373 = vmatpush1.bf16.msra.mxu0 0
      %7374 = vmatprep.mubr.bf16.mxu0 0
      %7375 = vmatmul.mubr.bf16.gmra.mrb[0].mxu0 %v6896
      %v7376 = vpop.f32.mrb[0].mxu0
      %v7377 = vadd.f32 0.0, %v7376
      %v7378 = vpop.f32.mrb[0].mxu0
      %v7379 = vpop.f32.mrb[0].mxu0
      %v7380 = vadd.f32 0.0, %v7379
      %v7381 = vpop.f32.mrb[0].mxu0
      %7382 = vmatprep.mubr.bf16.mxu0 0
      %7383 = vmatmul.mubr.bf16.gmra.mrb[0].mxu0 %v6899
      %v7384 = vpop.f32.mrb[0].mxu0
      %v7385 = vadd.f32 0.0, %v7384
      %v7386 = vpop.f32.mrb[0].mxu0
      %v7387 = vpop.f32.mrb[0].mxu0
      %v7388 = vadd.f32 0.0, %v7387
      %v7389 = vpop.f32.mrb[0].mxu0
      %7390 = vmatprep.mubr.bf16.mxu0 0
      %7391 = vmatmul.mubr.bf16.gmra.mrb[0].mxu0 %v6902
      %v7392 = vpop.f32.mrb[0].mxu0
      %v7393 = vadd.f32 0.0, %v7392
      %v7394 = vpop.f32.mrb[0].mxu0
      %v7395 = vpop.f32.mrb[0].mxu0
      %v7396 = vadd.f32 0.0, %v7395
      %v7397 = vpop.f32.mrb[0].mxu0
      %7398 = vmatprep.mubr.bf16.mxu0 0
      %7399 = vmatmul.mubr.bf16.gmra.mrb[0].mxu0 %v6905
      %v7400 = vpop.f32.mrb[0].mxu0
      %v7401 = vadd.f32 0.0, %v7400
      %v7402 = vpop.f32.mrb[0].mxu0
      %v7403 = vpop.f32.mrb[0].mxu0
      %v7404 = vadd.f32 0.0, %v7403
      %v7405 = vpop.f32.mrb[0].mxu0
      %7406 = vmatprep.mubr.bf16.mxu0 0
      %7407 = vmatmul.mubr.bf16.gmra.mrb[0].mxu0 %v6908
      %v7408 = vpop.f32.mrb[0].mxu0
      %v7409 = vadd.f32 0.0, %v7408
      %v7410 = vpop.f32.mrb[0].mxu0
      %v7411 = vpop.f32.mrb[0].mxu0
      %v7412 = vadd.f32 0.0, %v7411
      %v7413 = vpop.f32.mrb[0].mxu0
      %7414 = vmatprep.mubr.bf16.mxu0 0
      %7415 = vmatmul.mubr.bf16.gmra.mrb[0].mxu0 %v6911
      %v7416 = vpop.f32.mrb[0].mxu0
      %v7417 = vadd.f32 0.0, %v7416
      %v7418 = vpop.f32.mrb[0].mxu0
      %v7419 = vpop.f32.mrb[0].mxu0
      %v7420 = vadd.f32 0.0, %v7419
      %v7421 = vpop.f32.mrb[0].mxu0
      %7422 = vmatprep.mubr.bf16.mxu0 0
      %7423 = vmatmul.mubr.bf16.gmra.mrb[0].mxu0 %v6914
      %v7424 = vpop.f32.mrb[0].mxu0
      %v7425 = vadd.f32 0.0, %v7424
      %v7426 = vpop.f32.mrb[0].mxu0
      %v7427 = vpop.f32.mrb[0].mxu0
      %v7428 = vadd.f32 0.0, %v7427
      %v7429 = vpop.f32.mrb[0].mxu0
      %7430 = vmatprep.mubr.bf16.mxu0 0
      %7431 = vmatmul.mubr.bf16.gmra.mrb[0].mxu0 %v6917
      %v7432 = vpop.f32.mrb[0].mxu0
      %v7433 = vadd.f32 0.0, %v7432
      %v7434 = vpop.f32.mrb[0].mxu0
      %v7435 = vpop.f32.mrb[0].mxu0
      %v7436 = vadd.f32 0.0, %v7435
      %v7437 = vpop.f32.mrb[0].mxu0
      %7438 = vmatprep.mubr.bf16.mxu0 0
      %7439 = vmatmul.mubr.bf16.gmra.mrb[0].mxu0 %v6920
      %v7440 = vpop.f32.mrb[0].mxu0
      %v7441 = vadd.f32 0.0, %v7440
      %v7442 = vpop.f32.mrb[0].mxu0
      %v7443 = vpop.f32.mrb[0].mxu0
      %v7444 = vadd.f32 0.0, %v7443
      %v7445 = vpop.f32.mrb[0].mxu0
      %7446 = vmatprep.mubr.bf16.mxu0 0
      %7447 = vmatmul.mubr.bf16.gmra.mrb[0].mxu0 %v6923
      %v7448 = vpop.f32.mrb[0].mxu0
      %v7449 = vadd.f32 0.0, %v7448
      %v7450 = vpop.f32.mrb[0].mxu0
      %v7451 = vpop.f32.mrb[0].mxu0
      %v7452 = vadd.f32 0.0, %v7451
      %v7453 = vpop.f32.mrb[0].mxu0
      %7454 = vmatprep.mubr.bf16.mxu0 0
      %7455 = vmatmul.mubr.bf16.gmra.mrb[0].mxu0 %v6926
      %v7456 = vpop.f32.mrb[0].mxu0
      %v7457 = vadd.f32 0.0, %v7456
      %v7458 = vpop.f32.mrb[0].mxu0
      %v7459 = vpop.f32.mrb[0].mxu0
      %v7460 = vadd.f32 0.0, %v7459
      %v7461 = vpop.f32.mrb[0].mxu0
      %7462 = vmatprep.mubr.bf16.mxu0 0
      %7463 = vmatmul.mubr.bf16.gmra.mrb[0].mxu0 %v6929
      %v7464 = vpop.f32.mrb[0].mxu0
      %v7465 = vadd.f32 0.0, %v7464
      %v7466 = vpop.f32.mrb[0].mxu0
      %v7467 = vpop.f32.mrb[0].mxu0
      %v7468 = vadd.f32 0.0, %v7467
      %v7469 = vpop.f32.mrb[0].mxu0
      %7470 = vmatprep.mubr.bf16.mxu0 0
      %7471 = vmatmul.mubr.bf16.gmra.mrb[0].mxu0 %v6932
      %v7472 = vpop.f32.mrb[0].mxu0
      %v7473 = vadd.f32 0.0, %v7472
      %v7474 = vpop.f32.mrb[0].mxu0
      %v7475 = vpop.f32.mrb[0].mxu0
      %v7476 = vadd.f32 0.0, %v7475
      %v7477 = vpop.f32.mrb[0].mxu0
      %7478 = vmatprep.mubr.bf16.mxu0 0
      %7479 = vmatmul.mubr.bf16.gmra.mrb[0].mxu0 %v6935
      %v7480 = vpop.f32.mrb[0].mxu0
      %v7481 = vadd.f32 0.0, %v7480
      %v7482 = vpop.f32.mrb[0].mxu0
      %v7483 = vpop.f32.mrb[0].mxu0
      %v7484 = vadd.f32 0.0, %v7483
      %v7485 = vpop.f32.mrb[0].mxu0
      %7486 = vmatprep.mubr.bf16.mxu0 0
      %7487 = vmatmul.mubr.bf16.gmra.mrb[0].mxu0 %v7136
      %v7488 = vpop.f32.mrb[0].mxu0
      %v7489 = vadd.f32 0.0, %v7488
      %v7490 = vpop.f32.mrb[0].mxu0
      %v7491 = vpop.f32.mrb[0].mxu0
      %v7492 = vadd.f32 0.0, %v7491
      %v7493 = vpop.f32.mrb[0].mxu0
      %7494 = vmatprep.mubr.bf16.mxu0 0
      %7495 = vmatmul.mubr.bf16.gmra.mrb[0].mxu0 %v7337
      %v7496 = vpop.f32.mrb[0].mxu0
      %v7497 = vadd.f32 0.0, %v7496
      %v7498 = vpop.f32.mrb[0].mxu0
      %v7499 = vpop.f32.mrb[0].mxu0
      %v7500 = vadd.f32 0.0, %v7499
      %v7501 = vpop.f32.mrb[0].mxu0
      %7502 = vdwg.mxu0
      %v7503 = vadd.f32 %v7302, %v7377
      %v7504 = vadd.f32 %v7303, %v7380
      %v7505 = vadd.f32 %v7304, %v7385
      %v7506 = vadd.f32 %v7305, %v7388
      %v7507 = vadd.f32 %v7306, %v7393
      %v7508 = vadd.f32 %v7307, %v7396
      %v7509 = vadd.f32 %v7308, %v7401
      %v7510 = vadd.f32 %v7309, %v7404
      %v7511 = vadd.f32 %v7310, %v7409
      %v7512 = vadd.f32 %v7311, %v7412
      %v7513 = vadd.f32 %v7312, %v7417
      %v7514 = vadd.f32 %v7313, %v7420
      %v7515 = vadd.f32 %v7314, %v7425
      %v7516 = vadd.f32 %v7315, %v7428
      %v7517 = vadd.f32 %v7316, %v7433
      %v7518 = vadd.f32 %v7317, %v7436
      %v7519 = vadd.f32 %v7318, %v7441
      %v7520 = vadd.f32 %v7319, %v7444
      %v7521 = vadd.f32 %v7320, %v7449
      %v7522 = vadd.f32 %v7321, %v7452
      %v7523 = vadd.f32 %v7322, %v7457
      %v7524 = vadd.f32 %v7323, %v7460
      %v7525 = vadd.f32 %v7324, %v7465
      %v7526 = vadd.f32 %v7325, %v7468
      %v7527 = vadd.f32 %v7326, %v7473
      %v7528 = vadd.f32 %v7327, %v7476
      %v7529 = vadd.f32 %v7328, %v7481
      %v7530 = vadd.f32 %v7329, %v7484
      %v7531 = vadd.f32 %v7330, %v7489
      %v7532 = vadd.f32 %v7331, %v7492
      %v7533 = vadd.f32 %v7332, %v7497
      %v7534 = vadd.f32 %v7333, %v7500
      %v7536 = vlaneseq
      %v7537 = vshrl.u32 %v7536, 7
      %v7538 = vsub.s32 0, %v7537
      %v7539 = vrot.slane %v536, %v7538
      %v7541 = vmul.f32 %v7503, %v7539
      %v7542 = vmul.f32 %v7504, %v7539
      %v7543 = vmul.f32 %v7505, %v7539
      %v7544 = vmul.f32 %v7506, %v7539
      %v7545 = vmul.f32 %v7507, %v7539
      %v7546 = vmul.f32 %v7508, %v7539
      %v7547 = vmul.f32 %v7509, %v7539
      %v7548 = vmul.f32 %v7510, %v7539
      %v7549 = vmul.f32 %v7511, %v7539
      %v7550 = vmul.f32 %v7512, %v7539
      %v7551 = vmul.f32 %v7513, %v7539
      %v7552 = vmul.f32 %v7514, %v7539
      %v7553 = vmul.f32 %v7515, %v7539
      %v7554 = vmul.f32 %v7516, %v7539
      %v7555 = vmul.f32 %v7517, %v7539
      %v7556 = vmul.f32 %v7518, %v7539
      %v7557 = vmul.f32 %v7519, %v7539
      %v7558 = vmul.f32 %v7520, %v7539
      %v7559 = vmul.f32 %v7521, %v7539
      %v7560 = vmul.f32 %v7522, %v7539
      %v7561 = vmul.f32 %v7523, %v7539
      %v7562 = vmul.f32 %v7524, %v7539
      %v7563 = vmul.f32 %v7525, %v7539
      %v7564 = vmul.f32 %v7526, %v7539
      %v7565 = vmul.f32 %v7527, %v7539
      %v7566 = vmul.f32 %v7528, %v7539
      %v7567 = vmul.f32 %v7529, %v7539
      %v7568 = vmul.f32 %v7530, %v7539
      %v7569 = vmul.f32 %v7531, %v7539
      %v7570 = vmul.f32 %v7532, %v7539
      %v7571 = vmul.f32 %v7533, %v7539
      %v7572 = vmul.f32 %v7534, %v7539
      %v7574 = vlaneseq
      %v7575 = vshrl.u32 %v7574, 7
      %v7576 = vsub.s32 0, %v7575
      %v7577 = vrot.slane %v537, %v7576
      %v7579 = vadd.f32 %v7541, %v7577
      %v7580 = vadd.f32 %v7542, %v7577
      %v7581 = vadd.f32 %v7543, %v7577
      %v7582 = vadd.f32 %v7544, %v7577
      %v7583 = vadd.f32 %v7545, %v7577
      %v7584 = vadd.f32 %v7546, %v7577
      %v7585 = vadd.f32 %v7547, %v7577
      %v7586 = vadd.f32 %v7548, %v7577
      %v7587 = vadd.f32 %v7549, %v7577
      %v7588 = vadd.f32 %v7550, %v7577
      %v7589 = vadd.f32 %v7551, %v7577
      %v7590 = vadd.f32 %v7552, %v7577
      %v7591 = vadd.f32 %v7553, %v7577
      %v7592 = vadd.f32 %v7554, %v7577
      %v7593 = vadd.f32 %v7555, %v7577
      %v7594 = vadd.f32 %v7556, %v7577
      %v7595 = vadd.f32 %v7557, %v7577
      %v7596 = vadd.f32 %v7558, %v7577
      %v7597 = vadd.f32 %v7559, %v7577
      %v7598 = vadd.f32 %v7560, %v7577
      %v7599 = vadd.f32 %v7561, %v7577
      %v7600 = vadd.f32 %v7562, %v7577
      %v7601 = vadd.f32 %v7563, %v7577
      %v7602 = vadd.f32 %v7564, %v7577
      %v7603 = vadd.f32 %v7565, %v7577
      %v7604 = vadd.f32 %v7566, %v7577
      %v7605 = vadd.f32 %v7567, %v7577
      %v7606 = vadd.f32 %v7568, %v7577
      %v7607 = vadd.f32 %v7569, %v7577
      %v7608 = vadd.f32 %v7570, %v7577
      %v7609 = vadd.f32 %v7571, %v7577
      %v7610 = vadd.f32 %v7572, %v7577
      %v7611 = vadd.f32 %v7579, %v3619
      %v7612 = vadd.f32 %v7580, %v3622
      %v7613 = vadd.f32 %v7581, %v3627
      %v7614 = vadd.f32 %v7582, %v3630
      %v7615 = vadd.f32 %v7583, %v3635
      %v7616 = vadd.f32 %v7584, %v3638
      %v7617 = vadd.f32 %v7585, %v3643
      %v7618 = vadd.f32 %v7586, %v3646
      %v7619 = vadd.f32 %v7587, %v3651
      %v7620 = vadd.f32 %v7588, %v3654
      %v7621 = vadd.f32 %v7589, %v3659
      %v7622 = vadd.f32 %v7590, %v3662
      %v7623 = vadd.f32 %v7591, %v3667
      %v7624 = vadd.f32 %v7592, %v3670
      %v7625 = vadd.f32 %v7593, %v3675
      %v7626 = vadd.f32 %v7594, %v3678
      %v7627 = vadd.f32 %v7595, %v3683
      %v7628 = vadd.f32 %v7596, %v3686
      %v7629 = vadd.f32 %v7597, %v3691
      %v7630 = vadd.f32 %v7598, %v3694
      %v7631 = vadd.f32 %v7599, %v3699
      %v7632 = vadd.f32 %v7600, %v3702
      %v7633 = vadd.f32 %v7601, %v3707
      %v7634 = vadd.f32 %v7602, %v3710
      %v7635 = vadd.f32 %v7603, %v3715
      %v7636 = vadd.f32 %v7604, %v3718
      %v7637 = vadd.f32 %v7605, %v3723
      %v7638 = vadd.f32 %v7606, %v3726
      %v7639 = vadd.f32 %v7607, %v3731
      %v7640 = vadd.f32 %v7608, %v3734
      %v7641 = vadd.f32 %v7609, %v3739
      %v7642 = vadd.f32 %v7610, %v3742
      %v7643 = vmax.f32 %v7611, 0.0
      %v7644 = vmax.f32 %v7612, 0.0
      %v7645 = vmax.f32 %v7613, 0.0
      %v7646 = vmax.f32 %v7614, 0.0
      %v7647 = vmax.f32 %v7615, 0.0
      %v7648 = vmax.f32 %v7616, 0.0
      %v7649 = vmax.f32 %v7617, 0.0
      %v7650 = vmax.f32 %v7618, 0.0
      %v7651 = vmax.f32 %v7619, 0.0
      %v7652 = vmax.f32 %v7620, 0.0
      %v7653 = vmax.f32 %v7621, 0.0
      %v7654 = vmax.f32 %v7622, 0.0
      %v7655 = vmax.f32 %v7623, 0.0
      %v7656 = vmax.f32 %v7624, 0.0
      %v7657 = vmax.f32 %v7625, 0.0
      %v7658 = vmax.f32 %v7626, 0.0
      %v7659 = vmax.f32 %v7627, 0.0
      %v7660 = vmax.f32 %v7628, 0.0
      %v7661 = vmax.f32 %v7629, 0.0
      %v7662 = vmax.f32 %v7630, 0.0
      %v7663 = vmax.f32 %v7631, 0.0
      %v7664 = vmax.f32 %v7632, 0.0
      %v7665 = vmax.f32 %v7633, 0.0
      %v7666 = vmax.f32 %v7634, 0.0
      %v7667 = vmax.f32 %v7635, 0.0
      %v7668 = vmax.f32 %v7636, 0.0
      %v7669 = vmax.f32 %v7637, 0.0
      %v7670 = vmax.f32 %v7638, 0.0
      %v7671 = vmax.f32 %v7639, 0.0
      %v7672 = vmax.f32 %v7640, 0.0
      %v7673 = vmax.f32 %v7641, 0.0
      %v7674 = vmax.f32 %v7642, 0.0
      %7675 = vst.msk [vmem:[%s332] sm:$0xff] %vm5420, %v7643
      %7676 = vst.msk [vmem:[%s332 + $0x8] sm:$0xff] %vm5420, %v7644
      %7677 = vst.msk [vmem:[%s332 + $0x10] sm:$0xff] %vm5420, %v7645
      %7678 = vst.msk [vmem:[%s332 + $0x18] sm:$0xff] %vm5420, %v7646
      %7679 = vst.msk [vmem:[%s332 + $0x20] sm:$0xff] %vm5420, %v7647
      %7680 = vst.msk [vmem:[%s332 + $0x28] sm:$0xff] %vm5420, %v7648
      %7681 = vst.msk [vmem:[%s332 + $0x30] sm:$0xff] %vm5420, %v7649
      %7682 = vst.msk [vmem:[%s332 + $0x38] sm:$0xff] %vm5420, %v7650
      %7683 = vst.msk [vmem:[%s332 + $0x40] sm:$0xff] %vm5420, %v7651
      %7684 = vst.msk [vmem:[%s332 + $0x48] sm:$0xff] %vm5420, %v7652
      %7685 = vst.msk [vmem:[%s332 + $0x50] sm:$0xff] %vm5420, %v7653
      %7686 = vst.msk [vmem:[%s332 + $0x58] sm:$0xff] %vm5420, %v7654
      %7687 = vst.msk [vmem:[%s332 + $0x60] sm:$0xff] %vm5420, %v7655
      %7688 = vst.msk [vmem:[%s332 + $0x68] sm:$0xff] %vm5420, %v7656
      %7689 = vst.msk [vmem:[%s332 + $0x70] sm:$0xff] %vm5420, %v7657
      %7690 = vst.msk [vmem:[%s332 + $0x78] sm:$0xff] %vm5420, %v7658
      %7691 = vst.msk [vmem:[%s332 + $0x80] sm:$0xff] %vm5420, %v7659
      %7692 = vst.msk [vmem:[%s332 + $0x88] sm:$0xff] %vm5420, %v7660
      %7693 = vst.msk [vmem:[%s332 + $0x90] sm:$0xff] %vm5420, %v7661
      %7694 = vst.msk [vmem:[%s332 + $0x98] sm:$0xff] %vm5420, %v7662
      %7695 = vst.msk [vmem:[%s332 + $0xa0] sm:$0xff] %vm5420, %v7663
      %7696 = vst.msk [vmem:[%s332 + $0xa8] sm:$0xff] %vm5420, %v7664
      %7697 = vst.msk [vmem:[%s332 + $0xb0] sm:$0xff] %vm5420, %v7665
      %7698 = vst.msk [vmem:[%s332 + $0xb8] sm:$0xff] %vm5420, %v7666
      %7699 = vst.msk [vmem:[%s332 + $0xc0] sm:$0xff] %vm5420, %v7667
      %7700 = vst.msk [vmem:[%s332 + $0xc8] sm:$0xff] %vm5420, %v7668
      %7701 = vst.msk [vmem:[%s332 + $0xd0] sm:$0xff] %vm5420, %v7669
      %7702 = vst.msk [vmem:[%s332 + $0xd8] sm:$0xff] %vm5420, %v7670
      %7703 = vst.msk [vmem:[%s332 + $0xe0] sm:$0xff] %vm5420, %v7671
      %7704 = vst.msk [vmem:[%s332 + $0xe8] sm:$0xff] %vm5420, %v7672
      %7705 = vst.msk [vmem:[%s332 + $0xf0] sm:$0xff] %vm5420, %v7673
      %7706 = vst.msk [vmem:[%s332 + $0xf8] sm:$0xff] %vm5420, %v7674
      %p7707 = scmp.lt.s32.totalorder %s20, 1
      %s7708 = scalar_select %p7707, %s20, 1
      %s7709 = smul.addr %s7708, 32
      %s7710 = smul.addr %s7709, 8
      %s7711 = scalar_lea.vmem %s9, %s7710
      // Predicated region
      $region57: #{res_conv_block_forward.1} parent=55 // pred_check
        %p7712 = pneg %p232
      $region58: #{res_conv_block_forward.1} parent=55 // pred_check_branch
        %7714 = sbr.rel (%p7712) target = $region60
      $region59: #{res_conv_block_forward.1} parent=55 // pred_region
        _
      $region60: #{res_conv_block_forward.1} parent=55 // pred_fallthru
        _
    $region56: #{res_conv_block_forward.1} parent=5 // pred_fallthru
      _
    %p7715 = scmp.le.s32.totalorder 2, %s15
    // Predicated region
    $region61: #{res_conv_block_forward.1} parent=5 // pred_check
      %p7716 = pneg %p7715
    $region62: #{res_conv_block_forward.1} parent=5 // pred_check_branch
      %7718 = sbr.rel (%p7716) target = $region64
    $region63: #{res_conv_block_forward.1} parent=5 // pred_region
      %s7719 = ssub.s32 %s15, 2
      // Predicated region
      $region65: #{res_conv_block_forward.1} parent=63 // pred_check
        %p7720 = pneg %p238
      $region66: #{res_conv_block_forward.1} parent=63 // pred_check_branch
        %7722 = sbr.rel (%p7720) target = $region68
      $region67: #{res_conv_block_forward.1} parent=63 // pred_region
        %p7723 = scmp.lt.s32.totalorder %s21, 1
        %s7724 = scalar_select %p7723, %s21, 1
        %s7725 = smul.addr %s7724, 32
        %s7726 = smul.addr %s7725, 8
        %s7727 = scalar_lea.vmem %s9, %s7726
      $region68: #{res_conv_block_forward.1} parent=63 // pred_fallthru
        _
    $region64: #{res_conv_block_forward.1} parent=5 // pred_fallthru
      _
  $region6: #{res_conv_block_forward.1} parent=0 // loop_footer
    %s19 = sadd.s32 1, %s15
  $region7: #{res_conv_block_forward.1} parent=0 // loop_footer_branch
    %14 = sbr.rel target = $region3
  $region8: #{res_conv_block_forward.1} parent=0 // loop_exit
    _

</llo_original>
